<compile_context>
chip_gen: v7x
topology: tpu7x:2x2x1
jax: 0.10.0
libtpu: 0.0.40
codegen_flags: <defaults>
</compile_context>

<pallas_src>
import jax
import jax.numpy as jnp
from jax.experimental import pallas as pl
from jax.experimental.pallas import tpu as pltpu

# ----------------------------- problem sizes ---------------------------------
BATCH = 2
SEQ_LEN = 16                       # input token sequence length L
IN_CLASSES = 256                   # wavenet.in_classes (token alphabet)
NCLASSES = 256                     # output quantization bins (hard-coded in forward)
NMIX = 4                           # logistic mixture components -> 3*NMIX wavenet outputs
RES = 32                           # residual channels
SKIP = 64                          # skip channels
DILATIONS = (1, 2, 4, 8)
NLAYERS = len(DILATIONS)
KERNEL_SIZE = 2
RECEPTIVE_FIELD = (KERNEL_SIZE - 1) * sum(DILATIONS) + 1   # = 16 = padding_left
T_PAD = SEQ_LEN + RECEPTIVE_FIELD                          # = 32 padded length


# ------------------------------ fused kernel ---------------------------------
def _encoder_kernel(tok_ref, shift_ref, wfront_ref, bfront_ref,
                    wcur_ref, wprev_ref, bfg_ref,
                    wskip_ref, bskip_ref, wres_ref, bres_ref,
                    wo1_ref, bo1_ref, wo2_ref, bo2_ref, out_ref):
    inv_bins = 1.0 / NCLASSES

    def sigmoid(v):
        # 1 / (1 + exp(-v)); exp on the EUP, reciprocal via pl.reciprocal.
        return pl.reciprocal(1.0 + jnp.exp(-v), approx=False)

    # class iota for in-kernel one-hot, and bin left edges k/256 (lane axis = 256)
    col = jax.lax.broadcasted_iota(jnp.int32, (T_PAD, IN_CLASSES), 1)
    pos = (jax.lax.broadcasted_iota(jnp.int32, (SEQ_LEN, NCLASSES), 1)
           .astype(jnp.float32) * inv_bins)

    for b in range(BATCH):                                   # B=2, unrolled (serial TC)
        tok_b = tok_ref[b]                                   # (T_PAD, 1) int32
        onehot = jnp.where(col == tok_b, 1.0, 0.0)           # (T_PAD, IN_CLASSES) f32

        # front 1x1 conv on the one-hot input
        h = (jnp.dot(onehot, wfront_ref[...],
                     preferred_element_type=jnp.float32) + bfront_ref[...])  # (T_PAD, RES)

        skip = jnp.zeros((T_PAD, SKIP), jnp.float32)
        for li, d in enumerate(DILATIONS):
            # causal shift by d: prev[t] = h[t-d], zeros for t < d (0/1 matrix on MXU)
            prev = jnp.dot(shift_ref[li], h, preferred_element_type=jnp.float32)
            fg = (jnp.dot(h, wcur_ref[li], preferred_element_type=jnp.float32)
                  + jnp.dot(prev, wprev_ref[li], preferred_element_type=jnp.float32)
                  + bfg_ref[li])                             # (T_PAD, 2*RES)
            gated = jnp.tanh(fg[:, :RES]) * sigmoid(fg[:, RES:])
            skip = (skip
                    + jnp.dot(gated, wskip_ref[li], preferred_element_type=jnp.float32)
                    + bskip_ref[li])
            h = (h
                 + jnp.dot(gated, wres_ref[li], preferred_element_type=jnp.float32)
                 + bres_ref[li])

        # output head: relu -> 1x1 -> relu -> 1x1 -> 3*NMIX channels
        o = jnp.maximum(skip, 0.0)
        o = jnp.maximum(
            jnp.dot(o, wo1_ref[...], preferred_element_type=jnp.float32) + bo1_ref[...],
            0.0)
        o = jnp.dot(o, wo2_ref[...], preferred_element_type=jnp.float32) + bo2_ref[...]

        y = o[T_PAD - SEQ_LEN:, :]                           # last L frames, (L, 3M)
        loc = sigmoid(y[:, 0:NMIX])                          # (L, M)
        scale = sigmoid(y[:, NMIX:2 * NMIX]) * 0.05          # (L, M)
        logits = y[:, 2 * NMIX:3 * NMIX]                     # (L, M)

        # softmax over mixture components
        logits = logits - jnp.max(logits, axis=-1, keepdims=True)
        e = jnp.exp(logits)
        pi = e * pl.reciprocal(jnp.sum(e, axis=-1, keepdims=True), approx=False)
        inv_scale = pl.reciprocal(scale, approx=False)

        # quantized logistic-mixture: cdf(x + 1/256) - cdf(x) for the 256 bins
        acc = jnp.zeros((SEQ_LEN, NCLASSES), jnp.float32)
        for m in range(NMIX):
            loc_m = loc[:, m:m + 1]                          # (L, 1)
            isc_m = inv_scale[:, m:m + 1]
            pi_m = pi[:, m:m + 1]
            cdf_lo = sigmoid((pos - loc_m) * isc_m)          # (L, 256)
            cdf_hi = sigmoid((pos + inv_bins - loc_m) * isc_m)
            acc = acc + pi_m * (cdf_hi - cdf_lo)

        denom = jnp.sum(acc, axis=-1, keepdims=True)
        qd = acc * pl.reciprocal(denom, approx=False) + 1e-12
        out_ref[b] = jnp.log(qd)                             # lane-dense (L, 256) store


# ------------------------------- wrapper --------------------------------------
@jax.jit
def encoder_forward(params, x):
    """x: (B, SEQ_LEN) int32 tokens in [0, IN_CLASSES). Returns (B, 256, SEQ_LEN)
    log of the quantized logistic-mixture distribution (matches torch forward)."""
    # left pad by the receptive field (pad value 0 -> one-hot class 0, as in torch)
    x_pad = jnp.pad(x.astype(jnp.int32), ((0, 0), (RECEPTIVE_FIELD, 0)))
    tok = x_pad.reshape(BATCH, T_PAD, 1)
    # 0/1 causal shift matrices (prev[t] = h[t-d]); constants folded by XLA
    shift = jnp.stack([jnp.eye(T_PAD, k=-d, dtype=jnp.float32) for d in DILATIONS])

    vmem = pl.BlockSpec(memory_space=pltpu.MemorySpace.VMEM)
    out = pl.pallas_call(
        _encoder_kernel,
        out_shape=jax.ShapeDtypeStruct((BATCH, SEQ_LEN, NCLASSES), jnp.float32),
        in_specs=[vmem] * 15,
        out_specs=vmem,
    )(tok, shift,
      params["w_front"], params["b_front"],
      params["w_cur"], params["w_prev"], params["b_fg"],
      params["w_skip"], params["b_skip"],
      params["w_res"], params["b_res"],
      params["w_o1"], params["b_o1"],
      params["w_o2"], params["b_o2"])

    # torch returns quantized_dist.transpose(-1, -2).log() -> (B, 256, L);
    # the kernel writes a lane-dense (B, L, 256) slab, this transpose is format glue.
    return jnp.transpose(out, (0, 2, 1))


# ---------------------------- parameter init ----------------------------------
def init_params(key):
    ks = jax.random.split(key, 13)

    def u(k, shape, fan_in):
        s = 1.0 / jnp.sqrt(jnp.float32(fan_in))
        return jax.random.uniform(k, shape, jnp.float32, -s, s)

    return {
        "w_front": u(ks[0], (IN_CLASSES, RES), IN_CLASSES),
        "b_front": u(ks[1], (1, RES), IN_CLASSES),
        "w_cur":   u(ks[2], (NLAYERS, RES, 2 * RES), RES),
        "w_prev":  u(ks[3], (NLAYERS, RES, 2 * RES), RES),
        "b_fg":    u(ks[4], (NLAYERS, 1, 2 * RES), RES),
        "w_skip":  u(ks[5], (NLAYERS, RES, SKIP), RES),
        "b_skip":  u(ks[6], (NLAYERS, 1, SKIP), RES),
        "w_res":   u(ks[7], (NLAYERS, RES, RES), RES),
        "b_res":   u(ks[8], (NLAYERS, 1, RES), RES),
        "w_o1":    u(ks[9], (SKIP, SKIP), SKIP),
        "b_o1":    u(ks[10], (1, SKIP), SKIP),
        "w_o2":    u(ks[11], (SKIP, 3 * NMIX), SKIP),
        "b_o2":    u(ks[12], (1, 3 * NMIX), SKIP),
    }


# --------------------------- pure-JAX reference --------------------------------
def reference_forward(params, x):
    hp = jax.lax.Precision.HIGHEST
    xp = jnp.pad(x.astype(jnp.int32), ((0, 0), (RECEPTIVE_FIELD, 0)))
    onehot = jax.nn.one_hot(xp, IN_CLASSES, dtype=jnp.float32)           # (B, T, C)
    h = jnp.einsum("btc,cr->btr", onehot, params["w_front"], precision=hp) + params["b_front"]
    skip = jnp.zeros((x.shape[0], T_PAD, SKIP), jnp.float32)
    for li, d in enumerate(DILATIONS):
        prev = jnp.pad(h, ((0, 0), (d, 0), (0, 0)))[:, :T_PAD, :]
        fg = (jnp.einsum("btr,rk->btk", h, params["w_cur"][li], precision=hp)
              + jnp.einsum("btr,rk->btk", prev, params["w_prev"][li], precision=hp)
              + params["b_fg"][li])
        gated = jnp.tanh(fg[..., :RES]) * jax.nn.sigmoid(fg[..., RES:])
        skip = skip + jnp.einsum("btr,rs->bts", gated, params["w_skip"][li], precision=hp) + params["b_skip"][li]
        h = h + jnp.einsum("btr,rq->btq", gated, params["w_res"][li], precision=hp) + params["b_res"][li]
    o = jax.nn.relu(skip)
    o = jax.nn.relu(jnp.einsum("bts,su->btu", o, params["w_o1"], precision=hp) + params["b_o1"])
    o = jnp.einsum("bts,su->btu", o, params["w_o2"], precision=hp) + params["b_o2"]
    y = o[:, T_PAD - SEQ_LEN:, :]
    loc = jax.nn.sigmoid(y[..., :NMIX])
    scale = jax.nn.sigmoid(y[..., NMIX:2 * NMIX]) * 0.05
    pi = jax.nn.softmax(y[..., 2 * NMIX:], axis=-1)
    pos = jnp.arange(NCLASSES, dtype=jnp.float32) / NCLASSES
    z_lo = (pos[None, None, :, None] - loc[:, :, None, :]) / scale[:, :, None, :]
    z_hi = (pos[None, None, :, None] + 1.0 / NCLASSES - loc[:, :, None, :]) / scale[:, :, None, :]
    qd = jnp.sum(pi[:, :, None, :] * (jax.nn.sigmoid(z_hi) - jax.nn.sigmoid(z_lo)), axis=-1)
    qd = qd / jnp.sum(qd, axis=-1, keepdims=True) + 1e-12
    return jnp.transpose(jnp.log(qd), (0, 2, 1))


# ---------------------------------- main ---------------------------------------
if __name__ == "__main__":
    key = jax.random.PRNGKey(0)
    pkey, xkey = jax.random.split(key)

    params = init_params(pkey)
    x = jax.random.randint(xkey, (BATCH, SEQ_LEN), 0, IN_CLASSES, dtype=jnp.int32)

    out = encoder_forward(params, x)
    jax.block_until_ready(out)

    assert out.shape == (BATCH, NCLASSES, SEQ_LEN), out.shape
    assert out.dtype == jnp.float32

    # sanity: each (b, t) column is a log-distribution over the 256 quantization bins
    prob = jnp.exp(out)
    assert bool(jnp.all(jnp.isfinite(out)))
    assert bool(jnp.max(jnp.abs(jnp.sum(prob, axis=1) - 1.0)) < 1e-3)

    # cross-check against a pure-JAX reference of the same forward pass
    # (compare in probability space; log space is ill-conditioned in the cdf tails)
    ref_prob = jnp.exp(reference_forward(params, x))
    assert bool(jnp.max(jnp.abs(prob - ref_prob)) < 1e-2)

    print("KERNEL_OK")
</pallas_src>

<mosaic_0001>
module attributes {stable_mosaic.version = 11 : i64} {
  func.func @_encoder_kernel(%arg0: memref<2x32x1xi32, #tpu.memory_space<vmem>>, %arg1: memref<4x32x32xf32, #tpu.memory_space<vmem>>, %arg2: memref<256x32xf32, #tpu.memory_space<vmem>>, %arg3: memref<1x32xf32, #tpu.memory_space<vmem>>, %arg4: memref<4x32x64xf32, #tpu.memory_space<vmem>>, %arg5: memref<4x32x64xf32, #tpu.memory_space<vmem>>, %arg6: memref<4x1x64xf32, #tpu.memory_space<vmem>>, %arg7: memref<4x32x64xf32, #tpu.memory_space<vmem>>, %arg8: memref<4x1x64xf32, #tpu.memory_space<vmem>>, %arg9: memref<4x32x32xf32, #tpu.memory_space<vmem>>, %arg10: memref<4x1x32xf32, #tpu.memory_space<vmem>>, %arg11: memref<64x64xf32, #tpu.memory_space<vmem>>, %arg12: memref<1x64xf32, #tpu.memory_space<vmem>>, %arg13: memref<64x12xf32, #tpu.memory_space<vmem>>, %arg14: memref<1x12xf32, #tpu.memory_space<vmem>>, %arg15: memref<2x16x256xf32, #tpu.memory_space<vmem>>) attributes {dimension_semantics = [], scalar_prefetch = 0 : i64, scratch_operands = 0 : i64, tpu.core_type = #tpu.core_type<tc>} {
    %0 = tpu.iota {dimensions = array<i32: 1>} : vector<32x256xi32>
    %1 = tpu.iota {dimensions = array<i32: 1>} : vector<16x256xi32>
    %2 = arith.sitofp %1 : vector<16x256xi32> to vector<16x256xf32>
    %cst = arith.constant 3.906250e-03 : f32
    %3 = vector.broadcast %cst : f32 to vector<16x256xf32>
    %4 = arith.mulf %2, %3 : vector<16x256xf32>
    %c0 = arith.constant 0 : index
    %c0_0 = arith.constant 0 : index
    %c0_1 = arith.constant 0 : index
    %5 = vector.load %arg0[%c0, %c0_0, %c0_1] : memref<2x32x1xi32, #tpu.memory_space<vmem>>, vector<1x32x1xi32>
    %6 = vector.shape_cast %5 : vector<1x32x1xi32> to vector<32x1xi32>
    %7 = vector.broadcast %6 : vector<32x1xi32> to vector<32x256xi32>
    %8 = arith.cmpi eq, %0, %7 : vector<32x256xi32>
    %cst_2 = arith.constant 1.000000e+00 : f32
    %cst_3 = arith.constant 0.000000e+00 : f32
    %9 = vector.broadcast %cst_2 : f32 to vector<32x256xf32>
    %10 = vector.broadcast %cst_3 : f32 to vector<32x256xf32>
    %11 = arith.select %8, %9, %10 : vector<32x256xi1>, vector<32x256xf32>
    %c0_4 = arith.constant 0 : index
    %c0_5 = arith.constant 0 : index
    %12 = vector.load %arg2[%c0_4, %c0_5] : memref<256x32xf32, #tpu.memory_space<vmem>>, vector<256x32xf32>
    %cst_6 = arith.constant dense<0.000000e+00> : vector<32x32xf32>
    %13 = tpu.matmul %11, %12, %cst_6 {dimension_numbers = #tpu.dot_dimension_numbers<[1], [0], [0], [1], [0, 0, 1, 1], [], []>} : vector<32x256xf32>, vector<256x32xf32>, vector<32x32xf32> -> vector<32x32xf32>
    %c0_7 = arith.constant 0 : index
    %c0_8 = arith.constant 0 : index
    %14 = vector.load %arg3[%c0_7, %c0_8] : memref<1x32xf32, #tpu.memory_space<vmem>>, vector<1x32xf32>
    %15 = vector.broadcast %14 : vector<1x32xf32> to vector<32x32xf32>
    %16 = arith.addf %13, %15 : vector<32x32xf32>
    %cst_9 = arith.constant 0.000000e+00 : f32
    %17 = vector.broadcast %cst_9 : f32 to vector<32x64xf32>
    %c0_10 = arith.constant 0 : index
    %c0_11 = arith.constant 0 : index
    %c0_12 = arith.constant 0 : index
    %18 = vector.load %arg1[%c0_10, %c0_11, %c0_12] : memref<4x32x32xf32, #tpu.memory_space<vmem>>, vector<1x32x32xf32>
    %19 = vector.shape_cast %18 : vector<1x32x32xf32> to vector<32x32xf32>
    %cst_13 = arith.constant dense<0.000000e+00> : vector<32x32xf32>
    %20 = tpu.matmul %19, %16, %cst_13 {dimension_numbers = #tpu.dot_dimension_numbers<[1], [0], [0], [1], [0, 0, 1, 1], [], []>} : vector<32x32xf32>, vector<32x32xf32>, vector<32x32xf32> -> vector<32x32xf32>
    %c0_14 = arith.constant 0 : index
    %c0_15 = arith.constant 0 : index
    %c0_16 = arith.constant 0 : index
    %21 = vector.load %arg4[%c0_14, %c0_15, %c0_16] : memref<4x32x64xf32, #tpu.memory_space<vmem>>, vector<1x32x64xf32>
    %22 = vector.shape_cast %21 : vector<1x32x64xf32> to vector<32x64xf32>
    %cst_17 = arith.constant dense<0.000000e+00> : vector<32x64xf32>
    %23 = tpu.matmul %16, %22, %cst_17 {dimension_numbers = #tpu.dot_dimension_numbers<[1], [0], [0], [1], [0, 0, 1, 1], [], []>} : vector<32x32xf32>, vector<32x64xf32>, vector<32x64xf32> -> vector<32x64xf32>
    %c0_18 = arith.constant 0 : index
    %c0_19 = arith.constant 0 : index
    %c0_20 = arith.constant 0 : index
    %24 = vector.load %arg5[%c0_18, %c0_19, %c0_20] : memref<4x32x64xf32, #tpu.memory_space<vmem>>, vector<1x32x64xf32>
    %25 = vector.shape_cast %24 : vector<1x32x64xf32> to vector<32x64xf32>
    %cst_21 = arith.constant dense<0.000000e+00> : vector<32x64xf32>
    %26 = tpu.matmul %20, %25, %cst_21 {dimension_numbers = #tpu.dot_dimension_numbers<[1], [0], [0], [1], [0, 0, 1, 1], [], []>} : vector<32x32xf32>, vector<32x64xf32>, vector<32x64xf32> -> vector<32x64xf32>
    %27 = arith.addf %23, %26 : vector<32x64xf32>
    %c0_22 = arith.constant 0 : index
    %c0_23 = arith.constant 0 : index
    %c0_24 = arith.constant 0 : index
    %28 = vector.load %arg6[%c0_22, %c0_23, %c0_24] : memref<4x1x64xf32, #tpu.memory_space<vmem>>, vector<1x1x64xf32>
    %29 = vector.shape_cast %28 : vector<1x1x64xf32> to vector<1x64xf32>
    %30 = vector.broadcast %29 : vector<1x64xf32> to vector<32x64xf32>
    %31 = arith.addf %27, %30 : vector<32x64xf32>
    %32 = vector.extract_strided_slice %31 {offsets = [0, 0], sizes = [32, 32], strides = [1, 1]} : vector<32x64xf32> to vector<32x32xf32>
    %33 = math.tanh %32 : vector<32x32xf32>
    %34 = vector.extract_strided_slice %31 {offsets = [0, 32], sizes = [32, 32], strides = [1, 1]} : vector<32x64xf32> to vector<32x32xf32>
    %cst_25 = arith.constant 0.000000e+00 : f32
    %35 = vector.broadcast %cst_25 : f32 to vector<32x32xf32>
    %36 = arith.subf %35, %34 : vector<32x32xf32>
    %37 = math.exp %36 : vector<32x32xf32>
    %cst_26 = arith.constant 1.000000e+00 : f32
    %38 = vector.broadcast %cst_26 : f32 to vector<32x32xf32>
    %39 = arith.addf %38, %37 : vector<32x32xf32>
    %40 = tpu.reciprocal %39 : vector<32x32xf32> -> vector<32x32xf32>
    %41 = arith.mulf %33, %40 : vector<32x32xf32>
    %c0_27 = arith.constant 0 : index
    %c0_28 = arith.constant 0 : index
    %c0_29 = arith.constant 0 : index
    %42 = vector.load %arg7[%c0_27, %c0_28, %c0_29] : memref<4x32x64xf32, #tpu.memory_space<vmem>>, vector<1x32x64xf32>
    %43 = vector.shape_cast %42 : vector<1x32x64xf32> to vector<32x64xf32>
    %cst_30 = arith.constant dense<0.000000e+00> : vector<32x64xf32>
    %44 = tpu.matmul %41, %43, %cst_30 {dimension_numbers = #tpu.dot_dimension_numbers<[1], [0], [0], [1], [0, 0, 1, 1], [], []>} : vector<32x32xf32>, vector<32x64xf32>, vector<32x64xf32> -> vector<32x64xf32>
    %45 = arith.addf %17, %44 : vector<32x64xf32>
    %c0_31 = arith.constant 0 : index
    %c0_32 = arith.constant 0 : index
    %c0_33 = arith.constant 0 : index
    %46 = vector.load %arg8[%c0_31, %c0_32, %c0_33] : memref<4x1x64xf32, #tpu.memory_space<vmem>>, vector<1x1x64xf32>
    %47 = vector.shape_cast %46 : vector<1x1x64xf32> to vector<1x64xf32>
    %48 = vector.broadcast %47 : vector<1x64xf32> to vector<32x64xf32>
    %49 = arith.addf %45, %48 : vector<32x64xf32>
    %c0_34 = arith.constant 0 : index
    %c0_35 = arith.constant 0 : index
    %c0_36 = arith.constant 0 : index
    %50 = vector.load %arg9[%c0_34, %c0_35, %c0_36] : memref<4x32x32xf32, #tpu.memory_space<vmem>>, vector<1x32x32xf32>
    %51 = vector.shape_cast %50 : vector<1x32x32xf32> to vector<32x32xf32>
    %cst_37 = arith.constant dense<0.000000e+00> : vector<32x32xf32>
    %52 = tpu.matmul %41, %51, %cst_37 {dimension_numbers = #tpu.dot_dimension_numbers<[1], [0], [0], [1], [0, 0, 1, 1], [], []>} : vector<32x32xf32>, vector<32x32xf32>, vector<32x32xf32> -> vector<32x32xf32>
    %53 = arith.addf %16, %52 : vector<32x32xf32>
    %c0_38 = arith.constant 0 : index
    %c0_39 = arith.constant 0 : index
    %c0_40 = arith.constant 0 : index
    %54 = vector.load %arg10[%c0_38, %c0_39, %c0_40] : memref<4x1x32xf32, #tpu.memory_space<vmem>>, vector<1x1x32xf32>
    %55 = vector.shape_cast %54 : vector<1x1x32xf32> to vector<1x32xf32>
    %56 = vector.broadcast %55 : vector<1x32xf32> to vector<32x32xf32>
    %57 = arith.addf %53, %56 : vector<32x32xf32>
    %c1 = arith.constant 1 : index
    %c0_41 = arith.constant 0 : index
    %c0_42 = arith.constant 0 : index
    %58 = vector.load %arg1[%c1, %c0_41, %c0_42] : memref<4x32x32xf32, #tpu.memory_space<vmem>>, vector<1x32x32xf32>
    %59 = vector.shape_cast %58 : vector<1x32x32xf32> to vector<32x32xf32>
    %cst_43 = arith.constant dense<0.000000e+00> : vector<32x32xf32>
    %60 = tpu.matmul %59, %57, %cst_43 {dimension_numbers = #tpu.dot_dimension_numbers<[1], [0], [0], [1], [0, 0, 1, 1], [], []>} : vector<32x32xf32>, vector<32x32xf32>, vector<32x32xf32> -> vector<32x32xf32>
    %c1_44 = arith.constant 1 : index
    %c0_45 = arith.constant 0 : index
    %c0_46 = arith.constant 0 : index
    %61 = vector.load %arg4[%c1_44, %c0_45, %c0_46] : memref<4x32x64xf32, #tpu.memory_space<vmem>>, vector<1x32x64xf32>
    %62 = vector.shape_cast %61 : vector<1x32x64xf32> to vector<32x64xf32>
    %cst_47 = arith.constant dense<0.000000e+00> : vector<32x64xf32>
    %63 = tpu.matmul %57, %62, %cst_47 {dimension_numbers = #tpu.dot_dimension_numbers<[1], [0], [0], [1], [0, 0, 1, 1], [], []>} : vector<32x32xf32>, vector<32x64xf32>, vector<32x64xf32> -> vector<32x64xf32>
    %c1_48 = arith.constant 1 : index
    %c0_49 = arith.constant 0 : index
    %c0_50 = arith.constant 0 : index
    %64 = vector.load %arg5[%c1_48, %c0_49, %c0_50] : memref<4x32x64xf32, #tpu.memory_space<vmem>>, vector<1x32x64xf32>
    %65 = vector.shape_cast %64 : vector<1x32x64xf32> to vector<32x64xf32>
    %cst_51 = arith.constant dense<0.000000e+00> : vector<32x64xf32>
    %66 = tpu.matmul %60, %65, %cst_51 {dimension_numbers = #tpu.dot_dimension_numbers<[1], [0], [0], [1], [0, 0, 1, 1], [], []>} : vector<32x32xf32>, vector<32x64xf32>, vector<32x64xf32> -> vector<32x64xf32>
    %67 = arith.addf %63, %66 : vector<32x64xf32>
    %c1_52 = arith.constant 1 : index
    %c0_53 = arith.constant 0 : index
    %c0_54 = arith.constant 0 : index
    %68 = vector.load %arg6[%c1_52, %c0_53, %c0_54] : memref<4x1x64xf32, #tpu.memory_space<vmem>>, vector<1x1x64xf32>
    %69 = vector.shape_cast %68 : vector<1x1x64xf32> to vector<1x64xf32>
    %70 = vector.broadcast %69 : vector<1x64xf32> to vector<32x64xf32>
    %71 = arith.addf %67, %70 : vector<32x64xf32>
    %72 = vector.extract_strided_slice %71 {offsets = [0, 0], sizes = [32, 32], strides = [1, 1]} : vector<32x64xf32> to vector<32x32xf32>
    %73 = math.tanh %72 : vector<32x32xf32>
    %74 = vector.extract_strided_slice %71 {offsets = [0, 32], sizes = [32, 32], strides = [1, 1]} : vector<32x64xf32> to vector<32x32xf32>
    %cst_55 = arith.constant 0.000000e+00 : f32
    %75 = vector.broadcast %cst_55 : f32 to vector<32x32xf32>
    %76 = arith.subf %75, %74 : vector<32x32xf32>
    %77 = math.exp %76 : vector<32x32xf32>
    %cst_56 = arith.constant 1.000000e+00 : f32
    %78 = vector.broadcast %cst_56 : f32 to vector<32x32xf32>
    %79 = arith.addf %78, %77 : vector<32x32xf32>
    %80 = tpu.reciprocal %79 : vector<32x32xf32> -> vector<32x32xf32>
    %81 = arith.mulf %73, %80 : vector<32x32xf32>
    %c1_57 = arith.constant 1 : index
    %c0_58 = arith.constant 0 : index
    %c0_59 = arith.constant 0 : index
    %82 = vector.load %arg7[%c1_57, %c0_58, %c0_59] : memref<4x32x64xf32, #tpu.memory_space<vmem>>, vector<1x32x64xf32>
    %83 = vector.shape_cast %82 : vector<1x32x64xf32> to vector<32x64xf32>
    %cst_60 = arith.constant dense<0.000000e+00> : vector<32x64xf32>
    %84 = tpu.matmul %81, %83, %cst_60 {dimension_numbers = #tpu.dot_dimension_numbers<[1], [0], [0], [1], [0, 0, 1, 1], [], []>} : vector<32x32xf32>, vector<32x64xf32>, vector<32x64xf32> -> vector<32x64xf32>
    %85 = arith.addf %49, %84 : vector<32x64xf32>
    %c1_61 = arith.constant 1 : index
    %c0_62 = arith.constant 0 : index
    %c0_63 = arith.constant 0 : index
    %86 = vector.load %arg8[%c1_61, %c0_62, %c0_63] : memref<4x1x64xf32, #tpu.memory_space<vmem>>, vector<1x1x64xf32>
    %87 = vector.shape_cast %86 : vector<1x1x64xf32> to vector<1x64xf32>
    %88 = vector.broadcast %87 : vector<1x64xf32> to vector<32x64xf32>
    %89 = arith.addf %85, %88 : vector<32x64xf32>
    %c1_64 = arith.constant 1 : index
    %c0_65 = arith.constant 0 : index
    %c0_66 = arith.constant 0 : index
    %90 = vector.load %arg9[%c1_64, %c0_65, %c0_66] : memref<4x32x32xf32, #tpu.memory_space<vmem>>, vector<1x32x32xf32>
    %91 = vector.shape_cast %90 : vector<1x32x32xf32> to vector<32x32xf32>
    %cst_67 = arith.constant dense<0.000000e+00> : vector<32x32xf32>
    %92 = tpu.matmul %81, %91, %cst_67 {dimension_numbers = #tpu.dot_dimension_numbers<[1], [0], [0], [1], [0, 0, 1, 1], [], []>} : vector<32x32xf32>, vector<32x32xf32>, vector<32x32xf32> -> vector<32x32xf32>
    %93 = arith.addf %57, %92 : vector<32x32xf32>
    %c1_68 = arith.constant 1 : index
    %c0_69 = arith.constant 0 : index
    %c0_70 = arith.constant 0 : index
    %94 = vector.load %arg10[%c1_68, %c0_69, %c0_70] : memref<4x1x32xf32, #tpu.memory_space<vmem>>, vector<1x1x32xf32>
    %95 = vector.shape_cast %94 : vector<1x1x32xf32> to vector<1x32xf32>
    %96 = vector.broadcast %95 : vector<1x32xf32> to vector<32x32xf32>
    %97 = arith.addf %93, %96 : vector<32x32xf32>
    %c2 = arith.constant 2 : index
    %c0_71 = arith.constant 0 : index
    %c0_72 = arith.constant 0 : index
    %98 = vector.load %arg1[%c2, %c0_71, %c0_72] : memref<4x32x32xf32, #tpu.memory_space<vmem>>, vector<1x32x32xf32>
    %99 = vector.shape_cast %98 : vector<1x32x32xf32> to vector<32x32xf32>
    %cst_73 = arith.constant dense<0.000000e+00> : vector<32x32xf32>
    %100 = tpu.matmul %99, %97, %cst_73 {dimension_numbers = #tpu.dot_dimension_numbers<[1], [0], [0], [1], [0, 0, 1, 1], [], []>} : vector<32x32xf32>, vector<32x32xf32>, vector<32x32xf32> -> vector<32x32xf32>
    %c2_74 = arith.constant 2 : index
    %c0_75 = arith.constant 0 : index
    %c0_76 = arith.constant 0 : index
    %101 = vector.load %arg4[%c2_74, %c0_75, %c0_76] : memref<4x32x64xf32, #tpu.memory_space<vmem>>, vector<1x32x64xf32>
    %102 = vector.shape_cast %101 : vector<1x32x64xf32> to vector<32x64xf32>
    %cst_77 = arith.constant dense<0.000000e+00> : vector<32x64xf32>
    %103 = tpu.matmul %97, %102, %cst_77 {dimension_numbers = #tpu.dot_dimension_numbers<[1], [0], [0], [1], [0, 0, 1, 1], [], []>} : vector<32x32xf32>, vector<32x64xf32>, vector<32x64xf32> -> vector<32x64xf32>
    %c2_78 = arith.constant 2 : index
    %c0_79 = arith.constant 0 : index
    %c0_80 = arith.constant 0 : index
    %104 = vector.load %arg5[%c2_78, %c0_79, %c0_80] : memref<4x32x64xf32, #tpu.memory_space<vmem>>, vector<1x32x64xf32>
    %105 = vector.shape_cast %104 : vector<1x32x64xf32> to vector<32x64xf32>
    %cst_81 = arith.constant dense<0.000000e+00> : vector<32x64xf32>
    %106 = tpu.matmul %100, %105, %cst_81 {dimension_numbers = #tpu.dot_dimension_numbers<[1], [0], [0], [1], [0, 0, 1, 1], [], []>} : vector<32x32xf32>, vector<32x64xf32>, vector<32x64xf32> -> vector<32x64xf32>
    %107 = arith.addf %103, %106 : vector<32x64xf32>
    %c2_82 = arith.constant 2 : index
    %c0_83 = arith.constant 0 : index
    %c0_84 = arith.constant 0 : index
    %108 = vector.load %arg6[%c2_82, %c0_83, %c0_84] : memref<4x1x64xf32, #tpu.memory_space<vmem>>, vector<1x1x64xf32>
    %109 = vector.shape_cast %108 : vector<1x1x64xf32> to vector<1x64xf32>
    %110 = vector.broadcast %109 : vector<1x64xf32> to vector<32x64xf32>
    %111 = arith.addf %107, %110 : vector<32x64xf32>
    %112 = vector.extract_strided_slice %111 {offsets = [0, 0], sizes = [32, 32], strides = [1, 1]} : vector<32x64xf32> to vector<32x32xf32>
    %113 = math.tanh %112 : vector<32x32xf32>
    %114 = vector.extract_strided_slice %111 {offsets = [0, 32], sizes = [32, 32], strides = [1, 1]} : vector<32x64xf32> to vector<32x32xf32>
    %cst_85 = arith.constant 0.000000e+00 : f32
    %115 = vector.broadcast %cst_85 : f32 to vector<32x32xf32>
    %116 = arith.subf %115, %114 : vector<32x32xf32>
    %117 = math.exp %116 : vector<32x32xf32>
    %cst_86 = arith.constant 1.000000e+00 : f32
    %118 = vector.broadcast %cst_86 : f32 to vector<32x32xf32>
    %119 = arith.addf %118, %117 : vector<32x32xf32>
    %120 = tpu.reciprocal %119 : vector<32x32xf32> -> vector<32x32xf32>
    %121 = arith.mulf %113, %120 : vector<32x32xf32>
    %c2_87 = arith.constant 2 : index
    %c0_88 = arith.constant 0 : index
    %c0_89 = arith.constant 0 : index
    %122 = vector.load %arg7[%c2_87, %c0_88, %c0_89] : memref<4x32x64xf32, #tpu.memory_space<vmem>>, vector<1x32x64xf32>
    %123 = vector.shape_cast %122 : vector<1x32x64xf32> to vector<32x64xf32>
    %cst_90 = arith.constant dense<0.000000e+00> : vector<32x64xf32>
    %124 = tpu.matmul %121, %123, %cst_90 {dimension_numbers = #tpu.dot_dimension_numbers<[1], [0], [0], [1], [0, 0, 1, 1], [], []>} : vector<32x32xf32>, vector<32x64xf32>, vector<32x64xf32> -> vector<32x64xf32>
    %125 = arith.addf %89, %124 : vector<32x64xf32>
    %c2_91 = arith.constant 2 : index
    %c0_92 = arith.constant 0 : index
    %c0_93 = arith.constant 0 : index
    %126 = vector.load %arg8[%c2_91, %c0_92, %c0_93] : memref<4x1x64xf32, #tpu.memory_space<vmem>>, vector<1x1x64xf32>
    %127 = vector.shape_cast %126 : vector<1x1x64xf32> to vector<1x64xf32>
    %128 = vector.broadcast %127 : vector<1x64xf32> to vector<32x64xf32>
    %129 = arith.addf %125, %128 : vector<32x64xf32>
    %c2_94 = arith.constant 2 : index
    %c0_95 = arith.constant 0 : index
    %c0_96 = arith.constant 0 : index
    %130 = vector.load %arg9[%c2_94, %c0_95, %c0_96] : memref<4x32x32xf32, #tpu.memory_space<vmem>>, vector<1x32x32xf32>
    %131 = vector.shape_cast %130 : vector<1x32x32xf32> to vector<32x32xf32>
    %cst_97 = arith.constant dense<0.000000e+00> : vector<32x32xf32>
    %132 = tpu.matmul %121, %131, %cst_97 {dimension_numbers = #tpu.dot_dimension_numbers<[1], [0], [0], [1], [0, 0, 1, 1], [], []>} : vector<32x32xf32>, vector<32x32xf32>, vector<32x32xf32> -> vector<32x32xf32>
    %133 = arith.addf %97, %132 : vector<32x32xf32>
    %c2_98 = arith.constant 2 : index
    %c0_99 = arith.constant 0 : index
    %c0_100 = arith.constant 0 : index
    %134 = vector.load %arg10[%c2_98, %c0_99, %c0_100] : memref<4x1x32xf32, #tpu.memory_space<vmem>>, vector<1x1x32xf32>
    %135 = vector.shape_cast %134 : vector<1x1x32xf32> to vector<1x32xf32>
    %136 = vector.broadcast %135 : vector<1x32xf32> to vector<32x32xf32>
    %137 = arith.addf %133, %136 : vector<32x32xf32>
    %c3 = arith.constant 3 : index
    %c0_101 = arith.constant 0 : index
    %c0_102 = arith.constant 0 : index
    %138 = vector.load %arg1[%c3, %c0_101, %c0_102] : memref<4x32x32xf32, #tpu.memory_space<vmem>>, vector<1x32x32xf32>
    %139 = vector.shape_cast %138 : vector<1x32x32xf32> to vector<32x32xf32>
    %cst_103 = arith.constant dense<0.000000e+00> : vector<32x32xf32>
    %140 = tpu.matmul %139, %137, %cst_103 {dimension_numbers = #tpu.dot_dimension_numbers<[1], [0], [0], [1], [0, 0, 1, 1], [], []>} : vector<32x32xf32>, vector<32x32xf32>, vector<32x32xf32> -> vector<32x32xf32>
    %c3_104 = arith.constant 3 : index
    %c0_105 = arith.constant 0 : index
    %c0_106 = arith.constant 0 : index
    %141 = vector.load %arg4[%c3_104, %c0_105, %c0_106] : memref<4x32x64xf32, #tpu.memory_space<vmem>>, vector<1x32x64xf32>
    %142 = vector.shape_cast %141 : vector<1x32x64xf32> to vector<32x64xf32>
    %cst_107 = arith.constant dense<0.000000e+00> : vector<32x64xf32>
    %143 = tpu.matmul %137, %142, %cst_107 {dimension_numbers = #tpu.dot_dimension_numbers<[1], [0], [0], [1], [0, 0, 1, 1], [], []>} : vector<32x32xf32>, vector<32x64xf32>, vector<32x64xf32> -> vector<32x64xf32>
    %c3_108 = arith.constant 3 : index
    %c0_109 = arith.constant 0 : index
    %c0_110 = arith.constant 0 : index
    %144 = vector.load %arg5[%c3_108, %c0_109, %c0_110] : memref<4x32x64xf32, #tpu.memory_space<vmem>>, vector<1x32x64xf32>
    %145 = vector.shape_cast %144 : vector<1x32x64xf32> to vector<32x64xf32>
    %cst_111 = arith.constant dense<0.000000e+00> : vector<32x64xf32>
    %146 = tpu.matmul %140, %145, %cst_111 {dimension_numbers = #tpu.dot_dimension_numbers<[1], [0], [0], [1], [0, 0, 1, 1], [], []>} : vector<32x32xf32>, vector<32x64xf32>, vector<32x64xf32> -> vector<32x64xf32>
    %147 = arith.addf %143, %146 : vector<32x64xf32>
    %c3_112 = arith.constant 3 : index
    %c0_113 = arith.constant 0 : index
    %c0_114 = arith.constant 0 : index
    %148 = vector.load %arg6[%c3_112, %c0_113, %c0_114] : memref<4x1x64xf32, #tpu.memory_space<vmem>>, vector<1x1x64xf32>
    %149 = vector.shape_cast %148 : vector<1x1x64xf32> to vector<1x64xf32>
    %150 = vector.broadcast %149 : vector<1x64xf32> to vector<32x64xf32>
    %151 = arith.addf %147, %150 : vector<32x64xf32>
    %152 = vector.extract_strided_slice %151 {offsets = [0, 0], sizes = [32, 32], strides = [1, 1]} : vector<32x64xf32> to vector<32x32xf32>
    %153 = math.tanh %152 : vector<32x32xf32>
    %154 = vector.extract_strided_slice %151 {offsets = [0, 32], sizes = [32, 32], strides = [1, 1]} : vector<32x64xf32> to vector<32x32xf32>
    %cst_115 = arith.constant 0.000000e+00 : f32
    %155 = vector.broadcast %cst_115 : f32 to vector<32x32xf32>
    %156 = arith.subf %155, %154 : vector<32x32xf32>
    %157 = math.exp %156 : vector<32x32xf32>
    %cst_116 = arith.constant 1.000000e+00 : f32
    %158 = vector.broadcast %cst_116 : f32 to vector<32x32xf32>
    %159 = arith.addf %158, %157 : vector<32x32xf32>
    %160 = tpu.reciprocal %159 : vector<32x32xf32> -> vector<32x32xf32>
    %161 = arith.mulf %153, %160 : vector<32x32xf32>
    %c3_117 = arith.constant 3 : index
    %c0_118 = arith.constant 0 : index
    %c0_119 = arith.constant 0 : index
    %162 = vector.load %arg7[%c3_117, %c0_118, %c0_119] : memref<4x32x64xf32, #tpu.memory_space<vmem>>, vector<1x32x64xf32>
    %163 = vector.shape_cast %162 : vector<1x32x64xf32> to vector<32x64xf32>
    %cst_120 = arith.constant dense<0.000000e+00> : vector<32x64xf32>
    %164 = tpu.matmul %161, %163, %cst_120 {dimension_numbers = #tpu.dot_dimension_numbers<[1], [0], [0], [1], [0, 0, 1, 1], [], []>} : vector<32x32xf32>, vector<32x64xf32>, vector<32x64xf32> -> vector<32x64xf32>
    %165 = arith.addf %129, %164 : vector<32x64xf32>
    %c3_121 = arith.constant 3 : index
    %c0_122 = arith.constant 0 : index
    %c0_123 = arith.constant 0 : index
    %166 = vector.load %arg8[%c3_121, %c0_122, %c0_123] : memref<4x1x64xf32, #tpu.memory_space<vmem>>, vector<1x1x64xf32>
    %167 = vector.shape_cast %166 : vector<1x1x64xf32> to vector<1x64xf32>
    %168 = vector.broadcast %167 : vector<1x64xf32> to vector<32x64xf32>
    %169 = arith.addf %165, %168 : vector<32x64xf32>
    %cst_124 = arith.constant 0.000000e+00 : f32
    %170 = vector.broadcast %cst_124 : f32 to vector<32x64xf32>
    %171 = arith.maximumf %169, %170 : vector<32x64xf32>
    %c0_125 = arith.constant 0 : index
    %c0_126 = arith.constant 0 : index
    %172 = vector.load %arg11[%c0_125, %c0_126] : memref<64x64xf32, #tpu.memory_space<vmem>>, vector<64x64xf32>
    %cst_127 = arith.constant dense<0.000000e+00> : vector<32x64xf32>
    %173 = tpu.matmul %171, %172, %cst_127 {dimension_numbers = #tpu.dot_dimension_numbers<[1], [0], [0], [1], [0, 0, 1, 1], [], []>} : vector<32x64xf32>, vector<64x64xf32>, vector<32x64xf32> -> vector<32x64xf32>
    %c0_128 = arith.constant 0 : index
    %c0_129 = arith.constant 0 : index
    %174 = vector.load %arg12[%c0_128, %c0_129] : memref<1x64xf32, #tpu.memory_space<vmem>>, vector<1x64xf32>
    %175 = vector.broadcast %174 : vector<1x64xf32> to vector<32x64xf32>
    %176 = arith.addf %173, %175 : vector<32x64xf32>
    %cst_130 = arith.constant 0.000000e+00 : f32
    %177 = vector.broadcast %cst_130 : f32 to vector<32x64xf32>
    %178 = arith.maximumf %176, %177 : vector<32x64xf32>
    %c0_131 = arith.constant 0 : index
    %c0_132 = arith.constant 0 : index
    %179 = vector.load %arg13[%c0_131, %c0_132] : memref<64x12xf32, #tpu.memory_space<vmem>>, vector<64x12xf32>
    %cst_133 = arith.constant dense<0.000000e+00> : vector<32x12xf32>
    %180 = tpu.matmul %178, %179, %cst_133 {dimension_numbers = #tpu.dot_dimension_numbers<[1], [0], [0], [1], [0, 0, 1, 1], [], []>} : vector<32x64xf32>, vector<64x12xf32>, vector<32x12xf32> -> vector<32x12xf32>
    %c0_134 = arith.constant 0 : index
    %c0_135 = arith.constant 0 : index
    %181 = vector.load %arg14[%c0_134, %c0_135] : memref<1x12xf32, #tpu.memory_space<vmem>>, vector<1x12xf32>
    %182 = vector.broadcast %181 : vector<1x12xf32> to vector<32x12xf32>
    %183 = arith.addf %180, %182 : vector<32x12xf32>
    %184 = vector.extract_strided_slice %183 {offsets = [16, 0], sizes = [16, 12], strides = [1, 1]} : vector<32x12xf32> to vector<16x12xf32>
    %185 = vector.extract_strided_slice %184 {offsets = [0, 0], sizes = [16, 4], strides = [1, 1]} : vector<16x12xf32> to vector<16x4xf32>
    %cst_136 = arith.constant 0.000000e+00 : f32
    %186 = vector.broadcast %cst_136 : f32 to vector<16x4xf32>
    %187 = arith.subf %186, %185 : vector<16x4xf32>
    %188 = math.exp %187 : vector<16x4xf32>
    %cst_137 = arith.constant 1.000000e+00 : f32
    %189 = vector.broadcast %cst_137 : f32 to vector<16x4xf32>
    %190 = arith.addf %189, %188 : vector<16x4xf32>
    %191 = tpu.reciprocal %190 : vector<16x4xf32> -> vector<16x4xf32>
    %192 = vector.extract_strided_slice %184 {offsets = [0, 4], sizes = [16, 4], strides = [1, 1]} : vector<16x12xf32> to vector<16x4xf32>
    %cst_138 = arith.constant 0.000000e+00 : f32
    %193 = vector.broadcast %cst_138 : f32 to vector<16x4xf32>
    %194 = arith.subf %193, %192 : vector<16x4xf32>
    %195 = math.exp %194 : vector<16x4xf32>
    %cst_139 = arith.constant 1.000000e+00 : f32
    %196 = vector.broadcast %cst_139 : f32 to vector<16x4xf32>
    %197 = arith.addf %196, %195 : vector<16x4xf32>
    %198 = tpu.reciprocal %197 : vector<16x4xf32> -> vector<16x4xf32>
    %cst_140 = arith.constant 5.000000e-02 : f32
    %199 = vector.broadcast %cst_140 : f32 to vector<16x4xf32>
    %200 = arith.mulf %198, %199 : vector<16x4xf32>
    %201 = vector.extract_strided_slice %184 {offsets = [0, 8], sizes = [16, 4], strides = [1, 1]} : vector<16x12xf32> to vector<16x4xf32>
    %cst_141 = arith.constant dense<0xFF800000> : vector<16xf32>
    %202 = vector.multi_reduction <maximumf>, %201, %cst_141 [1] : vector<16x4xf32> to vector<16xf32>
    %203 = vector.shape_cast %202 : vector<16xf32> to vector<16x1xf32>
    %204 = vector.broadcast %203 : vector<16x1xf32> to vector<16x4xf32>
    %205 = arith.subf %201, %204 : vector<16x4xf32>
    %206 = math.exp %205 : vector<16x4xf32>
    %cst_142 = arith.constant dense<0.000000e+00> : vector<16xf32>
    %207 = vector.multi_reduction <add>, %206, %cst_142 [1] : vector<16x4xf32> to vector<16xf32>
    %208 = vector.shape_cast %207 : vector<16xf32> to vector<16x1xf32>
    %209 = tpu.reciprocal %208 : vector<16x1xf32> -> vector<16x1xf32>
    %210 = vector.broadcast %209 : vector<16x1xf32> to vector<16x4xf32>
    %211 = arith.mulf %206, %210 : vector<16x4xf32>
    %212 = tpu.reciprocal %200 : vector<16x4xf32> -> vector<16x4xf32>
    %cst_143 = arith.constant 0.000000e+00 : f32
    %213 = vector.broadcast %cst_143 : f32 to vector<16x256xf32>
    %214 = vector.extract_strided_slice %191 {offsets = [0, 0], sizes = [16, 1], strides = [1, 1]} : vector<16x4xf32> to vector<16x1xf32>
    %215 = vector.extract_strided_slice %212 {offsets = [0, 0], sizes = [16, 1], strides = [1, 1]} : vector<16x4xf32> to vector<16x1xf32>
    %216 = vector.extract_strided_slice %211 {offsets = [0, 0], sizes = [16, 1], strides = [1, 1]} : vector<16x4xf32> to vector<16x1xf32>
    %217 = vector.broadcast %214 : vector<16x1xf32> to vector<16x256xf32>
    %218 = arith.subf %4, %217 : vector<16x256xf32>
    %219 = vector.broadcast %215 : vector<16x1xf32> to vector<16x256xf32>
    %220 = arith.mulf %218, %219 : vector<16x256xf32>
    %cst_144 = arith.constant 0.000000e+00 : f32
    %221 = vector.broadcast %cst_144 : f32 to vector<16x256xf32>
    %222 = arith.subf %221, %220 : vector<16x256xf32>
    %223 = math.exp %222 : vector<16x256xf32>
    %cst_145 = arith.constant 1.000000e+00 : f32
    %224 = vector.broadcast %cst_145 : f32 to vector<16x256xf32>
    %225 = arith.addf %224, %223 : vector<16x256xf32>
    %226 = tpu.reciprocal %225 : vector<16x256xf32> -> vector<16x256xf32>
    %cst_146 = arith.constant 3.906250e-03 : f32
    %227 = vector.broadcast %cst_146 : f32 to vector<16x256xf32>
    %228 = arith.addf %4, %227 : vector<16x256xf32>
    %229 = vector.broadcast %214 : vector<16x1xf32> to vector<16x256xf32>
    %230 = arith.subf %228, %229 : vector<16x256xf32>
    %231 = vector.broadcast %215 : vector<16x1xf32> to vector<16x256xf32>
    %232 = arith.mulf %230, %231 : vector<16x256xf32>
    %cst_147 = arith.constant 0.000000e+00 : f32
    %233 = vector.broadcast %cst_147 : f32 to vector<16x256xf32>
    %234 = arith.subf %233, %232 : vector<16x256xf32>
    %235 = math.exp %234 : vector<16x256xf32>
    %cst_148 = arith.constant 1.000000e+00 : f32
    %236 = vector.broadcast %cst_148 : f32 to vector<16x256xf32>
    %237 = arith.addf %236, %235 : vector<16x256xf32>
    %238 = tpu.reciprocal %237 : vector<16x256xf32> -> vector<16x256xf32>
    %239 = arith.subf %238, %226 : vector<16x256xf32>
    %240 = vector.broadcast %216 : vector<16x1xf32> to vector<16x256xf32>
    %241 = arith.mulf %240, %239 : vector<16x256xf32>
    %242 = arith.addf %213, %241 : vector<16x256xf32>
    %243 = vector.extract_strided_slice %191 {offsets = [0, 1], sizes = [16, 1], strides = [1, 1]} : vector<16x4xf32> to vector<16x1xf32>
    %244 = vector.extract_strided_slice %212 {offsets = [0, 1], sizes = [16, 1], strides = [1, 1]} : vector<16x4xf32> to vector<16x1xf32>
    %245 = vector.extract_strided_slice %211 {offsets = [0, 1], sizes = [16, 1], strides = [1, 1]} : vector<16x4xf32> to vector<16x1xf32>
    %246 = vector.broadcast %243 : vector<16x1xf32> to vector<16x256xf32>
    %247 = arith.subf %4, %246 : vector<16x256xf32>
    %248 = vector.broadcast %244 : vector<16x1xf32> to vector<16x256xf32>
    %249 = arith.mulf %247, %248 : vector<16x256xf32>
    %cst_149 = arith.constant 0.000000e+00 : f32
    %250 = vector.broadcast %cst_149 : f32 to vector<16x256xf32>
    %251 = arith.subf %250, %249 : vector<16x256xf32>
    %252 = math.exp %251 : vector<16x256xf32>
    %cst_150 = arith.constant 1.000000e+00 : f32
    %253 = vector.broadcast %cst_150 : f32 to vector<16x256xf32>
    %254 = arith.addf %253, %252 : vector<16x256xf32>
    %255 = tpu.reciprocal %254 : vector<16x256xf32> -> vector<16x256xf32>
    %cst_151 = arith.constant 3.906250e-03 : f32
    %256 = vector.broadcast %cst_151 : f32 to vector<16x256xf32>
    %257 = arith.addf %4, %256 : vector<16x256xf32>
    %258 = vector.broadcast %243 : vector<16x1xf32> to vector<16x256xf32>
    %259 = arith.subf %257, %258 : vector<16x256xf32>
    %260 = vector.broadcast %244 : vector<16x1xf32> to vector<16x256xf32>
    %261 = arith.mulf %259, %260 : vector<16x256xf32>
    %cst_152 = arith.constant 0.000000e+00 : f32
    %262 = vector.broadcast %cst_152 : f32 to vector<16x256xf32>
    %263 = arith.subf %262, %261 : vector<16x256xf32>
    %264 = math.exp %263 : vector<16x256xf32>
    %cst_153 = arith.constant 1.000000e+00 : f32
    %265 = vector.broadcast %cst_153 : f32 to vector<16x256xf32>
    %266 = arith.addf %265, %264 : vector<16x256xf32>
    %267 = tpu.reciprocal %266 : vector<16x256xf32> -> vector<16x256xf32>
    %268 = arith.subf %267, %255 : vector<16x256xf32>
    %269 = vector.broadcast %245 : vector<16x1xf32> to vector<16x256xf32>
    %270 = arith.mulf %269, %268 : vector<16x256xf32>
    %271 = arith.addf %242, %270 : vector<16x256xf32>
    %272 = vector.extract_strided_slice %191 {offsets = [0, 2], sizes = [16, 1], strides = [1, 1]} : vector<16x4xf32> to vector<16x1xf32>
    %273 = vector.extract_strided_slice %212 {offsets = [0, 2], sizes = [16, 1], strides = [1, 1]} : vector<16x4xf32> to vector<16x1xf32>
    %274 = vector.extract_strided_slice %211 {offsets = [0, 2], sizes = [16, 1], strides = [1, 1]} : vector<16x4xf32> to vector<16x1xf32>
    %275 = vector.broadcast %272 : vector<16x1xf32> to vector<16x256xf32>
    %276 = arith.subf %4, %275 : vector<16x256xf32>
    %277 = vector.broadcast %273 : vector<16x1xf32> to vector<16x256xf32>
    %278 = arith.mulf %276, %277 : vector<16x256xf32>
    %cst_154 = arith.constant 0.000000e+00 : f32
    %279 = vector.broadcast %cst_154 : f32 to vector<16x256xf32>
    %280 = arith.subf %279, %278 : vector<16x256xf32>
    %281 = math.exp %280 : vector<16x256xf32>
    %cst_155 = arith.constant 1.000000e+00 : f32
    %282 = vector.broadcast %cst_155 : f32 to vector<16x256xf32>
    %283 = arith.addf %282, %281 : vector<16x256xf32>
    %284 = tpu.reciprocal %283 : vector<16x256xf32> -> vector<16x256xf32>
    %cst_156 = arith.constant 3.906250e-03 : f32
    %285 = vector.broadcast %cst_156 : f32 to vector<16x256xf32>
    %286 = arith.addf %4, %285 : vector<16x256xf32>
    %287 = vector.broadcast %272 : vector<16x1xf32> to vector<16x256xf32>
    %288 = arith.subf %286, %287 : vector<16x256xf32>
    %289 = vector.broadcast %273 : vector<16x1xf32> to vector<16x256xf32>
    %290 = arith.mulf %288, %289 : vector<16x256xf32>
    %cst_157 = arith.constant 0.000000e+00 : f32
    %291 = vector.broadcast %cst_157 : f32 to vector<16x256xf32>
    %292 = arith.subf %291, %290 : vector<16x256xf32>
    %293 = math.exp %292 : vector<16x256xf32>
    %cst_158 = arith.constant 1.000000e+00 : f32
    %294 = vector.broadcast %cst_158 : f32 to vector<16x256xf32>
    %295 = arith.addf %294, %293 : vector<16x256xf32>
    %296 = tpu.reciprocal %295 : vector<16x256xf32> -> vector<16x256xf32>
    %297 = arith.subf %296, %284 : vector<16x256xf32>
    %298 = vector.broadcast %274 : vector<16x1xf32> to vector<16x256xf32>
    %299 = arith.mulf %298, %297 : vector<16x256xf32>
    %300 = arith.addf %271, %299 : vector<16x256xf32>
    %301 = vector.extract_strided_slice %191 {offsets = [0, 3], sizes = [16, 1], strides = [1, 1]} : vector<16x4xf32> to vector<16x1xf32>
    %302 = vector.extract_strided_slice %212 {offsets = [0, 3], sizes = [16, 1], strides = [1, 1]} : vector<16x4xf32> to vector<16x1xf32>
    %303 = vector.extract_strided_slice %211 {offsets = [0, 3], sizes = [16, 1], strides = [1, 1]} : vector<16x4xf32> to vector<16x1xf32>
    %304 = vector.broadcast %301 : vector<16x1xf32> to vector<16x256xf32>
    %305 = arith.subf %4, %304 : vector<16x256xf32>
    %306 = vector.broadcast %302 : vector<16x1xf32> to vector<16x256xf32>
    %307 = arith.mulf %305, %306 : vector<16x256xf32>
    %cst_159 = arith.constant 0.000000e+00 : f32
    %308 = vector.broadcast %cst_159 : f32 to vector<16x256xf32>
    %309 = arith.subf %308, %307 : vector<16x256xf32>
    %310 = math.exp %309 : vector<16x256xf32>
    %cst_160 = arith.constant 1.000000e+00 : f32
    %311 = vector.broadcast %cst_160 : f32 to vector<16x256xf32>
    %312 = arith.addf %311, %310 : vector<16x256xf32>
    %313 = tpu.reciprocal %312 : vector<16x256xf32> -> vector<16x256xf32>
    %cst_161 = arith.constant 3.906250e-03 : f32
    %314 = vector.broadcast %cst_161 : f32 to vector<16x256xf32>
    %315 = arith.addf %4, %314 : vector<16x256xf32>
    %316 = vector.broadcast %301 : vector<16x1xf32> to vector<16x256xf32>
    %317 = arith.subf %315, %316 : vector<16x256xf32>
    %318 = vector.broadcast %302 : vector<16x1xf32> to vector<16x256xf32>
    %319 = arith.mulf %317, %318 : vector<16x256xf32>
    %cst_162 = arith.constant 0.000000e+00 : f32
    %320 = vector.broadcast %cst_162 : f32 to vector<16x256xf32>
    %321 = arith.subf %320, %319 : vector<16x256xf32>
    %322 = math.exp %321 : vector<16x256xf32>
    %cst_163 = arith.constant 1.000000e+00 : f32
    %323 = vector.broadcast %cst_163 : f32 to vector<16x256xf32>
    %324 = arith.addf %323, %322 : vector<16x256xf32>
    %325 = tpu.reciprocal %324 : vector<16x256xf32> -> vector<16x256xf32>
    %326 = arith.subf %325, %313 : vector<16x256xf32>
    %327 = vector.broadcast %303 : vector<16x1xf32> to vector<16x256xf32>
    %328 = arith.mulf %327, %326 : vector<16x256xf32>
    %329 = arith.addf %300, %328 : vector<16x256xf32>
    %cst_164 = arith.constant dense<0.000000e+00> : vector<16xf32>
    %330 = vector.multi_reduction <add>, %329, %cst_164 [1] : vector<16x256xf32> to vector<16xf32>
    %331 = vector.shape_cast %330 : vector<16xf32> to vector<16x1xf32>
    %332 = tpu.reciprocal %331 : vector<16x1xf32> -> vector<16x1xf32>
    %333 = vector.broadcast %332 : vector<16x1xf32> to vector<16x256xf32>
    %334 = arith.mulf %329, %333 : vector<16x256xf32>
    %cst_165 = arith.constant 9.99999996E-13 : f32
    %335 = vector.broadcast %cst_165 : f32 to vector<16x256xf32>
    %336 = arith.addf %334, %335 : vector<16x256xf32>
    %337 = math.log %336 : vector<16x256xf32>
    %c0_166 = arith.constant 0 : index
    %c0_167 = arith.constant 0 : index
    %c0_168 = arith.constant 0 : index
    %338 = vector.load %arg15[%c0_166, %c0_167, %c0_168] : memref<2x16x256xf32, #tpu.memory_space<vmem>>, vector<1x16x256xf32>
    %339 = vector.shape_cast %338 : vector<1x16x256xf32> to vector<16x256xf32>
    %340 = vector.shape_cast %337 : vector<16x256xf32> to vector<1x16x256xf32>
    tpu.vector_store %arg15[%c0_166, %c0_167, %c0_168], %340 {strides = array<i32>} : memref<2x16x256xf32, #tpu.memory_space<vmem>>, vector<1x16x256xf32>,
    %c1_169 = arith.constant 1 : index
    %c0_170 = arith.constant 0 : index
    %c0_171 = arith.constant 0 : index
    %341 = vector.load %arg0[%c1_169, %c0_170, %c0_171] : memref<2x32x1xi32, #tpu.memory_space<vmem>>, vector<1x32x1xi32>
    %342 = vector.shape_cast %341 : vector<1x32x1xi32> to vector<32x1xi32>
    %343 = vector.broadcast %342 : vector<32x1xi32> to vector<32x256xi32>
    %344 = arith.cmpi eq, %0, %343 : vector<32x256xi32>
    %cst_172 = arith.constant 1.000000e+00 : f32
    %cst_173 = arith.constant 0.000000e+00 : f32
    %345 = vector.broadcast %cst_172 : f32 to vector<32x256xf32>
    %346 = vector.broadcast %cst_173 : f32 to vector<32x256xf32>
    %347 = arith.select %344, %345, %346 : vector<32x256xi1>, vector<32x256xf32>
    %c0_174 = arith.constant 0 : index
    %c0_175 = arith.constant 0 : index
    %348 = vector.load %arg2[%c0_174, %c0_175] : memref<256x32xf32, #tpu.memory_space<vmem>>, vector<256x32xf32>
    %cst_176 = arith.constant dense<0.000000e+00> : vector<32x32xf32>
    %349 = tpu.matmul %347, %348, %cst_176 {dimension_numbers = #tpu.dot_dimension_numbers<[1], [0], [0], [1], [0, 0, 1, 1], [], []>} : vector<32x256xf32>, vector<256x32xf32>, vector<32x32xf32> -> vector<32x32xf32>
    %c0_177 = arith.constant 0 : index
    %c0_178 = arith.constant 0 : index
    %350 = vector.load %arg3[%c0_177, %c0_178] : memref<1x32xf32, #tpu.memory_space<vmem>>, vector<1x32xf32>
    %351 = vector.broadcast %350 : vector<1x32xf32> to vector<32x32xf32>
    %352 = arith.addf %349, %351 : vector<32x32xf32>
    %cst_179 = arith.constant 0.000000e+00 : f32
    %353 = vector.broadcast %cst_179 : f32 to vector<32x64xf32>
    %c0_180 = arith.constant 0 : index
    %c0_181 = arith.constant 0 : index
    %c0_182 = arith.constant 0 : index
    %354 = vector.load %arg1[%c0_180, %c0_181, %c0_182] : memref<4x32x32xf32, #tpu.memory_space<vmem>>, vector<1x32x32xf32>
    %355 = vector.shape_cast %354 : vector<1x32x32xf32> to vector<32x32xf32>
    %cst_183 = arith.constant dense<0.000000e+00> : vector<32x32xf32>
    %356 = tpu.matmul %355, %352, %cst_183 {dimension_numbers = #tpu.dot_dimension_numbers<[1], [0], [0], [1], [0, 0, 1, 1], [], []>} : vector<32x32xf32>, vector<32x32xf32>, vector<32x32xf32> -> vector<32x32xf32>
    %c0_184 = arith.constant 0 : index
    %c0_185 = arith.constant 0 : index
    %c0_186 = arith.constant 0 : index
    %357 = vector.load %arg4[%c0_184, %c0_185, %c0_186] : memref<4x32x64xf32, #tpu.memory_space<vmem>>, vector<1x32x64xf32>
    %358 = vector.shape_cast %357 : vector<1x32x64xf32> to vector<32x64xf32>
    %cst_187 = arith.constant dense<0.000000e+00> : vector<32x64xf32>
    %359 = tpu.matmul %352, %358, %cst_187 {dimension_numbers = #tpu.dot_dimension_numbers<[1], [0], [0], [1], [0, 0, 1, 1], [], []>} : vector<32x32xf32>, vector<32x64xf32>, vector<32x64xf32> -> vector<32x64xf32>
    %c0_188 = arith.constant 0 : index
    %c0_189 = arith.constant 0 : index
    %c0_190 = arith.constant 0 : index
    %360 = vector.load %arg5[%c0_188, %c0_189, %c0_190] : memref<4x32x64xf32, #tpu.memory_space<vmem>>, vector<1x32x64xf32>
    %361 = vector.shape_cast %360 : vector<1x32x64xf32> to vector<32x64xf32>
    %cst_191 = arith.constant dense<0.000000e+00> : vector<32x64xf32>
    %362 = tpu.matmul %356, %361, %cst_191 {dimension_numbers = #tpu.dot_dimension_numbers<[1], [0], [0], [1], [0, 0, 1, 1], [], []>} : vector<32x32xf32>, vector<32x64xf32>, vector<32x64xf32> -> vector<32x64xf32>
    %363 = arith.addf %359, %362 : vector<32x64xf32>
    %c0_192 = arith.constant 0 : index
    %c0_193 = arith.constant 0 : index
    %c0_194 = arith.constant 0 : index
    %364 = vector.load %arg6[%c0_192, %c0_193, %c0_194] : memref<4x1x64xf32, #tpu.memory_space<vmem>>, vector<1x1x64xf32>
    %365 = vector.shape_cast %364 : vector<1x1x64xf32> to vector<1x64xf32>
    %366 = vector.broadcast %365 : vector<1x64xf32> to vector<32x64xf32>
    %367 = arith.addf %363, %366 : vector<32x64xf32>
    %368 = vector.extract_strided_slice %367 {offsets = [0, 0], sizes = [32, 32], strides = [1, 1]} : vector<32x64xf32> to vector<32x32xf32>
    %369 = math.tanh %368 : vector<32x32xf32>
    %370 = vector.extract_strided_slice %367 {offsets = [0, 32], sizes = [32, 32], strides = [1, 1]} : vector<32x64xf32> to vector<32x32xf32>
    %cst_195 = arith.constant 0.000000e+00 : f32
    %371 = vector.broadcast %cst_195 : f32 to vector<32x32xf32>
    %372 = arith.subf %371, %370 : vector<32x32xf32>
    %373 = math.exp %372 : vector<32x32xf32>
    %cst_196 = arith.constant 1.000000e+00 : f32
    %374 = vector.broadcast %cst_196 : f32 to vector<32x32xf32>
    %375 = arith.addf %374, %373 : vector<32x32xf32>
    %376 = tpu.reciprocal %375 : vector<32x32xf32> -> vector<32x32xf32>
    %377 = arith.mulf %369, %376 : vector<32x32xf32>
    %c0_197 = arith.constant 0 : index
    %c0_198 = arith.constant 0 : index
    %c0_199 = arith.constant 0 : index
    %378 = vector.load %arg7[%c0_197, %c0_198, %c0_199] : memref<4x32x64xf32, #tpu.memory_space<vmem>>, vector<1x32x64xf32>
    %379 = vector.shape_cast %378 : vector<1x32x64xf32> to vector<32x64xf32>
    %cst_200 = arith.constant dense<0.000000e+00> : vector<32x64xf32>
    %380 = tpu.matmul %377, %379, %cst_200 {dimension_numbers = #tpu.dot_dimension_numbers<[1], [0], [0], [1], [0, 0, 1, 1], [], []>} : vector<32x32xf32>, vector<32x64xf32>, vector<32x64xf32> -> vector<32x64xf32>
    %381 = arith.addf %353, %380 : vector<32x64xf32>
    %c0_201 = arith.constant 0 : index
    %c0_202 = arith.constant 0 : index
    %c0_203 = arith.constant 0 : index
    %382 = vector.load %arg8[%c0_201, %c0_202, %c0_203] : memref<4x1x64xf32, #tpu.memory_space<vmem>>, vector<1x1x64xf32>
    %383 = vector.shape_cast %382 : vector<1x1x64xf32> to vector<1x64xf32>
    %384 = vector.broadcast %383 : vector<1x64xf32> to vector<32x64xf32>
    %385 = arith.addf %381, %384 : vector<32x64xf32>
    %c0_204 = arith.constant 0 : index
    %c0_205 = arith.constant 0 : index
    %c0_206 = arith.constant 0 : index
    %386 = vector.load %arg9[%c0_204, %c0_205, %c0_206] : memref<4x32x32xf32, #tpu.memory_space<vmem>>, vector<1x32x32xf32>
    %387 = vector.shape_cast %386 : vector<1x32x32xf32> to vector<32x32xf32>
    %cst_207 = arith.constant dense<0.000000e+00> : vector<32x32xf32>
    %388 = tpu.matmul %377, %387, %cst_207 {dimension_numbers = #tpu.dot_dimension_numbers<[1], [0], [0], [1], [0, 0, 1, 1], [], []>} : vector<32x32xf32>, vector<32x32xf32>, vector<32x32xf32> -> vector<32x32xf32>
    %389 = arith.addf %352, %388 : vector<32x32xf32>
    %c0_208 = arith.constant 0 : index
    %c0_209 = arith.constant 0 : index
    %c0_210 = arith.constant 0 : index
    %390 = vector.load %arg10[%c0_208, %c0_209, %c0_210] : memref<4x1x32xf32, #tpu.memory_space<vmem>>, vector<1x1x32xf32>
    %391 = vector.shape_cast %390 : vector<1x1x32xf32> to vector<1x32xf32>
    %392 = vector.broadcast %391 : vector<1x32xf32> to vector<32x32xf32>
    %393 = arith.addf %389, %392 : vector<32x32xf32>
    %c1_211 = arith.constant 1 : index
    %c0_212 = arith.constant 0 : index
    %c0_213 = arith.constant 0 : index
    %394 = vector.load %arg1[%c1_211, %c0_212, %c0_213] : memref<4x32x32xf32, #tpu.memory_space<vmem>>, vector<1x32x32xf32>
    %395 = vector.shape_cast %394 : vector<1x32x32xf32> to vector<32x32xf32>
    %cst_214 = arith.constant dense<0.000000e+00> : vector<32x32xf32>
    %396 = tpu.matmul %395, %393, %cst_214 {dimension_numbers = #tpu.dot_dimension_numbers<[1], [0], [0], [1], [0, 0, 1, 1], [], []>} : vector<32x32xf32>, vector<32x32xf32>, vector<32x32xf32> -> vector<32x32xf32>
    %c1_215 = arith.constant 1 : index
    %c0_216 = arith.constant 0 : index
    %c0_217 = arith.constant 0 : index
    %397 = vector.load %arg4[%c1_215, %c0_216, %c0_217] : memref<4x32x64xf32, #tpu.memory_space<vmem>>, vector<1x32x64xf32>
    %398 = vector.shape_cast %397 : vector<1x32x64xf32> to vector<32x64xf32>
    %cst_218 = arith.constant dense<0.000000e+00> : vector<32x64xf32>
    %399 = tpu.matmul %393, %398, %cst_218 {dimension_numbers = #tpu.dot_dimension_numbers<[1], [0], [0], [1], [0, 0, 1, 1], [], []>} : vector<32x32xf32>, vector<32x64xf32>, vector<32x64xf32> -> vector<32x64xf32>
    %c1_219 = arith.constant 1 : index
    %c0_220 = arith.constant 0 : index
    %c0_221 = arith.constant 0 : index
    %400 = vector.load %arg5[%c1_219, %c0_220, %c0_221] : memref<4x32x64xf32, #tpu.memory_space<vmem>>, vector<1x32x64xf32>
    %401 = vector.shape_cast %400 : vector<1x32x64xf32> to vector<32x64xf32>
    %cst_222 = arith.constant dense<0.000000e+00> : vector<32x64xf32>
    %402 = tpu.matmul %396, %401, %cst_222 {dimension_numbers = #tpu.dot_dimension_numbers<[1], [0], [0], [1], [0, 0, 1, 1], [], []>} : vector<32x32xf32>, vector<32x64xf32>, vector<32x64xf32> -> vector<32x64xf32>
    %403 = arith.addf %399, %402 : vector<32x64xf32>
    %c1_223 = arith.constant 1 : index
    %c0_224 = arith.constant 0 : index
    %c0_225 = arith.constant 0 : index
    %404 = vector.load %arg6[%c1_223, %c0_224, %c0_225] : memref<4x1x64xf32, #tpu.memory_space<vmem>>, vector<1x1x64xf32>
    %405 = vector.shape_cast %404 : vector<1x1x64xf32> to vector<1x64xf32>
    %406 = vector.broadcast %405 : vector<1x64xf32> to vector<32x64xf32>
    %407 = arith.addf %403, %406 : vector<32x64xf32>
    %408 = vector.extract_strided_slice %407 {offsets = [0, 0], sizes = [32, 32], strides = [1, 1]} : vector<32x64xf32> to vector<32x32xf32>
    %409 = math.tanh %408 : vector<32x32xf32>
    %410 = vector.extract_strided_slice %407 {offsets = [0, 32], sizes = [32, 32], strides = [1, 1]} : vector<32x64xf32> to vector<32x32xf32>
    %cst_226 = arith.constant 0.000000e+00 : f32
    %411 = vector.broadcast %cst_226 : f32 to vector<32x32xf32>
    %412 = arith.subf %411, %410 : vector<32x32xf32>
    %413 = math.exp %412 : vector<32x32xf32>
    %cst_227 = arith.constant 1.000000e+00 : f32
    %414 = vector.broadcast %cst_227 : f32 to vector<32x32xf32>
    %415 = arith.addf %414, %413 : vector<32x32xf32>
    %416 = tpu.reciprocal %415 : vector<32x32xf32> -> vector<32x32xf32>
    %417 = arith.mulf %409, %416 : vector<32x32xf32>
    %c1_228 = arith.constant 1 : index
    %c0_229 = arith.constant 0 : index
    %c0_230 = arith.constant 0 : index
    %418 = vector.load %arg7[%c1_228, %c0_229, %c0_230] : memref<4x32x64xf32, #tpu.memory_space<vmem>>, vector<1x32x64xf32>
    %419 = vector.shape_cast %418 : vector<1x32x64xf32> to vector<32x64xf32>
    %cst_231 = arith.constant dense<0.000000e+00> : vector<32x64xf32>
    %420 = tpu.matmul %417, %419, %cst_231 {dimension_numbers = #tpu.dot_dimension_numbers<[1], [0], [0], [1], [0, 0, 1, 1], [], []>} : vector<32x32xf32>, vector<32x64xf32>, vector<32x64xf32> -> vector<32x64xf32>
    %421 = arith.addf %385, %420 : vector<32x64xf32>
    %c1_232 = arith.constant 1 : index
    %c0_233 = arith.constant 0 : index
    %c0_234 = arith.constant 0 : index
    %422 = vector.load %arg8[%c1_232, %c0_233, %c0_234] : memref<4x1x64xf32, #tpu.memory_space<vmem>>, vector<1x1x64xf32>
    %423 = vector.shape_cast %422 : vector<1x1x64xf32> to vector<1x64xf32>
    %424 = vector.broadcast %423 : vector<1x64xf32> to vector<32x64xf32>
    %425 = arith.addf %421, %424 : vector<32x64xf32>
    %c1_235 = arith.constant 1 : index
    %c0_236 = arith.constant 0 : index
    %c0_237 = arith.constant 0 : index
    %426 = vector.load %arg9[%c1_235, %c0_236, %c0_237] : memref<4x32x32xf32, #tpu.memory_space<vmem>>, vector<1x32x32xf32>
    %427 = vector.shape_cast %426 : vector<1x32x32xf32> to vector<32x32xf32>
    %cst_238 = arith.constant dense<0.000000e+00> : vector<32x32xf32>
    %428 = tpu.matmul %417, %427, %cst_238 {dimension_numbers = #tpu.dot_dimension_numbers<[1], [0], [0], [1], [0, 0, 1, 1], [], []>} : vector<32x32xf32>, vector<32x32xf32>, vector<32x32xf32> -> vector<32x32xf32>
    %429 = arith.addf %393, %428 : vector<32x32xf32>
    %c1_239 = arith.constant 1 : index
    %c0_240 = arith.constant 0 : index
    %c0_241 = arith.constant 0 : index
    %430 = vector.load %arg10[%c1_239, %c0_240, %c0_241] : memref<4x1x32xf32, #tpu.memory_space<vmem>>, vector<1x1x32xf32>
    %431 = vector.shape_cast %430 : vector<1x1x32xf32> to vector<1x32xf32>
    %432 = vector.broadcast %431 : vector<1x32xf32> to vector<32x32xf32>
    %433 = arith.addf %429, %432 : vector<32x32xf32>
    %c2_242 = arith.constant 2 : index
    %c0_243 = arith.constant 0 : index
    %c0_244 = arith.constant 0 : index
    %434 = vector.load %arg1[%c2_242, %c0_243, %c0_244] : memref<4x32x32xf32, #tpu.memory_space<vmem>>, vector<1x32x32xf32>
    %435 = vector.shape_cast %434 : vector<1x32x32xf32> to vector<32x32xf32>
    %cst_245 = arith.constant dense<0.000000e+00> : vector<32x32xf32>
    %436 = tpu.matmul %435, %433, %cst_245 {dimension_numbers = #tpu.dot_dimension_numbers<[1], [0], [0], [1], [0, 0, 1, 1], [], []>} : vector<32x32xf32>, vector<32x32xf32>, vector<32x32xf32> -> vector<32x32xf32>
    %c2_246 = arith.constant 2 : index
    %c0_247 = arith.constant 0 : index
    %c0_248 = arith.constant 0 : index
    %437 = vector.load %arg4[%c2_246, %c0_247, %c0_248] : memref<4x32x64xf32, #tpu.memory_space<vmem>>, vector<1x32x64xf32>
    %438 = vector.shape_cast %437 : vector<1x32x64xf32> to vector<32x64xf32>
    %cst_249 = arith.constant dense<0.000000e+00> : vector<32x64xf32>
    %439 = tpu.matmul %433, %438, %cst_249 {dimension_numbers = #tpu.dot_dimension_numbers<[1], [0], [0], [1], [0, 0, 1, 1], [], []>} : vector<32x32xf32>, vector<32x64xf32>, vector<32x64xf32> -> vector<32x64xf32>
    %c2_250 = arith.constant 2 : index
    %c0_251 = arith.constant 0 : index
    %c0_252 = arith.constant 0 : index
    %440 = vector.load %arg5[%c2_250, %c0_251, %c0_252] : memref<4x32x64xf32, #tpu.memory_space<vmem>>, vector<1x32x64xf32>
    %441 = vector.shape_cast %440 : vector<1x32x64xf32> to vector<32x64xf32>
    %cst_253 = arith.constant dense<0.000000e+00> : vector<32x64xf32>
    %442 = tpu.matmul %436, %441, %cst_253 {dimension_numbers = #tpu.dot_dimension_numbers<[1], [0], [0], [1], [0, 0, 1, 1], [], []>} : vector<32x32xf32>, vector<32x64xf32>, vector<32x64xf32> -> vector<32x64xf32>
    %443 = arith.addf %439, %442 : vector<32x64xf32>
    %c2_254 = arith.constant 2 : index
    %c0_255 = arith.constant 0 : index
    %c0_256 = arith.constant 0 : index
    %444 = vector.load %arg6[%c2_254, %c0_255, %c0_256] : memref<4x1x64xf32, #tpu.memory_space<vmem>>, vector<1x1x64xf32>
    %445 = vector.shape_cast %444 : vector<1x1x64xf32> to vector<1x64xf32>
    %446 = vector.broadcast %445 : vector<1x64xf32> to vector<32x64xf32>
    %447 = arith.addf %443, %446 : vector<32x64xf32>
    %448 = vector.extract_strided_slice %447 {offsets = [0, 0], sizes = [32, 32], strides = [1, 1]} : vector<32x64xf32> to vector<32x32xf32>
    %449 = math.tanh %448 : vector<32x32xf32>
    %450 = vector.extract_strided_slice %447 {offsets = [0, 32], sizes = [32, 32], strides = [1, 1]} : vector<32x64xf32> to vector<32x32xf32>
    %cst_257 = arith.constant 0.000000e+00 : f32
    %451 = vector.broadcast %cst_257 : f32 to vector<32x32xf32>
    %452 = arith.subf %451, %450 : vector<32x32xf32>
    %453 = math.exp %452 : vector<32x32xf32>
    %cst_258 = arith.constant 1.000000e+00 : f32
    %454 = vector.broadcast %cst_258 : f32 to vector<32x32xf32>
    %455 = arith.addf %454, %453 : vector<32x32xf32>
    %456 = tpu.reciprocal %455 : vector<32x32xf32> -> vector<32x32xf32>
    %457 = arith.mulf %449, %456 : vector<32x32xf32>
    %c2_259 = arith.constant 2 : index
    %c0_260 = arith.constant 0 : index
    %c0_261 = arith.constant 0 : index
    %458 = vector.load %arg7[%c2_259, %c0_260, %c0_261] : memref<4x32x64xf32, #tpu.memory_space<vmem>>, vector<1x32x64xf32>
    %459 = vector.shape_cast %458 : vector<1x32x64xf32> to vector<32x64xf32>
    %cst_262 = arith.constant dense<0.000000e+00> : vector<32x64xf32>
    %460 = tpu.matmul %457, %459, %cst_262 {dimension_numbers = #tpu.dot_dimension_numbers<[1], [0], [0], [1], [0, 0, 1, 1], [], []>} : vector<32x32xf32>, vector<32x64xf32>, vector<32x64xf32> -> vector<32x64xf32>
    %461 = arith.addf %425, %460 : vector<32x64xf32>
    %c2_263 = arith.constant 2 : index
    %c0_264 = arith.constant 0 : index
    %c0_265 = arith.constant 0 : index
    %462 = vector.load %arg8[%c2_263, %c0_264, %c0_265] : memref<4x1x64xf32, #tpu.memory_space<vmem>>, vector<1x1x64xf32>
    %463 = vector.shape_cast %462 : vector<1x1x64xf32> to vector<1x64xf32>
    %464 = vector.broadcast %463 : vector<1x64xf32> to vector<32x64xf32>
    %465 = arith.addf %461, %464 : vector<32x64xf32>
    %c2_266 = arith.constant 2 : index
    %c0_267 = arith.constant 0 : index
    %c0_268 = arith.constant 0 : index
    %466 = vector.load %arg9[%c2_266, %c0_267, %c0_268] : memref<4x32x32xf32, #tpu.memory_space<vmem>>, vector<1x32x32xf32>
    %467 = vector.shape_cast %466 : vector<1x32x32xf32> to vector<32x32xf32>
    %cst_269 = arith.constant dense<0.000000e+00> : vector<32x32xf32>
    %468 = tpu.matmul %457, %467, %cst_269 {dimension_numbers = #tpu.dot_dimension_numbers<[1], [0], [0], [1], [0, 0, 1, 1], [], []>} : vector<32x32xf32>, vector<32x32xf32>, vector<32x32xf32> -> vector<32x32xf32>
    %469 = arith.addf %433, %468 : vector<32x32xf32>
    %c2_270 = arith.constant 2 : index
    %c0_271 = arith.constant 0 : index
    %c0_272 = arith.constant 0 : index
    %470 = vector.load %arg10[%c2_270, %c0_271, %c0_272] : memref<4x1x32xf32, #tpu.memory_space<vmem>>, vector<1x1x32xf32>
    %471 = vector.shape_cast %470 : vector<1x1x32xf32> to vector<1x32xf32>
    %472 = vector.broadcast %471 : vector<1x32xf32> to vector<32x32xf32>
    %473 = arith.addf %469, %472 : vector<32x32xf32>
    %c3_273 = arith.constant 3 : index
    %c0_274 = arith.constant 0 : index
    %c0_275 = arith.constant 0 : index
    %474 = vector.load %arg1[%c3_273, %c0_274, %c0_275] : memref<4x32x32xf32, #tpu.memory_space<vmem>>, vector<1x32x32xf32>
    %475 = vector.shape_cast %474 : vector<1x32x32xf32> to vector<32x32xf32>
    %cst_276 = arith.constant dense<0.000000e+00> : vector<32x32xf32>
    %476 = tpu.matmul %475, %473, %cst_276 {dimension_numbers = #tpu.dot_dimension_numbers<[1], [0], [0], [1], [0, 0, 1, 1], [], []>} : vector<32x32xf32>, vector<32x32xf32>, vector<32x32xf32> -> vector<32x32xf32>
    %c3_277 = arith.constant 3 : index
    %c0_278 = arith.constant 0 : index
    %c0_279 = arith.constant 0 : index
    %477 = vector.load %arg4[%c3_277, %c0_278, %c0_279] : memref<4x32x64xf32, #tpu.memory_space<vmem>>, vector<1x32x64xf32>
    %478 = vector.shape_cast %477 : vector<1x32x64xf32> to vector<32x64xf32>
    %cst_280 = arith.constant dense<0.000000e+00> : vector<32x64xf32>
    %479 = tpu.matmul %473, %478, %cst_280 {dimension_numbers = #tpu.dot_dimension_numbers<[1], [0], [0], [1], [0, 0, 1, 1], [], []>} : vector<32x32xf32>, vector<32x64xf32>, vector<32x64xf32> -> vector<32x64xf32>
    %c3_281 = arith.constant 3 : index
    %c0_282 = arith.constant 0 : index
    %c0_283 = arith.constant 0 : index
    %480 = vector.load %arg5[%c3_281, %c0_282, %c0_283] : memref<4x32x64xf32, #tpu.memory_space<vmem>>, vector<1x32x64xf32>
    %481 = vector.shape_cast %480 : vector<1x32x64xf32> to vector<32x64xf32>
    %cst_284 = arith.constant dense<0.000000e+00> : vector<32x64xf32>
    %482 = tpu.matmul %476, %481, %cst_284 {dimension_numbers = #tpu.dot_dimension_numbers<[1], [0], [0], [1], [0, 0, 1, 1], [], []>} : vector<32x32xf32>, vector<32x64xf32>, vector<32x64xf32> -> vector<32x64xf32>
    %483 = arith.addf %479, %482 : vector<32x64xf32>
    %c3_285 = arith.constant 3 : index
    %c0_286 = arith.constant 0 : index
    %c0_287 = arith.constant 0 : index
    %484 = vector.load %arg6[%c3_285, %c0_286, %c0_287] : memref<4x1x64xf32, #tpu.memory_space<vmem>>, vector<1x1x64xf32>
    %485 = vector.shape_cast %484 : vector<1x1x64xf32> to vector<1x64xf32>
    %486 = vector.broadcast %485 : vector<1x64xf32> to vector<32x64xf32>
    %487 = arith.addf %483, %486 : vector<32x64xf32>
    %488 = vector.extract_strided_slice %487 {offsets = [0, 0], sizes = [32, 32], strides = [1, 1]} : vector<32x64xf32> to vector<32x32xf32>
    %489 = math.tanh %488 : vector<32x32xf32>
    %490 = vector.extract_strided_slice %487 {offsets = [0, 32], sizes = [32, 32], strides = [1, 1]} : vector<32x64xf32> to vector<32x32xf32>
    %cst_288 = arith.constant 0.000000e+00 : f32
    %491 = vector.broadcast %cst_288 : f32 to vector<32x32xf32>
    %492 = arith.subf %491, %490 : vector<32x32xf32>
    %493 = math.exp %492 : vector<32x32xf32>
    %cst_289 = arith.constant 1.000000e+00 : f32
    %494 = vector.broadcast %cst_289 : f32 to vector<32x32xf32>
    %495 = arith.addf %494, %493 : vector<32x32xf32>
    %496 = tpu.reciprocal %495 : vector<32x32xf32> -> vector<32x32xf32>
    %497 = arith.mulf %489, %496 : vector<32x32xf32>
    %c3_290 = arith.constant 3 : index
    %c0_291 = arith.constant 0 : index
    %c0_292 = arith.constant 0 : index
    %498 = vector.load %arg7[%c3_290, %c0_291, %c0_292] : memref<4x32x64xf32, #tpu.memory_space<vmem>>, vector<1x32x64xf32>
    %499 = vector.shape_cast %498 : vector<1x32x64xf32> to vector<32x64xf32>
    %cst_293 = arith.constant dense<0.000000e+00> : vector<32x64xf32>
    %500 = tpu.matmul %497, %499, %cst_293 {dimension_numbers = #tpu.dot_dimension_numbers<[1], [0], [0], [1], [0, 0, 1, 1], [], []>} : vector<32x32xf32>, vector<32x64xf32>, vector<32x64xf32> -> vector<32x64xf32>
    %501 = arith.addf %465, %500 : vector<32x64xf32>
    %c3_294 = arith.constant 3 : index
    %c0_295 = arith.constant 0 : index
    %c0_296 = arith.constant 0 : index
    %502 = vector.load %arg8[%c3_294, %c0_295, %c0_296] : memref<4x1x64xf32, #tpu.memory_space<vmem>>, vector<1x1x64xf32>
    %503 = vector.shape_cast %502 : vector<1x1x64xf32> to vector<1x64xf32>
    %504 = vector.broadcast %503 : vector<1x64xf32> to vector<32x64xf32>
    %505 = arith.addf %501, %504 : vector<32x64xf32>
    %cst_297 = arith.constant 0.000000e+00 : f32
    %506 = vector.broadcast %cst_297 : f32 to vector<32x64xf32>
    %507 = arith.maximumf %505, %506 : vector<32x64xf32>
    %c0_298 = arith.constant 0 : index
    %c0_299 = arith.constant 0 : index
    %508 = vector.load %arg11[%c0_298, %c0_299] : memref<64x64xf32, #tpu.memory_space<vmem>>, vector<64x64xf32>
    %cst_300 = arith.constant dense<0.000000e+00> : vector<32x64xf32>
    %509 = tpu.matmul %507, %508, %cst_300 {dimension_numbers = #tpu.dot_dimension_numbers<[1], [0], [0], [1], [0, 0, 1, 1], [], []>} : vector<32x64xf32>, vector<64x64xf32>, vector<32x64xf32> -> vector<32x64xf32>
    %c0_301 = arith.constant 0 : index
    %c0_302 = arith.constant 0 : index
    %510 = vector.load %arg12[%c0_301, %c0_302] : memref<1x64xf32, #tpu.memory_space<vmem>>, vector<1x64xf32>
    %511 = vector.broadcast %510 : vector<1x64xf32> to vector<32x64xf32>
    %512 = arith.addf %509, %511 : vector<32x64xf32>
    %cst_303 = arith.constant 0.000000e+00 : f32
    %513 = vector.broadcast %cst_303 : f32 to vector<32x64xf32>
    %514 = arith.maximumf %512, %513 : vector<32x64xf32>
    %c0_304 = arith.constant 0 : index
    %c0_305 = arith.constant 0 : index
    %515 = vector.load %arg13[%c0_304, %c0_305] : memref<64x12xf32, #tpu.memory_space<vmem>>, vector<64x12xf32>
    %cst_306 = arith.constant dense<0.000000e+00> : vector<32x12xf32>
    %516 = tpu.matmul %514, %515, %cst_306 {dimension_numbers = #tpu.dot_dimension_numbers<[1], [0], [0], [1], [0, 0, 1, 1], [], []>} : vector<32x64xf32>, vector<64x12xf32>, vector<32x12xf32> -> vector<32x12xf32>
    %c0_307 = arith.constant 0 : index
    %c0_308 = arith.constant 0 : index
    %517 = vector.load %arg14[%c0_307, %c0_308] : memref<1x12xf32, #tpu.memory_space<vmem>>, vector<1x12xf32>
    %518 = vector.broadcast %517 : vector<1x12xf32> to vector<32x12xf32>
    %519 = arith.addf %516, %518 : vector<32x12xf32>
    %520 = vector.extract_strided_slice %519 {offsets = [16, 0], sizes = [16, 12], strides = [1, 1]} : vector<32x12xf32> to vector<16x12xf32>
    %521 = vector.extract_strided_slice %520 {offsets = [0, 0], sizes = [16, 4], strides = [1, 1]} : vector<16x12xf32> to vector<16x4xf32>
    %cst_309 = arith.constant 0.000000e+00 : f32
    %522 = vector.broadcast %cst_309 : f32 to vector<16x4xf32>
    %523 = arith.subf %522, %521 : vector<16x4xf32>
    %524 = math.exp %523 : vector<16x4xf32>
    %cst_310 = arith.constant 1.000000e+00 : f32
    %525 = vector.broadcast %cst_310 : f32 to vector<16x4xf32>
    %526 = arith.addf %525, %524 : vector<16x4xf32>
    %527 = tpu.reciprocal %526 : vector<16x4xf32> -> vector<16x4xf32>
    %528 = vector.extract_strided_slice %520 {offsets = [0, 4], sizes = [16, 4], strides = [1, 1]} : vector<16x12xf32> to vector<16x4xf32>
    %cst_311 = arith.constant 0.000000e+00 : f32
    %529 = vector.broadcast %cst_311 : f32 to vector<16x4xf32>
    %530 = arith.subf %529, %528 : vector<16x4xf32>
    %531 = math.exp %530 : vector<16x4xf32>
    %cst_312 = arith.constant 1.000000e+00 : f32
    %532 = vector.broadcast %cst_312 : f32 to vector<16x4xf32>
    %533 = arith.addf %532, %531 : vector<16x4xf32>
    %534 = tpu.reciprocal %533 : vector<16x4xf32> -> vector<16x4xf32>
    %cst_313 = arith.constant 5.000000e-02 : f32
    %535 = vector.broadcast %cst_313 : f32 to vector<16x4xf32>
    %536 = arith.mulf %534, %535 : vector<16x4xf32>
    %537 = vector.extract_strided_slice %520 {offsets = [0, 8], sizes = [16, 4], strides = [1, 1]} : vector<16x12xf32> to vector<16x4xf32>
    %cst_314 = arith.constant dense<0xFF800000> : vector<16xf32>
    %538 = vector.multi_reduction <maximumf>, %537, %cst_314 [1] : vector<16x4xf32> to vector<16xf32>
    %539 = vector.shape_cast %538 : vector<16xf32> to vector<16x1xf32>
    %540 = vector.broadcast %539 : vector<16x1xf32> to vector<16x4xf32>
    %541 = arith.subf %537, %540 : vector<16x4xf32>
    %542 = math.exp %541 : vector<16x4xf32>
    %cst_315 = arith.constant dense<0.000000e+00> : vector<16xf32>
    %543 = vector.multi_reduction <add>, %542, %cst_315 [1] : vector<16x4xf32> to vector<16xf32>
    %544 = vector.shape_cast %543 : vector<16xf32> to vector<16x1xf32>
    %545 = tpu.reciprocal %544 : vector<16x1xf32> -> vector<16x1xf32>
    %546 = vector.broadcast %545 : vector<16x1xf32> to vector<16x4xf32>
    %547 = arith.mulf %542, %546 : vector<16x4xf32>
    %548 = tpu.reciprocal %536 : vector<16x4xf32> -> vector<16x4xf32>
    %cst_316 = arith.constant 0.000000e+00 : f32
    %549 = vector.broadcast %cst_316 : f32 to vector<16x256xf32>
    %550 = vector.extract_strided_slice %527 {offsets = [0, 0], sizes = [16, 1], strides = [1, 1]} : vector<16x4xf32> to vector<16x1xf32>
    %551 = vector.extract_strided_slice %548 {offsets = [0, 0], sizes = [16, 1], strides = [1, 1]} : vector<16x4xf32> to vector<16x1xf32>
    %552 = vector.extract_strided_slice %547 {offsets = [0, 0], sizes = [16, 1], strides = [1, 1]} : vector<16x4xf32> to vector<16x1xf32>
    %553 = vector.broadcast %550 : vector<16x1xf32> to vector<16x256xf32>
    %554 = arith.subf %4, %553 : vector<16x256xf32>
    %555 = vector.broadcast %551 : vector<16x1xf32> to vector<16x256xf32>
    %556 = arith.mulf %554, %555 : vector<16x256xf32>
    %cst_317 = arith.constant 0.000000e+00 : f32
    %557 = vector.broadcast %cst_317 : f32 to vector<16x256xf32>
    %558 = arith.subf %557, %556 : vector<16x256xf32>
    %559 = math.exp %558 : vector<16x256xf32>
    %cst_318 = arith.constant 1.000000e+00 : f32
    %560 = vector.broadcast %cst_318 : f32 to vector<16x256xf32>
    %561 = arith.addf %560, %559 : vector<16x256xf32>
    %562 = tpu.reciprocal %561 : vector<16x256xf32> -> vector<16x256xf32>
    %cst_319 = arith.constant 3.906250e-03 : f32
    %563 = vector.broadcast %cst_319 : f32 to vector<16x256xf32>
    %564 = arith.addf %4, %563 : vector<16x256xf32>
    %565 = vector.broadcast %550 : vector<16x1xf32> to vector<16x256xf32>
    %566 = arith.subf %564, %565 : vector<16x256xf32>
    %567 = vector.broadcast %551 : vector<16x1xf32> to vector<16x256xf32>
    %568 = arith.mulf %566, %567 : vector<16x256xf32>
    %cst_320 = arith.constant 0.000000e+00 : f32
    %569 = vector.broadcast %cst_320 : f32 to vector<16x256xf32>
    %570 = arith.subf %569, %568 : vector<16x256xf32>
    %571 = math.exp %570 : vector<16x256xf32>
    %cst_321 = arith.constant 1.000000e+00 : f32
    %572 = vector.broadcast %cst_321 : f32 to vector<16x256xf32>
    %573 = arith.addf %572, %571 : vector<16x256xf32>
    %574 = tpu.reciprocal %573 : vector<16x256xf32> -> vector<16x256xf32>
    %575 = arith.subf %574, %562 : vector<16x256xf32>
    %576 = vector.broadcast %552 : vector<16x1xf32> to vector<16x256xf32>
    %577 = arith.mulf %576, %575 : vector<16x256xf32>
    %578 = arith.addf %549, %577 : vector<16x256xf32>
    %579 = vector.extract_strided_slice %527 {offsets = [0, 1], sizes = [16, 1], strides = [1, 1]} : vector<16x4xf32> to vector<16x1xf32>
    %580 = vector.extract_strided_slice %548 {offsets = [0, 1], sizes = [16, 1], strides = [1, 1]} : vector<16x4xf32> to vector<16x1xf32>
    %581 = vector.extract_strided_slice %547 {offsets = [0, 1], sizes = [16, 1], strides = [1, 1]} : vector<16x4xf32> to vector<16x1xf32>
    %582 = vector.broadcast %579 : vector<16x1xf32> to vector<16x256xf32>
    %583 = arith.subf %4, %582 : vector<16x256xf32>
    %584 = vector.broadcast %580 : vector<16x1xf32> to vector<16x256xf32>
    %585 = arith.mulf %583, %584 : vector<16x256xf32>
    %cst_322 = arith.constant 0.000000e+00 : f32
    %586 = vector.broadcast %cst_322 : f32 to vector<16x256xf32>
    %587 = arith.subf %586, %585 : vector<16x256xf32>
    %588 = math.exp %587 : vector<16x256xf32>
    %cst_323 = arith.constant 1.000000e+00 : f32
    %589 = vector.broadcast %cst_323 : f32 to vector<16x256xf32>
    %590 = arith.addf %589, %588 : vector<16x256xf32>
    %591 = tpu.reciprocal %590 : vector<16x256xf32> -> vector<16x256xf32>
    %cst_324 = arith.constant 3.906250e-03 : f32
    %592 = vector.broadcast %cst_324 : f32 to vector<16x256xf32>
    %593 = arith.addf %4, %592 : vector<16x256xf32>
    %594 = vector.broadcast %579 : vector<16x1xf32> to vector<16x256xf32>
    %595 = arith.subf %593, %594 : vector<16x256xf32>
    %596 = vector.broadcast %580 : vector<16x1xf32> to vector<16x256xf32>
    %597 = arith.mulf %595, %596 : vector<16x256xf32>
    %cst_325 = arith.constant 0.000000e+00 : f32
    %598 = vector.broadcast %cst_325 : f32 to vector<16x256xf32>
    %599 = arith.subf %598, %597 : vector<16x256xf32>
    %600 = math.exp %599 : vector<16x256xf32>
    %cst_326 = arith.constant 1.000000e+00 : f32
    %601 = vector.broadcast %cst_326 : f32 to vector<16x256xf32>
    %602 = arith.addf %601, %600 : vector<16x256xf32>
    %603 = tpu.reciprocal %602 : vector<16x256xf32> -> vector<16x256xf32>
    %604 = arith.subf %603, %591 : vector<16x256xf32>
    %605 = vector.broadcast %581 : vector<16x1xf32> to vector<16x256xf32>
    %606 = arith.mulf %605, %604 : vector<16x256xf32>
    %607 = arith.addf %578, %606 : vector<16x256xf32>
    %608 = vector.extract_strided_slice %527 {offsets = [0, 2], sizes = [16, 1], strides = [1, 1]} : vector<16x4xf32> to vector<16x1xf32>
    %609 = vector.extract_strided_slice %548 {offsets = [0, 2], sizes = [16, 1], strides = [1, 1]} : vector<16x4xf32> to vector<16x1xf32>
    %610 = vector.extract_strided_slice %547 {offsets = [0, 2], sizes = [16, 1], strides = [1, 1]} : vector<16x4xf32> to vector<16x1xf32>
    %611 = vector.broadcast %608 : vector<16x1xf32> to vector<16x256xf32>
    %612 = arith.subf %4, %611 : vector<16x256xf32>
    %613 = vector.broadcast %609 : vector<16x1xf32> to vector<16x256xf32>
    %614 = arith.mulf %612, %613 : vector<16x256xf32>
    %cst_327 = arith.constant 0.000000e+00 : f32
    %615 = vector.broadcast %cst_327 : f32 to vector<16x256xf32>
    %616 = arith.subf %615, %614 : vector<16x256xf32>
    %617 = math.exp %616 : vector<16x256xf32>
    %cst_328 = arith.constant 1.000000e+00 : f32
    %618 = vector.broadcast %cst_328 : f32 to vector<16x256xf32>
    %619 = arith.addf %618, %617 : vector<16x256xf32>
    %620 = tpu.reciprocal %619 : vector<16x256xf32> -> vector<16x256xf32>
    %cst_329 = arith.constant 3.906250e-03 : f32
    %621 = vector.broadcast %cst_329 : f32 to vector<16x256xf32>
    %622 = arith.addf %4, %621 : vector<16x256xf32>
    %623 = vector.broadcast %608 : vector<16x1xf32> to vector<16x256xf32>
    %624 = arith.subf %622, %623 : vector<16x256xf32>
    %625 = vector.broadcast %609 : vector<16x1xf32> to vector<16x256xf32>
    %626 = arith.mulf %624, %625 : vector<16x256xf32>
    %cst_330 = arith.constant 0.000000e+00 : f32
    %627 = vector.broadcast %cst_330 : f32 to vector<16x256xf32>
    %628 = arith.subf %627, %626 : vector<16x256xf32>
    %629 = math.exp %628 : vector<16x256xf32>
    %cst_331 = arith.constant 1.000000e+00 : f32
    %630 = vector.broadcast %cst_331 : f32 to vector<16x256xf32>
    %631 = arith.addf %630, %629 : vector<16x256xf32>
    %632 = tpu.reciprocal %631 : vector<16x256xf32> -> vector<16x256xf32>
    %633 = arith.subf %632, %620 : vector<16x256xf32>
    %634 = vector.broadcast %610 : vector<16x1xf32> to vector<16x256xf32>
    %635 = arith.mulf %634, %633 : vector<16x256xf32>
    %636 = arith.addf %607, %635 : vector<16x256xf32>
    %637 = vector.extract_strided_slice %527 {offsets = [0, 3], sizes = [16, 1], strides = [1, 1]} : vector<16x4xf32> to vector<16x1xf32>
    %638 = vector.extract_strided_slice %548 {offsets = [0, 3], sizes = [16, 1], strides = [1, 1]} : vector<16x4xf32> to vector<16x1xf32>
    %639 = vector.extract_strided_slice %547 {offsets = [0, 3], sizes = [16, 1], strides = [1, 1]} : vector<16x4xf32> to vector<16x1xf32>
    %640 = vector.broadcast %637 : vector<16x1xf32> to vector<16x256xf32>
    %641 = arith.subf %4, %640 : vector<16x256xf32>
    %642 = vector.broadcast %638 : vector<16x1xf32> to vector<16x256xf32>
    %643 = arith.mulf %641, %642 : vector<16x256xf32>
    %cst_332 = arith.constant 0.000000e+00 : f32
    %644 = vector.broadcast %cst_332 : f32 to vector<16x256xf32>
    %645 = arith.subf %644, %643 : vector<16x256xf32>
    %646 = math.exp %645 : vector<16x256xf32>
    %cst_333 = arith.constant 1.000000e+00 : f32
    %647 = vector.broadcast %cst_333 : f32 to vector<16x256xf32>
    %648 = arith.addf %647, %646 : vector<16x256xf32>
    %649 = tpu.reciprocal %648 : vector<16x256xf32> -> vector<16x256xf32>
    %cst_334 = arith.constant 3.906250e-03 : f32
    %650 = vector.broadcast %cst_334 : f32 to vector<16x256xf32>
    %651 = arith.addf %4, %650 : vector<16x256xf32>
    %652 = vector.broadcast %637 : vector<16x1xf32> to vector<16x256xf32>
    %653 = arith.subf %651, %652 : vector<16x256xf32>
    %654 = vector.broadcast %638 : vector<16x1xf32> to vector<16x256xf32>
    %655 = arith.mulf %653, %654 : vector<16x256xf32>
    %cst_335 = arith.constant 0.000000e+00 : f32
    %656 = vector.broadcast %cst_335 : f32 to vector<16x256xf32>
    %657 = arith.subf %656, %655 : vector<16x256xf32>
    %658 = math.exp %657 : vector<16x256xf32>
    %cst_336 = arith.constant 1.000000e+00 : f32
    %659 = vector.broadcast %cst_336 : f32 to vector<16x256xf32>
    %660 = arith.addf %659, %658 : vector<16x256xf32>
    %661 = tpu.reciprocal %660 : vector<16x256xf32> -> vector<16x256xf32>
    %662 = arith.subf %661, %649 : vector<16x256xf32>
    %663 = vector.broadcast %639 : vector<16x1xf32> to vector<16x256xf32>
    %664 = arith.mulf %663, %662 : vector<16x256xf32>
    %665 = arith.addf %636, %664 : vector<16x256xf32>
    %cst_337 = arith.constant dense<0.000000e+00> : vector<16xf32>
    %666 = vector.multi_reduction <add>, %665, %cst_337 [1] : vector<16x256xf32> to vector<16xf32>
    %667 = vector.shape_cast %666 : vector<16xf32> to vector<16x1xf32>
    %668 = tpu.reciprocal %667 : vector<16x1xf32> -> vector<16x1xf32>
    %669 = vector.broadcast %668 : vector<16x1xf32> to vector<16x256xf32>
    %670 = arith.mulf %665, %669 : vector<16x256xf32>
    %cst_338 = arith.constant 9.99999996E-13 : f32
    %671 = vector.broadcast %cst_338 : f32 to vector<16x256xf32>
    %672 = arith.addf %670, %671 : vector<16x256xf32>
    %673 = math.log %672 : vector<16x256xf32>
    %c1_339 = arith.constant 1 : index
    %c0_340 = arith.constant 0 : index
    %c0_341 = arith.constant 0 : index
    %674 = vector.load %arg15[%c1_339, %c0_340, %c0_341] : memref<2x16x256xf32, #tpu.memory_space<vmem>>, vector<1x16x256xf32>
    %675 = vector.shape_cast %674 : vector<1x16x256xf32> to vector<16x256xf32>
    %676 = vector.shape_cast %673 : vector<16x256xf32> to vector<1x16x256xf32>
    tpu.vector_store %arg15[%c1_339, %c0_340, %c0_341], %676 {strides = array<i32>} : memref<2x16x256xf32, #tpu.memory_space<vmem>>, vector<1x16x256xf32>,
    return
  }
}

</mosaic_0001>

<llo_original>
// kernel: encoder_forward.1
$region0: #{encoder_forward.1}
  #allocation0 [shape = 'u32[]', space=smem, size = 0x4, offset = 0x4, fixed_abs, tag = 'smem constant byte address 0x4 - core index']
  #allocation1 [shape = 'u32[144,128]{1,0:T(1,128)}', space=vmem, size = 0x12000, scoped, tag = 'internal scratch']
  %s0 = inlined_call_operand.vmem [shape: s32[2,32,1], index: 0, kind: input, shape index: {}]
  %s1 = inlined_call_operand.vmem [shape: f32[4,32,32], index: 1, kind: input, shape index: {}]
  %s2 = inlined_call_operand.vmem [shape: f32[256,32], index: 2, kind: input, shape index: {}]
  %s3 = inlined_call_operand.vmem [shape: f32[1,32], index: 3, kind: input, shape index: {}]
  %s4 = inlined_call_operand.vmem [shape: f32[4,32,64], index: 4, kind: input, shape index: {}]
  %s5 = inlined_call_operand.vmem [shape: f32[4,32,64], index: 5, kind: input, shape index: {}]
  %s6 = inlined_call_operand.vmem [shape: f32[4,1,64], index: 6, kind: input, shape index: {}]
  %s7 = inlined_call_operand.vmem [shape: f32[4,32,64], index: 7, kind: input, shape index: {}]
  %s8 = inlined_call_operand.vmem [shape: f32[4,1,64], index: 8, kind: input, shape index: {}]
  %s9 = inlined_call_operand.vmem [shape: f32[4,32,32], index: 9, kind: input, shape index: {}]
  %s10 = inlined_call_operand.vmem [shape: f32[4,1,32], index: 10, kind: input, shape index: {}]
  %s11 = inlined_call_operand.vmem [shape: f32[64,64], index: 11, kind: input, shape index: {}]
  %s12 = inlined_call_operand.vmem [shape: f32[1,64], index: 12, kind: input, shape index: {}]
  %s13 = inlined_call_operand.vmem [shape: f32[64,12], index: 13, kind: input, shape index: {}]
  %s14 = inlined_call_operand.vmem [shape: f32[1,12], index: 14, kind: input, shape index: {}]
  %s15 = inlined_call_operand.hbm [shape: f32[2,16,256], index: 15, kind: output, shape index: {}]
  %s16 = sld [smem:[#allocation0]]
  $region70: #{encoder_forward.1} parent=0
    _
  %s18 = ssub.s32 1, %s16
  %s19 = scalar_select 0, %s18, %s16
  $region1: #{encoder_forward.1} parent=0
    #allocation2 [shape = 'u8[32768]{0}', space=vmem, size = 0x8000, scoped, tag = 'output window, operand 0, single buffered']
    #allocation3 [shape = 's32[1]{0}', space=sflag, size = 0x4, scoped, tag = 'scoped memory for encoder_forward.1']
    %20 = vsyncpa [#allocation3], 0
    // Predicated region
    $region2: #{encoder_forward.1} parent=1 // pred_check
      _
    $region3: #{encoder_forward.1} parent=1 // pred_check_branch
      %22 = sbr.rel (0) target = $region5
    $region4: #{encoder_forward.1} parent=1 // pred_region
      _
    $region5: #{encoder_forward.1} parent=1 // pred_fallthru
      _
    // Predicated region
    $region6: #{encoder_forward.1} parent=1 // pred_check
      _
    $region7: #{encoder_forward.1} parent=1 // pred_check_branch
      %24 = sbr.rel (0) target = $region9
    $region8: #{encoder_forward.1} parent=1 // pred_region
      _
    $region9: #{encoder_forward.1} parent=1 // pred_fallthru
      _
    // Predicated region
    $region10: #{encoder_forward.1} parent=1 // pred_check
      _
    $region11: #{encoder_forward.1} parent=1 // pred_check_branch
      %26 = sbr.rel (0) target = $region13
    $region12: #{encoder_forward.1} parent=1 // pred_region
      _
    $region13: #{encoder_forward.1} parent=1 // pred_fallthru
      _
    // Predicated region
    $region14: #{encoder_forward.1} parent=1 // pred_check
      _
    $region15: #{encoder_forward.1} parent=1 // pred_check_branch
      %28 = sbr.rel (0) target = $region17
    $region16: #{encoder_forward.1} parent=1 // pred_region
      _
    $region17: #{encoder_forward.1} parent=1 // pred_fallthru
      _
    // Predicated region
    $region18: #{encoder_forward.1} parent=1 // pred_check
      _
    $region19: #{encoder_forward.1} parent=1 // pred_check_branch
      %30 = sbr.rel (0) target = $region21
    $region20: #{encoder_forward.1} parent=1 // pred_region
      _
    $region21: #{encoder_forward.1} parent=1 // pred_fallthru
      _
    // Predicated region
    $region22: #{encoder_forward.1} parent=1 // pred_check
      _
    $region23: #{encoder_forward.1} parent=1 // pred_check_branch
      %32 = sbr.rel (0) target = $region25
    $region24: #{encoder_forward.1} parent=1 // pred_region
      _
    $region25: #{encoder_forward.1} parent=1 // pred_fallthru
      _
    // Predicated region
    $region26: #{encoder_forward.1} parent=1 // pred_check
      _
    $region27: #{encoder_forward.1} parent=1 // pred_check_branch
      %34 = sbr.rel (0) target = $region29
    $region28: #{encoder_forward.1} parent=1 // pred_region
      _
    $region29: #{encoder_forward.1} parent=1 // pred_fallthru
      _
    // Predicated region
    $region30: #{encoder_forward.1} parent=1 // pred_check
      _
    $region31: #{encoder_forward.1} parent=1 // pred_check_branch
      %36 = sbr.rel (0) target = $region33
    $region32: #{encoder_forward.1} parent=1 // pred_region
      _
    $region33: #{encoder_forward.1} parent=1 // pred_fallthru
      _
    // Predicated region
    $region34: #{encoder_forward.1} parent=1 // pred_check
      _
    $region35: #{encoder_forward.1} parent=1 // pred_check_branch
      %38 = sbr.rel (0) target = $region37
    $region36: #{encoder_forward.1} parent=1 // pred_region
      _
    $region37: #{encoder_forward.1} parent=1 // pred_fallthru
      _
    // Predicated region
    $region38: #{encoder_forward.1} parent=1 // pred_check
      _
    $region39: #{encoder_forward.1} parent=1 // pred_check_branch
      %40 = sbr.rel (0) target = $region41
    $region40: #{encoder_forward.1} parent=1 // pred_region
      _
    $region41: #{encoder_forward.1} parent=1 // pred_fallthru
      _
    // Predicated region
    $region42: #{encoder_forward.1} parent=1 // pred_check
      _
    $region43: #{encoder_forward.1} parent=1 // pred_check_branch
      %42 = sbr.rel (0) target = $region45
    $region44: #{encoder_forward.1} parent=1 // pred_region
      _
    $region45: #{encoder_forward.1} parent=1 // pred_fallthru
      _
    // Predicated region
    $region46: #{encoder_forward.1} parent=1 // pred_check
      _
    $region47: #{encoder_forward.1} parent=1 // pred_check_branch
      %44 = sbr.rel (0) target = $region49
    $region48: #{encoder_forward.1} parent=1 // pred_region
      _
    $region49: #{encoder_forward.1} parent=1 // pred_fallthru
      _
    // Predicated region
    $region50: #{encoder_forward.1} parent=1 // pred_check
      _
    $region51: #{encoder_forward.1} parent=1 // pred_check_branch
      %46 = sbr.rel (0) target = $region53
    $region52: #{encoder_forward.1} parent=1 // pred_region
      _
    $region53: #{encoder_forward.1} parent=1 // pred_fallthru
      _
    // Predicated region
    $region54: #{encoder_forward.1} parent=1 // pred_check
      _
    $region55: #{encoder_forward.1} parent=1 // pred_check_branch
      %48 = sbr.rel (0) target = $region57
    $region56: #{encoder_forward.1} parent=1 // pred_region
      _
    $region57: #{encoder_forward.1} parent=1 // pred_fallthru
      _
    // Predicated region
    $region58: #{encoder_forward.1} parent=1 // pred_check
      _
    $region59: #{encoder_forward.1} parent=1 // pred_check_branch
      %50 = sbr.rel (0) target = $region61
    $region60: #{encoder_forward.1} parent=1 // pred_region
      _
    $region61: #{encoder_forward.1} parent=1 // pred_fallthru
      _
    %v51 = vlaneseq
    %v52 = vand.u32 %v51, 127
    %v53 = vadd.s32 %v52, 128
    %v54 = vcvt.s32.f32 %v52
    %v55 = vcvt.s32.f32 %v53
    %v56 = vmul.f32 %v54, 0.00390625
    %v57 = vmul.f32 %v55, 0.00390625
    %v58 = vld [vmem:[%s0] sm:$0xff]
    %v59 = vld [vmem:[%s0 + $0x8] sm:$0xff]
    %v60 = vld [vmem:[%s0 + $0x10] sm:$0xff]
    %v61 = vld [vmem:[%s0 + $0x18] sm:$0xff]
    %62 = vset.pattern.permute.xlu0 0
    %63 = vperm.xlu0 %62, %v58
    %v64 = vpop.permute.xlu0 %63
    %65 = vset.pattern.permute.xlu0 0
    %66 = vperm.xlu0 %65, %v59
    %v67 = vpop.permute.xlu0 %66
    %68 = vset.pattern.permute.xlu0 0
    %69 = vperm.xlu0 %68, %v60
    %v70 = vpop.permute.xlu0 %69
    %71 = vset.pattern.permute.xlu0 0
    %72 = vperm.xlu0 %71, %v61
    %v73 = vpop.permute.xlu0 %72
    %vm74 = vcmp.eq.s32.totalorder %v52, %v64
    %vm75 = vcmp.eq.s32.totalorder %v53, %v64
    %vm76 = vcmp.eq.s32.totalorder %v52, %v67
    %vm77 = vcmp.eq.s32.totalorder %v53, %v67
    %vm78 = vcmp.eq.s32.totalorder %v52, %v70
    %vm79 = vcmp.eq.s32.totalorder %v53, %v70
    %vm80 = vcmp.eq.s32.totalorder %v52, %v73
    %vm81 = vcmp.eq.s32.totalorder %v53, %v73
    %v82 = vsel %vm74, 1.0, 0.0
    %v83 = vsel %vm75, 1.0, 0.0
    %v84 = vsel %vm76, 1.0, 0.0
    %v85 = vsel %vm77, 1.0, 0.0
    %v86 = vsel %vm78, 1.0, 0.0
    %v87 = vsel %vm79, 1.0, 0.0
    %v88 = vsel %vm80, 1.0, 0.0
    %v89 = vsel %vm81, 1.0, 0.0
    %v90 = vld [vmem:[%s2] sm:$0xff]
    %v91 = vld [vmem:[%s2 + $0x8] sm:$0xff]
    %v92 = vld [vmem:[%s2 + $0x10] sm:$0xff]
    %v93 = vld [vmem:[%s2 + $0x18] sm:$0xff]
    %v94 = vld [vmem:[%s2 + $0x20] sm:$0xff]
    %v95 = vld [vmem:[%s2 + $0x28] sm:$0xff]
    %v96 = vld [vmem:[%s2 + $0x30] sm:$0xff]
    %v97 = vld [vmem:[%s2 + $0x38] sm:$0xff]
    %v98 = vld [vmem:[%s2 + $0x40] sm:$0xff]
    %v99 = vld [vmem:[%s2 + $0x48] sm:$0xff]
    %v100 = vld [vmem:[%s2 + $0x50] sm:$0xff]
    %v101 = vld [vmem:[%s2 + $0x58] sm:$0xff]
    %v102 = vld [vmem:[%s2 + $0x60] sm:$0xff]
    %v103 = vld [vmem:[%s2 + $0x68] sm:$0xff]
    %v104 = vld [vmem:[%s2 + $0x70] sm:$0xff]
    %v105 = vld [vmem:[%s2 + $0x78] sm:$0xff]
    %v106 = vld [vmem:[%s2 + $0x80] sm:$0xff]
    %v107 = vld [vmem:[%s2 + $0x88] sm:$0xff]
    %v108 = vld [vmem:[%s2 + $0x90] sm:$0xff]
    %v109 = vld [vmem:[%s2 + $0x98] sm:$0xff]
    %v110 = vld [vmem:[%s2 + $0xa0] sm:$0xff]
    %v111 = vld [vmem:[%s2 + $0xa8] sm:$0xff]
    %v112 = vld [vmem:[%s2 + $0xb0] sm:$0xff]
    %v113 = vld [vmem:[%s2 + $0xb8] sm:$0xff]
    %v114 = vld [vmem:[%s2 + $0xc0] sm:$0xff]
    %v115 = vld [vmem:[%s2 + $0xc8] sm:$0xff]
    %v116 = vld [vmem:[%s2 + $0xd0] sm:$0xff]
    %v117 = vld [vmem:[%s2 + $0xd8] sm:$0xff]
    %v118 = vld [vmem:[%s2 + $0xe0] sm:$0xff]
    %v119 = vld [vmem:[%s2 + $0xe8] sm:$0xff]
    %v120 = vld [vmem:[%s2 + $0xf0] sm:$0xff]
    %v121 = vld [vmem:[%s2 + $0xf8] sm:$0xff]
    %v122 = vld [vmem:[%s3] sm:$0x1]
    %v124 = vlaneseq
    %v125 = vshrl.u32 %v124, 7
    %v126 = vsub.s32 0, %v125
    %v127 = vrot.slane %v122, %v126
    %129 = vmatprep.subr.mxu0 0.0
    %130 = vmatpush1.msra.mxu0 %v90
    %131 = vmatprep.subr.mxu0 0.0
    %132 = vmatpush1.msra.mxu0 %v91
    %133 = vmatprep.subr.mxu0 0.0
    %134 = vmatpush1.msra.mxu0 %v92
    %135 = vmatprep.subr.mxu0 0.0
    %136 = vmatpush1.msra.mxu0 %v93
    %137 = vmatprep.subr.mxu0 0.0
    %138 = vmatpush1.msra.mxu0 %v94
    %139 = vmatprep.subr.mxu0 0.0
    %140 = vmatpush1.msra.mxu0 %v95
    %141 = vmatprep.subr.mxu0 0.0
    %142 = vmatpush1.msra.mxu0 %v96
    %143 = vmatprep.subr.mxu0 0.0
    %144 = vmatpush1.msra.mxu0 %v97
    %145 = vmatprep.subr.mxu0 0.0
    %146 = vmatpush1.msra.mxu0 %v98
    %147 = vmatprep.subr.mxu0 0.0
    %148 = vmatpush1.msra.mxu0 %v99
    %149 = vmatprep.subr.mxu0 0.0
    %150 = vmatpush1.msra.mxu0 %v100
    %151 = vmatprep.subr.mxu0 0.0
    %152 = vmatpush1.msra.mxu0 %v101
    %153 = vmatprep.subr.mxu0 0.0
    %154 = vmatpush1.msra.mxu0 %v102
    %155 = vmatprep.subr.mxu0 0.0
    %156 = vmatpush1.msra.mxu0 %v103
    %157 = vmatprep.subr.mxu0 0.0
    %158 = vmatpush1.msra.mxu0 %v104
    %159 = vmatprep.subr.mxu0 0.0
    %160 = vmatpush1.msra.mxu0 %v105
    %161 = vmatprep.subr.mxu0 0.0
    %162 = vmatpush1.msra.mxu0 %v106
    %163 = vmatprep.subr.mxu0 0.0
    %164 = vmatpush1.msra.mxu0 %v107
    %165 = vmatprep.subr.mxu0 0.0
    %166 = vmatpush1.msra.mxu0 %v108
    %167 = vmatprep.subr.mxu0 0.0
    %168 = vmatpush1.msra.mxu0 %v109
    %169 = vmatprep.subr.mxu0 0.0
    %170 = vmatpush1.msra.mxu0 %v110
    %171 = vmatprep.subr.mxu0 0.0
    %172 = vmatpush1.msra.mxu0 %v111
    %173 = vmatprep.subr.mxu0 0.0
    %174 = vmatpush1.msra.mxu0 %v112
    %175 = vmatprep.subr.mxu0 0.0
    %176 = vmatpush1.msra.mxu0 %v113
    %177 = vmatprep.subr.mxu0 0.0
    %178 = vmatpush1.msra.mxu0 %v114
    %179 = vmatprep.subr.mxu0 0.0
    %180 = vmatpush1.msra.mxu0 %v115
    %181 = vmatprep.subr.mxu0 0.0
    %182 = vmatpush1.msra.mxu0 %v116
    %183 = vmatprep.subr.mxu0 0.0
    %184 = vmatpush1.msra.mxu0 %v117
    %185 = vmatprep.subr.mxu0 0.0
    %186 = vmatpush1.msra.mxu0 %v118
    %187 = vmatprep.subr.mxu0 0.0
    %188 = vmatpush1.msra.mxu0 %v119
    %189 = vmatprep.subr.mxu0 0.0
    %190 = vmatpush1.msra.mxu0 %v120
    %191 = vmatprep.subr.mxu0 0.0
    %192 = vmatpush1.msra.mxu0 %v121
    %193 = vmatprep.mubr.f32.mxu0 %v83
    %194 = vmatmul.mubr.f32.gmra.mrb[0].mxu0 %v82
    %v195 = vpop.f32.mrb[0].mxu0
    %v196 = vadd.f32 %v127, %v195
    %v197 = vpop.f32.mrb[0].mxu0
    %198 = vmatprep.mubr.f32.mxu0 %v85
    %199 = vmatmul.mubr.f32.gmra.mrb[0].mxu0 %v84
    %v200 = vpop.f32.mrb[0].mxu0
    %v201 = vadd.f32 %v127, %v200
    %v202 = vpop.f32.mrb[0].mxu0
    %203 = vmatprep.mubr.f32.mxu0 %v87
    %204 = vmatmul.mubr.f32.gmra.mrb[0].mxu0 %v86
    %v205 = vpop.f32.mrb[0].mxu0
    %v206 = vadd.f32 %v127, %v205
    %v207 = vpop.f32.mrb[0].mxu0
    %208 = vmatprep.mubr.f32.mxu0 %v89
    %209 = vmatmul.mubr.f32.gmra.mrb[0].mxu0 %v88
    %v210 = vpop.f32.mrb[0].mxu0
    %v211 = vadd.f32 %v127, %v210
    %v212 = vpop.f32.mrb[0].mxu0
    %213 = vdwg.mxu0
    %v214 = vld [vmem:[%s1] sm:$0xff]
    %v215 = vld [vmem:[%s1 + $0x8] sm:$0xff]
    %v216 = vld [vmem:[%s1 + $0x10] sm:$0xff]
    %v217 = vld [vmem:[%s1 + $0x18] sm:$0xff]
    %vm218 = vcmask 261120
    %v220 = vsel %vm218, %v214, 0
    %v223 = vsel %vm218, %v215, 0
    %v226 = vsel %vm218, %v216, 0
    %v229 = vsel %vm218, %v217, 0
    %231 = vmatprep.subr.mxu0 0.0
    %232 = vmatpush1.msra.mxu0 %v196
    %233 = vmatprep.subr.mxu0 0.0
    %234 = vmatpush1.msra.mxu0 %v201
    %235 = vmatprep.subr.mxu0 0.0
    %236 = vmatpush1.msra.mxu0 %v206
    %237 = vmatprep.subr.mxu0 0.0
    %238 = vmatpush1.msra.mxu0 %v211
    %239 = vmatprep.subr.mxu0 0.0
    %240 = vmatpush1.msra.mxu0 0.0
    %241 = vmatprep.subr.mxu0 0.0
    %242 = vmatpush1.msra.mxu0 0.0
    %243 = vmatprep.subr.mxu0 0.0
    %244 = vmatpush1.msra.mxu0 0.0
    %245 = vmatprep.subr.mxu0 0.0
    %246 = vmatpush1.msra.mxu0 0.0
    %247 = vmatprep.subr.mxu0 0.0
    %248 = vmatpush1.msra.mxu0 0.0
    %249 = vmatprep.subr.mxu0 0.0
    %250 = vmatpush1.msra.mxu0 0.0
    %251 = vmatprep.subr.mxu0 0.0
    %252 = vmatpush1.msra.mxu0 0.0
    %253 = vmatprep.subr.mxu0 0.0
    %254 = vmatpush1.msra.mxu0 0.0
    %255 = vmatprep.subr.mxu0 0.0
    %256 = vmatpush1.msra.mxu0 0.0
    %257 = vmatprep.subr.mxu0 0.0
    %258 = vmatpush1.msra.mxu0 0.0
    %259 = vmatprep.subr.mxu0 0.0
    %260 = vmatpush1.msra.mxu0 0.0
    %261 = vmatprep.subr.mxu0 0.0
    %262 = vmatpush1.msra.mxu0 0.0
    %263 = vmatprep.subr.mxu0 0.0
    %264 = vmatpush1.msra.mxu0 0.0
    %265 = vmatprep.subr.mxu0 0.0
    %266 = vmatpush1.msra.mxu0 0.0
    %267 = vmatprep.subr.mxu0 0.0
    %268 = vmatpush1.msra.mxu0 0.0
    %269 = vmatprep.subr.mxu0 0.0
    %270 = vmatpush1.msra.mxu0 0.0
    %271 = vmatprep.subr.mxu0 0.0
    %272 = vmatpush1.msra.mxu0 0.0
    %273 = vmatprep.subr.mxu0 0.0
    %274 = vmatpush1.msra.mxu0 0.0
    %275 = vmatprep.subr.mxu0 0.0
    %276 = vmatpush1.msra.mxu0 0.0
    %277 = vmatprep.subr.mxu0 0.0
    %278 = vmatpush1.msra.mxu0 0.0
    %279 = vmatprep.subr.mxu0 0.0
    %280 = vmatpush1.msra.mxu0 0.0
    %281 = vmatprep.subr.mxu0 0.0
    %282 = vmatpush1.msra.mxu0 0.0
    %283 = vmatprep.subr.mxu0 0.0
    %284 = vmatpush1.msra.mxu0 0.0
    %285 = vmatprep.subr.mxu0 0.0
    %286 = vmatpush1.msra.mxu0 0.0
    %287 = vmatprep.subr.mxu0 0.0
    %288 = vmatpush1.msra.mxu0 0.0
    %289 = vmatprep.subr.mxu0 0.0
    %290 = vmatpush1.msra.mxu0 0.0
    %291 = vmatprep.subr.mxu0 0.0
    %292 = vmatpush1.msra.mxu0 0.0
    %293 = vmatprep.subr.mxu0 0.0
    %294 = vmatpush1.msra.mxu0 0.0
    %295 = vmatprep.mubr.f32.mxu0 0.0
    %296 = vmatmul.mubr.f32.gmra.mrb[0].mxu0 %v220
    %v297 = vpop.f32.mrb[0].mxu0
    %v298 = vadd.f32 0.0, %v297
    %v299 = vpop.f32.mrb[0].mxu0
    %300 = vmatprep.mubr.f32.mxu0 0.0
    %301 = vmatmul.mubr.f32.gmra.mrb[0].mxu0 %v223
    %v302 = vpop.f32.mrb[0].mxu0
    %v303 = vadd.f32 0.0, %v302
    %v304 = vpop.f32.mrb[0].mxu0
    %305 = vmatprep.mubr.f32.mxu0 0.0
    %306 = vmatmul.mubr.f32.gmra.mrb[0].mxu0 %v226
    %v307 = vpop.f32.mrb[0].mxu0
    %v308 = vadd.f32 0.0, %v307
    %v309 = vpop.f32.mrb[0].mxu0
    %310 = vmatprep.mubr.f32.mxu0 0.0
    %311 = vmatmul.mubr.f32.gmra.mrb[0].mxu0 %v229
    %v312 = vpop.f32.mrb[0].mxu0
    %v313 = vadd.f32 0.0, %v312
    %v314 = vpop.f32.mrb[0].mxu0
    %315 = vdwg.mxu0
    %v316 = vld [vmem:[%s4] sm:$0xff]
    %v317 = vld [vmem:[%s4 + $0x8] sm:$0xff]
    %v318 = vld [vmem:[%s4 + $0x10] sm:$0xff]
    %v319 = vld [vmem:[%s4 + $0x18] sm:$0xff]
    %v320 = vld [vmem:[%s5] sm:$0xff]
    %v321 = vld [vmem:[%s5 + $0x8] sm:$0xff]
    %v322 = vld [vmem:[%s5 + $0x10] sm:$0xff]
    %v323 = vld [vmem:[%s5 + $0x18] sm:$0xff]
    %v325 = vsel %vm218, %v298, 0
    %v328 = vsel %vm218, %v303, 0
    %v331 = vsel %vm218, %v308, 0
    %v334 = vsel %vm218, %v313, 0
    %336 = vmatprep.subr.mxu0 0.0
    %337 = vmatpush1.msra.mxu0 %v320
    %338 = vmatprep.subr.mxu0 0.0
    %339 = vmatpush1.msra.mxu0 %v321
    %340 = vmatprep.subr.mxu0 0.0
    %341 = vmatpush1.msra.mxu0 %v322
    %342 = vmatprep.subr.mxu0 0.0
    %343 = vmatpush1.msra.mxu0 %v323
    %344 = vmatprep.subr.mxu0 0.0
    %345 = vmatpush1.msra.mxu0 0.0
    %346 = vmatprep.subr.mxu0 0.0
    %347 = vmatpush1.msra.mxu0 0.0
    %348 = vmatprep.subr.mxu0 0.0
    %349 = vmatpush1.msra.mxu0 0.0
    %350 = vmatprep.subr.mxu0 0.0
    %351 = vmatpush1.msra.mxu0 0.0
    %352 = vmatprep.subr.mxu0 0.0
    %353 = vmatpush1.msra.mxu0 0.0
    %354 = vmatprep.subr.mxu0 0.0
    %355 = vmatpush1.msra.mxu0 0.0
    %356 = vmatprep.subr.mxu0 0.0
    %357 = vmatpush1.msra.mxu0 0.0
    %358 = vmatprep.subr.mxu0 0.0
    %359 = vmatpush1.msra.mxu0 0.0
    %360 = vmatprep.subr.mxu0 0.0
    %361 = vmatpush1.msra.mxu0 0.0
    %362 = vmatprep.subr.mxu0 0.0
    %363 = vmatpush1.msra.mxu0 0.0
    %364 = vmatprep.subr.mxu0 0.0
    %365 = vmatpush1.msra.mxu0 0.0
    %366 = vmatprep.subr.mxu0 0.0
    %367 = vmatpush1.msra.mxu0 0.0
    %368 = vmatprep.subr.mxu0 0.0
    %369 = vmatpush1.msra.mxu0 0.0
    %370 = vmatprep.subr.mxu0 0.0
    %371 = vmatpush1.msra.mxu0 0.0
    %372 = vmatprep.subr.mxu0 0.0
    %373 = vmatpush1.msra.mxu0 0.0
    %374 = vmatprep.subr.mxu0 0.0
    %375 = vmatpush1.msra.mxu0 0.0
    %376 = vmatprep.subr.mxu0 0.0
    %377 = vmatpush1.msra.mxu0 0.0
    %378 = vmatprep.subr.mxu0 0.0
    %379 = vmatpush1.msra.mxu0 0.0
    %380 = vmatprep.subr.mxu0 0.0
    %381 = vmatpush1.msra.mxu0 0.0
    %382 = vmatprep.subr.mxu0 0.0
    %383 = vmatpush1.msra.mxu0 0.0
    %384 = vmatprep.subr.mxu0 0.0
    %385 = vmatpush1.msra.mxu0 0.0
    %386 = vmatprep.subr.mxu0 0.0
    %387 = vmatpush1.msra.mxu0 0.0
    %388 = vmatprep.subr.mxu0 0.0
    %389 = vmatpush1.msra.mxu0 0.0
    %390 = vmatprep.subr.mxu0 0.0
    %391 = vmatpush1.msra.mxu0 0.0
    %392 = vmatprep.subr.mxu0 0.0
    %393 = vmatpush1.msra.mxu0 0.0
    %394 = vmatprep.subr.mxu0 0.0
    %395 = vmatpush1.msra.mxu0 0.0
    %396 = vmatprep.subr.mxu0 0.0
    %397 = vmatpush1.msra.mxu0 0.0
    %398 = vmatprep.subr.mxu0 0.0
    %399 = vmatpush1.msra.mxu0 0.0
    %400 = vmatprep.mubr.f32.mxu0 0.0
    %401 = vmatmul.mubr.f32.gmra.mrb[0].mxu0 %v325
    %v402 = vpop.f32.mrb[0].mxu0
    %v403 = vadd.f32 0.0, %v402
    %v404 = vpop.f32.mrb[0].mxu0
    %405 = vmatprep.mubr.f32.mxu0 0.0
    %406 = vmatmul.mubr.f32.gmra.mrb[0].mxu0 %v328
    %v407 = vpop.f32.mrb[0].mxu0
    %v408 = vadd.f32 0.0, %v407
    %v409 = vpop.f32.mrb[0].mxu0
    %410 = vmatprep.mubr.f32.mxu0 0.0
    %411 = vmatmul.mubr.f32.gmra.mrb[0].mxu0 %v331
    %v412 = vpop.f32.mrb[0].mxu0
    %v413 = vadd.f32 0.0, %v412
    %v414 = vpop.f32.mrb[0].mxu0
    %415 = vmatprep.mubr.f32.mxu0 0.0
    %416 = vmatmul.mubr.f32.gmra.mrb[0].mxu0 %v334
    %v417 = vpop.f32.mrb[0].mxu0
    %v418 = vadd.f32 0.0, %v417
    %v419 = vpop.f32.mrb[0].mxu0
    %420 = vdwg.mxu0
    %v422 = vsel %vm218, %v196, 0
    %v425 = vsel %vm218, %v201, 0
    %v428 = vsel %vm218, %v206, 0
    %v431 = vsel %vm218, %v211, 0
    %433 = vmatprep.subr.mxu0 0.0
    %434 = vmatpush1.msra.mxu0 %v316
    %435 = vmatprep.subr.mxu0 0.0
    %436 = vmatpush1.msra.mxu0 %v317
    %437 = vmatprep.subr.mxu0 0.0
    %438 = vmatpush1.msra.mxu0 %v318
    %439 = vmatprep.subr.mxu0 0.0
    %440 = vmatpush1.msra.mxu0 %v319
    %441 = vmatprep.subr.mxu0 0.0
    %442 = vmatpush1.msra.mxu0 0.0
    %443 = vmatprep.subr.mxu0 0.0
    %444 = vmatpush1.msra.mxu0 0.0
    %445 = vmatprep.subr.mxu0 0.0
    %446 = vmatpush1.msra.mxu0 0.0
    %447 = vmatprep.subr.mxu0 0.0
    %448 = vmatpush1.msra.mxu0 0.0
    %449 = vmatprep.subr.mxu0 0.0
    %450 = vmatpush1.msra.mxu0 0.0
    %451 = vmatprep.subr.mxu0 0.0
    %452 = vmatpush1.msra.mxu0 0.0
    %453 = vmatprep.subr.mxu0 0.0
    %454 = vmatpush1.msra.mxu0 0.0
    %455 = vmatprep.subr.mxu0 0.0
    %456 = vmatpush1.msra.mxu0 0.0
    %457 = vmatprep.subr.mxu0 0.0
    %458 = vmatpush1.msra.mxu0 0.0
    %459 = vmatprep.subr.mxu0 0.0
    %460 = vmatpush1.msra.mxu0 0.0
    %461 = vmatprep.subr.mxu0 0.0
    %462 = vmatpush1.msra.mxu0 0.0
    %463 = vmatprep.subr.mxu0 0.0
    %464 = vmatpush1.msra.mxu0 0.0
    %465 = vmatprep.subr.mxu0 0.0
    %466 = vmatpush1.msra.mxu0 0.0
    %467 = vmatprep.subr.mxu0 0.0
    %468 = vmatpush1.msra.mxu0 0.0
    %469 = vmatprep.subr.mxu0 0.0
    %470 = vmatpush1.msra.mxu0 0.0
    %471 = vmatprep.subr.mxu0 0.0
    %472 = vmatpush1.msra.mxu0 0.0
    %473 = vmatprep.subr.mxu0 0.0
    %474 = vmatpush1.msra.mxu0 0.0
    %475 = vmatprep.subr.mxu0 0.0
    %476 = vmatpush1.msra.mxu0 0.0
    %477 = vmatprep.subr.mxu0 0.0
    %478 = vmatpush1.msra.mxu0 0.0
    %479 = vmatprep.subr.mxu0 0.0
    %480 = vmatpush1.msra.mxu0 0.0
    %481 = vmatprep.subr.mxu0 0.0
    %482 = vmatpush1.msra.mxu0 0.0
    %483 = vmatprep.subr.mxu0 0.0
    %484 = vmatpush1.msra.mxu0 0.0
    %485 = vmatprep.subr.mxu0 0.0
    %486 = vmatpush1.msra.mxu0 0.0
    %487 = vmatprep.subr.mxu0 0.0
    %488 = vmatpush1.msra.mxu0 0.0
    %489 = vmatprep.subr.mxu0 0.0
    %490 = vmatpush1.msra.mxu0 0.0
    %491 = vmatprep.subr.mxu0 0.0
    %492 = vmatpush1.msra.mxu0 0.0
    %493 = vmatprep.subr.mxu0 0.0
    %494 = vmatpush1.msra.mxu0 0.0
    %495 = vmatprep.subr.mxu0 0.0
    %496 = vmatpush1.msra.mxu0 0.0
    %497 = vmatprep.mubr.f32.mxu0 0.0
    %498 = vmatmul.mubr.f32.gmra.mrb[0].mxu0 %v422
    %v499 = vpop.f32.mrb[0].mxu0
    %v500 = vadd.f32 %v403, %v499
    %v501 = vpop.f32.mrb[0].mxu0
    %502 = vmatprep.mubr.f32.mxu0 0.0
    %503 = vmatmul.mubr.f32.gmra.mrb[0].mxu0 %v425
    %v504 = vpop.f32.mrb[0].mxu0
    %v505 = vadd.f32 %v408, %v504
    %v506 = vpop.f32.mrb[0].mxu0
    %507 = vmatprep.mubr.f32.mxu0 0.0
    %508 = vmatmul.mubr.f32.gmra.mrb[0].mxu0 %v428
    %v509 = vpop.f32.mrb[0].mxu0
    %v510 = vadd.f32 %v413, %v509
    %v511 = vpop.f32.mrb[0].mxu0
    %512 = vmatprep.mubr.f32.mxu0 0.0
    %513 = vmatmul.mubr.f32.gmra.mrb[0].mxu0 %v431
    %v514 = vpop.f32.mrb[0].mxu0
    %v515 = vadd.f32 %v418, %v514
    %v516 = vpop.f32.mrb[0].mxu0
    %517 = vdwg.mxu0
    %v518 = vld [vmem:[%s6] sm:$0x1]
    %v520 = vlaneseq
    %v521 = vshrl.u32 %v520, 7
    %v522 = vsub.s32 0, %v521
    %v523 = vrot.slane %v518, %v522
    %v525 = vadd.f32 %v500, %v523
    %v526 = vadd.f32 %v505, %v523
    %v527 = vadd.f32 %v510, %v523
    %v528 = vadd.f32 %v515, %v523
    %v529 = vtanh.pop %v525
    %v530 = vtanh.pop %v526
    %v531 = vtanh.pop %v527
    %v532 = vtanh.pop %v528
    %v533 = vsub.f32 0.0, %v525
    %v534 = vsub.f32 0.0, %v526
    %v535 = vsub.f32 0.0, %v527
    %v536 = vsub.f32 0.0, %v528
    %v537 = vmul.f32 %v533, 1.442695
    %v538 = vpow.pop %v537
    %v539 = vmul.f32 %v534, 1.442695
    %v540 = vpow.pop %v539
    %v541 = vmul.f32 %v535, 1.442695
    %v542 = vpow.pop %v541
    %v543 = vmul.f32 %v536, 1.442695
    %v544 = vpow.pop %v543
    %v545 = vadd.f32 %v538, 1.0
    %v546 = vadd.f32 %v540, 1.0
    %v547 = vadd.f32 %v542, 1.0
    %v548 = vadd.f32 %v544, 1.0
    %v549 = vrcp.pop %v545
    %v550 = vrcp.pop %v546
    %v551 = vrcp.pop %v547
    %v552 = vrcp.pop %v548
    %557 = vrot.lane.b32.xlu0 %v549, 96
    %v558 = vpop.permute.xlu0 %557
    %559 = vrot.lane.b32.xlu0 %v550, 96
    %v560 = vpop.permute.xlu0 %559
    %561 = vrot.lane.b32.xlu0 %v551, 96
    %v562 = vpop.permute.xlu0 %561
    %563 = vrot.lane.b32.xlu0 %v552, 96
    %v564 = vpop.permute.xlu0 %563
    %v569 = vmul.f32 %v529, %v558
    %v570 = vmul.f32 %v530, %v560
    %v571 = vmul.f32 %v531, %v562
    %v572 = vmul.f32 %v532, %v564
    %v573 = vld [vmem:[%s7] sm:$0xff]
    %v574 = vld [vmem:[%s7 + $0x8] sm:$0xff]
    %v575 = vld [vmem:[%s7 + $0x10] sm:$0xff]
    %v576 = vld [vmem:[%s7 + $0x18] sm:$0xff]
    %v577 = vld [vmem:[%s8] sm:$0x1]
    %v579 = vlaneseq
    %v580 = vshrl.u32 %v579, 7
    %v581 = vsub.s32 0, %v580
    %v582 = vrot.slane %v577, %v581
    %v585 = vsel %vm218, %v569, 0
    %v588 = vsel %vm218, %v570, 0
    %v591 = vsel %vm218, %v571, 0
    %v594 = vsel %vm218, %v572, 0
    %596 = vmatprep.subr.mxu0 0.0
    %597 = vmatpush1.msra.mxu0 %v573
    %598 = vmatprep.subr.mxu0 0.0
    %599 = vmatpush1.msra.mxu0 %v574
    %600 = vmatprep.subr.mxu0 0.0
    %601 = vmatpush1.msra.mxu0 %v575
    %602 = vmatprep.subr.mxu0 0.0
    %603 = vmatpush1.msra.mxu0 %v576
    %604 = vmatprep.subr.mxu0 0.0
    %605 = vmatpush1.msra.mxu0 0.0
    %606 = vmatprep.subr.mxu0 0.0
    %607 = vmatpush1.msra.mxu0 0.0
    %608 = vmatprep.subr.mxu0 0.0
    %609 = vmatpush1.msra.mxu0 0.0
    %610 = vmatprep.subr.mxu0 0.0
    %611 = vmatpush1.msra.mxu0 0.0
    %612 = vmatprep.subr.mxu0 0.0
    %613 = vmatpush1.msra.mxu0 0.0
    %614 = vmatprep.subr.mxu0 0.0
    %615 = vmatpush1.msra.mxu0 0.0
    %616 = vmatprep.subr.mxu0 0.0
    %617 = vmatpush1.msra.mxu0 0.0
    %618 = vmatprep.subr.mxu0 0.0
    %619 = vmatpush1.msra.mxu0 0.0
    %620 = vmatprep.subr.mxu0 0.0
    %621 = vmatpush1.msra.mxu0 0.0
    %622 = vmatprep.subr.mxu0 0.0
    %623 = vmatpush1.msra.mxu0 0.0
    %624 = vmatprep.subr.mxu0 0.0
    %625 = vmatpush1.msra.mxu0 0.0
    %626 = vmatprep.subr.mxu0 0.0
    %627 = vmatpush1.msra.mxu0 0.0
    %628 = vmatprep.subr.mxu0 0.0
    %629 = vmatpush1.msra.mxu0 0.0
    %630 = vmatprep.subr.mxu0 0.0
    %631 = vmatpush1.msra.mxu0 0.0
    %632 = vmatprep.subr.mxu0 0.0
    %633 = vmatpush1.msra.mxu0 0.0
    %634 = vmatprep.subr.mxu0 0.0
    %635 = vmatpush1.msra.mxu0 0.0
    %636 = vmatprep.subr.mxu0 0.0
    %637 = vmatpush1.msra.mxu0 0.0
    %638 = vmatprep.subr.mxu0 0.0
    %639 = vmatpush1.msra.mxu0 0.0
    %640 = vmatprep.subr.mxu0 0.0
    %641 = vmatpush1.msra.mxu0 0.0
    %642 = vmatprep.subr.mxu0 0.0
    %643 = vmatpush1.msra.mxu0 0.0
    %644 = vmatprep.subr.mxu0 0.0
    %645 = vmatpush1.msra.mxu0 0.0
    %646 = vmatprep.subr.mxu0 0.0
    %647 = vmatpush1.msra.mxu0 0.0
    %648 = vmatprep.subr.mxu0 0.0
    %649 = vmatpush1.msra.mxu0 0.0
    %650 = vmatprep.subr.mxu0 0.0
    %651 = vmatpush1.msra.mxu0 0.0
    %652 = vmatprep.subr.mxu0 0.0
    %653 = vmatpush1.msra.mxu0 0.0
    %654 = vmatprep.subr.mxu0 0.0
    %655 = vmatpush1.msra.mxu0 0.0
    %656 = vmatprep.subr.mxu0 0.0
    %657 = vmatpush1.msra.mxu0 0.0
    %658 = vmatprep.subr.mxu0 0.0
    %659 = vmatpush1.msra.mxu0 0.0
    %660 = vmatprep.mubr.f32.mxu0 0.0
    %661 = vmatmul.mubr.f32.gmra.mrb[0].mxu0 %v585
    %v662 = vpop.f32.mrb[0].mxu0
    %v663 = vadd.f32 %v582, %v662
    %v664 = vpop.f32.mrb[0].mxu0
    %665 = vmatprep.mubr.f32.mxu0 0.0
    %666 = vmatmul.mubr.f32.gmra.mrb[0].mxu0 %v588
    %v667 = vpop.f32.mrb[0].mxu0
    %v668 = vadd.f32 %v582, %v667
    %v669 = vpop.f32.mrb[0].mxu0
    %670 = vmatprep.mubr.f32.mxu0 0.0
    %671 = vmatmul.mubr.f32.gmra.mrb[0].mxu0 %v591
    %v672 = vpop.f32.mrb[0].mxu0
    %v673 = vadd.f32 %v582, %v672
    %v674 = vpop.f32.mrb[0].mxu0
    %675 = vmatprep.mubr.f32.mxu0 0.0
    %676 = vmatmul.mubr.f32.gmra.mrb[0].mxu0 %v594
    %v677 = vpop.f32.mrb[0].mxu0
    %v678 = vadd.f32 %v582, %v677
    %v679 = vpop.f32.mrb[0].mxu0
    %680 = vdwg.mxu0
    %v681 = vld [vmem:[%s9] sm:$0xff]
    %v682 = vld [vmem:[%s9 + $0x8] sm:$0xff]
    %v683 = vld [vmem:[%s9 + $0x10] sm:$0xff]
    %v684 = vld [vmem:[%s9 + $0x18] sm:$0xff]
    %685 = vmatprep.subr.mxu0 0.0
    %686 = vmatpush1.msra.mxu0 %v681
    %687 = vmatprep.subr.mxu0 0.0
    %688 = vmatpush1.msra.mxu0 %v682
    %689 = vmatprep.subr.mxu0 0.0
    %690 = vmatpush1.msra.mxu0 %v683
    %691 = vmatprep.subr.mxu0 0.0
    %692 = vmatpush1.msra.mxu0 %v684
    %693 = vmatprep.subr.mxu0 0.0
    %694 = vmatpush1.msra.mxu0 0.0
    %695 = vmatprep.subr.mxu0 0.0
    %696 = vmatpush1.msra.mxu0 0.0
    %697 = vmatprep.subr.mxu0 0.0
    %698 = vmatpush1.msra.mxu0 0.0
    %699 = vmatprep.subr.mxu0 0.0
    %700 = vmatpush1.msra.mxu0 0.0
    %701 = vmatprep.subr.mxu0 0.0
    %702 = vmatpush1.msra.mxu0 0.0
    %703 = vmatprep.subr.mxu0 0.0
    %704 = vmatpush1.msra.mxu0 0.0
    %705 = vmatprep.subr.mxu0 0.0
    %706 = vmatpush1.msra.mxu0 0.0
    %707 = vmatprep.subr.mxu0 0.0
    %708 = vmatpush1.msra.mxu0 0.0
    %709 = vmatprep.subr.mxu0 0.0
    %710 = vmatpush1.msra.mxu0 0.0
    %711 = vmatprep.subr.mxu0 0.0
    %712 = vmatpush1.msra.mxu0 0.0
    %713 = vmatprep.subr.mxu0 0.0
    %714 = vmatpush1.msra.mxu0 0.0
    %715 = vmatprep.subr.mxu0 0.0
    %716 = vmatpush1.msra.mxu0 0.0
    %717 = vmatprep.subr.mxu0 0.0
    %718 = vmatpush1.msra.mxu0 0.0
    %719 = vmatprep.subr.mxu0 0.0
    %720 = vmatpush1.msra.mxu0 0.0
    %721 = vmatprep.subr.mxu0 0.0
    %722 = vmatpush1.msra.mxu0 0.0
    %723 = vmatprep.subr.mxu0 0.0
    %724 = vmatpush1.msra.mxu0 0.0
    %725 = vmatprep.subr.mxu0 0.0
    %726 = vmatpush1.msra.mxu0 0.0
    %727 = vmatprep.subr.mxu0 0.0
    %728 = vmatpush1.msra.mxu0 0.0
    %729 = vmatprep.subr.mxu0 0.0
    %730 = vmatpush1.msra.mxu0 0.0
    %731 = vmatprep.subr.mxu0 0.0
    %732 = vmatpush1.msra.mxu0 0.0
    %733 = vmatprep.subr.mxu0 0.0
    %734 = vmatpush1.msra.mxu0 0.0
    %735 = vmatprep.subr.mxu0 0.0
    %736 = vmatpush1.msra.mxu0 0.0
    %737 = vmatprep.subr.mxu0 0.0
    %738 = vmatpush1.msra.mxu0 0.0
    %739 = vmatprep.subr.mxu0 0.0
    %740 = vmatpush1.msra.mxu0 0.0
    %741 = vmatprep.subr.mxu0 0.0
    %742 = vmatpush1.msra.mxu0 0.0
    %743 = vmatprep.subr.mxu0 0.0
    %744 = vmatpush1.msra.mxu0 0.0
    %745 = vmatprep.subr.mxu0 0.0
    %746 = vmatpush1.msra.mxu0 0.0
    %747 = vmatprep.subr.mxu0 0.0
    %748 = vmatpush1.msra.mxu0 0.0
    %749 = vmatprep.mubr.f32.mxu0 0.0
    %750 = vmatmul.mubr.f32.gmra.mrb[0].mxu0 %v585
    %v751 = vpop.f32.mrb[0].mxu0
    %v752 = vadd.f32 0.0, %v751
    %v753 = vpop.f32.mrb[0].mxu0
    %754 = vmatprep.mubr.f32.mxu0 0.0
    %755 = vmatmul.mubr.f32.gmra.mrb[0].mxu0 %v588
    %v756 = vpop.f32.mrb[0].mxu0
    %v757 = vadd.f32 0.0, %v756
    %v758 = vpop.f32.mrb[0].mxu0
    %759 = vmatprep.mubr.f32.mxu0 0.0
    %760 = vmatmul.mubr.f32.gmra.mrb[0].mxu0 %v591
    %v761 = vpop.f32.mrb[0].mxu0
    %v762 = vadd.f32 0.0, %v761
    %v763 = vpop.f32.mrb[0].mxu0
    %764 = vmatprep.mubr.f32.mxu0 0.0
    %765 = vmatmul.mubr.f32.gmra.mrb[0].mxu0 %v594
    %v766 = vpop.f32.mrb[0].mxu0
    %v767 = vadd.f32 0.0, %v766
    %v768 = vpop.f32.mrb[0].mxu0
    %769 = vdwg.mxu0
    %v770 = vadd.f32 %v196, %v752
    %v771 = vadd.f32 %v201, %v757
    %v772 = vadd.f32 %v206, %v762
    %v773 = vadd.f32 %v211, %v767
    %v774 = vld [vmem:[%s10] sm:$0x1]
    %v776 = vlaneseq
    %v777 = vshrl.u32 %v776, 7
    %v778 = vsub.s32 0, %v777
    %v779 = vrot.slane %v774, %v778
    %v781 = vadd.f32 %v770, %v779
    %v782 = vadd.f32 %v771, %v779
    %v783 = vadd.f32 %v772, %v779
    %v784 = vadd.f32 %v773, %v779
    %s785 = scalar_lea.vmem %s1, 32
    %v786 = vld [vmem:[%s785] sm:$0xff]
    %v787 = vld [vmem:[%s785 + $0x8] sm:$0xff]
    %v788 = vld [vmem:[%s785 + $0x10] sm:$0xff]
    %v789 = vld [vmem:[%s785 + $0x18] sm:$0xff]
    %v791 = vsel %vm218, %v786, 0
    %v794 = vsel %vm218, %v787, 0
    %v797 = vsel %vm218, %v788, 0
    %v800 = vsel %vm218, %v789, 0
    %802 = vmatprep.subr.mxu0 0.0
    %803 = vmatpush1.msra.mxu0 %v781
    %804 = vmatprep.subr.mxu0 0.0
    %805 = vmatpush1.msra.mxu0 %v782
    %806 = vmatprep.subr.mxu0 0.0
    %807 = vmatpush1.msra.mxu0 %v783
    %808 = vmatprep.subr.mxu0 0.0
    %809 = vmatpush1.msra.mxu0 %v784
    %810 = vmatprep.subr.mxu0 0.0
    %811 = vmatpush1.msra.mxu0 0.0
    %812 = vmatprep.subr.mxu0 0.0
    %813 = vmatpush1.msra.mxu0 0.0
    %814 = vmatprep.subr.mxu0 0.0
    %815 = vmatpush1.msra.mxu0 0.0
    %816 = vmatprep.subr.mxu0 0.0
    %817 = vmatpush1.msra.mxu0 0.0
    %818 = vmatprep.subr.mxu0 0.0
    %819 = vmatpush1.msra.mxu0 0.0
    %820 = vmatprep.subr.mxu0 0.0
    %821 = vmatpush1.msra.mxu0 0.0
    %822 = vmatprep.subr.mxu0 0.0
    %823 = vmatpush1.msra.mxu0 0.0
    %824 = vmatprep.subr.mxu0 0.0
    %825 = vmatpush1.msra.mxu0 0.0
    %826 = vmatprep.subr.mxu0 0.0
    %827 = vmatpush1.msra.mxu0 0.0
    %828 = vmatprep.subr.mxu0 0.0
    %829 = vmatpush1.msra.mxu0 0.0
    %830 = vmatprep.subr.mxu0 0.0
    %831 = vmatpush1.msra.mxu0 0.0
    %832 = vmatprep.subr.mxu0 0.0
    %833 = vmatpush1.msra.mxu0 0.0
    %834 = vmatprep.subr.mxu0 0.0
    %835 = vmatpush1.msra.mxu0 0.0
    %836 = vmatprep.subr.mxu0 0.0
    %837 = vmatpush1.msra.mxu0 0.0
    %838 = vmatprep.subr.mxu0 0.0
    %839 = vmatpush1.msra.mxu0 0.0
    %840 = vmatprep.subr.mxu0 0.0
    %841 = vmatpush1.msra.mxu0 0.0
    %842 = vmatprep.subr.mxu0 0.0
    %843 = vmatpush1.msra.mxu0 0.0
    %844 = vmatprep.subr.mxu0 0.0
    %845 = vmatpush1.msra.mxu0 0.0
    %846 = vmatprep.subr.mxu0 0.0
    %847 = vmatpush1.msra.mxu0 0.0
    %848 = vmatprep.subr.mxu0 0.0
    %849 = vmatpush1.msra.mxu0 0.0
    %850 = vmatprep.subr.mxu0 0.0
    %851 = vmatpush1.msra.mxu0 0.0
    %852 = vmatprep.subr.mxu0 0.0
    %853 = vmatpush1.msra.mxu0 0.0
    %854 = vmatprep.subr.mxu0 0.0
    %855 = vmatpush1.msra.mxu0 0.0
    %856 = vmatprep.subr.mxu0 0.0
    %857 = vmatpush1.msra.mxu0 0.0
    %858 = vmatprep.subr.mxu0 0.0
    %859 = vmatpush1.msra.mxu0 0.0
    %860 = vmatprep.subr.mxu0 0.0
    %861 = vmatpush1.msra.mxu0 0.0
    %862 = vmatprep.subr.mxu0 0.0
    %863 = vmatpush1.msra.mxu0 0.0
    %864 = vmatprep.subr.mxu0 0.0
    %865 = vmatpush1.msra.mxu0 0.0
    %866 = vmatprep.mubr.f32.mxu0 0.0
    %867 = vmatmul.mubr.f32.gmra.mrb[0].mxu0 %v791
    %v868 = vpop.f32.mrb[0].mxu0
    %v869 = vadd.f32 0.0, %v868
    %v870 = vpop.f32.mrb[0].mxu0
    %871 = vmatprep.mubr.f32.mxu0 0.0
    %872 = vmatmul.mubr.f32.gmra.mrb[0].mxu0 %v794
    %v873 = vpop.f32.mrb[0].mxu0
    %v874 = vadd.f32 0.0, %v873
    %v875 = vpop.f32.mrb[0].mxu0
    %876 = vmatprep.mubr.f32.mxu0 0.0
    %877 = vmatmul.mubr.f32.gmra.mrb[0].mxu0 %v797
    %v878 = vpop.f32.mrb[0].mxu0
    %v879 = vadd.f32 0.0, %v878
    %v880 = vpop.f32.mrb[0].mxu0
    %881 = vmatprep.mubr.f32.mxu0 0.0
    %882 = vmatmul.mubr.f32.gmra.mrb[0].mxu0 %v800
    %v883 = vpop.f32.mrb[0].mxu0
    %v884 = vadd.f32 0.0, %v883
    %v885 = vpop.f32.mrb[0].mxu0
    %886 = vdwg.mxu0
    %s887 = scalar_lea.vmem %s4, 32
    %v888 = vld [vmem:[%s887] sm:$0xff]
    %v889 = vld [vmem:[%s887 + $0x8] sm:$0xff]
    %v890 = vld [vmem:[%s887 + $0x10] sm:$0xff]
    %v891 = vld [vmem:[%s887 + $0x18] sm:$0xff]
    %s892 = scalar_lea.vmem %s5, 32
    %v893 = vld [vmem:[%s892] sm:$0xff]
    %v894 = vld [vmem:[%s892 + $0x8] sm:$0xff]
    %v895 = vld [vmem:[%s892 + $0x10] sm:$0xff]
    %v896 = vld [vmem:[%s892 + $0x18] sm:$0xff]
    %v898 = vsel %vm218, %v869, 0
    %v901 = vsel %vm218, %v874, 0
    %v904 = vsel %vm218, %v879, 0
    %v907 = vsel %vm218, %v884, 0
    %909 = vmatprep.subr.mxu0 0.0
    %910 = vmatpush1.msra.mxu0 %v893
    %911 = vmatprep.subr.mxu0 0.0
    %912 = vmatpush1.msra.mxu0 %v894
    %913 = vmatprep.subr.mxu0 0.0
    %914 = vmatpush1.msra.mxu0 %v895
    %915 = vmatprep.subr.mxu0 0.0
    %916 = vmatpush1.msra.mxu0 %v896
    %917 = vmatprep.subr.mxu0 0.0
    %918 = vmatpush1.msra.mxu0 0.0
    %919 = vmatprep.subr.mxu0 0.0
    %920 = vmatpush1.msra.mxu0 0.0
    %921 = vmatprep.subr.mxu0 0.0
    %922 = vmatpush1.msra.mxu0 0.0
    %923 = vmatprep.subr.mxu0 0.0
    %924 = vmatpush1.msra.mxu0 0.0
    %925 = vmatprep.subr.mxu0 0.0
    %926 = vmatpush1.msra.mxu0 0.0
    %927 = vmatprep.subr.mxu0 0.0
    %928 = vmatpush1.msra.mxu0 0.0
    %929 = vmatprep.subr.mxu0 0.0
    %930 = vmatpush1.msra.mxu0 0.0
    %931 = vmatprep.subr.mxu0 0.0
    %932 = vmatpush1.msra.mxu0 0.0
    %933 = vmatprep.subr.mxu0 0.0
    %934 = vmatpush1.msra.mxu0 0.0
    %935 = vmatprep.subr.mxu0 0.0
    %936 = vmatpush1.msra.mxu0 0.0
    %937 = vmatprep.subr.mxu0 0.0
    %938 = vmatpush1.msra.mxu0 0.0
    %939 = vmatprep.subr.mxu0 0.0
    %940 = vmatpush1.msra.mxu0 0.0
    %941 = vmatprep.subr.mxu0 0.0
    %942 = vmatpush1.msra.mxu0 0.0
    %943 = vmatprep.subr.mxu0 0.0
    %944 = vmatpush1.msra.mxu0 0.0
    %945 = vmatprep.subr.mxu0 0.0
    %946 = vmatpush1.msra.mxu0 0.0
    %947 = vmatprep.subr.mxu0 0.0
    %948 = vmatpush1.msra.mxu0 0.0
    %949 = vmatprep.subr.mxu0 0.0
    %950 = vmatpush1.msra.mxu0 0.0
    %951 = vmatprep.subr.mxu0 0.0
    %952 = vmatpush1.msra.mxu0 0.0
    %953 = vmatprep.subr.mxu0 0.0
    %954 = vmatpush1.msra.mxu0 0.0
    %955 = vmatprep.subr.mxu0 0.0
    %956 = vmatpush1.msra.mxu0 0.0
    %957 = vmatprep.subr.mxu0 0.0
    %958 = vmatpush1.msra.mxu0 0.0
    %959 = vmatprep.subr.mxu0 0.0
    %960 = vmatpush1.msra.mxu0 0.0
    %961 = vmatprep.subr.mxu0 0.0
    %962 = vmatpush1.msra.mxu0 0.0
    %963 = vmatprep.subr.mxu0 0.0
    %964 = vmatpush1.msra.mxu0 0.0
    %965 = vmatprep.subr.mxu0 0.0
    %966 = vmatpush1.msra.mxu0 0.0
    %967 = vmatprep.subr.mxu0 0.0
    %968 = vmatpush1.msra.mxu0 0.0
    %969 = vmatprep.subr.mxu0 0.0
    %970 = vmatpush1.msra.mxu0 0.0
    %971 = vmatprep.subr.mxu0 0.0
    %972 = vmatpush1.msra.mxu0 0.0
    %973 = vmatprep.mubr.f32.mxu0 0.0
    %974 = vmatmul.mubr.f32.gmra.mrb[0].mxu0 %v898
    %v975 = vpop.f32.mrb[0].mxu0
    %v976 = vadd.f32 0.0, %v975
    %v977 = vpop.f32.mrb[0].mxu0
    %978 = vmatprep.mubr.f32.mxu0 0.0
    %979 = vmatmul.mubr.f32.gmra.mrb[0].mxu0 %v901
    %v980 = vpop.f32.mrb[0].mxu0
    %v981 = vadd.f32 0.0, %v980
    %v982 = vpop.f32.mrb[0].mxu0
    %983 = vmatprep.mubr.f32.mxu0 0.0
    %984 = vmatmul.mubr.f32.gmra.mrb[0].mxu0 %v904
    %v985 = vpop.f32.mrb[0].mxu0
    %v986 = vadd.f32 0.0, %v985
    %v987 = vpop.f32.mrb[0].mxu0
    %988 = vmatprep.mubr.f32.mxu0 0.0
    %989 = vmatmul.mubr.f32.gmra.mrb[0].mxu0 %v907
    %v990 = vpop.f32.mrb[0].mxu0
    %v991 = vadd.f32 0.0, %v990
    %v992 = vpop.f32.mrb[0].mxu0
    %993 = vdwg.mxu0
    %v995 = vsel %vm218, %v781, 0
    %v998 = vsel %vm218, %v782, 0
    %v1001 = vsel %vm218, %v783, 0
    %v1004 = vsel %vm218, %v784, 0
    %1006 = vmatprep.subr.mxu0 0.0
    %1007 = vmatpush1.msra.mxu0 %v888
    %1008 = vmatprep.subr.mxu0 0.0
    %1009 = vmatpush1.msra.mxu0 %v889
    %1010 = vmatprep.subr.mxu0 0.0
    %1011 = vmatpush1.msra.mxu0 %v890
    %1012 = vmatprep.subr.mxu0 0.0
    %1013 = vmatpush1.msra.mxu0 %v891
    %1014 = vmatprep.subr.mxu0 0.0
    %1015 = vmatpush1.msra.mxu0 0.0
    %1016 = vmatprep.subr.mxu0 0.0
    %1017 = vmatpush1.msra.mxu0 0.0
    %1018 = vmatprep.subr.mxu0 0.0
    %1019 = vmatpush1.msra.mxu0 0.0
    %1020 = vmatprep.subr.mxu0 0.0
    %1021 = vmatpush1.msra.mxu0 0.0
    %1022 = vmatprep.subr.mxu0 0.0
    %1023 = vmatpush1.msra.mxu0 0.0
    %1024 = vmatprep.subr.mxu0 0.0
    %1025 = vmatpush1.msra.mxu0 0.0
    %1026 = vmatprep.subr.mxu0 0.0
    %1027 = vmatpush1.msra.mxu0 0.0
    %1028 = vmatprep.subr.mxu0 0.0
    %1029 = vmatpush1.msra.mxu0 0.0
    %1030 = vmatprep.subr.mxu0 0.0
    %1031 = vmatpush1.msra.mxu0 0.0
    %1032 = vmatprep.subr.mxu0 0.0
    %1033 = vmatpush1.msra.mxu0 0.0
    %1034 = vmatprep.subr.mxu0 0.0
    %1035 = vmatpush1.msra.mxu0 0.0
    %1036 = vmatprep.subr.mxu0 0.0
    %1037 = vmatpush1.msra.mxu0 0.0
    %1038 = vmatprep.subr.mxu0 0.0
    %1039 = vmatpush1.msra.mxu0 0.0
    %1040 = vmatprep.subr.mxu0 0.0
    %1041 = vmatpush1.msra.mxu0 0.0
    %1042 = vmatprep.subr.mxu0 0.0
    %1043 = vmatpush1.msra.mxu0 0.0
    %1044 = vmatprep.subr.mxu0 0.0
    %1045 = vmatpush1.msra.mxu0 0.0
    %1046 = vmatprep.subr.mxu0 0.0
    %1047 = vmatpush1.msra.mxu0 0.0
    %1048 = vmatprep.subr.mxu0 0.0
    %1049 = vmatpush1.msra.mxu0 0.0
    %1050 = vmatprep.subr.mxu0 0.0
    %1051 = vmatpush1.msra.mxu0 0.0
    %1052 = vmatprep.subr.mxu0 0.0
    %1053 = vmatpush1.msra.mxu0 0.0
    %1054 = vmatprep.subr.mxu0 0.0
    %1055 = vmatpush1.msra.mxu0 0.0
    %1056 = vmatprep.subr.mxu0 0.0
    %1057 = vmatpush1.msra.mxu0 0.0
    %1058 = vmatprep.subr.mxu0 0.0
    %1059 = vmatpush1.msra.mxu0 0.0
    %1060 = vmatprep.subr.mxu0 0.0
    %1061 = vmatpush1.msra.mxu0 0.0
    %1062 = vmatprep.subr.mxu0 0.0
    %1063 = vmatpush1.msra.mxu0 0.0
    %1064 = vmatprep.subr.mxu0 0.0
    %1065 = vmatpush1.msra.mxu0 0.0
    %1066 = vmatprep.subr.mxu0 0.0
    %1067 = vmatpush1.msra.mxu0 0.0
    %1068 = vmatprep.subr.mxu0 0.0
    %1069 = vmatpush1.msra.mxu0 0.0
    %1070 = vmatprep.mubr.f32.mxu0 0.0
    %1071 = vmatmul.mubr.f32.gmra.mrb[0].mxu0 %v995
    %v1072 = vpop.f32.mrb[0].mxu0
    %v1073 = vadd.f32 %v976, %v1072
    %v1074 = vpop.f32.mrb[0].mxu0
    %1075 = vmatprep.mubr.f32.mxu0 0.0
    %1076 = vmatmul.mubr.f32.gmra.mrb[0].mxu0 %v998
    %v1077 = vpop.f32.mrb[0].mxu0
    %v1078 = vadd.f32 %v981, %v1077
    %v1079 = vpop.f32.mrb[0].mxu0
    %1080 = vmatprep.mubr.f32.mxu0 0.0
    %1081 = vmatmul.mubr.f32.gmra.mrb[0].mxu0 %v1001
    %v1082 = vpop.f32.mrb[0].mxu0
    %v1083 = vadd.f32 %v986, %v1082
    %v1084 = vpop.f32.mrb[0].mxu0
    %1085 = vmatprep.mubr.f32.mxu0 0.0
    %1086 = vmatmul.mubr.f32.gmra.mrb[0].mxu0 %v1004
    %v1087 = vpop.f32.mrb[0].mxu0
    %v1088 = vadd.f32 %v991, %v1087
    %v1089 = vpop.f32.mrb[0].mxu0
    %1090 = vdwg.mxu0
    %s1091 = scalar_lea.vmem %s6, 1
    %v1092 = vld [vmem:[%s1091] sm:$0x1]
    %v1094 = vlaneseq
    %v1095 = vshrl.u32 %v1094, 7
    %v1096 = vsub.s32 0, %v1095
    %v1097 = vrot.slane %v1092, %v1096
    %v1099 = vadd.f32 %v1073, %v1097
    %v1100 = vadd.f32 %v1078, %v1097
    %v1101 = vadd.f32 %v1083, %v1097
    %v1102 = vadd.f32 %v1088, %v1097
    %v1103 = vtanh.pop %v1099
    %v1104 = vtanh.pop %v1100
    %v1105 = vtanh.pop %v1101
    %v1106 = vtanh.pop %v1102
    %v1107 = vsub.f32 0.0, %v1099
    %v1108 = vsub.f32 0.0, %v1100
    %v1109 = vsub.f32 0.0, %v1101
    %v1110 = vsub.f32 0.0, %v1102
    %v1111 = vmul.f32 %v1107, 1.442695
    %v1112 = vpow.pop %v1111
    %v1113 = vmul.f32 %v1108, 1.442695
    %v1114 = vpow.pop %v1113
    %v1115 = vmul.f32 %v1109, 1.442695
    %v1116 = vpow.pop %v1115
    %v1117 = vmul.f32 %v1110, 1.442695
    %v1118 = vpow.pop %v1117
    %v1119 = vadd.f32 %v1112, 1.0
    %v1120 = vadd.f32 %v1114, 1.0
    %v1121 = vadd.f32 %v1116, 1.0
    %v1122 = vadd.f32 %v1118, 1.0
    %v1123 = vrcp.pop %v1119
    %v1124 = vrcp.pop %v1120
    %v1125 = vrcp.pop %v1121
    %v1126 = vrcp.pop %v1122
    %1131 = vrot.lane.b32.xlu0 %v1123, 96
    %v1132 = vpop.permute.xlu0 %1131
    %1133 = vrot.lane.b32.xlu0 %v1124, 96
    %v1134 = vpop.permute.xlu0 %1133
    %1135 = vrot.lane.b32.xlu0 %v1125, 96
    %v1136 = vpop.permute.xlu0 %1135
    %1137 = vrot.lane.b32.xlu0 %v1126, 96
    %v1138 = vpop.permute.xlu0 %1137
    %v1143 = vmul.f32 %v1103, %v1132
    %v1144 = vmul.f32 %v1104, %v1134
    %v1145 = vmul.f32 %v1105, %v1136
    %v1146 = vmul.f32 %v1106, %v1138
    %s1147 = scalar_lea.vmem %s7, 32
    %v1148 = vld [vmem:[%s1147] sm:$0xff]
    %v1149 = vld [vmem:[%s1147 + $0x8] sm:$0xff]
    %v1150 = vld [vmem:[%s1147 + $0x10] sm:$0xff]
    %v1151 = vld [vmem:[%s1147 + $0x18] sm:$0xff]
    %v1153 = vsel %vm218, %v1143, 0
    %v1156 = vsel %vm218, %v1144, 0
    %v1159 = vsel %vm218, %v1145, 0
    %v1162 = vsel %vm218, %v1146, 0
    %1164 = vmatprep.subr.mxu0 0.0
    %1165 = vmatpush1.msra.mxu0 %v1148
    %1166 = vmatprep.subr.mxu0 0.0
    %1167 = vmatpush1.msra.mxu0 %v1149
    %1168 = vmatprep.subr.mxu0 0.0
    %1169 = vmatpush1.msra.mxu0 %v1150
    %1170 = vmatprep.subr.mxu0 0.0
    %1171 = vmatpush1.msra.mxu0 %v1151
    %1172 = vmatprep.subr.mxu0 0.0
    %1173 = vmatpush1.msra.mxu0 0.0
    %1174 = vmatprep.subr.mxu0 0.0
    %1175 = vmatpush1.msra.mxu0 0.0
    %1176 = vmatprep.subr.mxu0 0.0
    %1177 = vmatpush1.msra.mxu0 0.0
    %1178 = vmatprep.subr.mxu0 0.0
    %1179 = vmatpush1.msra.mxu0 0.0
    %1180 = vmatprep.subr.mxu0 0.0
    %1181 = vmatpush1.msra.mxu0 0.0
    %1182 = vmatprep.subr.mxu0 0.0
    %1183 = vmatpush1.msra.mxu0 0.0
    %1184 = vmatprep.subr.mxu0 0.0
    %1185 = vmatpush1.msra.mxu0 0.0
    %1186 = vmatprep.subr.mxu0 0.0
    %1187 = vmatpush1.msra.mxu0 0.0
    %1188 = vmatprep.subr.mxu0 0.0
    %1189 = vmatpush1.msra.mxu0 0.0
    %1190 = vmatprep.subr.mxu0 0.0
    %1191 = vmatpush1.msra.mxu0 0.0
    %1192 = vmatprep.subr.mxu0 0.0
    %1193 = vmatpush1.msra.mxu0 0.0
    %1194 = vmatprep.subr.mxu0 0.0
    %1195 = vmatpush1.msra.mxu0 0.0
    %1196 = vmatprep.subr.mxu0 0.0
    %1197 = vmatpush1.msra.mxu0 0.0
    %1198 = vmatprep.subr.mxu0 0.0
    %1199 = vmatpush1.msra.mxu0 0.0
    %1200 = vmatprep.subr.mxu0 0.0
    %1201 = vmatpush1.msra.mxu0 0.0
    %1202 = vmatprep.subr.mxu0 0.0
    %1203 = vmatpush1.msra.mxu0 0.0
    %1204 = vmatprep.subr.mxu0 0.0
    %1205 = vmatpush1.msra.mxu0 0.0
    %1206 = vmatprep.subr.mxu0 0.0
    %1207 = vmatpush1.msra.mxu0 0.0
    %1208 = vmatprep.subr.mxu0 0.0
    %1209 = vmatpush1.msra.mxu0 0.0
    %1210 = vmatprep.subr.mxu0 0.0
    %1211 = vmatpush1.msra.mxu0 0.0
    %1212 = vmatprep.subr.mxu0 0.0
    %1213 = vmatpush1.msra.mxu0 0.0
    %1214 = vmatprep.subr.mxu0 0.0
    %1215 = vmatpush1.msra.mxu0 0.0
    %1216 = vmatprep.subr.mxu0 0.0
    %1217 = vmatpush1.msra.mxu0 0.0
    %1218 = vmatprep.subr.mxu0 0.0
    %1219 = vmatpush1.msra.mxu0 0.0
    %1220 = vmatprep.subr.mxu0 0.0
    %1221 = vmatpush1.msra.mxu0 0.0
    %1222 = vmatprep.subr.mxu0 0.0
    %1223 = vmatpush1.msra.mxu0 0.0
    %1224 = vmatprep.subr.mxu0 0.0
    %1225 = vmatpush1.msra.mxu0 0.0
    %1226 = vmatprep.subr.mxu0 0.0
    %1227 = vmatpush1.msra.mxu0 0.0
    %1228 = vmatprep.mubr.f32.mxu0 0.0
    %1229 = vmatmul.mubr.f32.gmra.mrb[0].mxu0 %v1153
    %v1230 = vpop.f32.mrb[0].mxu0
    %v1231 = vadd.f32 0.0, %v1230
    %v1232 = vpop.f32.mrb[0].mxu0
    %1233 = vmatprep.mubr.f32.mxu0 0.0
    %1234 = vmatmul.mubr.f32.gmra.mrb[0].mxu0 %v1156
    %v1235 = vpop.f32.mrb[0].mxu0
    %v1236 = vadd.f32 0.0, %v1235
    %v1237 = vpop.f32.mrb[0].mxu0
    %1238 = vmatprep.mubr.f32.mxu0 0.0
    %1239 = vmatmul.mubr.f32.gmra.mrb[0].mxu0 %v1159
    %v1240 = vpop.f32.mrb[0].mxu0
    %v1241 = vadd.f32 0.0, %v1240
    %v1242 = vpop.f32.mrb[0].mxu0
    %1243 = vmatprep.mubr.f32.mxu0 0.0
    %1244 = vmatmul.mubr.f32.gmra.mrb[0].mxu0 %v1162
    %v1245 = vpop.f32.mrb[0].mxu0
    %v1246 = vadd.f32 0.0, %v1245
    %v1247 = vpop.f32.mrb[0].mxu0
    %1248 = vdwg.mxu0
    %v1249 = vadd.f32 %v663, %v1231
    %v1250 = vadd.f32 %v668, %v1236
    %v1251 = vadd.f32 %v673, %v1241
    %v1252 = vadd.f32 %v678, %v1246
    %s1253 = scalar_lea.vmem %s8, 1
    %v1254 = vld [vmem:[%s1253] sm:$0x1]
    %v1256 = vlaneseq
    %v1257 = vshrl.u32 %v1256, 7
    %v1258 = vsub.s32 0, %v1257
    %v1259 = vrot.slane %v1254, %v1258
    %v1261 = vadd.f32 %v1249, %v1259
    %v1262 = vadd.f32 %v1250, %v1259
    %v1263 = vadd.f32 %v1251, %v1259
    %v1264 = vadd.f32 %v1252, %v1259
    %s1265 = scalar_lea.vmem %s9, 32
    %v1266 = vld [vmem:[%s1265] sm:$0xff]
    %v1267 = vld [vmem:[%s1265 + $0x8] sm:$0xff]
    %v1268 = vld [vmem:[%s1265 + $0x10] sm:$0xff]
    %v1269 = vld [vmem:[%s1265 + $0x18] sm:$0xff]
    %1270 = vmatprep.subr.mxu0 0.0
    %1271 = vmatpush1.msra.mxu0 %v1266
    %1272 = vmatprep.subr.mxu0 0.0
    %1273 = vmatpush1.msra.mxu0 %v1267
    %1274 = vmatprep.subr.mxu0 0.0
    %1275 = vmatpush1.msra.mxu0 %v1268
    %1276 = vmatprep.subr.mxu0 0.0
    %1277 = vmatpush1.msra.mxu0 %v1269
    %1278 = vmatprep.subr.mxu0 0.0
    %1279 = vmatpush1.msra.mxu0 0.0
    %1280 = vmatprep.subr.mxu0 0.0
    %1281 = vmatpush1.msra.mxu0 0.0
    %1282 = vmatprep.subr.mxu0 0.0
    %1283 = vmatpush1.msra.mxu0 0.0
    %1284 = vmatprep.subr.mxu0 0.0
    %1285 = vmatpush1.msra.mxu0 0.0
    %1286 = vmatprep.subr.mxu0 0.0
    %1287 = vmatpush1.msra.mxu0 0.0
    %1288 = vmatprep.subr.mxu0 0.0
    %1289 = vmatpush1.msra.mxu0 0.0
    %1290 = vmatprep.subr.mxu0 0.0
    %1291 = vmatpush1.msra.mxu0 0.0
    %1292 = vmatprep.subr.mxu0 0.0
    %1293 = vmatpush1.msra.mxu0 0.0
    %1294 = vmatprep.subr.mxu0 0.0
    %1295 = vmatpush1.msra.mxu0 0.0
    %1296 = vmatprep.subr.mxu0 0.0
    %1297 = vmatpush1.msra.mxu0 0.0
    %1298 = vmatprep.subr.mxu0 0.0
    %1299 = vmatpush1.msra.mxu0 0.0
    %1300 = vmatprep.subr.mxu0 0.0
    %1301 = vmatpush1.msra.mxu0 0.0
    %1302 = vmatprep.subr.mxu0 0.0
    %1303 = vmatpush1.msra.mxu0 0.0
    %1304 = vmatprep.subr.mxu0 0.0
    %1305 = vmatpush1.msra.mxu0 0.0
    %1306 = vmatprep.subr.mxu0 0.0
    %1307 = vmatpush1.msra.mxu0 0.0
    %1308 = vmatprep.subr.mxu0 0.0
    %1309 = vmatpush1.msra.mxu0 0.0
    %1310 = vmatprep.subr.mxu0 0.0
    %1311 = vmatpush1.msra.mxu0 0.0
    %1312 = vmatprep.subr.mxu0 0.0
    %1313 = vmatpush1.msra.mxu0 0.0
    %1314 = vmatprep.subr.mxu0 0.0
    %1315 = vmatpush1.msra.mxu0 0.0
    %1316 = vmatprep.subr.mxu0 0.0
    %1317 = vmatpush1.msra.mxu0 0.0
    %1318 = vmatprep.subr.mxu0 0.0
    %1319 = vmatpush1.msra.mxu0 0.0
    %1320 = vmatprep.subr.mxu0 0.0
    %1321 = vmatpush1.msra.mxu0 0.0
    %1322 = vmatprep.subr.mxu0 0.0
    %1323 = vmatpush1.msra.mxu0 0.0
    %1324 = vmatprep.subr.mxu0 0.0
    %1325 = vmatpush1.msra.mxu0 0.0
    %1326 = vmatprep.subr.mxu0 0.0
    %1327 = vmatpush1.msra.mxu0 0.0
    %1328 = vmatprep.subr.mxu0 0.0
    %1329 = vmatpush1.msra.mxu0 0.0
    %1330 = vmatprep.subr.mxu0 0.0
    %1331 = vmatpush1.msra.mxu0 0.0
    %1332 = vmatprep.subr.mxu0 0.0
    %1333 = vmatpush1.msra.mxu0 0.0
    %1334 = vmatprep.mubr.f32.mxu0 0.0
    %1335 = vmatmul.mubr.f32.gmra.mrb[0].mxu0 %v1153
    %v1336 = vpop.f32.mrb[0].mxu0
    %v1337 = vadd.f32 0.0, %v1336
    %v1338 = vpop.f32.mrb[0].mxu0
    %1339 = vmatprep.mubr.f32.mxu0 0.0
    %1340 = vmatmul.mubr.f32.gmra.mrb[0].mxu0 %v1156
    %v1341 = vpop.f32.mrb[0].mxu0
    %v1342 = vadd.f32 0.0, %v1341
    %v1343 = vpop.f32.mrb[0].mxu0
    %1344 = vmatprep.mubr.f32.mxu0 0.0
    %1345 = vmatmul.mubr.f32.gmra.mrb[0].mxu0 %v1159
    %v1346 = vpop.f32.mrb[0].mxu0
    %v1347 = vadd.f32 0.0, %v1346
    %v1348 = vpop.f32.mrb[0].mxu0
    %1349 = vmatprep.mubr.f32.mxu0 0.0
    %1350 = vmatmul.mubr.f32.gmra.mrb[0].mxu0 %v1162
    %v1351 = vpop.f32.mrb[0].mxu0
    %v1352 = vadd.f32 0.0, %v1351
    %v1353 = vpop.f32.mrb[0].mxu0
    %1354 = vdwg.mxu0
    %v1355 = vadd.f32 %v781, %v1337
    %v1356 = vadd.f32 %v782, %v1342
    %v1357 = vadd.f32 %v783, %v1347
    %v1358 = vadd.f32 %v784, %v1352
    %s1359 = scalar_lea.vmem %s10, 1
    %v1360 = vld [vmem:[%s1359] sm:$0x1]
    %v1362 = vlaneseq
    %v1363 = vshrl.u32 %v1362, 7
    %v1364 = vsub.s32 0, %v1363
    %v1365 = vrot.slane %v1360, %v1364
    %v1367 = vadd.f32 %v1355, %v1365
    %v1368 = vadd.f32 %v1356, %v1365
    %v1369 = vadd.f32 %v1357, %v1365
    %v1370 = vadd.f32 %v1358, %v1365
    %s1371 = scalar_lea.vmem %s1, 64
    %v1372 = vld [vmem:[%s1371] sm:$0xff]
    %v1373 = vld [vmem:[%s1371 + $0x8] sm:$0xff]
    %v1374 = vld [vmem:[%s1371 + $0x10] sm:$0xff]
    %v1375 = vld [vmem:[%s1371 + $0x18] sm:$0xff]
    %v1377 = vsel %vm218, %v1372, 0
    %v1380 = vsel %vm218, %v1373, 0
    %v1383 = vsel %vm218, %v1374, 0
    %v1386 = vsel %vm218, %v1375, 0
    %1388 = vmatprep.subr.mxu0 0.0
    %1389 = vmatpush1.msra.mxu0 %v1367
    %1390 = vmatprep.subr.mxu0 0.0
    %1391 = vmatpush1.msra.mxu0 %v1368
    %1392 = vmatprep.subr.mxu0 0.0
    %1393 = vmatpush1.msra.mxu0 %v1369
    %1394 = vmatprep.subr.mxu0 0.0
    %1395 = vmatpush1.msra.mxu0 %v1370
    %1396 = vmatprep.subr.mxu0 0.0
    %1397 = vmatpush1.msra.mxu0 0.0
    %1398 = vmatprep.subr.mxu0 0.0
    %1399 = vmatpush1.msra.mxu0 0.0
    %1400 = vmatprep.subr.mxu0 0.0
    %1401 = vmatpush1.msra.mxu0 0.0
    %1402 = vmatprep.subr.mxu0 0.0
    %1403 = vmatpush1.msra.mxu0 0.0
    %1404 = vmatprep.subr.mxu0 0.0
    %1405 = vmatpush1.msra.mxu0 0.0
    %1406 = vmatprep.subr.mxu0 0.0
    %1407 = vmatpush1.msra.mxu0 0.0
    %1408 = vmatprep.subr.mxu0 0.0
    %1409 = vmatpush1.msra.mxu0 0.0
    %1410 = vmatprep.subr.mxu0 0.0
    %1411 = vmatpush1.msra.mxu0 0.0
    %1412 = vmatprep.subr.mxu0 0.0
    %1413 = vmatpush1.msra.mxu0 0.0
    %1414 = vmatprep.subr.mxu0 0.0
    %1415 = vmatpush1.msra.mxu0 0.0
    %1416 = vmatprep.subr.mxu0 0.0
    %1417 = vmatpush1.msra.mxu0 0.0
    %1418 = vmatprep.subr.mxu0 0.0
    %1419 = vmatpush1.msra.mxu0 0.0
    %1420 = vmatprep.subr.mxu0 0.0
    %1421 = vmatpush1.msra.mxu0 0.0
    %1422 = vmatprep.subr.mxu0 0.0
    %1423 = vmatpush1.msra.mxu0 0.0
    %1424 = vmatprep.subr.mxu0 0.0
    %1425 = vmatpush1.msra.mxu0 0.0
    %1426 = vmatprep.subr.mxu0 0.0
    %1427 = vmatpush1.msra.mxu0 0.0
    %1428 = vmatprep.subr.mxu0 0.0
    %1429 = vmatpush1.msra.mxu0 0.0
    %1430 = vmatprep.subr.mxu0 0.0
    %1431 = vmatpush1.msra.mxu0 0.0
    %1432 = vmatprep.subr.mxu0 0.0
    %1433 = vmatpush1.msra.mxu0 0.0
    %1434 = vmatprep.subr.mxu0 0.0
    %1435 = vmatpush1.msra.mxu0 0.0
    %1436 = vmatprep.subr.mxu0 0.0
    %1437 = vmatpush1.msra.mxu0 0.0
    %1438 = vmatprep.subr.mxu0 0.0
    %1439 = vmatpush1.msra.mxu0 0.0
    %1440 = vmatprep.subr.mxu0 0.0
    %1441 = vmatpush1.msra.mxu0 0.0
    %1442 = vmatprep.subr.mxu0 0.0
    %1443 = vmatpush1.msra.mxu0 0.0
    %1444 = vmatprep.subr.mxu0 0.0
    %1445 = vmatpush1.msra.mxu0 0.0
    %1446 = vmatprep.subr.mxu0 0.0
    %1447 = vmatpush1.msra.mxu0 0.0
    %1448 = vmatprep.subr.mxu0 0.0
    %1449 = vmatpush1.msra.mxu0 0.0
    %1450 = vmatprep.subr.mxu0 0.0
    %1451 = vmatpush1.msra.mxu0 0.0
    %1452 = vmatprep.mubr.f32.mxu0 0.0
    %1453 = vmatmul.mubr.f32.gmra.mrb[0].mxu0 %v1377
    %v1454 = vpop.f32.mrb[0].mxu0
    %v1455 = vadd.f32 0.0, %v1454
    %v1456 = vpop.f32.mrb[0].mxu0
    %1457 = vmatprep.mubr.f32.mxu0 0.0
    %1458 = vmatmul.mubr.f32.gmra.mrb[0].mxu0 %v1380
    %v1459 = vpop.f32.mrb[0].mxu0
    %v1460 = vadd.f32 0.0, %v1459
    %v1461 = vpop.f32.mrb[0].mxu0
    %1462 = vmatprep.mubr.f32.mxu0 0.0
    %1463 = vmatmul.mubr.f32.gmra.mrb[0].mxu0 %v1383
    %v1464 = vpop.f32.mrb[0].mxu0
    %v1465 = vadd.f32 0.0, %v1464
    %v1466 = vpop.f32.mrb[0].mxu0
    %1467 = vmatprep.mubr.f32.mxu0 0.0
    %1468 = vmatmul.mubr.f32.gmra.mrb[0].mxu0 %v1386
    %v1469 = vpop.f32.mrb[0].mxu0
    %v1470 = vadd.f32 0.0, %v1469
    %v1471 = vpop.f32.mrb[0].mxu0
    %1472 = vdwg.mxu0
    %s1473 = scalar_lea.vmem %s4, 64
    %v1474 = vld [vmem:[%s1473] sm:$0xff]
    %v1475 = vld [vmem:[%s1473 + $0x8] sm:$0xff]
    %v1476 = vld [vmem:[%s1473 + $0x10] sm:$0xff]
    %v1477 = vld [vmem:[%s1473 + $0x18] sm:$0xff]
    %s1478 = scalar_lea.vmem %s5, 64
    %v1479 = vld [vmem:[%s1478] sm:$0xff]
    %v1480 = vld [vmem:[%s1478 + $0x8] sm:$0xff]
    %v1481 = vld [vmem:[%s1478 + $0x10] sm:$0xff]
    %v1482 = vld [vmem:[%s1478 + $0x18] sm:$0xff]
    %v1484 = vsel %vm218, %v1455, 0
    %v1487 = vsel %vm218, %v1460, 0
    %v1490 = vsel %vm218, %v1465, 0
    %v1493 = vsel %vm218, %v1470, 0
    %1495 = vmatprep.subr.mxu0 0.0
    %1496 = vmatpush1.msra.mxu0 %v1479
    %1497 = vmatprep.subr.mxu0 0.0
    %1498 = vmatpush1.msra.mxu0 %v1480
    %1499 = vmatprep.subr.mxu0 0.0
    %1500 = vmatpush1.msra.mxu0 %v1481
    %1501 = vmatprep.subr.mxu0 0.0
    %1502 = vmatpush1.msra.mxu0 %v1482
    %1503 = vmatprep.subr.mxu0 0.0
    %1504 = vmatpush1.msra.mxu0 0.0
    %1505 = vmatprep.subr.mxu0 0.0
    %1506 = vmatpush1.msra.mxu0 0.0
    %1507 = vmatprep.subr.mxu0 0.0
    %1508 = vmatpush1.msra.mxu0 0.0
    %1509 = vmatprep.subr.mxu0 0.0
    %1510 = vmatpush1.msra.mxu0 0.0
    %1511 = vmatprep.subr.mxu0 0.0
    %1512 = vmatpush1.msra.mxu0 0.0
    %1513 = vmatprep.subr.mxu0 0.0
    %1514 = vmatpush1.msra.mxu0 0.0
    %1515 = vmatprep.subr.mxu0 0.0
    %1516 = vmatpush1.msra.mxu0 0.0
    %1517 = vmatprep.subr.mxu0 0.0
    %1518 = vmatpush1.msra.mxu0 0.0
    %1519 = vmatprep.subr.mxu0 0.0
    %1520 = vmatpush1.msra.mxu0 0.0
    %1521 = vmatprep.subr.mxu0 0.0
    %1522 = vmatpush1.msra.mxu0 0.0
    %1523 = vmatprep.subr.mxu0 0.0
    %1524 = vmatpush1.msra.mxu0 0.0
    %1525 = vmatprep.subr.mxu0 0.0
    %1526 = vmatpush1.msra.mxu0 0.0
    %1527 = vmatprep.subr.mxu0 0.0
    %1528 = vmatpush1.msra.mxu0 0.0
    %1529 = vmatprep.subr.mxu0 0.0
    %1530 = vmatpush1.msra.mxu0 0.0
    %1531 = vmatprep.subr.mxu0 0.0
    %1532 = vmatpush1.msra.mxu0 0.0
    %1533 = vmatprep.subr.mxu0 0.0
    %1534 = vmatpush1.msra.mxu0 0.0
    %1535 = vmatprep.subr.mxu0 0.0
    %1536 = vmatpush1.msra.mxu0 0.0
    %1537 = vmatprep.subr.mxu0 0.0
    %1538 = vmatpush1.msra.mxu0 0.0
    %1539 = vmatprep.subr.mxu0 0.0
    %1540 = vmatpush1.msra.mxu0 0.0
    %1541 = vmatprep.subr.mxu0 0.0
    %1542 = vmatpush1.msra.mxu0 0.0
    %1543 = vmatprep.subr.mxu0 0.0
    %1544 = vmatpush1.msra.mxu0 0.0
    %1545 = vmatprep.subr.mxu0 0.0
    %1546 = vmatpush1.msra.mxu0 0.0
    %1547 = vmatprep.subr.mxu0 0.0
    %1548 = vmatpush1.msra.mxu0 0.0
    %1549 = vmatprep.subr.mxu0 0.0
    %1550 = vmatpush1.msra.mxu0 0.0
    %1551 = vmatprep.subr.mxu0 0.0
    %1552 = vmatpush1.msra.mxu0 0.0
    %1553 = vmatprep.subr.mxu0 0.0
    %1554 = vmatpush1.msra.mxu0 0.0
    %1555 = vmatprep.subr.mxu0 0.0
    %1556 = vmatpush1.msra.mxu0 0.0
    %1557 = vmatprep.subr.mxu0 0.0
    %1558 = vmatpush1.msra.mxu0 0.0
    %1559 = vmatprep.mubr.f32.mxu0 0.0
    %1560 = vmatmul.mubr.f32.gmra.mrb[0].mxu0 %v1484
    %v1561 = vpop.f32.mrb[0].mxu0
    %v1562 = vadd.f32 0.0, %v1561
    %v1563 = vpop.f32.mrb[0].mxu0
    %1564 = vmatprep.mubr.f32.mxu0 0.0
    %1565 = vmatmul.mubr.f32.gmra.mrb[0].mxu0 %v1487
    %v1566 = vpop.f32.mrb[0].mxu0
    %v1567 = vadd.f32 0.0, %v1566
    %v1568 = vpop.f32.mrb[0].mxu0
    %1569 = vmatprep.mubr.f32.mxu0 0.0
    %1570 = vmatmul.mubr.f32.gmra.mrb[0].mxu0 %v1490
    %v1571 = vpop.f32.mrb[0].mxu0
    %v1572 = vadd.f32 0.0, %v1571
    %v1573 = vpop.f32.mrb[0].mxu0
    %1574 = vmatprep.mubr.f32.mxu0 0.0
    %1575 = vmatmul.mubr.f32.gmra.mrb[0].mxu0 %v1493
    %v1576 = vpop.f32.mrb[0].mxu0
    %v1577 = vadd.f32 0.0, %v1576
    %v1578 = vpop.f32.mrb[0].mxu0
    %1579 = vdwg.mxu0
    %v1581 = vsel %vm218, %v1367, 0
    %v1584 = vsel %vm218, %v1368, 0
    %v1587 = vsel %vm218, %v1369, 0
    %v1590 = vsel %vm218, %v1370, 0
    %1592 = vmatprep.subr.mxu0 0.0
    %1593 = vmatpush1.msra.mxu0 %v1474
    %1594 = vmatprep.subr.mxu0 0.0
    %1595 = vmatpush1.msra.mxu0 %v1475
    %1596 = vmatprep.subr.mxu0 0.0
    %1597 = vmatpush1.msra.mxu0 %v1476
    %1598 = vmatprep.subr.mxu0 0.0
    %1599 = vmatpush1.msra.mxu0 %v1477
    %1600 = vmatprep.subr.mxu0 0.0
    %1601 = vmatpush1.msra.mxu0 0.0
    %1602 = vmatprep.subr.mxu0 0.0
    %1603 = vmatpush1.msra.mxu0 0.0
    %1604 = vmatprep.subr.mxu0 0.0
    %1605 = vmatpush1.msra.mxu0 0.0
    %1606 = vmatprep.subr.mxu0 0.0
    %1607 = vmatpush1.msra.mxu0 0.0
    %1608 = vmatprep.subr.mxu0 0.0
    %1609 = vmatpush1.msra.mxu0 0.0
    %1610 = vmatprep.subr.mxu0 0.0
    %1611 = vmatpush1.msra.mxu0 0.0
    %1612 = vmatprep.subr.mxu0 0.0
    %1613 = vmatpush1.msra.mxu0 0.0
    %1614 = vmatprep.subr.mxu0 0.0
    %1615 = vmatpush1.msra.mxu0 0.0
    %1616 = vmatprep.subr.mxu0 0.0
    %1617 = vmatpush1.msra.mxu0 0.0
    %1618 = vmatprep.subr.mxu0 0.0
    %1619 = vmatpush1.msra.mxu0 0.0
    %1620 = vmatprep.subr.mxu0 0.0
    %1621 = vmatpush1.msra.mxu0 0.0
    %1622 = vmatprep.subr.mxu0 0.0
    %1623 = vmatpush1.msra.mxu0 0.0
    %1624 = vmatprep.subr.mxu0 0.0
    %1625 = vmatpush1.msra.mxu0 0.0
    %1626 = vmatprep.subr.mxu0 0.0
    %1627 = vmatpush1.msra.mxu0 0.0
    %1628 = vmatprep.subr.mxu0 0.0
    %1629 = vmatpush1.msra.mxu0 0.0
    %1630 = vmatprep.subr.mxu0 0.0
    %1631 = vmatpush1.msra.mxu0 0.0
    %1632 = vmatprep.subr.mxu0 0.0
    %1633 = vmatpush1.msra.mxu0 0.0
    %1634 = vmatprep.subr.mxu0 0.0
    %1635 = vmatpush1.msra.mxu0 0.0
    %1636 = vmatprep.subr.mxu0 0.0
    %1637 = vmatpush1.msra.mxu0 0.0
    %1638 = vmatprep.subr.mxu0 0.0
    %1639 = vmatpush1.msra.mxu0 0.0
    %1640 = vmatprep.subr.mxu0 0.0
    %1641 = vmatpush1.msra.mxu0 0.0
    %1642 = vmatprep.subr.mxu0 0.0
    %1643 = vmatpush1.msra.mxu0 0.0
    %1644 = vmatprep.subr.mxu0 0.0
    %1645 = vmatpush1.msra.mxu0 0.0
    %1646 = vmatprep.subr.mxu0 0.0
    %1647 = vmatpush1.msra.mxu0 0.0
    %1648 = vmatprep.subr.mxu0 0.0
    %1649 = vmatpush1.msra.mxu0 0.0
    %1650 = vmatprep.subr.mxu0 0.0
    %1651 = vmatpush1.msra.mxu0 0.0
    %1652 = vmatprep.subr.mxu0 0.0
    %1653 = vmatpush1.msra.mxu0 0.0
    %1654 = vmatprep.subr.mxu0 0.0
    %1655 = vmatpush1.msra.mxu0 0.0
    %1656 = vmatprep.mubr.f32.mxu0 0.0
    %1657 = vmatmul.mubr.f32.gmra.mrb[0].mxu0 %v1581
    %v1658 = vpop.f32.mrb[0].mxu0
    %v1659 = vadd.f32 %v1562, %v1658
    %v1660 = vpop.f32.mrb[0].mxu0
    %1661 = vmatprep.mubr.f32.mxu0 0.0
    %1662 = vmatmul.mubr.f32.gmra.mrb[0].mxu0 %v1584
    %v1663 = vpop.f32.mrb[0].mxu0
    %v1664 = vadd.f32 %v1567, %v1663
    %v1665 = vpop.f32.mrb[0].mxu0
    %1666 = vmatprep.mubr.f32.mxu0 0.0
    %1667 = vmatmul.mubr.f32.gmra.mrb[0].mxu0 %v1587
    %v1668 = vpop.f32.mrb[0].mxu0
    %v1669 = vadd.f32 %v1572, %v1668
    %v1670 = vpop.f32.mrb[0].mxu0
    %1671 = vmatprep.mubr.f32.mxu0 0.0
    %1672 = vmatmul.mubr.f32.gmra.mrb[0].mxu0 %v1590
    %v1673 = vpop.f32.mrb[0].mxu0
    %v1674 = vadd.f32 %v1577, %v1673
    %v1675 = vpop.f32.mrb[0].mxu0
    %1676 = vdwg.mxu0
    %s1677 = scalar_lea.vmem %s6, 2
    %v1678 = vld [vmem:[%s1677] sm:$0x1]
    %v1680 = vlaneseq
    %v1681 = vshrl.u32 %v1680, 7
    %v1682 = vsub.s32 0, %v1681
    %v1683 = vrot.slane %v1678, %v1682
    %v1685 = vadd.f32 %v1659, %v1683
    %v1686 = vadd.f32 %v1664, %v1683
    %v1687 = vadd.f32 %v1669, %v1683
    %v1688 = vadd.f32 %v1674, %v1683
    %v1689 = vtanh.pop %v1685
    %v1690 = vtanh.pop %v1686
    %v1691 = vtanh.pop %v1687
    %v1692 = vtanh.pop %v1688
    %v1693 = vsub.f32 0.0, %v1685
    %v1694 = vsub.f32 0.0, %v1686
    %v1695 = vsub.f32 0.0, %v1687
    %v1696 = vsub.f32 0.0, %v1688
    %v1697 = vmul.f32 %v1693, 1.442695
    %v1698 = vpow.pop %v1697
    %v1699 = vmul.f32 %v1694, 1.442695
    %v1700 = vpow.pop %v1699
    %v1701 = vmul.f32 %v1695, 1.442695
    %v1702 = vpow.pop %v1701
    %v1703 = vmul.f32 %v1696, 1.442695
    %v1704 = vpow.pop %v1703
    %v1705 = vadd.f32 %v1698, 1.0
    %v1706 = vadd.f32 %v1700, 1.0
    %v1707 = vadd.f32 %v1702, 1.0
    %v1708 = vadd.f32 %v1704, 1.0
    %v1709 = vrcp.pop %v1705
    %v1710 = vrcp.pop %v1706
    %v1711 = vrcp.pop %v1707
    %v1712 = vrcp.pop %v1708
    %1717 = vrot.lane.b32.xlu0 %v1709, 96
    %v1718 = vpop.permute.xlu0 %1717
    %1719 = vrot.lane.b32.xlu0 %v1710, 96
    %v1720 = vpop.permute.xlu0 %1719
    %1721 = vrot.lane.b32.xlu0 %v1711, 96
    %v1722 = vpop.permute.xlu0 %1721
    %1723 = vrot.lane.b32.xlu0 %v1712, 96
    %v1724 = vpop.permute.xlu0 %1723
    %v1729 = vmul.f32 %v1689, %v1718
    %v1730 = vmul.f32 %v1690, %v1720
    %v1731 = vmul.f32 %v1691, %v1722
    %v1732 = vmul.f32 %v1692, %v1724
    %s1733 = scalar_lea.vmem %s7, 64
    %v1734 = vld [vmem:[%s1733] sm:$0xff]
    %v1735 = vld [vmem:[%s1733 + $0x8] sm:$0xff]
    %v1736 = vld [vmem:[%s1733 + $0x10] sm:$0xff]
    %v1737 = vld [vmem:[%s1733 + $0x18] sm:$0xff]
    %v1739 = vsel %vm218, %v1729, 0
    %v1742 = vsel %vm218, %v1730, 0
    %v1745 = vsel %vm218, %v1731, 0
    %v1748 = vsel %vm218, %v1732, 0
    %1750 = vmatprep.subr.mxu0 0.0
    %1751 = vmatpush1.msra.mxu0 %v1734
    %1752 = vmatprep.subr.mxu0 0.0
    %1753 = vmatpush1.msra.mxu0 %v1735
    %1754 = vmatprep.subr.mxu0 0.0
    %1755 = vmatpush1.msra.mxu0 %v1736
    %1756 = vmatprep.subr.mxu0 0.0
    %1757 = vmatpush1.msra.mxu0 %v1737
    %1758 = vmatprep.subr.mxu0 0.0
    %1759 = vmatpush1.msra.mxu0 0.0
    %1760 = vmatprep.subr.mxu0 0.0
    %1761 = vmatpush1.msra.mxu0 0.0
    %1762 = vmatprep.subr.mxu0 0.0
    %1763 = vmatpush1.msra.mxu0 0.0
    %1764 = vmatprep.subr.mxu0 0.0
    %1765 = vmatpush1.msra.mxu0 0.0
    %1766 = vmatprep.subr.mxu0 0.0
    %1767 = vmatpush1.msra.mxu0 0.0
    %1768 = vmatprep.subr.mxu0 0.0
    %1769 = vmatpush1.msra.mxu0 0.0
    %1770 = vmatprep.subr.mxu0 0.0
    %1771 = vmatpush1.msra.mxu0 0.0
    %1772 = vmatprep.subr.mxu0 0.0
    %1773 = vmatpush1.msra.mxu0 0.0
    %1774 = vmatprep.subr.mxu0 0.0
    %1775 = vmatpush1.msra.mxu0 0.0
    %1776 = vmatprep.subr.mxu0 0.0
    %1777 = vmatpush1.msra.mxu0 0.0
    %1778 = vmatprep.subr.mxu0 0.0
    %1779 = vmatpush1.msra.mxu0 0.0
    %1780 = vmatprep.subr.mxu0 0.0
    %1781 = vmatpush1.msra.mxu0 0.0
    %1782 = vmatprep.subr.mxu0 0.0
    %1783 = vmatpush1.msra.mxu0 0.0
    %1784 = vmatprep.subr.mxu0 0.0
    %1785 = vmatpush1.msra.mxu0 0.0
    %1786 = vmatprep.subr.mxu0 0.0
    %1787 = vmatpush1.msra.mxu0 0.0
    %1788 = vmatprep.subr.mxu0 0.0
    %1789 = vmatpush1.msra.mxu0 0.0
    %1790 = vmatprep.subr.mxu0 0.0
    %1791 = vmatpush1.msra.mxu0 0.0
    %1792 = vmatprep.subr.mxu0 0.0
    %1793 = vmatpush1.msra.mxu0 0.0
    %1794 = vmatprep.subr.mxu0 0.0
    %1795 = vmatpush1.msra.mxu0 0.0
    %1796 = vmatprep.subr.mxu0 0.0
    %1797 = vmatpush1.msra.mxu0 0.0
    %1798 = vmatprep.subr.mxu0 0.0
    %1799 = vmatpush1.msra.mxu0 0.0
    %1800 = vmatprep.subr.mxu0 0.0
    %1801 = vmatpush1.msra.mxu0 0.0
    %1802 = vmatprep.subr.mxu0 0.0
    %1803 = vmatpush1.msra.mxu0 0.0
    %1804 = vmatprep.subr.mxu0 0.0
    %1805 = vmatpush1.msra.mxu0 0.0
    %1806 = vmatprep.subr.mxu0 0.0
    %1807 = vmatpush1.msra.mxu0 0.0
    %1808 = vmatprep.subr.mxu0 0.0
    %1809 = vmatpush1.msra.mxu0 0.0
    %1810 = vmatprep.subr.mxu0 0.0
    %1811 = vmatpush1.msra.mxu0 0.0
    %1812 = vmatprep.subr.mxu0 0.0
    %1813 = vmatpush1.msra.mxu0 0.0
    %1814 = vmatprep.mubr.f32.mxu0 0.0
    %1815 = vmatmul.mubr.f32.gmra.mrb[0].mxu0 %v1739
    %v1816 = vpop.f32.mrb[0].mxu0
    %v1817 = vadd.f32 0.0, %v1816
    %v1818 = vpop.f32.mrb[0].mxu0
    %1819 = vmatprep.mubr.f32.mxu0 0.0
    %1820 = vmatmul.mubr.f32.gmra.mrb[0].mxu0 %v1742
    %v1821 = vpop.f32.mrb[0].mxu0
    %v1822 = vadd.f32 0.0, %v1821
    %v1823 = vpop.f32.mrb[0].mxu0
    %1824 = vmatprep.mubr.f32.mxu0 0.0
    %1825 = vmatmul.mubr.f32.gmra.mrb[0].mxu0 %v1745
    %v1826 = vpop.f32.mrb[0].mxu0
    %v1827 = vadd.f32 0.0, %v1826
    %v1828 = vpop.f32.mrb[0].mxu0
    %1829 = vmatprep.mubr.f32.mxu0 0.0
    %1830 = vmatmul.mubr.f32.gmra.mrb[0].mxu0 %v1748
    %v1831 = vpop.f32.mrb[0].mxu0
    %v1832 = vadd.f32 0.0, %v1831
    %v1833 = vpop.f32.mrb[0].mxu0
    %1834 = vdwg.mxu0
    %v1835 = vadd.f32 %v1261, %v1817
    %v1836 = vadd.f32 %v1262, %v1822
    %v1837 = vadd.f32 %v1263, %v1827
    %v1838 = vadd.f32 %v1264, %v1832
    %s1839 = scalar_lea.vmem %s8, 2
    %v1840 = vld [vmem:[%s1839] sm:$0x1]
    %v1842 = vlaneseq
    %v1843 = vshrl.u32 %v1842, 7
    %v1844 = vsub.s32 0, %v1843
    %v1845 = vrot.slane %v1840, %v1844
    %v1847 = vadd.f32 %v1835, %v1845
    %v1848 = vadd.f32 %v1836, %v1845
    %v1849 = vadd.f32 %v1837, %v1845
    %v1850 = vadd.f32 %v1838, %v1845
    %s1851 = scalar_lea.vmem %s9, 64
    %v1852 = vld [vmem:[%s1851] sm:$0xff]
    %v1853 = vld [vmem:[%s1851 + $0x8] sm:$0xff]
    %v1854 = vld [vmem:[%s1851 + $0x10] sm:$0xff]
    %v1855 = vld [vmem:[%s1851 + $0x18] sm:$0xff]
    %1856 = vmatprep.subr.mxu0 0.0
    %1857 = vmatpush1.msra.mxu0 %v1852
    %1858 = vmatprep.subr.mxu0 0.0
    %1859 = vmatpush1.msra.mxu0 %v1853
    %1860 = vmatprep.subr.mxu0 0.0
    %1861 = vmatpush1.msra.mxu0 %v1854
    %1862 = vmatprep.subr.mxu0 0.0
    %1863 = vmatpush1.msra.mxu0 %v1855
    %1864 = vmatprep.subr.mxu0 0.0
    %1865 = vmatpush1.msra.mxu0 0.0
    %1866 = vmatprep.subr.mxu0 0.0
    %1867 = vmatpush1.msra.mxu0 0.0
    %1868 = vmatprep.subr.mxu0 0.0
    %1869 = vmatpush1.msra.mxu0 0.0
    %1870 = vmatprep.subr.mxu0 0.0
    %1871 = vmatpush1.msra.mxu0 0.0
    %1872 = vmatprep.subr.mxu0 0.0
    %1873 = vmatpush1.msra.mxu0 0.0
    %1874 = vmatprep.subr.mxu0 0.0
    %1875 = vmatpush1.msra.mxu0 0.0
    %1876 = vmatprep.subr.mxu0 0.0
    %1877 = vmatpush1.msra.mxu0 0.0
    %1878 = vmatprep.subr.mxu0 0.0
    %1879 = vmatpush1.msra.mxu0 0.0
    %1880 = vmatprep.subr.mxu0 0.0
    %1881 = vmatpush1.msra.mxu0 0.0
    %1882 = vmatprep.subr.mxu0 0.0
    %1883 = vmatpush1.msra.mxu0 0.0
    %1884 = vmatprep.subr.mxu0 0.0
    %1885 = vmatpush1.msra.mxu0 0.0
    %1886 = vmatprep.subr.mxu0 0.0
    %1887 = vmatpush1.msra.mxu0 0.0
    %1888 = vmatprep.subr.mxu0 0.0
    %1889 = vmatpush1.msra.mxu0 0.0
    %1890 = vmatprep.subr.mxu0 0.0
    %1891 = vmatpush1.msra.mxu0 0.0
    %1892 = vmatprep.subr.mxu0 0.0
    %1893 = vmatpush1.msra.mxu0 0.0
    %1894 = vmatprep.subr.mxu0 0.0
    %1895 = vmatpush1.msra.mxu0 0.0
    %1896 = vmatprep.subr.mxu0 0.0
    %1897 = vmatpush1.msra.mxu0 0.0
    %1898 = vmatprep.subr.mxu0 0.0
    %1899 = vmatpush1.msra.mxu0 0.0
    %1900 = vmatprep.subr.mxu0 0.0
    %1901 = vmatpush1.msra.mxu0 0.0
    %1902 = vmatprep.subr.mxu0 0.0
    %1903 = vmatpush1.msra.mxu0 0.0
    %1904 = vmatprep.subr.mxu0 0.0
    %1905 = vmatpush1.msra.mxu0 0.0
    %1906 = vmatprep.subr.mxu0 0.0
    %1907 = vmatpush1.msra.mxu0 0.0
    %1908 = vmatprep.subr.mxu0 0.0
    %1909 = vmatpush1.msra.mxu0 0.0
    %1910 = vmatprep.subr.mxu0 0.0
    %1911 = vmatpush1.msra.mxu0 0.0
    %1912 = vmatprep.subr.mxu0 0.0
    %1913 = vmatpush1.msra.mxu0 0.0
    %1914 = vmatprep.subr.mxu0 0.0
    %1915 = vmatpush1.msra.mxu0 0.0
    %1916 = vmatprep.subr.mxu0 0.0
    %1917 = vmatpush1.msra.mxu0 0.0
    %1918 = vmatprep.subr.mxu0 0.0
    %1919 = vmatpush1.msra.mxu0 0.0
    %1920 = vmatprep.mubr.f32.mxu0 0.0
    %1921 = vmatmul.mubr.f32.gmra.mrb[0].mxu0 %v1739
    %v1922 = vpop.f32.mrb[0].mxu0
    %v1923 = vadd.f32 0.0, %v1922
    %v1924 = vpop.f32.mrb[0].mxu0
    %1925 = vmatprep.mubr.f32.mxu0 0.0
    %1926 = vmatmul.mubr.f32.gmra.mrb[0].mxu0 %v1742
    %v1927 = vpop.f32.mrb[0].mxu0
    %v1928 = vadd.f32 0.0, %v1927
    %v1929 = vpop.f32.mrb[0].mxu0
    %1930 = vmatprep.mubr.f32.mxu0 0.0
    %1931 = vmatmul.mubr.f32.gmra.mrb[0].mxu0 %v1745
    %v1932 = vpop.f32.mrb[0].mxu0
    %v1933 = vadd.f32 0.0, %v1932
    %v1934 = vpop.f32.mrb[0].mxu0
    %1935 = vmatprep.mubr.f32.mxu0 0.0
    %1936 = vmatmul.mubr.f32.gmra.mrb[0].mxu0 %v1748
    %v1937 = vpop.f32.mrb[0].mxu0
    %v1938 = vadd.f32 0.0, %v1937
    %v1939 = vpop.f32.mrb[0].mxu0
    %1940 = vdwg.mxu0
    %v1941 = vadd.f32 %v1367, %v1923
    %v1942 = vadd.f32 %v1368, %v1928
    %v1943 = vadd.f32 %v1369, %v1933
    %v1944 = vadd.f32 %v1370, %v1938
    %s1945 = scalar_lea.vmem %s10, 2
    %v1946 = vld [vmem:[%s1945] sm:$0x1]
    %v1948 = vlaneseq
    %v1949 = vshrl.u32 %v1948, 7
    %v1950 = vsub.s32 0, %v1949
    %v1951 = vrot.slane %v1946, %v1950
    %v1953 = vadd.f32 %v1941, %v1951
    %v1954 = vadd.f32 %v1942, %v1951
    %v1955 = vadd.f32 %v1943, %v1951
    %v1956 = vadd.f32 %v1944, %v1951
    %s1957 = scalar_lea.vmem %s1, 96
    %v1958 = vld [vmem:[%s1957] sm:$0xff]
    %v1959 = vld [vmem:[%s1957 + $0x8] sm:$0xff]
    %v1960 = vld [vmem:[%s1957 + $0x10] sm:$0xff]
    %v1961 = vld [vmem:[%s1957 + $0x18] sm:$0xff]
    %v1963 = vsel %vm218, %v1958, 0
    %v1966 = vsel %vm218, %v1959, 0
    %v1969 = vsel %vm218, %v1960, 0
    %v1972 = vsel %vm218, %v1961, 0
    %1974 = vmatprep.subr.mxu0 0.0
    %1975 = vmatpush1.msra.mxu0 %v1953
    %1976 = vmatprep.subr.mxu0 0.0
    %1977 = vmatpush1.msra.mxu0 %v1954
    %1978 = vmatprep.subr.mxu0 0.0
    %1979 = vmatpush1.msra.mxu0 %v1955
    %1980 = vmatprep.subr.mxu0 0.0
    %1981 = vmatpush1.msra.mxu0 %v1956
    %1982 = vmatprep.subr.mxu0 0.0
    %1983 = vmatpush1.msra.mxu0 0.0
    %1984 = vmatprep.subr.mxu0 0.0
    %1985 = vmatpush1.msra.mxu0 0.0
    %1986 = vmatprep.subr.mxu0 0.0
    %1987 = vmatpush1.msra.mxu0 0.0
    %1988 = vmatprep.subr.mxu0 0.0
    %1989 = vmatpush1.msra.mxu0 0.0
    %1990 = vmatprep.subr.mxu0 0.0
    %1991 = vmatpush1.msra.mxu0 0.0
    %1992 = vmatprep.subr.mxu0 0.0
    %1993 = vmatpush1.msra.mxu0 0.0
    %1994 = vmatprep.subr.mxu0 0.0
    %1995 = vmatpush1.msra.mxu0 0.0
    %1996 = vmatprep.subr.mxu0 0.0
    %1997 = vmatpush1.msra.mxu0 0.0
    %1998 = vmatprep.subr.mxu0 0.0
    %1999 = vmatpush1.msra.mxu0 0.0
    %2000 = vmatprep.subr.mxu0 0.0
    %2001 = vmatpush1.msra.mxu0 0.0
    %2002 = vmatprep.subr.mxu0 0.0
    %2003 = vmatpush1.msra.mxu0 0.0
    %2004 = vmatprep.subr.mxu0 0.0
    %2005 = vmatpush1.msra.mxu0 0.0
    %2006 = vmatprep.subr.mxu0 0.0
    %2007 = vmatpush1.msra.mxu0 0.0
    %2008 = vmatprep.subr.mxu0 0.0
    %2009 = vmatpush1.msra.mxu0 0.0
    %2010 = vmatprep.subr.mxu0 0.0
    %2011 = vmatpush1.msra.mxu0 0.0
    %2012 = vmatprep.subr.mxu0 0.0
    %2013 = vmatpush1.msra.mxu0 0.0
    %2014 = vmatprep.subr.mxu0 0.0
    %2015 = vmatpush1.msra.mxu0 0.0
    %2016 = vmatprep.subr.mxu0 0.0
    %2017 = vmatpush1.msra.mxu0 0.0
    %2018 = vmatprep.subr.mxu0 0.0
    %2019 = vmatpush1.msra.mxu0 0.0
    %2020 = vmatprep.subr.mxu0 0.0
    %2021 = vmatpush1.msra.mxu0 0.0
    %2022 = vmatprep.subr.mxu0 0.0
    %2023 = vmatpush1.msra.mxu0 0.0
    %2024 = vmatprep.subr.mxu0 0.0
    %2025 = vmatpush1.msra.mxu0 0.0
    %2026 = vmatprep.subr.mxu0 0.0
    %2027 = vmatpush1.msra.mxu0 0.0
    %2028 = vmatprep.subr.mxu0 0.0
    %2029 = vmatpush1.msra.mxu0 0.0
    %2030 = vmatprep.subr.mxu0 0.0
    %2031 = vmatpush1.msra.mxu0 0.0
    %2032 = vmatprep.subr.mxu0 0.0
    %2033 = vmatpush1.msra.mxu0 0.0
    %2034 = vmatprep.subr.mxu0 0.0
    %2035 = vmatpush1.msra.mxu0 0.0
    %2036 = vmatprep.subr.mxu0 0.0
    %2037 = vmatpush1.msra.mxu0 0.0
    %2038 = vmatprep.mubr.f32.mxu0 0.0
    %2039 = vmatmul.mubr.f32.gmra.mrb[0].mxu0 %v1963
    %v2040 = vpop.f32.mrb[0].mxu0
    %v2041 = vadd.f32 0.0, %v2040
    %v2042 = vpop.f32.mrb[0].mxu0
    %2043 = vmatprep.mubr.f32.mxu0 0.0
    %2044 = vmatmul.mubr.f32.gmra.mrb[0].mxu0 %v1966
    %v2045 = vpop.f32.mrb[0].mxu0
    %v2046 = vadd.f32 0.0, %v2045
    %v2047 = vpop.f32.mrb[0].mxu0
    %2048 = vmatprep.mubr.f32.mxu0 0.0
    %2049 = vmatmul.mubr.f32.gmra.mrb[0].mxu0 %v1969
    %v2050 = vpop.f32.mrb[0].mxu0
    %v2051 = vadd.f32 0.0, %v2050
    %v2052 = vpop.f32.mrb[0].mxu0
    %2053 = vmatprep.mubr.f32.mxu0 0.0
    %2054 = vmatmul.mubr.f32.gmra.mrb[0].mxu0 %v1972
    %v2055 = vpop.f32.mrb[0].mxu0
    %v2056 = vadd.f32 0.0, %v2055
    %v2057 = vpop.f32.mrb[0].mxu0
    %2058 = vdwg.mxu0
    %s2059 = scalar_lea.vmem %s4, 96
    %v2060 = vld [vmem:[%s2059] sm:$0xff]
    %v2061 = vld [vmem:[%s2059 + $0x8] sm:$0xff]
    %v2062 = vld [vmem:[%s2059 + $0x10] sm:$0xff]
    %v2063 = vld [vmem:[%s2059 + $0x18] sm:$0xff]
    %s2064 = scalar_lea.vmem %s5, 96
    %v2065 = vld [vmem:[%s2064] sm:$0xff]
    %v2066 = vld [vmem:[%s2064 + $0x8] sm:$0xff]
    %v2067 = vld [vmem:[%s2064 + $0x10] sm:$0xff]
    %v2068 = vld [vmem:[%s2064 + $0x18] sm:$0xff]
    %v2070 = vsel %vm218, %v2041, 0
    %v2073 = vsel %vm218, %v2046, 0
    %v2076 = vsel %vm218, %v2051, 0
    %v2079 = vsel %vm218, %v2056, 0
    %2081 = vmatprep.subr.mxu0 0.0
    %2082 = vmatpush1.msra.mxu0 %v2065
    %2083 = vmatprep.subr.mxu0 0.0
    %2084 = vmatpush1.msra.mxu0 %v2066
    %2085 = vmatprep.subr.mxu0 0.0
    %2086 = vmatpush1.msra.mxu0 %v2067
    %2087 = vmatprep.subr.mxu0 0.0
    %2088 = vmatpush1.msra.mxu0 %v2068
    %2089 = vmatprep.subr.mxu0 0.0
    %2090 = vmatpush1.msra.mxu0 0.0
    %2091 = vmatprep.subr.mxu0 0.0
    %2092 = vmatpush1.msra.mxu0 0.0
    %2093 = vmatprep.subr.mxu0 0.0
    %2094 = vmatpush1.msra.mxu0 0.0
    %2095 = vmatprep.subr.mxu0 0.0
    %2096 = vmatpush1.msra.mxu0 0.0
    %2097 = vmatprep.subr.mxu0 0.0
    %2098 = vmatpush1.msra.mxu0 0.0
    %2099 = vmatprep.subr.mxu0 0.0
    %2100 = vmatpush1.msra.mxu0 0.0
    %2101 = vmatprep.subr.mxu0 0.0
    %2102 = vmatpush1.msra.mxu0 0.0
    %2103 = vmatprep.subr.mxu0 0.0
    %2104 = vmatpush1.msra.mxu0 0.0
    %2105 = vmatprep.subr.mxu0 0.0
    %2106 = vmatpush1.msra.mxu0 0.0
    %2107 = vmatprep.subr.mxu0 0.0
    %2108 = vmatpush1.msra.mxu0 0.0
    %2109 = vmatprep.subr.mxu0 0.0
    %2110 = vmatpush1.msra.mxu0 0.0
    %2111 = vmatprep.subr.mxu0 0.0
    %2112 = vmatpush1.msra.mxu0 0.0
    %2113 = vmatprep.subr.mxu0 0.0
    %2114 = vmatpush1.msra.mxu0 0.0
    %2115 = vmatprep.subr.mxu0 0.0
    %2116 = vmatpush1.msra.mxu0 0.0
    %2117 = vmatprep.subr.mxu0 0.0
    %2118 = vmatpush1.msra.mxu0 0.0
    %2119 = vmatprep.subr.mxu0 0.0
    %2120 = vmatpush1.msra.mxu0 0.0
    %2121 = vmatprep.subr.mxu0 0.0
    %2122 = vmatpush1.msra.mxu0 0.0
    %2123 = vmatprep.subr.mxu0 0.0
    %2124 = vmatpush1.msra.mxu0 0.0
    %2125 = vmatprep.subr.mxu0 0.0
    %2126 = vmatpush1.msra.mxu0 0.0
    %2127 = vmatprep.subr.mxu0 0.0
    %2128 = vmatpush1.msra.mxu0 0.0
    %2129 = vmatprep.subr.mxu0 0.0
    %2130 = vmatpush1.msra.mxu0 0.0
    %2131 = vmatprep.subr.mxu0 0.0
    %2132 = vmatpush1.msra.mxu0 0.0
    %2133 = vmatprep.subr.mxu0 0.0
    %2134 = vmatpush1.msra.mxu0 0.0
    %2135 = vmatprep.subr.mxu0 0.0
    %2136 = vmatpush1.msra.mxu0 0.0
    %2137 = vmatprep.subr.mxu0 0.0
    %2138 = vmatpush1.msra.mxu0 0.0
    %2139 = vmatprep.subr.mxu0 0.0
    %2140 = vmatpush1.msra.mxu0 0.0
    %2141 = vmatprep.subr.mxu0 0.0
    %2142 = vmatpush1.msra.mxu0 0.0
    %2143 = vmatprep.subr.mxu0 0.0
    %2144 = vmatpush1.msra.mxu0 0.0
    %2145 = vmatprep.mubr.f32.mxu0 0.0
    %2146 = vmatmul.mubr.f32.gmra.mrb[0].mxu0 %v2070
    %v2147 = vpop.f32.mrb[0].mxu0
    %v2148 = vadd.f32 0.0, %v2147
    %v2149 = vpop.f32.mrb[0].mxu0
    %2150 = vmatprep.mubr.f32.mxu0 0.0
    %2151 = vmatmul.mubr.f32.gmra.mrb[0].mxu0 %v2073
    %v2152 = vpop.f32.mrb[0].mxu0
    %v2153 = vadd.f32 0.0, %v2152
    %v2154 = vpop.f32.mrb[0].mxu0
    %2155 = vmatprep.mubr.f32.mxu0 0.0
    %2156 = vmatmul.mubr.f32.gmra.mrb[0].mxu0 %v2076
    %v2157 = vpop.f32.mrb[0].mxu0
    %v2158 = vadd.f32 0.0, %v2157
    %v2159 = vpop.f32.mrb[0].mxu0
    %2160 = vmatprep.mubr.f32.mxu0 0.0
    %2161 = vmatmul.mubr.f32.gmra.mrb[0].mxu0 %v2079
    %v2162 = vpop.f32.mrb[0].mxu0
    %v2163 = vadd.f32 0.0, %v2162
    %v2164 = vpop.f32.mrb[0].mxu0
    %2165 = vdwg.mxu0
    %v2167 = vsel %vm218, %v1953, 0
    %v2170 = vsel %vm218, %v1954, 0
    %v2173 = vsel %vm218, %v1955, 0
    %v2176 = vsel %vm218, %v1956, 0
    %2178 = vmatprep.subr.mxu0 0.0
    %2179 = vmatpush1.msra.mxu0 %v2060
    %2180 = vmatprep.subr.mxu0 0.0
    %2181 = vmatpush1.msra.mxu0 %v2061
    %2182 = vmatprep.subr.mxu0 0.0
    %2183 = vmatpush1.msra.mxu0 %v2062
    %2184 = vmatprep.subr.mxu0 0.0
    %2185 = vmatpush1.msra.mxu0 %v2063
    %2186 = vmatprep.subr.mxu0 0.0
    %2187 = vmatpush1.msra.mxu0 0.0
    %2188 = vmatprep.subr.mxu0 0.0
    %2189 = vmatpush1.msra.mxu0 0.0
    %2190 = vmatprep.subr.mxu0 0.0
    %2191 = vmatpush1.msra.mxu0 0.0
    %2192 = vmatprep.subr.mxu0 0.0
    %2193 = vmatpush1.msra.mxu0 0.0
    %2194 = vmatprep.subr.mxu0 0.0
    %2195 = vmatpush1.msra.mxu0 0.0
    %2196 = vmatprep.subr.mxu0 0.0
    %2197 = vmatpush1.msra.mxu0 0.0
    %2198 = vmatprep.subr.mxu0 0.0
    %2199 = vmatpush1.msra.mxu0 0.0
    %2200 = vmatprep.subr.mxu0 0.0
    %2201 = vmatpush1.msra.mxu0 0.0
    %2202 = vmatprep.subr.mxu0 0.0
    %2203 = vmatpush1.msra.mxu0 0.0
    %2204 = vmatprep.subr.mxu0 0.0
    %2205 = vmatpush1.msra.mxu0 0.0
    %2206 = vmatprep.subr.mxu0 0.0
    %2207 = vmatpush1.msra.mxu0 0.0
    %2208 = vmatprep.subr.mxu0 0.0
    %2209 = vmatpush1.msra.mxu0 0.0
    %2210 = vmatprep.subr.mxu0 0.0
    %2211 = vmatpush1.msra.mxu0 0.0
    %2212 = vmatprep.subr.mxu0 0.0
    %2213 = vmatpush1.msra.mxu0 0.0
    %2214 = vmatprep.subr.mxu0 0.0
    %2215 = vmatpush1.msra.mxu0 0.0
    %2216 = vmatprep.subr.mxu0 0.0
    %2217 = vmatpush1.msra.mxu0 0.0
    %2218 = vmatprep.subr.mxu0 0.0
    %2219 = vmatpush1.msra.mxu0 0.0
    %2220 = vmatprep.subr.mxu0 0.0
    %2221 = vmatpush1.msra.mxu0 0.0
    %2222 = vmatprep.subr.mxu0 0.0
    %2223 = vmatpush1.msra.mxu0 0.0
    %2224 = vmatprep.subr.mxu0 0.0
    %2225 = vmatpush1.msra.mxu0 0.0
    %2226 = vmatprep.subr.mxu0 0.0
    %2227 = vmatpush1.msra.mxu0 0.0
    %2228 = vmatprep.subr.mxu0 0.0
    %2229 = vmatpush1.msra.mxu0 0.0
    %2230 = vmatprep.subr.mxu0 0.0
    %2231 = vmatpush1.msra.mxu0 0.0
    %2232 = vmatprep.subr.mxu0 0.0
    %2233 = vmatpush1.msra.mxu0 0.0
    %2234 = vmatprep.subr.mxu0 0.0
    %2235 = vmatpush1.msra.mxu0 0.0
    %2236 = vmatprep.subr.mxu0 0.0
    %2237 = vmatpush1.msra.mxu0 0.0
    %2238 = vmatprep.subr.mxu0 0.0
    %2239 = vmatpush1.msra.mxu0 0.0
    %2240 = vmatprep.subr.mxu0 0.0
    %2241 = vmatpush1.msra.mxu0 0.0
    %2242 = vmatprep.mubr.f32.mxu0 0.0
    %2243 = vmatmul.mubr.f32.gmra.mrb[0].mxu0 %v2167
    %v2244 = vpop.f32.mrb[0].mxu0
    %v2245 = vadd.f32 %v2148, %v2244
    %v2246 = vpop.f32.mrb[0].mxu0
    %2247 = vmatprep.mubr.f32.mxu0 0.0
    %2248 = vmatmul.mubr.f32.gmra.mrb[0].mxu0 %v2170
    %v2249 = vpop.f32.mrb[0].mxu0
    %v2250 = vadd.f32 %v2153, %v2249
    %v2251 = vpop.f32.mrb[0].mxu0
    %2252 = vmatprep.mubr.f32.mxu0 0.0
    %2253 = vmatmul.mubr.f32.gmra.mrb[0].mxu0 %v2173
    %v2254 = vpop.f32.mrb[0].mxu0
    %v2255 = vadd.f32 %v2158, %v2254
    %v2256 = vpop.f32.mrb[0].mxu0
    %2257 = vmatprep.mubr.f32.mxu0 0.0
    %2258 = vmatmul.mubr.f32.gmra.mrb[0].mxu0 %v2176
    %v2259 = vpop.f32.mrb[0].mxu0
    %v2260 = vadd.f32 %v2163, %v2259
    %v2261 = vpop.f32.mrb[0].mxu0
    %2262 = vdwg.mxu0
    %s2263 = scalar_lea.vmem %s6, 3
    %v2264 = vld [vmem:[%s2263] sm:$0x1]
    %v2266 = vlaneseq
    %v2267 = vshrl.u32 %v2266, 7
    %v2268 = vsub.s32 0, %v2267
    %v2269 = vrot.slane %v2264, %v2268
    %v2271 = vadd.f32 %v2245, %v2269
    %v2272 = vadd.f32 %v2250, %v2269
    %v2273 = vadd.f32 %v2255, %v2269
    %v2274 = vadd.f32 %v2260, %v2269
    %v2275 = vtanh.pop %v2271
    %v2276 = vtanh.pop %v2272
    %v2277 = vtanh.pop %v2273
    %v2278 = vtanh.pop %v2274
    %v2279 = vsub.f32 0.0, %v2271
    %v2280 = vsub.f32 0.0, %v2272
    %v2281 = vsub.f32 0.0, %v2273
    %v2282 = vsub.f32 0.0, %v2274
    %v2283 = vmul.f32 %v2279, 1.442695
    %v2284 = vpow.pop %v2283
    %v2285 = vmul.f32 %v2280, 1.442695
    %v2286 = vpow.pop %v2285
    %v2287 = vmul.f32 %v2281, 1.442695
    %v2288 = vpow.pop %v2287
    %v2289 = vmul.f32 %v2282, 1.442695
    %v2290 = vpow.pop %v2289
    %v2291 = vadd.f32 %v2284, 1.0
    %v2292 = vadd.f32 %v2286, 1.0
    %v2293 = vadd.f32 %v2288, 1.0
    %v2294 = vadd.f32 %v2290, 1.0
    %v2295 = vrcp.pop %v2291
    %v2296 = vrcp.pop %v2292
    %v2297 = vrcp.pop %v2293
    %v2298 = vrcp.pop %v2294
    %2303 = vrot.lane.b32.xlu0 %v2295, 96
    %v2304 = vpop.permute.xlu0 %2303
    %2305 = vrot.lane.b32.xlu0 %v2296, 96
    %v2306 = vpop.permute.xlu0 %2305
    %2307 = vrot.lane.b32.xlu0 %v2297, 96
    %v2308 = vpop.permute.xlu0 %2307
    %2309 = vrot.lane.b32.xlu0 %v2298, 96
    %v2310 = vpop.permute.xlu0 %2309
    %v2315 = vmul.f32 %v2275, %v2304
    %v2316 = vmul.f32 %v2276, %v2306
    %v2317 = vmul.f32 %v2277, %v2308
    %v2318 = vmul.f32 %v2278, %v2310
    %s2319 = scalar_lea.vmem %s7, 96
    %v2320 = vld [vmem:[%s2319] sm:$0xff]
    %v2321 = vld [vmem:[%s2319 + $0x8] sm:$0xff]
    %v2322 = vld [vmem:[%s2319 + $0x10] sm:$0xff]
    %v2323 = vld [vmem:[%s2319 + $0x18] sm:$0xff]
    %v2325 = vsel %vm218, %v2315, 0
    %v2328 = vsel %vm218, %v2316, 0
    %v2331 = vsel %vm218, %v2317, 0
    %v2334 = vsel %vm218, %v2318, 0
    %2336 = vmatprep.subr.mxu0 0.0
    %2337 = vmatpush1.msra.mxu0 %v2320
    %2338 = vmatprep.subr.mxu0 0.0
    %2339 = vmatpush1.msra.mxu0 %v2321
    %2340 = vmatprep.subr.mxu0 0.0
    %2341 = vmatpush1.msra.mxu0 %v2322
    %2342 = vmatprep.subr.mxu0 0.0
    %2343 = vmatpush1.msra.mxu0 %v2323
    %2344 = vmatprep.subr.mxu0 0.0
    %2345 = vmatpush1.msra.mxu0 0.0
    %2346 = vmatprep.subr.mxu0 0.0
    %2347 = vmatpush1.msra.mxu0 0.0
    %2348 = vmatprep.subr.mxu0 0.0
    %2349 = vmatpush1.msra.mxu0 0.0
    %2350 = vmatprep.subr.mxu0 0.0
    %2351 = vmatpush1.msra.mxu0 0.0
    %2352 = vmatprep.subr.mxu0 0.0
    %2353 = vmatpush1.msra.mxu0 0.0
    %2354 = vmatprep.subr.mxu0 0.0
    %2355 = vmatpush1.msra.mxu0 0.0
    %2356 = vmatprep.subr.mxu0 0.0
    %2357 = vmatpush1.msra.mxu0 0.0
    %2358 = vmatprep.subr.mxu0 0.0
    %2359 = vmatpush1.msra.mxu0 0.0
    %2360 = vmatprep.subr.mxu0 0.0
    %2361 = vmatpush1.msra.mxu0 0.0
    %2362 = vmatprep.subr.mxu0 0.0
    %2363 = vmatpush1.msra.mxu0 0.0
    %2364 = vmatprep.subr.mxu0 0.0
    %2365 = vmatpush1.msra.mxu0 0.0
    %2366 = vmatprep.subr.mxu0 0.0
    %2367 = vmatpush1.msra.mxu0 0.0
    %2368 = vmatprep.subr.mxu0 0.0
    %2369 = vmatpush1.msra.mxu0 0.0
    %2370 = vmatprep.subr.mxu0 0.0
    %2371 = vmatpush1.msra.mxu0 0.0
    %2372 = vmatprep.subr.mxu0 0.0
    %2373 = vmatpush1.msra.mxu0 0.0
    %2374 = vmatprep.subr.mxu0 0.0
    %2375 = vmatpush1.msra.mxu0 0.0
    %2376 = vmatprep.subr.mxu0 0.0
    %2377 = vmatpush1.msra.mxu0 0.0
    %2378 = vmatprep.subr.mxu0 0.0
    %2379 = vmatpush1.msra.mxu0 0.0
    %2380 = vmatprep.subr.mxu0 0.0
    %2381 = vmatpush1.msra.mxu0 0.0
    %2382 = vmatprep.subr.mxu0 0.0
    %2383 = vmatpush1.msra.mxu0 0.0
    %2384 = vmatprep.subr.mxu0 0.0
    %2385 = vmatpush1.msra.mxu0 0.0
    %2386 = vmatprep.subr.mxu0 0.0
    %2387 = vmatpush1.msra.mxu0 0.0
    %2388 = vmatprep.subr.mxu0 0.0
    %2389 = vmatpush1.msra.mxu0 0.0
    %2390 = vmatprep.subr.mxu0 0.0
    %2391 = vmatpush1.msra.mxu0 0.0
    %2392 = vmatprep.subr.mxu0 0.0
    %2393 = vmatpush1.msra.mxu0 0.0
    %2394 = vmatprep.subr.mxu0 0.0
    %2395 = vmatpush1.msra.mxu0 0.0
    %2396 = vmatprep.subr.mxu0 0.0
    %2397 = vmatpush1.msra.mxu0 0.0
    %2398 = vmatprep.subr.mxu0 0.0
    %2399 = vmatpush1.msra.mxu0 0.0
    %2400 = vmatprep.mubr.f32.mxu0 0.0
    %2401 = vmatmul.mubr.f32.gmra.mrb[0].mxu0 %v2325
    %v2402 = vpop.f32.mrb[0].mxu0
    %v2403 = vadd.f32 0.0, %v2402
    %v2404 = vpop.f32.mrb[0].mxu0
    %2405 = vmatprep.mubr.f32.mxu0 0.0
    %2406 = vmatmul.mubr.f32.gmra.mrb[0].mxu0 %v2328
    %v2407 = vpop.f32.mrb[0].mxu0
    %v2408 = vadd.f32 0.0, %v2407
    %v2409 = vpop.f32.mrb[0].mxu0
    %2410 = vmatprep.mubr.f32.mxu0 0.0
    %2411 = vmatmul.mubr.f32.gmra.mrb[0].mxu0 %v2331
    %v2412 = vpop.f32.mrb[0].mxu0
    %v2413 = vadd.f32 0.0, %v2412
    %v2414 = vpop.f32.mrb[0].mxu0
    %2415 = vmatprep.mubr.f32.mxu0 0.0
    %2416 = vmatmul.mubr.f32.gmra.mrb[0].mxu0 %v2334
    %v2417 = vpop.f32.mrb[0].mxu0
    %v2418 = vadd.f32 0.0, %v2417
    %v2419 = vpop.f32.mrb[0].mxu0
    %2420 = vdwg.mxu0
    %v2421 = vadd.f32 %v1847, %v2403
    %v2422 = vadd.f32 %v1848, %v2408
    %v2423 = vadd.f32 %v1849, %v2413
    %v2424 = vadd.f32 %v1850, %v2418
    %s2425 = scalar_lea.vmem %s8, 3
    %v2426 = vld [vmem:[%s2425] sm:$0x1]
    %v2428 = vlaneseq
    %v2429 = vshrl.u32 %v2428, 7
    %v2430 = vsub.s32 0, %v2429
    %v2431 = vrot.slane %v2426, %v2430
    %v2433 = vadd.f32 %v2421, %v2431
    %v2434 = vadd.f32 %v2422, %v2431
    %v2435 = vadd.f32 %v2423, %v2431
    %v2436 = vadd.f32 %v2424, %v2431
    %v2437 = vmax.f32 %v2433, 0.0
    %v2438 = vmax.f32 %v2434, 0.0
    %v2439 = vmax.f32 %v2435, 0.0
    %v2440 = vmax.f32 %v2436, 0.0
    %v2441 = vld [vmem:[%s11] sm:$0xff]
    %v2442 = vld [vmem:[%s11 + $0x8] sm:$0xff]
    %v2443 = vld [vmem:[%s11 + $0x10] sm:$0xff]
    %v2444 = vld [vmem:[%s11 + $0x18] sm:$0xff]
    %v2445 = vld [vmem:[%s11 + $0x20] sm:$0xff]
    %v2446 = vld [vmem:[%s11 + $0x28] sm:$0xff]
    %v2447 = vld [vmem:[%s11 + $0x30] sm:$0xff]
    %v2448 = vld [vmem:[%s11 + $0x38] sm:$0xff]
    %v2449 = vld [vmem:[%s12] sm:$0x1]
    %v2451 = vlaneseq
    %v2452 = vshrl.u32 %v2451, 7
    %v2453 = vsub.s32 0, %v2452
    %v2454 = vrot.slane %v2449, %v2453
    %vm2456 = vcmask 523264
    %v2458 = vsel %vm2456, %v2437, 0
    %v2461 = vsel %vm2456, %v2438, 0
    %v2464 = vsel %vm2456, %v2439, 0
    %v2467 = vsel %vm2456, %v2440, 0
    %2469 = vmatprep.subr.mxu0 0.0
    %2470 = vmatpush1.msra.mxu0 %v2441
    %2471 = vmatprep.subr.mxu0 0.0
    %2472 = vmatpush1.msra.mxu0 %v2442
    %2473 = vmatprep.subr.mxu0 0.0
    %2474 = vmatpush1.msra.mxu0 %v2443
    %2475 = vmatprep.subr.mxu0 0.0
    %2476 = vmatpush1.msra.mxu0 %v2444
    %2477 = vmatprep.subr.mxu0 0.0
    %2478 = vmatpush1.msra.mxu0 %v2445
    %2479 = vmatprep.subr.mxu0 0.0
    %2480 = vmatpush1.msra.mxu0 %v2446
    %2481 = vmatprep.subr.mxu0 0.0
    %2482 = vmatpush1.msra.mxu0 %v2447
    %2483 = vmatprep.subr.mxu0 0.0
    %2484 = vmatpush1.msra.mxu0 %v2448
    %2485 = vmatprep.subr.mxu0 0.0
    %2486 = vmatpush1.msra.mxu0 0.0
    %2487 = vmatprep.subr.mxu0 0.0
    %2488 = vmatpush1.msra.mxu0 0.0
    %2489 = vmatprep.subr.mxu0 0.0
    %2490 = vmatpush1.msra.mxu0 0.0
    %2491 = vmatprep.subr.mxu0 0.0
    %2492 = vmatpush1.msra.mxu0 0.0
    %2493 = vmatprep.subr.mxu0 0.0
    %2494 = vmatpush1.msra.mxu0 0.0
    %2495 = vmatprep.subr.mxu0 0.0
    %2496 = vmatpush1.msra.mxu0 0.0
    %2497 = vmatprep.subr.mxu0 0.0
    %2498 = vmatpush1.msra.mxu0 0.0
    %2499 = vmatprep.subr.mxu0 0.0
    %2500 = vmatpush1.msra.mxu0 0.0
    %2501 = vmatprep.subr.mxu0 0.0
    %2502 = vmatpush1.msra.mxu0 0.0
    %2503 = vmatprep.subr.mxu0 0.0
    %2504 = vmatpush1.msra.mxu0 0.0
    %2505 = vmatprep.subr.mxu0 0.0
    %2506 = vmatpush1.msra.mxu0 0.0
    %2507 = vmatprep.subr.mxu0 0.0
    %2508 = vmatpush1.msra.mxu0 0.0
    %2509 = vmatprep.subr.mxu0 0.0
    %2510 = vmatpush1.msra.mxu0 0.0
    %2511 = vmatprep.subr.mxu0 0.0
    %2512 = vmatpush1.msra.mxu0 0.0
    %2513 = vmatprep.subr.mxu0 0.0
    %2514 = vmatpush1.msra.mxu0 0.0
    %2515 = vmatprep.subr.mxu0 0.0
    %2516 = vmatpush1.msra.mxu0 0.0
    %2517 = vmatprep.subr.mxu0 0.0
    %2518 = vmatpush1.msra.mxu0 0.0
    %2519 = vmatprep.subr.mxu0 0.0
    %2520 = vmatpush1.msra.mxu0 0.0
    %2521 = vmatprep.subr.mxu0 0.0
    %2522 = vmatpush1.msra.mxu0 0.0
    %2523 = vmatprep.subr.mxu0 0.0
    %2524 = vmatpush1.msra.mxu0 0.0
    %2525 = vmatprep.subr.mxu0 0.0
    %2526 = vmatpush1.msra.mxu0 0.0
    %2527 = vmatprep.subr.mxu0 0.0
    %2528 = vmatpush1.msra.mxu0 0.0
    %2529 = vmatprep.subr.mxu0 0.0
    %2530 = vmatpush1.msra.mxu0 0.0
    %2531 = vmatprep.subr.mxu0 0.0
    %2532 = vmatpush1.msra.mxu0 0.0
    %2533 = vmatprep.mubr.f32.mxu0 0.0
    %2534 = vmatmul.mubr.f32.gmra.mrb[0].mxu0 %v2458
    %v2535 = vpop.f32.mrb[0].mxu0
    %v2536 = vadd.f32 %v2454, %v2535
    %v2537 = vpop.f32.mrb[0].mxu0
    %2538 = vmatprep.mubr.f32.mxu0 0.0
    %2539 = vmatmul.mubr.f32.gmra.mrb[0].mxu0 %v2461
    %v2540 = vpop.f32.mrb[0].mxu0
    %v2541 = vadd.f32 %v2454, %v2540
    %v2542 = vpop.f32.mrb[0].mxu0
    %2543 = vmatprep.mubr.f32.mxu0 0.0
    %2544 = vmatmul.mubr.f32.gmra.mrb[0].mxu0 %v2464
    %v2545 = vpop.f32.mrb[0].mxu0
    %v2546 = vadd.f32 %v2454, %v2545
    %v2547 = vpop.f32.mrb[0].mxu0
    %2548 = vmatprep.mubr.f32.mxu0 0.0
    %2549 = vmatmul.mubr.f32.gmra.mrb[0].mxu0 %v2467
    %v2550 = vpop.f32.mrb[0].mxu0
    %v2551 = vadd.f32 %v2454, %v2550
    %v2552 = vpop.f32.mrb[0].mxu0
    %2553 = vdwg.mxu0
    %v2554 = vmax.f32 %v2536, 0.0
    %v2555 = vmax.f32 %v2541, 0.0
    %v2556 = vmax.f32 %v2546, 0.0
    %v2557 = vmax.f32 %v2551, 0.0
    %v2558 = vld [vmem:[%s13] sm:$0xff]
    %v2559 = vld [vmem:[%s13 + $0x8] sm:$0xff]
    %v2560 = vld [vmem:[%s13 + $0x10] sm:$0xff]
    %v2561 = vld [vmem:[%s13 + $0x18] sm:$0xff]
    %v2562 = vld [vmem:[%s13 + $0x20] sm:$0xff]
    %v2563 = vld [vmem:[%s13 + $0x28] sm:$0xff]
    %v2564 = vld [vmem:[%s13 + $0x30] sm:$0xff]
    %v2565 = vld [vmem:[%s13 + $0x38] sm:$0xff]
    %v2566 = vld [vmem:[%s14] sm:$0x1]
    %v2568 = vlaneseq
    %v2569 = vshrl.u32 %v2568, 7
    %v2570 = vsub.s32 0, %v2569
    %v2571 = vrot.slane %v2566, %v2570
    %v2574 = vsel %vm2456, %v2554, 0
    %v2577 = vsel %vm2456, %v2555, 0
    %v2580 = vsel %vm2456, %v2556, 0
    %v2583 = vsel %vm2456, %v2557, 0
    %2585 = vmatprep.subr.mxu0 0.0
    %2586 = vmatpush1.msra.mxu0 %v2558
    %2587 = vmatprep.subr.mxu0 0.0
    %2588 = vmatpush1.msra.mxu0 %v2559
    %2589 = vmatprep.subr.mxu0 0.0
    %2590 = vmatpush1.msra.mxu0 %v2560
    %2591 = vmatprep.subr.mxu0 0.0
    %2592 = vmatpush1.msra.mxu0 %v2561
    %2593 = vmatprep.subr.mxu0 0.0
    %2594 = vmatpush1.msra.mxu0 %v2562
    %2595 = vmatprep.subr.mxu0 0.0
    %2596 = vmatpush1.msra.mxu0 %v2563
    %2597 = vmatprep.subr.mxu0 0.0
    %2598 = vmatpush1.msra.mxu0 %v2564
    %2599 = vmatprep.subr.mxu0 0.0
    %2600 = vmatpush1.msra.mxu0 %v2565
    %2601 = vmatprep.subr.mxu0 0.0
    %2602 = vmatpush1.msra.mxu0 0.0
    %2603 = vmatprep.subr.mxu0 0.0
    %2604 = vmatpush1.msra.mxu0 0.0
    %2605 = vmatprep.subr.mxu0 0.0
    %2606 = vmatpush1.msra.mxu0 0.0
    %2607 = vmatprep.subr.mxu0 0.0
    %2608 = vmatpush1.msra.mxu0 0.0
    %2609 = vmatprep.subr.mxu0 0.0
    %2610 = vmatpush1.msra.mxu0 0.0
    %2611 = vmatprep.subr.mxu0 0.0
    %2612 = vmatpush1.msra.mxu0 0.0
    %2613 = vmatprep.subr.mxu0 0.0
    %2614 = vmatpush1.msra.mxu0 0.0
    %2615 = vmatprep.subr.mxu0 0.0
    %2616 = vmatpush1.msra.mxu0 0.0
    %2617 = vmatprep.subr.mxu0 0.0
    %2618 = vmatpush1.msra.mxu0 0.0
    %2619 = vmatprep.subr.mxu0 0.0
    %2620 = vmatpush1.msra.mxu0 0.0
    %2621 = vmatprep.subr.mxu0 0.0
    %2622 = vmatpush1.msra.mxu0 0.0
    %2623 = vmatprep.subr.mxu0 0.0
    %2624 = vmatpush1.msra.mxu0 0.0
    %2625 = vmatprep.subr.mxu0 0.0
    %2626 = vmatpush1.msra.mxu0 0.0
    %2627 = vmatprep.subr.mxu0 0.0
    %2628 = vmatpush1.msra.mxu0 0.0
    %2629 = vmatprep.subr.mxu0 0.0
    %2630 = vmatpush1.msra.mxu0 0.0
    %2631 = vmatprep.subr.mxu0 0.0
    %2632 = vmatpush1.msra.mxu0 0.0
    %2633 = vmatprep.subr.mxu0 0.0
    %2634 = vmatpush1.msra.mxu0 0.0
    %2635 = vmatprep.subr.mxu0 0.0
    %2636 = vmatpush1.msra.mxu0 0.0
    %2637 = vmatprep.subr.mxu0 0.0
    %2638 = vmatpush1.msra.mxu0 0.0
    %2639 = vmatprep.subr.mxu0 0.0
    %2640 = vmatpush1.msra.mxu0 0.0
    %2641 = vmatprep.subr.mxu0 0.0
    %2642 = vmatpush1.msra.mxu0 0.0
    %2643 = vmatprep.subr.mxu0 0.0
    %2644 = vmatpush1.msra.mxu0 0.0
    %2645 = vmatprep.subr.mxu0 0.0
    %2646 = vmatpush1.msra.mxu0 0.0
    %2647 = vmatprep.subr.mxu0 0.0
    %2648 = vmatpush1.msra.mxu0 0.0
    %2649 = vmatprep.mubr.f32.mxu0 0.0
    %2650 = vmatmul.mubr.f32.gmra.mrb[0].mxu0 %v2574
    %v2651 = vpop.f32.mrb[0].mxu0
    %v2652 = vpop.f32.mrb[0].mxu0
    %2653 = vmatprep.mubr.f32.mxu0 0.0
    %2654 = vmatmul.mubr.f32.gmra.mrb[0].mxu0 %v2577
    %v2655 = vpop.f32.mrb[0].mxu0
    %v2656 = vpop.f32.mrb[0].mxu0
    %2657 = vmatprep.mubr.f32.mxu0 0.0
    %2658 = vmatmul.mubr.f32.gmra.mrb[0].mxu0 %v2580
    %v2659 = vpop.f32.mrb[0].mxu0
    %v2660 = vadd.f32 %v2571, %v2659
    %v2661 = vpop.f32.mrb[0].mxu0
    %2662 = vmatprep.mubr.f32.mxu0 0.0
    %2663 = vmatmul.mubr.f32.gmra.mrb[0].mxu0 %v2583
    %v2664 = vpop.f32.mrb[0].mxu0
    %v2665 = vadd.f32 %v2571, %v2664
    %v2666 = vpop.f32.mrb[0].mxu0
    %2667 = vdwg.mxu0
    %v2668 = vsub.f32 0.0, %v2660
    %v2669 = vsub.f32 0.0, %v2665
    %v2670 = vmul.f32 %v2668, 1.442695
    %v2671 = vpow.pop %v2670
    %v2672 = vmul.f32 %v2669, 1.442695
    %v2673 = vpow.pop %v2672
    %v2674 = vadd.f32 %v2671, 1.0
    %v2675 = vadd.f32 %v2673, 1.0
    %v2676 = vrcp.pop %v2674
    %v2677 = vrcp.pop %v2675
    %v2678 = vmul.f32 %v2676, 0.05
    %v2679 = vmul.f32 %v2677, 0.05
    %vm2680 = vcmask 97344
    %v2681 = vsel %vm2680, %v2660, -inf
    %2682 = vmax.xlane.f32.xlu0 %v2681
    %v2683 = vpop.xlane.xlu0 %2682
    %v2684 = vsel %vm2680, %v2665, -inf
    %2685 = vmax.xlane.f32.xlu0 %v2684
    %v2686 = vpop.xlane.xlu0 %2685
    %v2687 = vsub.f32 %v2660, %v2683
    %v2688 = vsub.f32 %v2665, %v2686
    %v2689 = vmul.f32 %v2687, 1.442695
    %v2690 = vpow.pop %v2689
    %v2691 = vmul.f32 %v2688, 1.442695
    %v2692 = vpow.pop %v2691
    %2695 = vrot.lane.b32.xlu0 %v2690, 120
    %v2696 = vpop.permute.xlu0 %2695
    %2697 = vrot.lane.b32.xlu0 %v2692, 120
    %v2698 = vpop.permute.xlu0 %2697
    %vm2701 = vcmask 31744
    %v2702 = vsel %vm2701, %v2696, 0.0
    %2703 = vadd.xlane.f32.xlu0 %v2702
    %v2704 = vpop.xlane.xlu0 %2703
    %v2705 = vsel %vm2701, %v2698, 0.0
    %2706 = vadd.xlane.f32.xlu0 %v2705
    %v2707 = vpop.xlane.xlu0 %2706
    %v2708 = vrcp.pop %v2704
    %v2709 = vrcp.pop %v2707
    %v2710 = vmul.f32 %v2690, %v2708
    %v2711 = vmul.f32 %v2692, %v2709
    %v2712 = vrcp.pop %v2678
    %v2713 = vrcp.pop %v2679
    %2715 = vset.pattern.permute.xlu0 0
    %2716 = vperm.xlu0 %2715, %v2676
    %v2717 = vpop.permute.xlu0 %2716
    %2720 = vset.pattern.permute.xlu0 0
    %2721 = vperm.xlu0 %2720, %v2677
    %v2722 = vpop.permute.xlu0 %2721
    %v2724 = vsub.f32 %v56, %v2717
    %v2725 = vsub.f32 %v57, %v2717
    %v2726 = vsub.f32 %v56, %v2722
    %v2727 = vsub.f32 %v57, %v2722
    %2729 = vset.pattern.permute.xlu0 4
    %2730 = vperm.xlu0 %2729, %v2712
    %v2731 = vpop.permute.xlu0 %2730
    %2734 = vset.pattern.permute.xlu0 4
    %2735 = vperm.xlu0 %2734, %v2713
    %v2736 = vpop.permute.xlu0 %2735
    %v2738 = vmul.f32 %v2724, %v2731
    %v2739 = vmul.f32 %v2725, %v2731
    %v2740 = vmul.f32 %v2726, %v2736
    %v2741 = vmul.f32 %v2727, %v2736
    %v2742 = vsub.f32 0.0, %v2738
    %v2743 = vsub.f32 0.0, %v2739
    %v2744 = vsub.f32 0.0, %v2740
    %v2745 = vsub.f32 0.0, %v2741
    %v2746 = vmul.f32 %v2742, 1.442695
    %v2747 = vpow.pop %v2746
    %v2748 = vmul.f32 %v2743, 1.442695
    %v2749 = vpow.pop %v2748
    %v2750 = vmul.f32 %v2744, 1.442695
    %v2751 = vpow.pop %v2750
    %v2752 = vmul.f32 %v2745, 1.442695
    %v2753 = vpow.pop %v2752
    %v2754 = vadd.f32 %v2747, 1.0
    %v2755 = vadd.f32 %v2749, 1.0
    %v2756 = vadd.f32 %v2751, 1.0
    %v2757 = vadd.f32 %v2753, 1.0
    %v2758 = vrcp.pop %v2754
    %v2759 = vrcp.pop %v2755
    %v2760 = vrcp.pop %v2756
    %v2761 = vrcp.pop %v2757
    %v2762 = vadd.f32 %v56, 0.00390625
    %v2763 = vadd.f32 %v57, 0.00390625
    %v2764 = vsub.f32 %v2762, %v2717
    %v2765 = vsub.f32 %v2763, %v2717
    %v2766 = vsub.f32 %v2762, %v2722
    %v2767 = vsub.f32 %v2763, %v2722
    %v2768 = vmul.f32 %v2764, %v2731
    %v2769 = vmul.f32 %v2765, %v2731
    %v2770 = vmul.f32 %v2766, %v2736
    %v2771 = vmul.f32 %v2767, %v2736
    %v2772 = vsub.f32 0.0, %v2768
    %v2773 = vsub.f32 0.0, %v2769
    %v2774 = vsub.f32 0.0, %v2770
    %v2775 = vsub.f32 0.0, %v2771
    %v2776 = vmul.f32 %v2772, 1.442695
    %v2777 = vpow.pop %v2776
    %v2778 = vmul.f32 %v2773, 1.442695
    %v2779 = vpow.pop %v2778
    %v2780 = vmul.f32 %v2774, 1.442695
    %v2781 = vpow.pop %v2780
    %v2782 = vmul.f32 %v2775, 1.442695
    %v2783 = vpow.pop %v2782
    %v2784 = vadd.f32 %v2777, 1.0
    %v2785 = vadd.f32 %v2779, 1.0
    %v2786 = vadd.f32 %v2781, 1.0
    %v2787 = vadd.f32 %v2783, 1.0
    %v2788 = vrcp.pop %v2784
    %v2789 = vrcp.pop %v2785
    %v2790 = vrcp.pop %v2786
    %v2791 = vrcp.pop %v2787
    %v2792 = vsub.f32 %v2788, %v2758
    %v2793 = vsub.f32 %v2789, %v2759
    %v2794 = vsub.f32 %v2790, %v2760
    %v2795 = vsub.f32 %v2791, %v2761
    %2797 = vset.pattern.permute.xlu0 8
    %2798 = vperm.xlu0 %2797, %v2710
    %v2799 = vpop.permute.xlu0 %2798
    %2802 = vset.pattern.permute.xlu0 8
    %2803 = vperm.xlu0 %2802, %v2711
    %v2804 = vpop.permute.xlu0 %2803
    %v2806 = vmul.f32 %v2799, %v2792
    %v2807 = vmul.f32 %v2799, %v2793
    %v2808 = vmul.f32 %v2804, %v2794
    %v2809 = vmul.f32 %v2804, %v2795
    %v2810 = vadd.f32 %v2806, 0.0
    %v2811 = vadd.f32 %v2807, 0.0
    %v2812 = vadd.f32 %v2808, 0.0
    %v2813 = vadd.f32 %v2809, 0.0
    %2814 = vset.pattern.permute.xlu0 1
    %2815 = vperm.xlu0 %2814, %v2676
    %v2816 = vpop.permute.xlu0 %2815
    %2818 = vset.pattern.permute.xlu0 1
    %2819 = vperm.xlu0 %2818, %v2677
    %v2820 = vpop.permute.xlu0 %2819
    %v2822 = vsub.f32 %v56, %v2816
    %v2823 = vsub.f32 %v57, %v2816
    %v2824 = vsub.f32 %v56, %v2820
    %v2825 = vsub.f32 %v57, %v2820
    %2826 = vset.pattern.permute.xlu0 5
    %2827 = vperm.xlu0 %2826, %v2712
    %v2828 = vpop.permute.xlu0 %2827
    %2830 = vset.pattern.permute.xlu0 5
    %2831 = vperm.xlu0 %2830, %v2713
    %v2832 = vpop.permute.xlu0 %2831
    %v2834 = vmul.f32 %v2822, %v2828
    %v2835 = vmul.f32 %v2823, %v2828
    %v2836 = vmul.f32 %v2824, %v2832
    %v2837 = vmul.f32 %v2825, %v2832
    %v2838 = vsub.f32 0.0, %v2834
    %v2839 = vsub.f32 0.0, %v2835
    %v2840 = vsub.f32 0.0, %v2836
    %v2841 = vsub.f32 0.0, %v2837
    %v2842 = vmul.f32 %v2838, 1.442695
    %v2843 = vpow.pop %v2842
    %v2844 = vmul.f32 %v2839, 1.442695
    %v2845 = vpow.pop %v2844
    %v2846 = vmul.f32 %v2840, 1.442695
    %v2847 = vpow.pop %v2846
    %v2848 = vmul.f32 %v2841, 1.442695
    %v2849 = vpow.pop %v2848
    %v2850 = vadd.f32 %v2843, 1.0
    %v2851 = vadd.f32 %v2845, 1.0
    %v2852 = vadd.f32 %v2847, 1.0
    %v2853 = vadd.f32 %v2849, 1.0
    %v2854 = vrcp.pop %v2850
    %v2855 = vrcp.pop %v2851
    %v2856 = vrcp.pop %v2852
    %v2857 = vrcp.pop %v2853
    %v2858 = vsub.f32 %v2762, %v2816
    %v2859 = vsub.f32 %v2763, %v2816
    %v2860 = vsub.f32 %v2762, %v2820
    %v2861 = vsub.f32 %v2763, %v2820
    %v2862 = vmul.f32 %v2858, %v2828
    %v2863 = vmul.f32 %v2859, %v2828
    %v2864 = vmul.f32 %v2860, %v2832
    %v2865 = vmul.f32 %v2861, %v2832
    %v2866 = vsub.f32 0.0, %v2862
    %v2867 = vsub.f32 0.0, %v2863
    %v2868 = vsub.f32 0.0, %v2864
    %v2869 = vsub.f32 0.0, %v2865
    %v2870 = vmul.f32 %v2866, 1.442695
    %v2871 = vpow.pop %v2870
    %v2872 = vmul.f32 %v2867, 1.442695
    %v2873 = vpow.pop %v2872
    %v2874 = vmul.f32 %v2868, 1.442695
    %v2875 = vpow.pop %v2874
    %v2876 = vmul.f32 %v2869, 1.442695
    %v2877 = vpow.pop %v2876
    %v2878 = vadd.f32 %v2871, 1.0
    %v2879 = vadd.f32 %v2873, 1.0
    %v2880 = vadd.f32 %v2875, 1.0
    %v2881 = vadd.f32 %v2877, 1.0
    %v2882 = vrcp.pop %v2878
    %v2883 = vrcp.pop %v2879
    %v2884 = vrcp.pop %v2880
    %v2885 = vrcp.pop %v2881
    %v2886 = vsub.f32 %v2882, %v2854
    %v2887 = vsub.f32 %v2883, %v2855
    %v2888 = vsub.f32 %v2884, %v2856
    %v2889 = vsub.f32 %v2885, %v2857
    %2890 = vset.pattern.permute.xlu0 9
    %2891 = vperm.xlu0 %2890, %v2710
    %v2892 = vpop.permute.xlu0 %2891
    %2894 = vset.pattern.permute.xlu0 9
    %2895 = vperm.xlu0 %2894, %v2711
    %v2896 = vpop.permute.xlu0 %2895
    %v2898 = vmul.f32 %v2892, %v2886
    %v2899 = vmul.f32 %v2892, %v2887
    %v2900 = vmul.f32 %v2896, %v2888
    %v2901 = vmul.f32 %v2896, %v2889
    %v2902 = vadd.f32 %v2810, %v2898
    %v2903 = vadd.f32 %v2811, %v2899
    %v2904 = vadd.f32 %v2812, %v2900
    %v2905 = vadd.f32 %v2813, %v2901
    %2906 = vset.pattern.permute.xlu0 2
    %2907 = vperm.xlu0 %2906, %v2676
    %v2908 = vpop.permute.xlu0 %2907
    %2910 = vset.pattern.permute.xlu0 2
    %2911 = vperm.xlu0 %2910, %v2677
    %v2912 = vpop.permute.xlu0 %2911
    %v2914 = vsub.f32 %v56, %v2908
    %v2915 = vsub.f32 %v57, %v2908
    %v2916 = vsub.f32 %v56, %v2912
    %v2917 = vsub.f32 %v57, %v2912
    %2918 = vset.pattern.permute.xlu0 6
    %2919 = vperm.xlu0 %2918, %v2712
    %v2920 = vpop.permute.xlu0 %2919
    %2922 = vset.pattern.permute.xlu0 6
    %2923 = vperm.xlu0 %2922, %v2713
    %v2924 = vpop.permute.xlu0 %2923
    %v2926 = vmul.f32 %v2914, %v2920
    %v2927 = vmul.f32 %v2915, %v2920
    %v2928 = vmul.f32 %v2916, %v2924
    %v2929 = vmul.f32 %v2917, %v2924
    %v2930 = vsub.f32 0.0, %v2926
    %v2931 = vsub.f32 0.0, %v2927
    %v2932 = vsub.f32 0.0, %v2928
    %v2933 = vsub.f32 0.0, %v2929
    %v2934 = vmul.f32 %v2930, 1.442695
    %v2935 = vpow.pop %v2934
    %v2936 = vmul.f32 %v2931, 1.442695
    %v2937 = vpow.pop %v2936
    %v2938 = vmul.f32 %v2932, 1.442695
    %v2939 = vpow.pop %v2938
    %v2940 = vmul.f32 %v2933, 1.442695
    %v2941 = vpow.pop %v2940
    %v2942 = vadd.f32 %v2935, 1.0
    %v2943 = vadd.f32 %v2937, 1.0
    %v2944 = vadd.f32 %v2939, 1.0
    %v2945 = vadd.f32 %v2941, 1.0
    %v2946 = vrcp.pop %v2942
    %v2947 = vrcp.pop %v2943
    %v2948 = vrcp.pop %v2944
    %v2949 = vrcp.pop %v2945
    %v2950 = vsub.f32 %v2762, %v2908
    %v2951 = vsub.f32 %v2763, %v2908
    %v2952 = vsub.f32 %v2762, %v2912
    %v2953 = vsub.f32 %v2763, %v2912
    %v2954 = vmul.f32 %v2950, %v2920
    %v2955 = vmul.f32 %v2951, %v2920
    %v2956 = vmul.f32 %v2952, %v2924
    %v2957 = vmul.f32 %v2953, %v2924
    %v2958 = vsub.f32 0.0, %v2954
    %v2959 = vsub.f32 0.0, %v2955
    %v2960 = vsub.f32 0.0, %v2956
    %v2961 = vsub.f32 0.0, %v2957
    %v2962 = vmul.f32 %v2958, 1.442695
    %v2963 = vpow.pop %v2962
    %v2964 = vmul.f32 %v2959, 1.442695
    %v2965 = vpow.pop %v2964
    %v2966 = vmul.f32 %v2960, 1.442695
    %v2967 = vpow.pop %v2966
    %v2968 = vmul.f32 %v2961, 1.442695
    %v2969 = vpow.pop %v2968
    %v2970 = vadd.f32 %v2963, 1.0
    %v2971 = vadd.f32 %v2965, 1.0
    %v2972 = vadd.f32 %v2967, 1.0
    %v2973 = vadd.f32 %v2969, 1.0
    %v2974 = vrcp.pop %v2970
    %v2975 = vrcp.pop %v2971
    %v2976 = vrcp.pop %v2972
    %v2977 = vrcp.pop %v2973
    %v2978 = vsub.f32 %v2974, %v2946
    %v2979 = vsub.f32 %v2975, %v2947
    %v2980 = vsub.f32 %v2976, %v2948
    %v2981 = vsub.f32 %v2977, %v2949
    %2982 = vset.pattern.permute.xlu0 10
    %2983 = vperm.xlu0 %2982, %v2710
    %v2984 = vpop.permute.xlu0 %2983
    %2986 = vset.pattern.permute.xlu0 10
    %2987 = vperm.xlu0 %2986, %v2711
    %v2988 = vpop.permute.xlu0 %2987
    %v2990 = vmul.f32 %v2984, %v2978
    %v2991 = vmul.f32 %v2984, %v2979
    %v2992 = vmul.f32 %v2988, %v2980
    %v2993 = vmul.f32 %v2988, %v2981
    %v2994 = vadd.f32 %v2902, %v2990
    %v2995 = vadd.f32 %v2903, %v2991
    %v2996 = vadd.f32 %v2904, %v2992
    %v2997 = vadd.f32 %v2905, %v2993
    %2998 = vset.pattern.permute.xlu0 3
    %2999 = vperm.xlu0 %2998, %v2676
    %v3000 = vpop.permute.xlu0 %2999
    %3002 = vset.pattern.permute.xlu0 3
    %3003 = vperm.xlu0 %3002, %v2677
    %v3004 = vpop.permute.xlu0 %3003
    %v3006 = vsub.f32 %v56, %v3000
    %v3007 = vsub.f32 %v57, %v3000
    %v3008 = vsub.f32 %v56, %v3004
    %v3009 = vsub.f32 %v57, %v3004
    %3010 = vset.pattern.permute.xlu0 7
    %3011 = vperm.xlu0 %3010, %v2712
    %v3012 = vpop.permute.xlu0 %3011
    %3014 = vset.pattern.permute.xlu0 7
    %3015 = vperm.xlu0 %3014, %v2713
    %v3016 = vpop.permute.xlu0 %3015
    %v3018 = vmul.f32 %v3006, %v3012
    %v3019 = vmul.f32 %v3007, %v3012
    %v3020 = vmul.f32 %v3008, %v3016
    %v3021 = vmul.f32 %v3009, %v3016
    %v3022 = vsub.f32 0.0, %v3018
    %v3023 = vsub.f32 0.0, %v3019
    %v3024 = vsub.f32 0.0, %v3020
    %v3025 = vsub.f32 0.0, %v3021
    %v3026 = vmul.f32 %v3022, 1.442695
    %v3027 = vpow.pop %v3026
    %v3028 = vmul.f32 %v3023, 1.442695
    %v3029 = vpow.pop %v3028
    %v3030 = vmul.f32 %v3024, 1.442695
    %v3031 = vpow.pop %v3030
    %v3032 = vmul.f32 %v3025, 1.442695
    %v3033 = vpow.pop %v3032
    %v3034 = vadd.f32 %v3027, 1.0
    %v3035 = vadd.f32 %v3029, 1.0
    %v3036 = vadd.f32 %v3031, 1.0
    %v3037 = vadd.f32 %v3033, 1.0
    %v3038 = vrcp.pop %v3034
    %v3039 = vrcp.pop %v3035
    %v3040 = vrcp.pop %v3036
    %v3041 = vrcp.pop %v3037
    %v3042 = vsub.f32 %v2762, %v3000
    %v3043 = vsub.f32 %v2763, %v3000
    %v3044 = vsub.f32 %v2762, %v3004
    %v3045 = vsub.f32 %v2763, %v3004
    %v3046 = vmul.f32 %v3042, %v3012
    %v3047 = vmul.f32 %v3043, %v3012
    %v3048 = vmul.f32 %v3044, %v3016
    %v3049 = vmul.f32 %v3045, %v3016
    %v3050 = vsub.f32 0.0, %v3046
    %v3051 = vsub.f32 0.0, %v3047
    %v3052 = vsub.f32 0.0, %v3048
    %v3053 = vsub.f32 0.0, %v3049
    %v3054 = vmul.f32 %v3050, 1.442695
    %v3055 = vpow.pop %v3054
    %v3056 = vmul.f32 %v3051, 1.442695
    %v3057 = vpow.pop %v3056
    %v3058 = vmul.f32 %v3052, 1.442695
    %v3059 = vpow.pop %v3058
    %v3060 = vmul.f32 %v3053, 1.442695
    %v3061 = vpow.pop %v3060
    %v3062 = vadd.f32 %v3055, 1.0
    %v3063 = vadd.f32 %v3057, 1.0
    %v3064 = vadd.f32 %v3059, 1.0
    %v3065 = vadd.f32 %v3061, 1.0
    %v3066 = vrcp.pop %v3062
    %v3067 = vrcp.pop %v3063
    %v3068 = vrcp.pop %v3064
    %v3069 = vrcp.pop %v3065
    %v3070 = vsub.f32 %v3066, %v3038
    %v3071 = vsub.f32 %v3067, %v3039
    %v3072 = vsub.f32 %v3068, %v3040
    %v3073 = vsub.f32 %v3069, %v3041
    %3074 = vset.pattern.permute.xlu0 11
    %3075 = vperm.xlu0 %3074, %v2710
    %v3076 = vpop.permute.xlu0 %3075
    %3078 = vset.pattern.permute.xlu0 11
    %3079 = vperm.xlu0 %3078, %v2711
    %v3080 = vpop.permute.xlu0 %3079
    %v3082 = vmul.f32 %v3076, %v3070
    %v3083 = vmul.f32 %v3076, %v3071
    %v3084 = vmul.f32 %v3080, %v3072
    %v3085 = vmul.f32 %v3080, %v3073
    %v3086 = vadd.f32 %v2994, %v3082
    %v3087 = vadd.f32 %v2995, %v3083
    %v3088 = vadd.f32 %v2996, %v3084
    %v3089 = vadd.f32 %v2997, %v3085
    %v3090 = vadd.f32 %v3086, %v3087
    %3091 = vadd.xlane.f32.xlu0 %v3090
    %v3092 = vpop.xlane.xlu0 %3091
    %v3093 = vadd.f32 %v3088, %v3089
    %3094 = vadd.xlane.f32.xlu0 %v3093
    %v3095 = vpop.xlane.xlu0 %3094
    %v3096 = vrcp.pop %v3092
    %v3097 = vrcp.pop %v3095
    %v3098 = vmul.f32 %v3086, %v3096
    %v3099 = vmul.f32 %v3087, %v3096
    %v3100 = vmul.f32 %v3088, %v3097
    %v3101 = vmul.f32 %v3089, %v3097
    %v3102 = vadd.f32 %v3098, 1e-12
    %v3103 = vadd.f32 %v3099, 1e-12
    %v3104 = vadd.f32 %v3100, 1e-12
    %v3105 = vadd.f32 %v3101, 1e-12
    %v3106 = vlog2.pop %v3102
    %v3107 = vmul.f32 %v3106, 0.6931472
    %v3108 = vlog2.pop %v3103
    %v3109 = vmul.f32 %v3108, 0.6931472
    %v3110 = vlog2.pop %v3104
    %v3111 = vmul.f32 %v3110, 0.6931472
    %v3112 = vlog2.pop %v3105
    %v3113 = vmul.f32 %v3112, 0.6931472
    %3114 = vst [vmem:[#allocation2] sm:$0xff] %v3107
    %3115 = vst [vmem:[#allocation2 + $0x8] sm:$0xff] %v3109
    %3116 = vst [vmem:[#allocation2 + $0x10] sm:$0xff] %v3111
    %3117 = vst [vmem:[#allocation2 + $0x18] sm:$0xff] %v3113
    %s3118 = scalar_lea.vmem %s0, 32
    %v3119 = vld [vmem:[%s3118] sm:$0xff]
    %v3120 = vld [vmem:[%s3118 + $0x8] sm:$0xff]
    %v3121 = vld [vmem:[%s3118 + $0x10] sm:$0xff]
    %v3122 = vld [vmem:[%s3118 + $0x18] sm:$0xff]
    %3123 = vset.pattern.permute.xlu0 0
    %3124 = vperm.xlu0 %3123, %v3119
    %v3125 = vpop.permute.xlu0 %3124
    %3126 = vset.pattern.permute.xlu0 0
    %3127 = vperm.xlu0 %3126, %v3120
    %v3128 = vpop.permute.xlu0 %3127
    %3129 = vset.pattern.permute.xlu0 0
    %3130 = vperm.xlu0 %3129, %v3121
    %v3131 = vpop.permute.xlu0 %3130
    %3132 = vset.pattern.permute.xlu0 0
    %3133 = vperm.xlu0 %3132, %v3122
    %v3134 = vpop.permute.xlu0 %3133
    %vm3135 = vcmp.eq.s32.totalorder %v52, %v3125
    %vm3136 = vcmp.eq.s32.totalorder %v53, %v3125
    %vm3137 = vcmp.eq.s32.totalorder %v52, %v3128
    %vm3138 = vcmp.eq.s32.totalorder %v53, %v3128
    %vm3139 = vcmp.eq.s32.totalorder %v52, %v3131
    %vm3140 = vcmp.eq.s32.totalorder %v53, %v3131
    %vm3141 = vcmp.eq.s32.totalorder %v52, %v3134
    %vm3142 = vcmp.eq.s32.totalorder %v53, %v3134
    %v3143 = vsel %vm3135, 1.0, 0.0
    %v3144 = vsel %vm3136, 1.0, 0.0
    %v3145 = vsel %vm3137, 1.0, 0.0
    %v3146 = vsel %vm3138, 1.0, 0.0
    %v3147 = vsel %vm3139, 1.0, 0.0
    %v3148 = vsel %vm3140, 1.0, 0.0
    %v3149 = vsel %vm3141, 1.0, 0.0
    %v3150 = vsel %vm3142, 1.0, 0.0
    %v3151 = vld [vmem:[%s2] sm:$0xff]
    %v3152 = vld [vmem:[%s2 + $0x8] sm:$0xff]
    %v3153 = vld [vmem:[%s2 + $0x10] sm:$0xff]
    %v3154 = vld [vmem:[%s2 + $0x18] sm:$0xff]
    %v3155 = vld [vmem:[%s2 + $0x20] sm:$0xff]
    %v3156 = vld [vmem:[%s2 + $0x28] sm:$0xff]
    %v3157 = vld [vmem:[%s2 + $0x30] sm:$0xff]
    %v3158 = vld [vmem:[%s2 + $0x38] sm:$0xff]
    %v3159 = vld [vmem:[%s2 + $0x40] sm:$0xff]
    %v3160 = vld [vmem:[%s2 + $0x48] sm:$0xff]
    %v3161 = vld [vmem:[%s2 + $0x50] sm:$0xff]
    %v3162 = vld [vmem:[%s2 + $0x58] sm:$0xff]
    %v3163 = vld [vmem:[%s2 + $0x60] sm:$0xff]
    %v3164 = vld [vmem:[%s2 + $0x68] sm:$0xff]
    %v3165 = vld [vmem:[%s2 + $0x70] sm:$0xff]
    %v3166 = vld [vmem:[%s2 + $0x78] sm:$0xff]
    %v3167 = vld [vmem:[%s2 + $0x80] sm:$0xff]
    %v3168 = vld [vmem:[%s2 + $0x88] sm:$0xff]
    %v3169 = vld [vmem:[%s2 + $0x90] sm:$0xff]
    %v3170 = vld [vmem:[%s2 + $0x98] sm:$0xff]
    %v3171 = vld [vmem:[%s2 + $0xa0] sm:$0xff]
    %v3172 = vld [vmem:[%s2 + $0xa8] sm:$0xff]
    %v3173 = vld [vmem:[%s2 + $0xb0] sm:$0xff]
    %v3174 = vld [vmem:[%s2 + $0xb8] sm:$0xff]
    %v3175 = vld [vmem:[%s2 + $0xc0] sm:$0xff]
    %v3176 = vld [vmem:[%s2 + $0xc8] sm:$0xff]
    %v3177 = vld [vmem:[%s2 + $0xd0] sm:$0xff]
    %v3178 = vld [vmem:[%s2 + $0xd8] sm:$0xff]
    %v3179 = vld [vmem:[%s2 + $0xe0] sm:$0xff]
    %v3180 = vld [vmem:[%s2 + $0xe8] sm:$0xff]
    %v3181 = vld [vmem:[%s2 + $0xf0] sm:$0xff]
    %v3182 = vld [vmem:[%s2 + $0xf8] sm:$0xff]
    %v3183 = vld [vmem:[%s3] sm:$0x1]
    %v3185 = vlaneseq
    %v3186 = vshrl.u32 %v3185, 7
    %v3187 = vsub.s32 0, %v3186
    %v3188 = vrot.slane %v3183, %v3187
    %3190 = vmatprep.subr.mxu0 0.0
    %3191 = vmatpush1.msra.mxu0 %v3151
    %3192 = vmatprep.subr.mxu0 0.0
    %3193 = vmatpush1.msra.mxu0 %v3152
    %3194 = vmatprep.subr.mxu0 0.0
    %3195 = vmatpush1.msra.mxu0 %v3153
    %3196 = vmatprep.subr.mxu0 0.0
    %3197 = vmatpush1.msra.mxu0 %v3154
    %3198 = vmatprep.subr.mxu0 0.0
    %3199 = vmatpush1.msra.mxu0 %v3155
    %3200 = vmatprep.subr.mxu0 0.0
    %3201 = vmatpush1.msra.mxu0 %v3156
    %3202 = vmatprep.subr.mxu0 0.0
    %3203 = vmatpush1.msra.mxu0 %v3157
    %3204 = vmatprep.subr.mxu0 0.0
    %3205 = vmatpush1.msra.mxu0 %v3158
    %3206 = vmatprep.subr.mxu0 0.0
    %3207 = vmatpush1.msra.mxu0 %v3159
    %3208 = vmatprep.subr.mxu0 0.0
    %3209 = vmatpush1.msra.mxu0 %v3160
    %3210 = vmatprep.subr.mxu0 0.0
    %3211 = vmatpush1.msra.mxu0 %v3161
    %3212 = vmatprep.subr.mxu0 0.0
    %3213 = vmatpush1.msra.mxu0 %v3162
    %3214 = vmatprep.subr.mxu0 0.0
    %3215 = vmatpush1.msra.mxu0 %v3163
    %3216 = vmatprep.subr.mxu0 0.0
    %3217 = vmatpush1.msra.mxu0 %v3164
    %3218 = vmatprep.subr.mxu0 0.0
    %3219 = vmatpush1.msra.mxu0 %v3165
    %3220 = vmatprep.subr.mxu0 0.0
    %3221 = vmatpush1.msra.mxu0 %v3166
    %3222 = vmatprep.subr.mxu0 0.0
    %3223 = vmatpush1.msra.mxu0 %v3167
    %3224 = vmatprep.subr.mxu0 0.0
    %3225 = vmatpush1.msra.mxu0 %v3168
    %3226 = vmatprep.subr.mxu0 0.0
    %3227 = vmatpush1.msra.mxu0 %v3169
    %3228 = vmatprep.subr.mxu0 0.0
    %3229 = vmatpush1.msra.mxu0 %v3170
    %3230 = vmatprep.subr.mxu0 0.0
    %3231 = vmatpush1.msra.mxu0 %v3171
    %3232 = vmatprep.subr.mxu0 0.0
    %3233 = vmatpush1.msra.mxu0 %v3172
    %3234 = vmatprep.subr.mxu0 0.0
    %3235 = vmatpush1.msra.mxu0 %v3173
    %3236 = vmatprep.subr.mxu0 0.0
    %3237 = vmatpush1.msra.mxu0 %v3174
    %3238 = vmatprep.subr.mxu0 0.0
    %3239 = vmatpush1.msra.mxu0 %v3175
    %3240 = vmatprep.subr.mxu0 0.0
    %3241 = vmatpush1.msra.mxu0 %v3176
    %3242 = vmatprep.subr.mxu0 0.0
    %3243 = vmatpush1.msra.mxu0 %v3177
    %3244 = vmatprep.subr.mxu0 0.0
    %3245 = vmatpush1.msra.mxu0 %v3178
    %3246 = vmatprep.subr.mxu0 0.0
    %3247 = vmatpush1.msra.mxu0 %v3179
    %3248 = vmatprep.subr.mxu0 0.0
    %3249 = vmatpush1.msra.mxu0 %v3180
    %3250 = vmatprep.subr.mxu0 0.0
    %3251 = vmatpush1.msra.mxu0 %v3181
    %3252 = vmatprep.subr.mxu0 0.0
    %3253 = vmatpush1.msra.mxu0 %v3182
    %3254 = vmatprep.mubr.f32.mxu0 %v3144
    %3255 = vmatmul.mubr.f32.gmra.mrb[0].mxu0 %v3143
    %v3256 = vpop.f32.mrb[0].mxu0
    %v3257 = vadd.f32 %v3188, %v3256
    %v3258 = vpop.f32.mrb[0].mxu0
    %3259 = vmatprep.mubr.f32.mxu0 %v3146
    %3260 = vmatmul.mubr.f32.gmra.mrb[0].mxu0 %v3145
    %v3261 = vpop.f32.mrb[0].mxu0
    %v3262 = vadd.f32 %v3188, %v3261
    %v3263 = vpop.f32.mrb[0].mxu0
    %3264 = vmatprep.mubr.f32.mxu0 %v3148
    %3265 = vmatmul.mubr.f32.gmra.mrb[0].mxu0 %v3147
    %v3266 = vpop.f32.mrb[0].mxu0
    %v3267 = vadd.f32 %v3188, %v3266
    %v3268 = vpop.f32.mrb[0].mxu0
    %3269 = vmatprep.mubr.f32.mxu0 %v3150
    %3270 = vmatmul.mubr.f32.gmra.mrb[0].mxu0 %v3149
    %v3271 = vpop.f32.mrb[0].mxu0
    %v3272 = vadd.f32 %v3188, %v3271
    %v3273 = vpop.f32.mrb[0].mxu0
    %3274 = vdwg.mxu0
    %v3275 = vld [vmem:[%s1] sm:$0xff]
    %v3276 = vld [vmem:[%s1 + $0x8] sm:$0xff]
    %v3277 = vld [vmem:[%s1 + $0x10] sm:$0xff]
    %v3278 = vld [vmem:[%s1 + $0x18] sm:$0xff]
    %v3280 = vsel %vm218, %v3275, 0
    %v3283 = vsel %vm218, %v3276, 0
    %v3286 = vsel %vm218, %v3277, 0
    %v3289 = vsel %vm218, %v3278, 0
    %3291 = vmatprep.subr.mxu0 0.0
    %3292 = vmatpush1.msra.mxu0 %v3257
    %3293 = vmatprep.subr.mxu0 0.0
    %3294 = vmatpush1.msra.mxu0 %v3262
    %3295 = vmatprep.subr.mxu0 0.0
    %3296 = vmatpush1.msra.mxu0 %v3267
    %3297 = vmatprep.subr.mxu0 0.0
    %3298 = vmatpush1.msra.mxu0 %v3272
    %3299 = vmatprep.subr.mxu0 0.0
    %3300 = vmatpush1.msra.mxu0 0.0
    %3301 = vmatprep.subr.mxu0 0.0
    %3302 = vmatpush1.msra.mxu0 0.0
    %3303 = vmatprep.subr.mxu0 0.0
    %3304 = vmatpush1.msra.mxu0 0.0
    %3305 = vmatprep.subr.mxu0 0.0
    %3306 = vmatpush1.msra.mxu0 0.0
    %3307 = vmatprep.subr.mxu0 0.0
    %3308 = vmatpush1.msra.mxu0 0.0
    %3309 = vmatprep.subr.mxu0 0.0
    %3310 = vmatpush1.msra.mxu0 0.0
    %3311 = vmatprep.subr.mxu0 0.0
    %3312 = vmatpush1.msra.mxu0 0.0
    %3313 = vmatprep.subr.mxu0 0.0
    %3314 = vmatpush1.msra.mxu0 0.0
    %3315 = vmatprep.subr.mxu0 0.0
    %3316 = vmatpush1.msra.mxu0 0.0
    %3317 = vmatprep.subr.mxu0 0.0
    %3318 = vmatpush1.msra.mxu0 0.0
    %3319 = vmatprep.subr.mxu0 0.0
    %3320 = vmatpush1.msra.mxu0 0.0
    %3321 = vmatprep.subr.mxu0 0.0
    %3322 = vmatpush1.msra.mxu0 0.0
    %3323 = vmatprep.subr.mxu0 0.0
    %3324 = vmatpush1.msra.mxu0 0.0
    %3325 = vmatprep.subr.mxu0 0.0
    %3326 = vmatpush1.msra.mxu0 0.0
    %3327 = vmatprep.subr.mxu0 0.0
    %3328 = vmatpush1.msra.mxu0 0.0
    %3329 = vmatprep.subr.mxu0 0.0
    %3330 = vmatpush1.msra.mxu0 0.0
    %3331 = vmatprep.subr.mxu0 0.0
    %3332 = vmatpush1.msra.mxu0 0.0
    %3333 = vmatprep.subr.mxu0 0.0
    %3334 = vmatpush1.msra.mxu0 0.0
    %3335 = vmatprep.subr.mxu0 0.0
    %3336 = vmatpush1.msra.mxu0 0.0
    %3337 = vmatprep.subr.mxu0 0.0
    %3338 = vmatpush1.msra.mxu0 0.0
    %3339 = vmatprep.subr.mxu0 0.0
    %3340 = vmatpush1.msra.mxu0 0.0
    %3341 = vmatprep.subr.mxu0 0.0
    %3342 = vmatpush1.msra.mxu0 0.0
    %3343 = vmatprep.subr.mxu0 0.0
    %3344 = vmatpush1.msra.mxu0 0.0
    %3345 = vmatprep.subr.mxu0 0.0
    %3346 = vmatpush1.msra.mxu0 0.0
    %3347 = vmatprep.subr.mxu0 0.0
    %3348 = vmatpush1.msra.mxu0 0.0
    %3349 = vmatprep.subr.mxu0 0.0
    %3350 = vmatpush1.msra.mxu0 0.0
    %3351 = vmatprep.subr.mxu0 0.0
    %3352 = vmatpush1.msra.mxu0 0.0
    %3353 = vmatprep.subr.mxu0 0.0
    %3354 = vmatpush1.msra.mxu0 0.0
    %3355 = vmatprep.mubr.f32.mxu0 0.0
    %3356 = vmatmul.mubr.f32.gmra.mrb[0].mxu0 %v3280
    %v3357 = vpop.f32.mrb[0].mxu0
    %v3358 = vadd.f32 0.0, %v3357
    %v3359 = vpop.f32.mrb[0].mxu0
    %3360 = vmatprep.mubr.f32.mxu0 0.0
    %3361 = vmatmul.mubr.f32.gmra.mrb[0].mxu0 %v3283
    %v3362 = vpop.f32.mrb[0].mxu0
    %v3363 = vadd.f32 0.0, %v3362
    %v3364 = vpop.f32.mrb[0].mxu0
    %3365 = vmatprep.mubr.f32.mxu0 0.0
    %3366 = vmatmul.mubr.f32.gmra.mrb[0].mxu0 %v3286
    %v3367 = vpop.f32.mrb[0].mxu0
    %v3368 = vadd.f32 0.0, %v3367
    %v3369 = vpop.f32.mrb[0].mxu0
    %3370 = vmatprep.mubr.f32.mxu0 0.0
    %3371 = vmatmul.mubr.f32.gmra.mrb[0].mxu0 %v3289
    %v3372 = vpop.f32.mrb[0].mxu0
    %v3373 = vadd.f32 0.0, %v3372
    %v3374 = vpop.f32.mrb[0].mxu0
    %3375 = vdwg.mxu0
    %v3376 = vld [vmem:[%s4] sm:$0xff]
    %v3377 = vld [vmem:[%s4 + $0x8] sm:$0xff]
    %v3378 = vld [vmem:[%s4 + $0x10] sm:$0xff]
    %v3379 = vld [vmem:[%s4 + $0x18] sm:$0xff]
    %v3380 = vld [vmem:[%s5] sm:$0xff]
    %v3381 = vld [vmem:[%s5 + $0x8] sm:$0xff]
    %v3382 = vld [vmem:[%s5 + $0x10] sm:$0xff]
    %v3383 = vld [vmem:[%s5 + $0x18] sm:$0xff]
    %v3385 = vsel %vm218, %v3358, 0
    %v3388 = vsel %vm218, %v3363, 0
    %v3391 = vsel %vm218, %v3368, 0
    %v3394 = vsel %vm218, %v3373, 0
    %3396 = vmatprep.subr.mxu0 0.0
    %3397 = vmatpush1.msra.mxu0 %v3380
    %3398 = vmatprep.subr.mxu0 0.0
    %3399 = vmatpush1.msra.mxu0 %v3381
    %3400 = vmatprep.subr.mxu0 0.0
    %3401 = vmatpush1.msra.mxu0 %v3382
    %3402 = vmatprep.subr.mxu0 0.0
    %3403 = vmatpush1.msra.mxu0 %v3383
    %3404 = vmatprep.subr.mxu0 0.0
    %3405 = vmatpush1.msra.mxu0 0.0
    %3406 = vmatprep.subr.mxu0 0.0
    %3407 = vmatpush1.msra.mxu0 0.0
    %3408 = vmatprep.subr.mxu0 0.0
    %3409 = vmatpush1.msra.mxu0 0.0
    %3410 = vmatprep.subr.mxu0 0.0
    %3411 = vmatpush1.msra.mxu0 0.0
    %3412 = vmatprep.subr.mxu0 0.0
    %3413 = vmatpush1.msra.mxu0 0.0
    %3414 = vmatprep.subr.mxu0 0.0
    %3415 = vmatpush1.msra.mxu0 0.0
    %3416 = vmatprep.subr.mxu0 0.0
    %3417 = vmatpush1.msra.mxu0 0.0
    %3418 = vmatprep.subr.mxu0 0.0
    %3419 = vmatpush1.msra.mxu0 0.0
    %3420 = vmatprep.subr.mxu0 0.0
    %3421 = vmatpush1.msra.mxu0 0.0
    %3422 = vmatprep.subr.mxu0 0.0
    %3423 = vmatpush1.msra.mxu0 0.0
    %3424 = vmatprep.subr.mxu0 0.0
    %3425 = vmatpush1.msra.mxu0 0.0
    %3426 = vmatprep.subr.mxu0 0.0
    %3427 = vmatpush1.msra.mxu0 0.0
    %3428 = vmatprep.subr.mxu0 0.0
    %3429 = vmatpush1.msra.mxu0 0.0
    %3430 = vmatprep.subr.mxu0 0.0
    %3431 = vmatpush1.msra.mxu0 0.0
    %3432 = vmatprep.subr.mxu0 0.0
    %3433 = vmatpush1.msra.mxu0 0.0
    %3434 = vmatprep.subr.mxu0 0.0
    %3435 = vmatpush1.msra.mxu0 0.0
    %3436 = vmatprep.subr.mxu0 0.0
    %3437 = vmatpush1.msra.mxu0 0.0
    %3438 = vmatprep.subr.mxu0 0.0
    %3439 = vmatpush1.msra.mxu0 0.0
    %3440 = vmatprep.subr.mxu0 0.0
    %3441 = vmatpush1.msra.mxu0 0.0
    %3442 = vmatprep.subr.mxu0 0.0
    %3443 = vmatpush1.msra.mxu0 0.0
    %3444 = vmatprep.subr.mxu0 0.0
    %3445 = vmatpush1.msra.mxu0 0.0
    %3446 = vmatprep.subr.mxu0 0.0
    %3447 = vmatpush1.msra.mxu0 0.0
    %3448 = vmatprep.subr.mxu0 0.0
    %3449 = vmatpush1.msra.mxu0 0.0
    %3450 = vmatprep.subr.mxu0 0.0
    %3451 = vmatpush1.msra.mxu0 0.0
    %3452 = vmatprep.subr.mxu0 0.0
    %3453 = vmatpush1.msra.mxu0 0.0
    %3454 = vmatprep.subr.mxu0 0.0
    %3455 = vmatpush1.msra.mxu0 0.0
    %3456 = vmatprep.subr.mxu0 0.0
    %3457 = vmatpush1.msra.mxu0 0.0
    %3458 = vmatprep.subr.mxu0 0.0
    %3459 = vmatpush1.msra.mxu0 0.0
    %3460 = vmatprep.mubr.f32.mxu0 0.0
    %3461 = vmatmul.mubr.f32.gmra.mrb[0].mxu0 %v3385
    %v3462 = vpop.f32.mrb[0].mxu0
    %v3463 = vadd.f32 0.0, %v3462
    %v3464 = vpop.f32.mrb[0].mxu0
    %3465 = vmatprep.mubr.f32.mxu0 0.0
    %3466 = vmatmul.mubr.f32.gmra.mrb[0].mxu0 %v3388
    %v3467 = vpop.f32.mrb[0].mxu0
    %v3468 = vadd.f32 0.0, %v3467
    %v3469 = vpop.f32.mrb[0].mxu0
    %3470 = vmatprep.mubr.f32.mxu0 0.0
    %3471 = vmatmul.mubr.f32.gmra.mrb[0].mxu0 %v3391
    %v3472 = vpop.f32.mrb[0].mxu0
    %v3473 = vadd.f32 0.0, %v3472
    %v3474 = vpop.f32.mrb[0].mxu0
    %3475 = vmatprep.mubr.f32.mxu0 0.0
    %3476 = vmatmul.mubr.f32.gmra.mrb[0].mxu0 %v3394
    %v3477 = vpop.f32.mrb[0].mxu0
    %v3478 = vadd.f32 0.0, %v3477
    %v3479 = vpop.f32.mrb[0].mxu0
    %3480 = vdwg.mxu0
    %v3482 = vsel %vm218, %v3257, 0
    %v3485 = vsel %vm218, %v3262, 0
    %v3488 = vsel %vm218, %v3267, 0
    %v3491 = vsel %vm218, %v3272, 0
    %3493 = vmatprep.subr.mxu0 0.0
    %3494 = vmatpush1.msra.mxu0 %v3376
    %3495 = vmatprep.subr.mxu0 0.0
    %3496 = vmatpush1.msra.mxu0 %v3377
    %3497 = vmatprep.subr.mxu0 0.0
    %3498 = vmatpush1.msra.mxu0 %v3378
    %3499 = vmatprep.subr.mxu0 0.0
    %3500 = vmatpush1.msra.mxu0 %v3379
    %3501 = vmatprep.subr.mxu0 0.0
    %3502 = vmatpush1.msra.mxu0 0.0
    %3503 = vmatprep.subr.mxu0 0.0
    %3504 = vmatpush1.msra.mxu0 0.0
    %3505 = vmatprep.subr.mxu0 0.0
    %3506 = vmatpush1.msra.mxu0 0.0
    %3507 = vmatprep.subr.mxu0 0.0
    %3508 = vmatpush1.msra.mxu0 0.0
    %3509 = vmatprep.subr.mxu0 0.0
    %3510 = vmatpush1.msra.mxu0 0.0
    %3511 = vmatprep.subr.mxu0 0.0
    %3512 = vmatpush1.msra.mxu0 0.0
    %3513 = vmatprep.subr.mxu0 0.0
    %3514 = vmatpush1.msra.mxu0 0.0
    %3515 = vmatprep.subr.mxu0 0.0
    %3516 = vmatpush1.msra.mxu0 0.0
    %3517 = vmatprep.subr.mxu0 0.0
    %3518 = vmatpush1.msra.mxu0 0.0
    %3519 = vmatprep.subr.mxu0 0.0
    %3520 = vmatpush1.msra.mxu0 0.0
    %3521 = vmatprep.subr.mxu0 0.0
    %3522 = vmatpush1.msra.mxu0 0.0
    %3523 = vmatprep.subr.mxu0 0.0
    %3524 = vmatpush1.msra.mxu0 0.0
    %3525 = vmatprep.subr.mxu0 0.0
    %3526 = vmatpush1.msra.mxu0 0.0
    %3527 = vmatprep.subr.mxu0 0.0
    %3528 = vmatpush1.msra.mxu0 0.0
    %3529 = vmatprep.subr.mxu0 0.0
    %3530 = vmatpush1.msra.mxu0 0.0
    %3531 = vmatprep.subr.mxu0 0.0
    %3532 = vmatpush1.msra.mxu0 0.0
    %3533 = vmatprep.subr.mxu0 0.0
    %3534 = vmatpush1.msra.mxu0 0.0
    %3535 = vmatprep.subr.mxu0 0.0
    %3536 = vmatpush1.msra.mxu0 0.0
    %3537 = vmatprep.subr.mxu0 0.0
    %3538 = vmatpush1.msra.mxu0 0.0
    %3539 = vmatprep.subr.mxu0 0.0
    %3540 = vmatpush1.msra.mxu0 0.0
    %3541 = vmatprep.subr.mxu0 0.0
    %3542 = vmatpush1.msra.mxu0 0.0
    %3543 = vmatprep.subr.mxu0 0.0
    %3544 = vmatpush1.msra.mxu0 0.0
    %3545 = vmatprep.subr.mxu0 0.0
    %3546 = vmatpush1.msra.mxu0 0.0
    %3547 = vmatprep.subr.mxu0 0.0
    %3548 = vmatpush1.msra.mxu0 0.0
    %3549 = vmatprep.subr.mxu0 0.0
    %3550 = vmatpush1.msra.mxu0 0.0
    %3551 = vmatprep.subr.mxu0 0.0
    %3552 = vmatpush1.msra.mxu0 0.0
    %3553 = vmatprep.subr.mxu0 0.0
    %3554 = vmatpush1.msra.mxu0 0.0
    %3555 = vmatprep.subr.mxu0 0.0
    %3556 = vmatpush1.msra.mxu0 0.0
    %3557 = vmatprep.mubr.f32.mxu0 0.0
    %3558 = vmatmul.mubr.f32.gmra.mrb[0].mxu0 %v3482
    %v3559 = vpop.f32.mrb[0].mxu0
    %v3560 = vadd.f32 %v3463, %v3559
    %v3561 = vpop.f32.mrb[0].mxu0
    %3562 = vmatprep.mubr.f32.mxu0 0.0
    %3563 = vmatmul.mubr.f32.gmra.mrb[0].mxu0 %v3485
    %v3564 = vpop.f32.mrb[0].mxu0
    %v3565 = vadd.f32 %v3468, %v3564
    %v3566 = vpop.f32.mrb[0].mxu0
    %3567 = vmatprep.mubr.f32.mxu0 0.0
    %3568 = vmatmul.mubr.f32.gmra.mrb[0].mxu0 %v3488
    %v3569 = vpop.f32.mrb[0].mxu0
    %v3570 = vadd.f32 %v3473, %v3569
    %v3571 = vpop.f32.mrb[0].mxu0
    %3572 = vmatprep.mubr.f32.mxu0 0.0
    %3573 = vmatmul.mubr.f32.gmra.mrb[0].mxu0 %v3491
    %v3574 = vpop.f32.mrb[0].mxu0
    %v3575 = vadd.f32 %v3478, %v3574
    %v3576 = vpop.f32.mrb[0].mxu0
    %3577 = vdwg.mxu0
    %v3578 = vld [vmem:[%s6] sm:$0x1]
    %v3580 = vlaneseq
    %v3581 = vshrl.u32 %v3580, 7
    %v3582 = vsub.s32 0, %v3581
    %v3583 = vrot.slane %v3578, %v3582
    %v3585 = vadd.f32 %v3560, %v3583
    %v3586 = vadd.f32 %v3565, %v3583
    %v3587 = vadd.f32 %v3570, %v3583
    %v3588 = vadd.f32 %v3575, %v3583
    %v3589 = vtanh.pop %v3585
    %v3590 = vtanh.pop %v3586
    %v3591 = vtanh.pop %v3587
    %v3592 = vtanh.pop %v3588
    %v3593 = vsub.f32 0.0, %v3585
    %v3594 = vsub.f32 0.0, %v3586
    %v3595 = vsub.f32 0.0, %v3587
    %v3596 = vsub.f32 0.0, %v3588
    %v3597 = vmul.f32 %v3593, 1.442695
    %v3598 = vpow.pop %v3597
    %v3599 = vmul.f32 %v3594, 1.442695
    %v3600 = vpow.pop %v3599
    %v3601 = vmul.f32 %v3595, 1.442695
    %v3602 = vpow.pop %v3601
    %v3603 = vmul.f32 %v3596, 1.442695
    %v3604 = vpow.pop %v3603
    %v3605 = vadd.f32 %v3598, 1.0
    %v3606 = vadd.f32 %v3600, 1.0
    %v3607 = vadd.f32 %v3602, 1.0
    %v3608 = vadd.f32 %v3604, 1.0
    %v3609 = vrcp.pop %v3605
    %v3610 = vrcp.pop %v3606
    %v3611 = vrcp.pop %v3607
    %v3612 = vrcp.pop %v3608
    %3617 = vrot.lane.b32.xlu0 %v3609, 96
    %v3618 = vpop.permute.xlu0 %3617
    %3619 = vrot.lane.b32.xlu0 %v3610, 96
    %v3620 = vpop.permute.xlu0 %3619
    %3621 = vrot.lane.b32.xlu0 %v3611, 96
    %v3622 = vpop.permute.xlu0 %3621
    %3623 = vrot.lane.b32.xlu0 %v3612, 96
    %v3624 = vpop.permute.xlu0 %3623
    %v3629 = vmul.f32 %v3589, %v3618
    %v3630 = vmul.f32 %v3590, %v3620
    %v3631 = vmul.f32 %v3591, %v3622
    %v3632 = vmul.f32 %v3592, %v3624
    %v3633 = vld [vmem:[%s7] sm:$0xff]
    %v3634 = vld [vmem:[%s7 + $0x8] sm:$0xff]
    %v3635 = vld [vmem:[%s7 + $0x10] sm:$0xff]
    %v3636 = vld [vmem:[%s7 + $0x18] sm:$0xff]
    %v3637 = vld [vmem:[%s8] sm:$0x1]
    %v3639 = vlaneseq
    %v3640 = vshrl.u32 %v3639, 7
    %v3641 = vsub.s32 0, %v3640
    %v3642 = vrot.slane %v3637, %v3641
    %v3645 = vsel %vm218, %v3629, 0
    %v3648 = vsel %vm218, %v3630, 0
    %v3651 = vsel %vm218, %v3631, 0
    %v3654 = vsel %vm218, %v3632, 0
    %3656 = vmatprep.subr.mxu0 0.0
    %3657 = vmatpush1.msra.mxu0 %v3633
    %3658 = vmatprep.subr.mxu0 0.0
    %3659 = vmatpush1.msra.mxu0 %v3634
    %3660 = vmatprep.subr.mxu0 0.0
    %3661 = vmatpush1.msra.mxu0 %v3635
    %3662 = vmatprep.subr.mxu0 0.0
    %3663 = vmatpush1.msra.mxu0 %v3636
    %3664 = vmatprep.subr.mxu0 0.0
    %3665 = vmatpush1.msra.mxu0 0.0
    %3666 = vmatprep.subr.mxu0 0.0
    %3667 = vmatpush1.msra.mxu0 0.0
    %3668 = vmatprep.subr.mxu0 0.0
    %3669 = vmatpush1.msra.mxu0 0.0
    %3670 = vmatprep.subr.mxu0 0.0
    %3671 = vmatpush1.msra.mxu0 0.0
    %3672 = vmatprep.subr.mxu0 0.0
    %3673 = vmatpush1.msra.mxu0 0.0
    %3674 = vmatprep.subr.mxu0 0.0
    %3675 = vmatpush1.msra.mxu0 0.0
    %3676 = vmatprep.subr.mxu0 0.0
    %3677 = vmatpush1.msra.mxu0 0.0
    %3678 = vmatprep.subr.mxu0 0.0
    %3679 = vmatpush1.msra.mxu0 0.0
    %3680 = vmatprep.subr.mxu0 0.0
    %3681 = vmatpush1.msra.mxu0 0.0
    %3682 = vmatprep.subr.mxu0 0.0
    %3683 = vmatpush1.msra.mxu0 0.0
    %3684 = vmatprep.subr.mxu0 0.0
    %3685 = vmatpush1.msra.mxu0 0.0
    %3686 = vmatprep.subr.mxu0 0.0
    %3687 = vmatpush1.msra.mxu0 0.0
    %3688 = vmatprep.subr.mxu0 0.0
    %3689 = vmatpush1.msra.mxu0 0.0
    %3690 = vmatprep.subr.mxu0 0.0
    %3691 = vmatpush1.msra.mxu0 0.0
    %3692 = vmatprep.subr.mxu0 0.0
    %3693 = vmatpush1.msra.mxu0 0.0
    %3694 = vmatprep.subr.mxu0 0.0
    %3695 = vmatpush1.msra.mxu0 0.0
    %3696 = vmatprep.subr.mxu0 0.0
    %3697 = vmatpush1.msra.mxu0 0.0
    %3698 = vmatprep.subr.mxu0 0.0
    %3699 = vmatpush1.msra.mxu0 0.0
    %3700 = vmatprep.subr.mxu0 0.0
    %3701 = vmatpush1.msra.mxu0 0.0
    %3702 = vmatprep.subr.mxu0 0.0
    %3703 = vmatpush1.msra.mxu0 0.0
    %3704 = vmatprep.subr.mxu0 0.0
    %3705 = vmatpush1.msra.mxu0 0.0
    %3706 = vmatprep.subr.mxu0 0.0
    %3707 = vmatpush1.msra.mxu0 0.0
    %3708 = vmatprep.subr.mxu0 0.0
    %3709 = vmatpush1.msra.mxu0 0.0
    %3710 = vmatprep.subr.mxu0 0.0
    %3711 = vmatpush1.msra.mxu0 0.0
    %3712 = vmatprep.subr.mxu0 0.0
    %3713 = vmatpush1.msra.mxu0 0.0
    %3714 = vmatprep.subr.mxu0 0.0
    %3715 = vmatpush1.msra.mxu0 0.0
    %3716 = vmatprep.subr.mxu0 0.0
    %3717 = vmatpush1.msra.mxu0 0.0
    %3718 = vmatprep.subr.mxu0 0.0
    %3719 = vmatpush1.msra.mxu0 0.0
    %3720 = vmatprep.mubr.f32.mxu0 0.0
    %3721 = vmatmul.mubr.f32.gmra.mrb[0].mxu0 %v3645
    %v3722 = vpop.f32.mrb[0].mxu0
    %v3723 = vadd.f32 %v3642, %v3722
    %v3724 = vpop.f32.mrb[0].mxu0
    %3725 = vmatprep.mubr.f32.mxu0 0.0
    %3726 = vmatmul.mubr.f32.gmra.mrb[0].mxu0 %v3648
    %v3727 = vpop.f32.mrb[0].mxu0
    %v3728 = vadd.f32 %v3642, %v3727
    %v3729 = vpop.f32.mrb[0].mxu0
    %3730 = vmatprep.mubr.f32.mxu0 0.0
    %3731 = vmatmul.mubr.f32.gmra.mrb[0].mxu0 %v3651
    %v3732 = vpop.f32.mrb[0].mxu0
    %v3733 = vadd.f32 %v3642, %v3732
    %v3734 = vpop.f32.mrb[0].mxu0
    %3735 = vmatprep.mubr.f32.mxu0 0.0
    %3736 = vmatmul.mubr.f32.gmra.mrb[0].mxu0 %v3654
    %v3737 = vpop.f32.mrb[0].mxu0
    %v3738 = vadd.f32 %v3642, %v3737
    %v3739 = vpop.f32.mrb[0].mxu0
    %3740 = vdwg.mxu0
    %v3741 = vld [vmem:[%s9] sm:$0xff]
    %v3742 = vld [vmem:[%s9 + $0x8] sm:$0xff]
    %v3743 = vld [vmem:[%s9 + $0x10] sm:$0xff]
    %v3744 = vld [vmem:[%s9 + $0x18] sm:$0xff]
    %3745 = vmatprep.subr.mxu0 0.0
    %3746 = vmatpush1.msra.mxu0 %v3741
    %3747 = vmatprep.subr.mxu0 0.0
    %3748 = vmatpush1.msra.mxu0 %v3742
    %3749 = vmatprep.subr.mxu0 0.0
    %3750 = vmatpush1.msra.mxu0 %v3743
    %3751 = vmatprep.subr.mxu0 0.0
    %3752 = vmatpush1.msra.mxu0 %v3744
    %3753 = vmatprep.subr.mxu0 0.0
    %3754 = vmatpush1.msra.mxu0 0.0
    %3755 = vmatprep.subr.mxu0 0.0
    %3756 = vmatpush1.msra.mxu0 0.0
    %3757 = vmatprep.subr.mxu0 0.0
    %3758 = vmatpush1.msra.mxu0 0.0
    %3759 = vmatprep.subr.mxu0 0.0
    %3760 = vmatpush1.msra.mxu0 0.0
    %3761 = vmatprep.subr.mxu0 0.0
    %3762 = vmatpush1.msra.mxu0 0.0
    %3763 = vmatprep.subr.mxu0 0.0
    %3764 = vmatpush1.msra.mxu0 0.0
    %3765 = vmatprep.subr.mxu0 0.0
    %3766 = vmatpush1.msra.mxu0 0.0
    %3767 = vmatprep.subr.mxu0 0.0
    %3768 = vmatpush1.msra.mxu0 0.0
    %3769 = vmatprep.subr.mxu0 0.0
    %3770 = vmatpush1.msra.mxu0 0.0
    %3771 = vmatprep.subr.mxu0 0.0
    %3772 = vmatpush1.msra.mxu0 0.0
    %3773 = vmatprep.subr.mxu0 0.0
    %3774 = vmatpush1.msra.mxu0 0.0
    %3775 = vmatprep.subr.mxu0 0.0
    %3776 = vmatpush1.msra.mxu0 0.0
    %3777 = vmatprep.subr.mxu0 0.0
    %3778 = vmatpush1.msra.mxu0 0.0
    %3779 = vmatprep.subr.mxu0 0.0
    %3780 = vmatpush1.msra.mxu0 0.0
    %3781 = vmatprep.subr.mxu0 0.0
    %3782 = vmatpush1.msra.mxu0 0.0
    %3783 = vmatprep.subr.mxu0 0.0
    %3784 = vmatpush1.msra.mxu0 0.0
    %3785 = vmatprep.subr.mxu0 0.0
    %3786 = vmatpush1.msra.mxu0 0.0
    %3787 = vmatprep.subr.mxu0 0.0
    %3788 = vmatpush1.msra.mxu0 0.0
    %3789 = vmatprep.subr.mxu0 0.0
    %3790 = vmatpush1.msra.mxu0 0.0
    %3791 = vmatprep.subr.mxu0 0.0
    %3792 = vmatpush1.msra.mxu0 0.0
    %3793 = vmatprep.subr.mxu0 0.0
    %3794 = vmatpush1.msra.mxu0 0.0
    %3795 = vmatprep.subr.mxu0 0.0
    %3796 = vmatpush1.msra.mxu0 0.0
    %3797 = vmatprep.subr.mxu0 0.0
    %3798 = vmatpush1.msra.mxu0 0.0
    %3799 = vmatprep.subr.mxu0 0.0
    %3800 = vmatpush1.msra.mxu0 0.0
    %3801 = vmatprep.subr.mxu0 0.0
    %3802 = vmatpush1.msra.mxu0 0.0
    %3803 = vmatprep.subr.mxu0 0.0
    %3804 = vmatpush1.msra.mxu0 0.0
    %3805 = vmatprep.subr.mxu0 0.0
    %3806 = vmatpush1.msra.mxu0 0.0
    %3807 = vmatprep.subr.mxu0 0.0
    %3808 = vmatpush1.msra.mxu0 0.0
    %3809 = vmatprep.mubr.f32.mxu0 0.0
    %3810 = vmatmul.mubr.f32.gmra.mrb[0].mxu0 %v3645
    %v3811 = vpop.f32.mrb[0].mxu0
    %v3812 = vadd.f32 0.0, %v3811
    %v3813 = vpop.f32.mrb[0].mxu0
    %3814 = vmatprep.mubr.f32.mxu0 0.0
    %3815 = vmatmul.mubr.f32.gmra.mrb[0].mxu0 %v3648
    %v3816 = vpop.f32.mrb[0].mxu0
    %v3817 = vadd.f32 0.0, %v3816
    %v3818 = vpop.f32.mrb[0].mxu0
    %3819 = vmatprep.mubr.f32.mxu0 0.0
    %3820 = vmatmul.mubr.f32.gmra.mrb[0].mxu0 %v3651
    %v3821 = vpop.f32.mrb[0].mxu0
    %v3822 = vadd.f32 0.0, %v3821
    %v3823 = vpop.f32.mrb[0].mxu0
    %3824 = vmatprep.mubr.f32.mxu0 0.0
    %3825 = vmatmul.mubr.f32.gmra.mrb[0].mxu0 %v3654
    %v3826 = vpop.f32.mrb[0].mxu0
    %v3827 = vadd.f32 0.0, %v3826
    %v3828 = vpop.f32.mrb[0].mxu0
    %3829 = vdwg.mxu0
    %v3830 = vadd.f32 %v3257, %v3812
    %v3831 = vadd.f32 %v3262, %v3817
    %v3832 = vadd.f32 %v3267, %v3822
    %v3833 = vadd.f32 %v3272, %v3827
    %v3834 = vld [vmem:[%s10] sm:$0x1]
    %v3836 = vlaneseq
    %v3837 = vshrl.u32 %v3836, 7
    %v3838 = vsub.s32 0, %v3837
    %v3839 = vrot.slane %v3834, %v3838
    %v3841 = vadd.f32 %v3830, %v3839
    %v3842 = vadd.f32 %v3831, %v3839
    %v3843 = vadd.f32 %v3832, %v3839
    %v3844 = vadd.f32 %v3833, %v3839
    %v3845 = vld [vmem:[%s785] sm:$0xff]
    %v3846 = vld [vmem:[%s785 + $0x8] sm:$0xff]
    %v3847 = vld [vmem:[%s785 + $0x10] sm:$0xff]
    %v3848 = vld [vmem:[%s785 + $0x18] sm:$0xff]
    %v3850 = vsel %vm218, %v3845, 0
    %v3853 = vsel %vm218, %v3846, 0
    %v3856 = vsel %vm218, %v3847, 0
    %v3859 = vsel %vm218, %v3848, 0
    %3861 = vmatprep.subr.mxu0 0.0
    %3862 = vmatpush1.msra.mxu0 %v3841
    %3863 = vmatprep.subr.mxu0 0.0
    %3864 = vmatpush1.msra.mxu0 %v3842
    %3865 = vmatprep.subr.mxu0 0.0
    %3866 = vmatpush1.msra.mxu0 %v3843
    %3867 = vmatprep.subr.mxu0 0.0
    %3868 = vmatpush1.msra.mxu0 %v3844
    %3869 = vmatprep.subr.mxu0 0.0
    %3870 = vmatpush1.msra.mxu0 0.0
    %3871 = vmatprep.subr.mxu0 0.0
    %3872 = vmatpush1.msra.mxu0 0.0
    %3873 = vmatprep.subr.mxu0 0.0
    %3874 = vmatpush1.msra.mxu0 0.0
    %3875 = vmatprep.subr.mxu0 0.0
    %3876 = vmatpush1.msra.mxu0 0.0
    %3877 = vmatprep.subr.mxu0 0.0
    %3878 = vmatpush1.msra.mxu0 0.0
    %3879 = vmatprep.subr.mxu0 0.0
    %3880 = vmatpush1.msra.mxu0 0.0
    %3881 = vmatprep.subr.mxu0 0.0
    %3882 = vmatpush1.msra.mxu0 0.0
    %3883 = vmatprep.subr.mxu0 0.0
    %3884 = vmatpush1.msra.mxu0 0.0
    %3885 = vmatprep.subr.mxu0 0.0
    %3886 = vmatpush1.msra.mxu0 0.0
    %3887 = vmatprep.subr.mxu0 0.0
    %3888 = vmatpush1.msra.mxu0 0.0
    %3889 = vmatprep.subr.mxu0 0.0
    %3890 = vmatpush1.msra.mxu0 0.0
    %3891 = vmatprep.subr.mxu0 0.0
    %3892 = vmatpush1.msra.mxu0 0.0
    %3893 = vmatprep.subr.mxu0 0.0
    %3894 = vmatpush1.msra.mxu0 0.0
    %3895 = vmatprep.subr.mxu0 0.0
    %3896 = vmatpush1.msra.mxu0 0.0
    %3897 = vmatprep.subr.mxu0 0.0
    %3898 = vmatpush1.msra.mxu0 0.0
    %3899 = vmatprep.subr.mxu0 0.0
    %3900 = vmatpush1.msra.mxu0 0.0
    %3901 = vmatprep.subr.mxu0 0.0
    %3902 = vmatpush1.msra.mxu0 0.0
    %3903 = vmatprep.subr.mxu0 0.0
    %3904 = vmatpush1.msra.mxu0 0.0
    %3905 = vmatprep.subr.mxu0 0.0
    %3906 = vmatpush1.msra.mxu0 0.0
    %3907 = vmatprep.subr.mxu0 0.0
    %3908 = vmatpush1.msra.mxu0 0.0
    %3909 = vmatprep.subr.mxu0 0.0
    %3910 = vmatpush1.msra.mxu0 0.0
    %3911 = vmatprep.subr.mxu0 0.0
    %3912 = vmatpush1.msra.mxu0 0.0
    %3913 = vmatprep.subr.mxu0 0.0
    %3914 = vmatpush1.msra.mxu0 0.0
    %3915 = vmatprep.subr.mxu0 0.0
    %3916 = vmatpush1.msra.mxu0 0.0
    %3917 = vmatprep.subr.mxu0 0.0
    %3918 = vmatpush1.msra.mxu0 0.0
    %3919 = vmatprep.subr.mxu0 0.0
    %3920 = vmatpush1.msra.mxu0 0.0
    %3921 = vmatprep.subr.mxu0 0.0
    %3922 = vmatpush1.msra.mxu0 0.0
    %3923 = vmatprep.subr.mxu0 0.0
    %3924 = vmatpush1.msra.mxu0 0.0
    %3925 = vmatprep.mubr.f32.mxu0 0.0
    %3926 = vmatmul.mubr.f32.gmra.mrb[0].mxu0 %v3850
    %v3927 = vpop.f32.mrb[0].mxu0
    %v3928 = vadd.f32 0.0, %v3927
    %v3929 = vpop.f32.mrb[0].mxu0
    %3930 = vmatprep.mubr.f32.mxu0 0.0
    %3931 = vmatmul.mubr.f32.gmra.mrb[0].mxu0 %v3853
    %v3932 = vpop.f32.mrb[0].mxu0
    %v3933 = vadd.f32 0.0, %v3932
    %v3934 = vpop.f32.mrb[0].mxu0
    %3935 = vmatprep.mubr.f32.mxu0 0.0
    %3936 = vmatmul.mubr.f32.gmra.mrb[0].mxu0 %v3856
    %v3937 = vpop.f32.mrb[0].mxu0
    %v3938 = vadd.f32 0.0, %v3937
    %v3939 = vpop.f32.mrb[0].mxu0
    %3940 = vmatprep.mubr.f32.mxu0 0.0
    %3941 = vmatmul.mubr.f32.gmra.mrb[0].mxu0 %v3859
    %v3942 = vpop.f32.mrb[0].mxu0
    %v3943 = vadd.f32 0.0, %v3942
    %v3944 = vpop.f32.mrb[0].mxu0
    %3945 = vdwg.mxu0
    %v3946 = vld [vmem:[%s887] sm:$0xff]
    %v3947 = vld [vmem:[%s887 + $0x8] sm:$0xff]
    %v3948 = vld [vmem:[%s887 + $0x10] sm:$0xff]
    %v3949 = vld [vmem:[%s887 + $0x18] sm:$0xff]
    %v3950 = vld [vmem:[%s892] sm:$0xff]
    %v3951 = vld [vmem:[%s892 + $0x8] sm:$0xff]
    %v3952 = vld [vmem:[%s892 + $0x10] sm:$0xff]
    %v3953 = vld [vmem:[%s892 + $0x18] sm:$0xff]
    %v3955 = vsel %vm218, %v3928, 0
    %v3958 = vsel %vm218, %v3933, 0
    %v3961 = vsel %vm218, %v3938, 0
    %v3964 = vsel %vm218, %v3943, 0
    %3966 = vmatprep.subr.mxu0 0.0
    %3967 = vmatpush1.msra.mxu0 %v3950
    %3968 = vmatprep.subr.mxu0 0.0
    %3969 = vmatpush1.msra.mxu0 %v3951
    %3970 = vmatprep.subr.mxu0 0.0
    %3971 = vmatpush1.msra.mxu0 %v3952
    %3972 = vmatprep.subr.mxu0 0.0
    %3973 = vmatpush1.msra.mxu0 %v3953
    %3974 = vmatprep.subr.mxu0 0.0
    %3975 = vmatpush1.msra.mxu0 0.0
    %3976 = vmatprep.subr.mxu0 0.0
    %3977 = vmatpush1.msra.mxu0 0.0
    %3978 = vmatprep.subr.mxu0 0.0
    %3979 = vmatpush1.msra.mxu0 0.0
    %3980 = vmatprep.subr.mxu0 0.0
    %3981 = vmatpush1.msra.mxu0 0.0
    %3982 = vmatprep.subr.mxu0 0.0
    %3983 = vmatpush1.msra.mxu0 0.0
    %3984 = vmatprep.subr.mxu0 0.0
    %3985 = vmatpush1.msra.mxu0 0.0
    %3986 = vmatprep.subr.mxu0 0.0
    %3987 = vmatpush1.msra.mxu0 0.0
    %3988 = vmatprep.subr.mxu0 0.0
    %3989 = vmatpush1.msra.mxu0 0.0
    %3990 = vmatprep.subr.mxu0 0.0
    %3991 = vmatpush1.msra.mxu0 0.0
    %3992 = vmatprep.subr.mxu0 0.0
    %3993 = vmatpush1.msra.mxu0 0.0
    %3994 = vmatprep.subr.mxu0 0.0
    %3995 = vmatpush1.msra.mxu0 0.0
    %3996 = vmatprep.subr.mxu0 0.0
    %3997 = vmatpush1.msra.mxu0 0.0
    %3998 = vmatprep.subr.mxu0 0.0
    %3999 = vmatpush1.msra.mxu0 0.0
    %4000 = vmatprep.subr.mxu0 0.0
    %4001 = vmatpush1.msra.mxu0 0.0
    %4002 = vmatprep.subr.mxu0 0.0
    %4003 = vmatpush1.msra.mxu0 0.0
    %4004 = vmatprep.subr.mxu0 0.0
    %4005 = vmatpush1.msra.mxu0 0.0
    %4006 = vmatprep.subr.mxu0 0.0
    %4007 = vmatpush1.msra.mxu0 0.0
    %4008 = vmatprep.subr.mxu0 0.0
    %4009 = vmatpush1.msra.mxu0 0.0
    %4010 = vmatprep.subr.mxu0 0.0
    %4011 = vmatpush1.msra.mxu0 0.0
    %4012 = vmatprep.subr.mxu0 0.0
    %4013 = vmatpush1.msra.mxu0 0.0
    %4014 = vmatprep.subr.mxu0 0.0
    %4015 = vmatpush1.msra.mxu0 0.0
    %4016 = vmatprep.subr.mxu0 0.0
    %4017 = vmatpush1.msra.mxu0 0.0
    %4018 = vmatprep.subr.mxu0 0.0
    %4019 = vmatpush1.msra.mxu0 0.0
    %4020 = vmatprep.subr.mxu0 0.0
    %4021 = vmatpush1.msra.mxu0 0.0
    %4022 = vmatprep.subr.mxu0 0.0
    %4023 = vmatpush1.msra.mxu0 0.0
    %4024 = vmatprep.subr.mxu0 0.0
    %4025 = vmatpush1.msra.mxu0 0.0
    %4026 = vmatprep.subr.mxu0 0.0
    %4027 = vmatpush1.msra.mxu0 0.0
    %4028 = vmatprep.subr.mxu0 0.0
    %4029 = vmatpush1.msra.mxu0 0.0
    %4030 = vmatprep.mubr.f32.mxu0 0.0
    %4031 = vmatmul.mubr.f32.gmra.mrb[0].mxu0 %v3955
    %v4032 = vpop.f32.mrb[0].mxu0
    %v4033 = vadd.f32 0.0, %v4032
    %v4034 = vpop.f32.mrb[0].mxu0
    %4035 = vmatprep.mubr.f32.mxu0 0.0
    %4036 = vmatmul.mubr.f32.gmra.mrb[0].mxu0 %v3958
    %v4037 = vpop.f32.mrb[0].mxu0
    %v4038 = vadd.f32 0.0, %v4037
    %v4039 = vpop.f32.mrb[0].mxu0
    %4040 = vmatprep.mubr.f32.mxu0 0.0
    %4041 = vmatmul.mubr.f32.gmra.mrb[0].mxu0 %v3961
    %v4042 = vpop.f32.mrb[0].mxu0
    %v4043 = vadd.f32 0.0, %v4042
    %v4044 = vpop.f32.mrb[0].mxu0
    %4045 = vmatprep.mubr.f32.mxu0 0.0
    %4046 = vmatmul.mubr.f32.gmra.mrb[0].mxu0 %v3964
    %v4047 = vpop.f32.mrb[0].mxu0
    %v4048 = vadd.f32 0.0, %v4047
    %v4049 = vpop.f32.mrb[0].mxu0
    %4050 = vdwg.mxu0
    %v4052 = vsel %vm218, %v3841, 0
    %v4055 = vsel %vm218, %v3842, 0
    %v4058 = vsel %vm218, %v3843, 0
    %v4061 = vsel %vm218, %v3844, 0
    %4063 = vmatprep.subr.mxu0 0.0
    %4064 = vmatpush1.msra.mxu0 %v3946
    %4065 = vmatprep.subr.mxu0 0.0
    %4066 = vmatpush1.msra.mxu0 %v3947
    %4067 = vmatprep.subr.mxu0 0.0
    %4068 = vmatpush1.msra.mxu0 %v3948
    %4069 = vmatprep.subr.mxu0 0.0
    %4070 = vmatpush1.msra.mxu0 %v3949
    %4071 = vmatprep.subr.mxu0 0.0
    %4072 = vmatpush1.msra.mxu0 0.0
    %4073 = vmatprep.subr.mxu0 0.0
    %4074 = vmatpush1.msra.mxu0 0.0
    %4075 = vmatprep.subr.mxu0 0.0
    %4076 = vmatpush1.msra.mxu0 0.0
    %4077 = vmatprep.subr.mxu0 0.0
    %4078 = vmatpush1.msra.mxu0 0.0
    %4079 = vmatprep.subr.mxu0 0.0
    %4080 = vmatpush1.msra.mxu0 0.0
    %4081 = vmatprep.subr.mxu0 0.0
    %4082 = vmatpush1.msra.mxu0 0.0
    %4083 = vmatprep.subr.mxu0 0.0
    %4084 = vmatpush1.msra.mxu0 0.0
    %4085 = vmatprep.subr.mxu0 0.0
    %4086 = vmatpush1.msra.mxu0 0.0
    %4087 = vmatprep.subr.mxu0 0.0
    %4088 = vmatpush1.msra.mxu0 0.0
    %4089 = vmatprep.subr.mxu0 0.0
    %4090 = vmatpush1.msra.mxu0 0.0
    %4091 = vmatprep.subr.mxu0 0.0
    %4092 = vmatpush1.msra.mxu0 0.0
    %4093 = vmatprep.subr.mxu0 0.0
    %4094 = vmatpush1.msra.mxu0 0.0
    %4095 = vmatprep.subr.mxu0 0.0
    %4096 = vmatpush1.msra.mxu0 0.0
    %4097 = vmatprep.subr.mxu0 0.0
    %4098 = vmatpush1.msra.mxu0 0.0
    %4099 = vmatprep.subr.mxu0 0.0
    %4100 = vmatpush1.msra.mxu0 0.0
    %4101 = vmatprep.subr.mxu0 0.0
    %4102 = vmatpush1.msra.mxu0 0.0
    %4103 = vmatprep.subr.mxu0 0.0
    %4104 = vmatpush1.msra.mxu0 0.0
    %4105 = vmatprep.subr.mxu0 0.0
    %4106 = vmatpush1.msra.mxu0 0.0
    %4107 = vmatprep.subr.mxu0 0.0
    %4108 = vmatpush1.msra.mxu0 0.0
    %4109 = vmatprep.subr.mxu0 0.0
    %4110 = vmatpush1.msra.mxu0 0.0
    %4111 = vmatprep.subr.mxu0 0.0
    %4112 = vmatpush1.msra.mxu0 0.0
    %4113 = vmatprep.subr.mxu0 0.0
    %4114 = vmatpush1.msra.mxu0 0.0
    %4115 = vmatprep.subr.mxu0 0.0
    %4116 = vmatpush1.msra.mxu0 0.0
    %4117 = vmatprep.subr.mxu0 0.0
    %4118 = vmatpush1.msra.mxu0 0.0
    %4119 = vmatprep.subr.mxu0 0.0
    %4120 = vmatpush1.msra.mxu0 0.0
    %4121 = vmatprep.subr.mxu0 0.0
    %4122 = vmatpush1.msra.mxu0 0.0
    %4123 = vmatprep.subr.mxu0 0.0
    %4124 = vmatpush1.msra.mxu0 0.0
    %4125 = vmatprep.subr.mxu0 0.0
    %4126 = vmatpush1.msra.mxu0 0.0
    %4127 = vmatprep.mubr.f32.mxu0 0.0
    %4128 = vmatmul.mubr.f32.gmra.mrb[0].mxu0 %v4052
    %v4129 = vpop.f32.mrb[0].mxu0
    %v4130 = vadd.f32 %v4033, %v4129
    %v4131 = vpop.f32.mrb[0].mxu0
    %4132 = vmatprep.mubr.f32.mxu0 0.0
    %4133 = vmatmul.mubr.f32.gmra.mrb[0].mxu0 %v4055
    %v4134 = vpop.f32.mrb[0].mxu0
    %v4135 = vadd.f32 %v4038, %v4134
    %v4136 = vpop.f32.mrb[0].mxu0
    %4137 = vmatprep.mubr.f32.mxu0 0.0
    %4138 = vmatmul.mubr.f32.gmra.mrb[0].mxu0 %v4058
    %v4139 = vpop.f32.mrb[0].mxu0
    %v4140 = vadd.f32 %v4043, %v4139
    %v4141 = vpop.f32.mrb[0].mxu0
    %4142 = vmatprep.mubr.f32.mxu0 0.0
    %4143 = vmatmul.mubr.f32.gmra.mrb[0].mxu0 %v4061
    %v4144 = vpop.f32.mrb[0].mxu0
    %v4145 = vadd.f32 %v4048, %v4144
    %v4146 = vpop.f32.mrb[0].mxu0
    %4147 = vdwg.mxu0
    %v4148 = vld [vmem:[%s1091] sm:$0x1]
    %v4150 = vlaneseq
    %v4151 = vshrl.u32 %v4150, 7
    %v4152 = vsub.s32 0, %v4151
    %v4153 = vrot.slane %v4148, %v4152
    %v4155 = vadd.f32 %v4130, %v4153
    %v4156 = vadd.f32 %v4135, %v4153
    %v4157 = vadd.f32 %v4140, %v4153
    %v4158 = vadd.f32 %v4145, %v4153
    %v4159 = vtanh.pop %v4155
    %v4160 = vtanh.pop %v4156
    %v4161 = vtanh.pop %v4157
    %v4162 = vtanh.pop %v4158
    %v4163 = vsub.f32 0.0, %v4155
    %v4164 = vsub.f32 0.0, %v4156
    %v4165 = vsub.f32 0.0, %v4157
    %v4166 = vsub.f32 0.0, %v4158
    %v4167 = vmul.f32 %v4163, 1.442695
    %v4168 = vpow.pop %v4167
    %v4169 = vmul.f32 %v4164, 1.442695
    %v4170 = vpow.pop %v4169
    %v4171 = vmul.f32 %v4165, 1.442695
    %v4172 = vpow.pop %v4171
    %v4173 = vmul.f32 %v4166, 1.442695
    %v4174 = vpow.pop %v4173
    %v4175 = vadd.f32 %v4168, 1.0
    %v4176 = vadd.f32 %v4170, 1.0
    %v4177 = vadd.f32 %v4172, 1.0
    %v4178 = vadd.f32 %v4174, 1.0
    %v4179 = vrcp.pop %v4175
    %v4180 = vrcp.pop %v4176
    %v4181 = vrcp.pop %v4177
    %v4182 = vrcp.pop %v4178
    %4187 = vrot.lane.b32.xlu0 %v4179, 96
    %v4188 = vpop.permute.xlu0 %4187
    %4189 = vrot.lane.b32.xlu0 %v4180, 96
    %v4190 = vpop.permute.xlu0 %4189
    %4191 = vrot.lane.b32.xlu0 %v4181, 96
    %v4192 = vpop.permute.xlu0 %4191
    %4193 = vrot.lane.b32.xlu0 %v4182, 96
    %v4194 = vpop.permute.xlu0 %4193
    %v4199 = vmul.f32 %v4159, %v4188
    %v4200 = vmul.f32 %v4160, %v4190
    %v4201 = vmul.f32 %v4161, %v4192
    %v4202 = vmul.f32 %v4162, %v4194
    %v4203 = vld [vmem:[%s1147] sm:$0xff]
    %v4204 = vld [vmem:[%s1147 + $0x8] sm:$0xff]
    %v4205 = vld [vmem:[%s1147 + $0x10] sm:$0xff]
    %v4206 = vld [vmem:[%s1147 + $0x18] sm:$0xff]
    %v4208 = vsel %vm218, %v4199, 0
    %v4211 = vsel %vm218, %v4200, 0
    %v4214 = vsel %vm218, %v4201, 0
    %v4217 = vsel %vm218, %v4202, 0
    %4219 = vmatprep.subr.mxu0 0.0
    %4220 = vmatpush1.msra.mxu0 %v4203
    %4221 = vmatprep.subr.mxu0 0.0
    %4222 = vmatpush1.msra.mxu0 %v4204
    %4223 = vmatprep.subr.mxu0 0.0
    %4224 = vmatpush1.msra.mxu0 %v4205
    %4225 = vmatprep.subr.mxu0 0.0
    %4226 = vmatpush1.msra.mxu0 %v4206
    %4227 = vmatprep.subr.mxu0 0.0
    %4228 = vmatpush1.msra.mxu0 0.0
    %4229 = vmatprep.subr.mxu0 0.0
    %4230 = vmatpush1.msra.mxu0 0.0
    %4231 = vmatprep.subr.mxu0 0.0
    %4232 = vmatpush1.msra.mxu0 0.0
    %4233 = vmatprep.subr.mxu0 0.0
    %4234 = vmatpush1.msra.mxu0 0.0
    %4235 = vmatprep.subr.mxu0 0.0
    %4236 = vmatpush1.msra.mxu0 0.0
    %4237 = vmatprep.subr.mxu0 0.0
    %4238 = vmatpush1.msra.mxu0 0.0
    %4239 = vmatprep.subr.mxu0 0.0
    %4240 = vmatpush1.msra.mxu0 0.0
    %4241 = vmatprep.subr.mxu0 0.0
    %4242 = vmatpush1.msra.mxu0 0.0
    %4243 = vmatprep.subr.mxu0 0.0
    %4244 = vmatpush1.msra.mxu0 0.0
    %4245 = vmatprep.subr.mxu0 0.0
    %4246 = vmatpush1.msra.mxu0 0.0
    %4247 = vmatprep.subr.mxu0 0.0
    %4248 = vmatpush1.msra.mxu0 0.0
    %4249 = vmatprep.subr.mxu0 0.0
    %4250 = vmatpush1.msra.mxu0 0.0
    %4251 = vmatprep.subr.mxu0 0.0
    %4252 = vmatpush1.msra.mxu0 0.0
    %4253 = vmatprep.subr.mxu0 0.0
    %4254 = vmatpush1.msra.mxu0 0.0
    %4255 = vmatprep.subr.mxu0 0.0
    %4256 = vmatpush1.msra.mxu0 0.0
    %4257 = vmatprep.subr.mxu0 0.0
    %4258 = vmatpush1.msra.mxu0 0.0
    %4259 = vmatprep.subr.mxu0 0.0
    %4260 = vmatpush1.msra.mxu0 0.0
    %4261 = vmatprep.subr.mxu0 0.0
    %4262 = vmatpush1.msra.mxu0 0.0
    %4263 = vmatprep.subr.mxu0 0.0
    %4264 = vmatpush1.msra.mxu0 0.0
    %4265 = vmatprep.subr.mxu0 0.0
    %4266 = vmatpush1.msra.mxu0 0.0
    %4267 = vmatprep.subr.mxu0 0.0
    %4268 = vmatpush1.msra.mxu0 0.0
    %4269 = vmatprep.subr.mxu0 0.0
    %4270 = vmatpush1.msra.mxu0 0.0
    %4271 = vmatprep.subr.mxu0 0.0
    %4272 = vmatpush1.msra.mxu0 0.0
    %4273 = vmatprep.subr.mxu0 0.0
    %4274 = vmatpush1.msra.mxu0 0.0
    %4275 = vmatprep.subr.mxu0 0.0
    %4276 = vmatpush1.msra.mxu0 0.0
    %4277 = vmatprep.subr.mxu0 0.0
    %4278 = vmatpush1.msra.mxu0 0.0
    %4279 = vmatprep.subr.mxu0 0.0
    %4280 = vmatpush1.msra.mxu0 0.0
    %4281 = vmatprep.subr.mxu0 0.0
    %4282 = vmatpush1.msra.mxu0 0.0
    %4283 = vmatprep.mubr.f32.mxu0 0.0
    %4284 = vmatmul.mubr.f32.gmra.mrb[0].mxu0 %v4208
    %v4285 = vpop.f32.mrb[0].mxu0
    %v4286 = vadd.f32 0.0, %v4285
    %v4287 = vpop.f32.mrb[0].mxu0
    %4288 = vmatprep.mubr.f32.mxu0 0.0
    %4289 = vmatmul.mubr.f32.gmra.mrb[0].mxu0 %v4211
    %v4290 = vpop.f32.mrb[0].mxu0
    %v4291 = vadd.f32 0.0, %v4290
    %v4292 = vpop.f32.mrb[0].mxu0
    %4293 = vmatprep.mubr.f32.mxu0 0.0
    %4294 = vmatmul.mubr.f32.gmra.mrb[0].mxu0 %v4214
    %v4295 = vpop.f32.mrb[0].mxu0
    %v4296 = vadd.f32 0.0, %v4295
    %v4297 = vpop.f32.mrb[0].mxu0
    %4298 = vmatprep.mubr.f32.mxu0 0.0
    %4299 = vmatmul.mubr.f32.gmra.mrb[0].mxu0 %v4217
    %v4300 = vpop.f32.mrb[0].mxu0
    %v4301 = vadd.f32 0.0, %v4300
    %v4302 = vpop.f32.mrb[0].mxu0
    %4303 = vdwg.mxu0
    %v4304 = vadd.f32 %v3723, %v4286
    %v4305 = vadd.f32 %v3728, %v4291
    %v4306 = vadd.f32 %v3733, %v4296
    %v4307 = vadd.f32 %v3738, %v4301
    %v4308 = vld [vmem:[%s1253] sm:$0x1]
    %v4310 = vlaneseq
    %v4311 = vshrl.u32 %v4310, 7
    %v4312 = vsub.s32 0, %v4311
    %v4313 = vrot.slane %v4308, %v4312
    %v4315 = vadd.f32 %v4304, %v4313
    %v4316 = vadd.f32 %v4305, %v4313
    %v4317 = vadd.f32 %v4306, %v4313
    %v4318 = vadd.f32 %v4307, %v4313
    %v4319 = vld [vmem:[%s1265] sm:$0xff]
    %v4320 = vld [vmem:[%s1265 + $0x8] sm:$0xff]
    %v4321 = vld [vmem:[%s1265 + $0x10] sm:$0xff]
    %v4322 = vld [vmem:[%s1265 + $0x18] sm:$0xff]
    %4323 = vmatprep.subr.mxu0 0.0
    %4324 = vmatpush1.msra.mxu0 %v4319
    %4325 = vmatprep.subr.mxu0 0.0
    %4326 = vmatpush1.msra.mxu0 %v4320
    %4327 = vmatprep.subr.mxu0 0.0
    %4328 = vmatpush1.msra.mxu0 %v4321
    %4329 = vmatprep.subr.mxu0 0.0
    %4330 = vmatpush1.msra.mxu0 %v4322
    %4331 = vmatprep.subr.mxu0 0.0
    %4332 = vmatpush1.msra.mxu0 0.0
    %4333 = vmatprep.subr.mxu0 0.0
    %4334 = vmatpush1.msra.mxu0 0.0
    %4335 = vmatprep.subr.mxu0 0.0
    %4336 = vmatpush1.msra.mxu0 0.0
    %4337 = vmatprep.subr.mxu0 0.0
    %4338 = vmatpush1.msra.mxu0 0.0
    %4339 = vmatprep.subr.mxu0 0.0
    %4340 = vmatpush1.msra.mxu0 0.0
    %4341 = vmatprep.subr.mxu0 0.0
    %4342 = vmatpush1.msra.mxu0 0.0
    %4343 = vmatprep.subr.mxu0 0.0
    %4344 = vmatpush1.msra.mxu0 0.0
    %4345 = vmatprep.subr.mxu0 0.0
    %4346 = vmatpush1.msra.mxu0 0.0
    %4347 = vmatprep.subr.mxu0 0.0
    %4348 = vmatpush1.msra.mxu0 0.0
    %4349 = vmatprep.subr.mxu0 0.0
    %4350 = vmatpush1.msra.mxu0 0.0
    %4351 = vmatprep.subr.mxu0 0.0
    %4352 = vmatpush1.msra.mxu0 0.0
    %4353 = vmatprep.subr.mxu0 0.0
    %4354 = vmatpush1.msra.mxu0 0.0
    %4355 = vmatprep.subr.mxu0 0.0
    %4356 = vmatpush1.msra.mxu0 0.0
    %4357 = vmatprep.subr.mxu0 0.0
    %4358 = vmatpush1.msra.mxu0 0.0
    %4359 = vmatprep.subr.mxu0 0.0
    %4360 = vmatpush1.msra.mxu0 0.0
    %4361 = vmatprep.subr.mxu0 0.0
    %4362 = vmatpush1.msra.mxu0 0.0
    %4363 = vmatprep.subr.mxu0 0.0
    %4364 = vmatpush1.msra.mxu0 0.0
    %4365 = vmatprep.subr.mxu0 0.0
    %4366 = vmatpush1.msra.mxu0 0.0
    %4367 = vmatprep.subr.mxu0 0.0
    %4368 = vmatpush1.msra.mxu0 0.0
    %4369 = vmatprep.subr.mxu0 0.0
    %4370 = vmatpush1.msra.mxu0 0.0
    %4371 = vmatprep.subr.mxu0 0.0
    %4372 = vmatpush1.msra.mxu0 0.0
    %4373 = vmatprep.subr.mxu0 0.0
    %4374 = vmatpush1.msra.mxu0 0.0
    %4375 = vmatprep.subr.mxu0 0.0
    %4376 = vmatpush1.msra.mxu0 0.0
    %4377 = vmatprep.subr.mxu0 0.0
    %4378 = vmatpush1.msra.mxu0 0.0
    %4379 = vmatprep.subr.mxu0 0.0
    %4380 = vmatpush1.msra.mxu0 0.0
    %4381 = vmatprep.subr.mxu0 0.0
    %4382 = vmatpush1.msra.mxu0 0.0
    %4383 = vmatprep.subr.mxu0 0.0
    %4384 = vmatpush1.msra.mxu0 0.0
    %4385 = vmatprep.subr.mxu0 0.0
    %4386 = vmatpush1.msra.mxu0 0.0
    %4387 = vmatprep.mubr.f32.mxu0 0.0
    %4388 = vmatmul.mubr.f32.gmra.mrb[0].mxu0 %v4208
    %v4389 = vpop.f32.mrb[0].mxu0
    %v4390 = vadd.f32 0.0, %v4389
    %v4391 = vpop.f32.mrb[0].mxu0
    %4392 = vmatprep.mubr.f32.mxu0 0.0
    %4393 = vmatmul.mubr.f32.gmra.mrb[0].mxu0 %v4211
    %v4394 = vpop.f32.mrb[0].mxu0
    %v4395 = vadd.f32 0.0, %v4394
    %v4396 = vpop.f32.mrb[0].mxu0
    %4397 = vmatprep.mubr.f32.mxu0 0.0
    %4398 = vmatmul.mubr.f32.gmra.mrb[0].mxu0 %v4214
    %v4399 = vpop.f32.mrb[0].mxu0
    %v4400 = vadd.f32 0.0, %v4399
    %v4401 = vpop.f32.mrb[0].mxu0
    %4402 = vmatprep.mubr.f32.mxu0 0.0
    %4403 = vmatmul.mubr.f32.gmra.mrb[0].mxu0 %v4217
    %v4404 = vpop.f32.mrb[0].mxu0
    %v4405 = vadd.f32 0.0, %v4404
    %v4406 = vpop.f32.mrb[0].mxu0
    %4407 = vdwg.mxu0
    %v4408 = vadd.f32 %v3841, %v4390
    %v4409 = vadd.f32 %v3842, %v4395
    %v4410 = vadd.f32 %v3843, %v4400
    %v4411 = vadd.f32 %v3844, %v4405
    %v4412 = vld [vmem:[%s1359] sm:$0x1]
    %v4414 = vlaneseq
    %v4415 = vshrl.u32 %v4414, 7
    %v4416 = vsub.s32 0, %v4415
    %v4417 = vrot.slane %v4412, %v4416
    %v4419 = vadd.f32 %v4408, %v4417
    %v4420 = vadd.f32 %v4409, %v4417
    %v4421 = vadd.f32 %v4410, %v4417
    %v4422 = vadd.f32 %v4411, %v4417
    %v4423 = vld [vmem:[%s1371] sm:$0xff]
    %v4424 = vld [vmem:[%s1371 + $0x8] sm:$0xff]
    %v4425 = vld [vmem:[%s1371 + $0x10] sm:$0xff]
    %v4426 = vld [vmem:[%s1371 + $0x18] sm:$0xff]
    %v4428 = vsel %vm218, %v4423, 0
    %v4431 = vsel %vm218, %v4424, 0
    %v4434 = vsel %vm218, %v4425, 0
    %v4437 = vsel %vm218, %v4426, 0
    %4439 = vmatprep.subr.mxu0 0.0
    %4440 = vmatpush1.msra.mxu0 %v4419
    %4441 = vmatprep.subr.mxu0 0.0
    %4442 = vmatpush1.msra.mxu0 %v4420
    %4443 = vmatprep.subr.mxu0 0.0
    %4444 = vmatpush1.msra.mxu0 %v4421
    %4445 = vmatprep.subr.mxu0 0.0
    %4446 = vmatpush1.msra.mxu0 %v4422
    %4447 = vmatprep.subr.mxu0 0.0
    %4448 = vmatpush1.msra.mxu0 0.0
    %4449 = vmatprep.subr.mxu0 0.0
    %4450 = vmatpush1.msra.mxu0 0.0
    %4451 = vmatprep.subr.mxu0 0.0
    %4452 = vmatpush1.msra.mxu0 0.0
    %4453 = vmatprep.subr.mxu0 0.0
    %4454 = vmatpush1.msra.mxu0 0.0
    %4455 = vmatprep.subr.mxu0 0.0
    %4456 = vmatpush1.msra.mxu0 0.0
    %4457 = vmatprep.subr.mxu0 0.0
    %4458 = vmatpush1.msra.mxu0 0.0
    %4459 = vmatprep.subr.mxu0 0.0
    %4460 = vmatpush1.msra.mxu0 0.0
    %4461 = vmatprep.subr.mxu0 0.0
    %4462 = vmatpush1.msra.mxu0 0.0
    %4463 = vmatprep.subr.mxu0 0.0
    %4464 = vmatpush1.msra.mxu0 0.0
    %4465 = vmatprep.subr.mxu0 0.0
    %4466 = vmatpush1.msra.mxu0 0.0
    %4467 = vmatprep.subr.mxu0 0.0
    %4468 = vmatpush1.msra.mxu0 0.0
    %4469 = vmatprep.subr.mxu0 0.0
    %4470 = vmatpush1.msra.mxu0 0.0
    %4471 = vmatprep.subr.mxu0 0.0
    %4472 = vmatpush1.msra.mxu0 0.0
    %4473 = vmatprep.subr.mxu0 0.0
    %4474 = vmatpush1.msra.mxu0 0.0
    %4475 = vmatprep.subr.mxu0 0.0
    %4476 = vmatpush1.msra.mxu0 0.0
    %4477 = vmatprep.subr.mxu0 0.0
    %4478 = vmatpush1.msra.mxu0 0.0
    %4479 = vmatprep.subr.mxu0 0.0
    %4480 = vmatpush1.msra.mxu0 0.0
    %4481 = vmatprep.subr.mxu0 0.0
    %4482 = vmatpush1.msra.mxu0 0.0
    %4483 = vmatprep.subr.mxu0 0.0
    %4484 = vmatpush1.msra.mxu0 0.0
    %4485 = vmatprep.subr.mxu0 0.0
    %4486 = vmatpush1.msra.mxu0 0.0
    %4487 = vmatprep.subr.mxu0 0.0
    %4488 = vmatpush1.msra.mxu0 0.0
    %4489 = vmatprep.subr.mxu0 0.0
    %4490 = vmatpush1.msra.mxu0 0.0
    %4491 = vmatprep.subr.mxu0 0.0
    %4492 = vmatpush1.msra.mxu0 0.0
    %4493 = vmatprep.subr.mxu0 0.0
    %4494 = vmatpush1.msra.mxu0 0.0
    %4495 = vmatprep.subr.mxu0 0.0
    %4496 = vmatpush1.msra.mxu0 0.0
    %4497 = vmatprep.subr.mxu0 0.0
    %4498 = vmatpush1.msra.mxu0 0.0
    %4499 = vmatprep.subr.mxu0 0.0
    %4500 = vmatpush1.msra.mxu0 0.0
    %4501 = vmatprep.subr.mxu0 0.0
    %4502 = vmatpush1.msra.mxu0 0.0
    %4503 = vmatprep.mubr.f32.mxu0 0.0
    %4504 = vmatmul.mubr.f32.gmra.mrb[0].mxu0 %v4428
    %v4505 = vpop.f32.mrb[0].mxu0
    %v4506 = vadd.f32 0.0, %v4505
    %v4507 = vpop.f32.mrb[0].mxu0
    %4508 = vmatprep.mubr.f32.mxu0 0.0
    %4509 = vmatmul.mubr.f32.gmra.mrb[0].mxu0 %v4431
    %v4510 = vpop.f32.mrb[0].mxu0
    %v4511 = vadd.f32 0.0, %v4510
    %v4512 = vpop.f32.mrb[0].mxu0
    %4513 = vmatprep.mubr.f32.mxu0 0.0
    %4514 = vmatmul.mubr.f32.gmra.mrb[0].mxu0 %v4434
    %v4515 = vpop.f32.mrb[0].mxu0
    %v4516 = vadd.f32 0.0, %v4515
    %v4517 = vpop.f32.mrb[0].mxu0
    %4518 = vmatprep.mubr.f32.mxu0 0.0
    %4519 = vmatmul.mubr.f32.gmra.mrb[0].mxu0 %v4437
    %v4520 = vpop.f32.mrb[0].mxu0
    %v4521 = vadd.f32 0.0, %v4520
    %v4522 = vpop.f32.mrb[0].mxu0
    %4523 = vdwg.mxu0
    %v4524 = vld [vmem:[%s1473] sm:$0xff]
    %v4525 = vld [vmem:[%s1473 + $0x8] sm:$0xff]
    %v4526 = vld [vmem:[%s1473 + $0x10] sm:$0xff]
    %v4527 = vld [vmem:[%s1473 + $0x18] sm:$0xff]
    %v4528 = vld [vmem:[%s1478] sm:$0xff]
    %v4529 = vld [vmem:[%s1478 + $0x8] sm:$0xff]
    %v4530 = vld [vmem:[%s1478 + $0x10] sm:$0xff]
    %v4531 = vld [vmem:[%s1478 + $0x18] sm:$0xff]
    %v4533 = vsel %vm218, %v4506, 0
    %v4536 = vsel %vm218, %v4511, 0
    %v4539 = vsel %vm218, %v4516, 0
    %v4542 = vsel %vm218, %v4521, 0
    %4544 = vmatprep.subr.mxu0 0.0
    %4545 = vmatpush1.msra.mxu0 %v4528
    %4546 = vmatprep.subr.mxu0 0.0
    %4547 = vmatpush1.msra.mxu0 %v4529
    %4548 = vmatprep.subr.mxu0 0.0
    %4549 = vmatpush1.msra.mxu0 %v4530
    %4550 = vmatprep.subr.mxu0 0.0
    %4551 = vmatpush1.msra.mxu0 %v4531
    %4552 = vmatprep.subr.mxu0 0.0
    %4553 = vmatpush1.msra.mxu0 0.0
    %4554 = vmatprep.subr.mxu0 0.0
    %4555 = vmatpush1.msra.mxu0 0.0
    %4556 = vmatprep.subr.mxu0 0.0
    %4557 = vmatpush1.msra.mxu0 0.0
    %4558 = vmatprep.subr.mxu0 0.0
    %4559 = vmatpush1.msra.mxu0 0.0
    %4560 = vmatprep.subr.mxu0 0.0
    %4561 = vmatpush1.msra.mxu0 0.0
    %4562 = vmatprep.subr.mxu0 0.0
    %4563 = vmatpush1.msra.mxu0 0.0
    %4564 = vmatprep.subr.mxu0 0.0
    %4565 = vmatpush1.msra.mxu0 0.0
    %4566 = vmatprep.subr.mxu0 0.0
    %4567 = vmatpush1.msra.mxu0 0.0
    %4568 = vmatprep.subr.mxu0 0.0
    %4569 = vmatpush1.msra.mxu0 0.0
    %4570 = vmatprep.subr.mxu0 0.0
    %4571 = vmatpush1.msra.mxu0 0.0
    %4572 = vmatprep.subr.mxu0 0.0
    %4573 = vmatpush1.msra.mxu0 0.0
    %4574 = vmatprep.subr.mxu0 0.0
    %4575 = vmatpush1.msra.mxu0 0.0
    %4576 = vmatprep.subr.mxu0 0.0
    %4577 = vmatpush1.msra.mxu0 0.0
    %4578 = vmatprep.subr.mxu0 0.0
    %4579 = vmatpush1.msra.mxu0 0.0
    %4580 = vmatprep.subr.mxu0 0.0
    %4581 = vmatpush1.msra.mxu0 0.0
    %4582 = vmatprep.subr.mxu0 0.0
    %4583 = vmatpush1.msra.mxu0 0.0
    %4584 = vmatprep.subr.mxu0 0.0
    %4585 = vmatpush1.msra.mxu0 0.0
    %4586 = vmatprep.subr.mxu0 0.0
    %4587 = vmatpush1.msra.mxu0 0.0
    %4588 = vmatprep.subr.mxu0 0.0
    %4589 = vmatpush1.msra.mxu0 0.0
    %4590 = vmatprep.subr.mxu0 0.0
    %4591 = vmatpush1.msra.mxu0 0.0
    %4592 = vmatprep.subr.mxu0 0.0
    %4593 = vmatpush1.msra.mxu0 0.0
    %4594 = vmatprep.subr.mxu0 0.0
    %4595 = vmatpush1.msra.mxu0 0.0
    %4596 = vmatprep.subr.mxu0 0.0
    %4597 = vmatpush1.msra.mxu0 0.0
    %4598 = vmatprep.subr.mxu0 0.0
    %4599 = vmatpush1.msra.mxu0 0.0
    %4600 = vmatprep.subr.mxu0 0.0
    %4601 = vmatpush1.msra.mxu0 0.0
    %4602 = vmatprep.subr.mxu0 0.0
    %4603 = vmatpush1.msra.mxu0 0.0
    %4604 = vmatprep.subr.mxu0 0.0
    %4605 = vmatpush1.msra.mxu0 0.0
    %4606 = vmatprep.subr.mxu0 0.0
    %4607 = vmatpush1.msra.mxu0 0.0
    %4608 = vmatprep.mubr.f32.mxu0 0.0
    %4609 = vmatmul.mubr.f32.gmra.mrb[0].mxu0 %v4533
    %v4610 = vpop.f32.mrb[0].mxu0
    %v4611 = vadd.f32 0.0, %v4610
    %v4612 = vpop.f32.mrb[0].mxu0
    %4613 = vmatprep.mubr.f32.mxu0 0.0
    %4614 = vmatmul.mubr.f32.gmra.mrb[0].mxu0 %v4536
    %v4615 = vpop.f32.mrb[0].mxu0
    %v4616 = vadd.f32 0.0, %v4615
    %v4617 = vpop.f32.mrb[0].mxu0
    %4618 = vmatprep.mubr.f32.mxu0 0.0
    %4619 = vmatmul.mubr.f32.gmra.mrb[0].mxu0 %v4539
    %v4620 = vpop.f32.mrb[0].mxu0
    %v4621 = vadd.f32 0.0, %v4620
    %v4622 = vpop.f32.mrb[0].mxu0
    %4623 = vmatprep.mubr.f32.mxu0 0.0
    %4624 = vmatmul.mubr.f32.gmra.mrb[0].mxu0 %v4542
    %v4625 = vpop.f32.mrb[0].mxu0
    %v4626 = vadd.f32 0.0, %v4625
    %v4627 = vpop.f32.mrb[0].mxu0
    %4628 = vdwg.mxu0
    %v4630 = vsel %vm218, %v4419, 0
    %v4633 = vsel %vm218, %v4420, 0
    %v4636 = vsel %vm218, %v4421, 0
    %v4639 = vsel %vm218, %v4422, 0
    %4641 = vmatprep.subr.mxu0 0.0
    %4642 = vmatpush1.msra.mxu0 %v4524
    %4643 = vmatprep.subr.mxu0 0.0
    %4644 = vmatpush1.msra.mxu0 %v4525
    %4645 = vmatprep.subr.mxu0 0.0
    %4646 = vmatpush1.msra.mxu0 %v4526
    %4647 = vmatprep.subr.mxu0 0.0
    %4648 = vmatpush1.msra.mxu0 %v4527
    %4649 = vmatprep.subr.mxu0 0.0
    %4650 = vmatpush1.msra.mxu0 0.0
    %4651 = vmatprep.subr.mxu0 0.0
    %4652 = vmatpush1.msra.mxu0 0.0
    %4653 = vmatprep.subr.mxu0 0.0
    %4654 = vmatpush1.msra.mxu0 0.0
    %4655 = vmatprep.subr.mxu0 0.0
    %4656 = vmatpush1.msra.mxu0 0.0
    %4657 = vmatprep.subr.mxu0 0.0
    %4658 = vmatpush1.msra.mxu0 0.0
    %4659 = vmatprep.subr.mxu0 0.0
    %4660 = vmatpush1.msra.mxu0 0.0
    %4661 = vmatprep.subr.mxu0 0.0
    %4662 = vmatpush1.msra.mxu0 0.0
    %4663 = vmatprep.subr.mxu0 0.0
    %4664 = vmatpush1.msra.mxu0 0.0
    %4665 = vmatprep.subr.mxu0 0.0
    %4666 = vmatpush1.msra.mxu0 0.0
    %4667 = vmatprep.subr.mxu0 0.0
    %4668 = vmatpush1.msra.mxu0 0.0
    %4669 = vmatprep.subr.mxu0 0.0
    %4670 = vmatpush1.msra.mxu0 0.0
    %4671 = vmatprep.subr.mxu0 0.0
    %4672 = vmatpush1.msra.mxu0 0.0
    %4673 = vmatprep.subr.mxu0 0.0
    %4674 = vmatpush1.msra.mxu0 0.0
    %4675 = vmatprep.subr.mxu0 0.0
    %4676 = vmatpush1.msra.mxu0 0.0
    %4677 = vmatprep.subr.mxu0 0.0
    %4678 = vmatpush1.msra.mxu0 0.0
    %4679 = vmatprep.subr.mxu0 0.0
    %4680 = vmatpush1.msra.mxu0 0.0
    %4681 = vmatprep.subr.mxu0 0.0
    %4682 = vmatpush1.msra.mxu0 0.0
    %4683 = vmatprep.subr.mxu0 0.0
    %4684 = vmatpush1.msra.mxu0 0.0
    %4685 = vmatprep.subr.mxu0 0.0
    %4686 = vmatpush1.msra.mxu0 0.0
    %4687 = vmatprep.subr.mxu0 0.0
    %4688 = vmatpush1.msra.mxu0 0.0
    %4689 = vmatprep.subr.mxu0 0.0
    %4690 = vmatpush1.msra.mxu0 0.0
    %4691 = vmatprep.subr.mxu0 0.0
    %4692 = vmatpush1.msra.mxu0 0.0
    %4693 = vmatprep.subr.mxu0 0.0
    %4694 = vmatpush1.msra.mxu0 0.0
    %4695 = vmatprep.subr.mxu0 0.0
    %4696 = vmatpush1.msra.mxu0 0.0
    %4697 = vmatprep.subr.mxu0 0.0
    %4698 = vmatpush1.msra.mxu0 0.0
    %4699 = vmatprep.subr.mxu0 0.0
    %4700 = vmatpush1.msra.mxu0 0.0
    %4701 = vmatprep.subr.mxu0 0.0
    %4702 = vmatpush1.msra.mxu0 0.0
    %4703 = vmatprep.subr.mxu0 0.0
    %4704 = vmatpush1.msra.mxu0 0.0
    %4705 = vmatprep.mubr.f32.mxu0 0.0
    %4706 = vmatmul.mubr.f32.gmra.mrb[0].mxu0 %v4630
    %v4707 = vpop.f32.mrb[0].mxu0
    %v4708 = vadd.f32 %v4611, %v4707
    %v4709 = vpop.f32.mrb[0].mxu0
    %4710 = vmatprep.mubr.f32.mxu0 0.0
    %4711 = vmatmul.mubr.f32.gmra.mrb[0].mxu0 %v4633
    %v4712 = vpop.f32.mrb[0].mxu0
    %v4713 = vadd.f32 %v4616, %v4712
    %v4714 = vpop.f32.mrb[0].mxu0
    %4715 = vmatprep.mubr.f32.mxu0 0.0
    %4716 = vmatmul.mubr.f32.gmra.mrb[0].mxu0 %v4636
    %v4717 = vpop.f32.mrb[0].mxu0
    %v4718 = vadd.f32 %v4621, %v4717
    %v4719 = vpop.f32.mrb[0].mxu0
    %4720 = vmatprep.mubr.f32.mxu0 0.0
    %4721 = vmatmul.mubr.f32.gmra.mrb[0].mxu0 %v4639
    %v4722 = vpop.f32.mrb[0].mxu0
    %v4723 = vadd.f32 %v4626, %v4722
    %v4724 = vpop.f32.mrb[0].mxu0
    %4725 = vdwg.mxu0
    %v4726 = vld [vmem:[%s1677] sm:$0x1]
    %v4728 = vlaneseq
    %v4729 = vshrl.u32 %v4728, 7
    %v4730 = vsub.s32 0, %v4729
    %v4731 = vrot.slane %v4726, %v4730
    %v4733 = vadd.f32 %v4708, %v4731
    %v4734 = vadd.f32 %v4713, %v4731
    %v4735 = vadd.f32 %v4718, %v4731
    %v4736 = vadd.f32 %v4723, %v4731
    %v4737 = vtanh.pop %v4733
    %v4738 = vtanh.pop %v4734
    %v4739 = vtanh.pop %v4735
    %v4740 = vtanh.pop %v4736
    %v4741 = vsub.f32 0.0, %v4733
    %v4742 = vsub.f32 0.0, %v4734
    %v4743 = vsub.f32 0.0, %v4735
    %v4744 = vsub.f32 0.0, %v4736
    %v4745 = vmul.f32 %v4741, 1.442695
    %v4746 = vpow.pop %v4745
    %v4747 = vmul.f32 %v4742, 1.442695
    %v4748 = vpow.pop %v4747
    %v4749 = vmul.f32 %v4743, 1.442695
    %v4750 = vpow.pop %v4749
    %v4751 = vmul.f32 %v4744, 1.442695
    %v4752 = vpow.pop %v4751
    %v4753 = vadd.f32 %v4746, 1.0
    %v4754 = vadd.f32 %v4748, 1.0
    %v4755 = vadd.f32 %v4750, 1.0
    %v4756 = vadd.f32 %v4752, 1.0
    %v4757 = vrcp.pop %v4753
    %v4758 = vrcp.pop %v4754
    %v4759 = vrcp.pop %v4755
    %v4760 = vrcp.pop %v4756
    %4765 = vrot.lane.b32.xlu0 %v4757, 96
    %v4766 = vpop.permute.xlu0 %4765
    %4767 = vrot.lane.b32.xlu0 %v4758, 96
    %v4768 = vpop.permute.xlu0 %4767
    %4769 = vrot.lane.b32.xlu0 %v4759, 96
    %v4770 = vpop.permute.xlu0 %4769
    %4771 = vrot.lane.b32.xlu0 %v4760, 96
    %v4772 = vpop.permute.xlu0 %4771
    %v4777 = vmul.f32 %v4737, %v4766
    %v4778 = vmul.f32 %v4738, %v4768
    %v4779 = vmul.f32 %v4739, %v4770
    %v4780 = vmul.f32 %v4740, %v4772
    %v4781 = vld [vmem:[%s1733] sm:$0xff]
    %v4782 = vld [vmem:[%s1733 + $0x8] sm:$0xff]
    %v4783 = vld [vmem:[%s1733 + $0x10] sm:$0xff]
    %v4784 = vld [vmem:[%s1733 + $0x18] sm:$0xff]
    %v4786 = vsel %vm218, %v4777, 0
    %v4789 = vsel %vm218, %v4778, 0
    %v4792 = vsel %vm218, %v4779, 0
    %v4795 = vsel %vm218, %v4780, 0
    %4797 = vmatprep.subr.mxu0 0.0
    %4798 = vmatpush1.msra.mxu0 %v4781
    %4799 = vmatprep.subr.mxu0 0.0
    %4800 = vmatpush1.msra.mxu0 %v4782
    %4801 = vmatprep.subr.mxu0 0.0
    %4802 = vmatpush1.msra.mxu0 %v4783
    %4803 = vmatprep.subr.mxu0 0.0
    %4804 = vmatpush1.msra.mxu0 %v4784
    %4805 = vmatprep.subr.mxu0 0.0
    %4806 = vmatpush1.msra.mxu0 0.0
    %4807 = vmatprep.subr.mxu0 0.0
    %4808 = vmatpush1.msra.mxu0 0.0
    %4809 = vmatprep.subr.mxu0 0.0
    %4810 = vmatpush1.msra.mxu0 0.0
    %4811 = vmatprep.subr.mxu0 0.0
    %4812 = vmatpush1.msra.mxu0 0.0
    %4813 = vmatprep.subr.mxu0 0.0
    %4814 = vmatpush1.msra.mxu0 0.0
    %4815 = vmatprep.subr.mxu0 0.0
    %4816 = vmatpush1.msra.mxu0 0.0
    %4817 = vmatprep.subr.mxu0 0.0
    %4818 = vmatpush1.msra.mxu0 0.0
    %4819 = vmatprep.subr.mxu0 0.0
    %4820 = vmatpush1.msra.mxu0 0.0
    %4821 = vmatprep.subr.mxu0 0.0
    %4822 = vmatpush1.msra.mxu0 0.0
    %4823 = vmatprep.subr.mxu0 0.0
    %4824 = vmatpush1.msra.mxu0 0.0
    %4825 = vmatprep.subr.mxu0 0.0
    %4826 = vmatpush1.msra.mxu0 0.0
    %4827 = vmatprep.subr.mxu0 0.0
    %4828 = vmatpush1.msra.mxu0 0.0
    %4829 = vmatprep.subr.mxu0 0.0
    %4830 = vmatpush1.msra.mxu0 0.0
    %4831 = vmatprep.subr.mxu0 0.0
    %4832 = vmatpush1.msra.mxu0 0.0
    %4833 = vmatprep.subr.mxu0 0.0
    %4834 = vmatpush1.msra.mxu0 0.0
    %4835 = vmatprep.subr.mxu0 0.0
    %4836 = vmatpush1.msra.mxu0 0.0
    %4837 = vmatprep.subr.mxu0 0.0
    %4838 = vmatpush1.msra.mxu0 0.0
    %4839 = vmatprep.subr.mxu0 0.0
    %4840 = vmatpush1.msra.mxu0 0.0
    %4841 = vmatprep.subr.mxu0 0.0
    %4842 = vmatpush1.msra.mxu0 0.0
    %4843 = vmatprep.subr.mxu0 0.0
    %4844 = vmatpush1.msra.mxu0 0.0
    %4845 = vmatprep.subr.mxu0 0.0
    %4846 = vmatpush1.msra.mxu0 0.0
    %4847 = vmatprep.subr.mxu0 0.0
    %4848 = vmatpush1.msra.mxu0 0.0
    %4849 = vmatprep.subr.mxu0 0.0
    %4850 = vmatpush1.msra.mxu0 0.0
    %4851 = vmatprep.subr.mxu0 0.0
    %4852 = vmatpush1.msra.mxu0 0.0
    %4853 = vmatprep.subr.mxu0 0.0
    %4854 = vmatpush1.msra.mxu0 0.0
    %4855 = vmatprep.subr.mxu0 0.0
    %4856 = vmatpush1.msra.mxu0 0.0
    %4857 = vmatprep.subr.mxu0 0.0
    %4858 = vmatpush1.msra.mxu0 0.0
    %4859 = vmatprep.subr.mxu0 0.0
    %4860 = vmatpush1.msra.mxu0 0.0
    %4861 = vmatprep.mubr.f32.mxu0 0.0
    %4862 = vmatmul.mubr.f32.gmra.mrb[0].mxu0 %v4786
    %v4863 = vpop.f32.mrb[0].mxu0
    %v4864 = vadd.f32 0.0, %v4863
    %v4865 = vpop.f32.mrb[0].mxu0
    %4866 = vmatprep.mubr.f32.mxu0 0.0
    %4867 = vmatmul.mubr.f32.gmra.mrb[0].mxu0 %v4789
    %v4868 = vpop.f32.mrb[0].mxu0
    %v4869 = vadd.f32 0.0, %v4868
    %v4870 = vpop.f32.mrb[0].mxu0
    %4871 = vmatprep.mubr.f32.mxu0 0.0
    %4872 = vmatmul.mubr.f32.gmra.mrb[0].mxu0 %v4792
    %v4873 = vpop.f32.mrb[0].mxu0
    %v4874 = vadd.f32 0.0, %v4873
    %v4875 = vpop.f32.mrb[0].mxu0
    %4876 = vmatprep.mubr.f32.mxu0 0.0
    %4877 = vmatmul.mubr.f32.gmra.mrb[0].mxu0 %v4795
    %v4878 = vpop.f32.mrb[0].mxu0
    %v4879 = vadd.f32 0.0, %v4878
    %v4880 = vpop.f32.mrb[0].mxu0
    %4881 = vdwg.mxu0
    %v4882 = vadd.f32 %v4315, %v4864
    %v4883 = vadd.f32 %v4316, %v4869
    %v4884 = vadd.f32 %v4317, %v4874
    %v4885 = vadd.f32 %v4318, %v4879
    %v4886 = vld [vmem:[%s1839] sm:$0x1]
    %v4888 = vlaneseq
    %v4889 = vshrl.u32 %v4888, 7
    %v4890 = vsub.s32 0, %v4889
    %v4891 = vrot.slane %v4886, %v4890
    %v4893 = vadd.f32 %v4882, %v4891
    %v4894 = vadd.f32 %v4883, %v4891
    %v4895 = vadd.f32 %v4884, %v4891
    %v4896 = vadd.f32 %v4885, %v4891
    %v4897 = vld [vmem:[%s1851] sm:$0xff]
    %v4898 = vld [vmem:[%s1851 + $0x8] sm:$0xff]
    %v4899 = vld [vmem:[%s1851 + $0x10] sm:$0xff]
    %v4900 = vld [vmem:[%s1851 + $0x18] sm:$0xff]
    %4901 = vmatprep.subr.mxu0 0.0
    %4902 = vmatpush1.msra.mxu0 %v4897
    %4903 = vmatprep.subr.mxu0 0.0
    %4904 = vmatpush1.msra.mxu0 %v4898
    %4905 = vmatprep.subr.mxu0 0.0
    %4906 = vmatpush1.msra.mxu0 %v4899
    %4907 = vmatprep.subr.mxu0 0.0
    %4908 = vmatpush1.msra.mxu0 %v4900
    %4909 = vmatprep.subr.mxu0 0.0
    %4910 = vmatpush1.msra.mxu0 0.0
    %4911 = vmatprep.subr.mxu0 0.0
    %4912 = vmatpush1.msra.mxu0 0.0
    %4913 = vmatprep.subr.mxu0 0.0
    %4914 = vmatpush1.msra.mxu0 0.0
    %4915 = vmatprep.subr.mxu0 0.0
    %4916 = vmatpush1.msra.mxu0 0.0
    %4917 = vmatprep.subr.mxu0 0.0
    %4918 = vmatpush1.msra.mxu0 0.0
    %4919 = vmatprep.subr.mxu0 0.0
    %4920 = vmatpush1.msra.mxu0 0.0
    %4921 = vmatprep.subr.mxu0 0.0
    %4922 = vmatpush1.msra.mxu0 0.0
    %4923 = vmatprep.subr.mxu0 0.0
    %4924 = vmatpush1.msra.mxu0 0.0
    %4925 = vmatprep.subr.mxu0 0.0
    %4926 = vmatpush1.msra.mxu0 0.0
    %4927 = vmatprep.subr.mxu0 0.0
    %4928 = vmatpush1.msra.mxu0 0.0
    %4929 = vmatprep.subr.mxu0 0.0
    %4930 = vmatpush1.msra.mxu0 0.0
    %4931 = vmatprep.subr.mxu0 0.0
    %4932 = vmatpush1.msra.mxu0 0.0
    %4933 = vmatprep.subr.mxu0 0.0
    %4934 = vmatpush1.msra.mxu0 0.0
    %4935 = vmatprep.subr.mxu0 0.0
    %4936 = vmatpush1.msra.mxu0 0.0
    %4937 = vmatprep.subr.mxu0 0.0
    %4938 = vmatpush1.msra.mxu0 0.0
    %4939 = vmatprep.subr.mxu0 0.0
    %4940 = vmatpush1.msra.mxu0 0.0
    %4941 = vmatprep.subr.mxu0 0.0
    %4942 = vmatpush1.msra.mxu0 0.0
    %4943 = vmatprep.subr.mxu0 0.0
    %4944 = vmatpush1.msra.mxu0 0.0
    %4945 = vmatprep.subr.mxu0 0.0
    %4946 = vmatpush1.msra.mxu0 0.0
    %4947 = vmatprep.subr.mxu0 0.0
    %4948 = vmatpush1.msra.mxu0 0.0
    %4949 = vmatprep.subr.mxu0 0.0
    %4950 = vmatpush1.msra.mxu0 0.0
    %4951 = vmatprep.subr.mxu0 0.0
    %4952 = vmatpush1.msra.mxu0 0.0
    %4953 = vmatprep.subr.mxu0 0.0
    %4954 = vmatpush1.msra.mxu0 0.0
    %4955 = vmatprep.subr.mxu0 0.0
    %4956 = vmatpush1.msra.mxu0 0.0
    %4957 = vmatprep.subr.mxu0 0.0
    %4958 = vmatpush1.msra.mxu0 0.0
    %4959 = vmatprep.subr.mxu0 0.0
    %4960 = vmatpush1.msra.mxu0 0.0
    %4961 = vmatprep.subr.mxu0 0.0
    %4962 = vmatpush1.msra.mxu0 0.0
    %4963 = vmatprep.subr.mxu0 0.0
    %4964 = vmatpush1.msra.mxu0 0.0
    %4965 = vmatprep.mubr.f32.mxu0 0.0
    %4966 = vmatmul.mubr.f32.gmra.mrb[0].mxu0 %v4786
    %v4967 = vpop.f32.mrb[0].mxu0
    %v4968 = vadd.f32 0.0, %v4967
    %v4969 = vpop.f32.mrb[0].mxu0
    %4970 = vmatprep.mubr.f32.mxu0 0.0
    %4971 = vmatmul.mubr.f32.gmra.mrb[0].mxu0 %v4789
    %v4972 = vpop.f32.mrb[0].mxu0
    %v4973 = vadd.f32 0.0, %v4972
    %v4974 = vpop.f32.mrb[0].mxu0
    %4975 = vmatprep.mubr.f32.mxu0 0.0
    %4976 = vmatmul.mubr.f32.gmra.mrb[0].mxu0 %v4792
    %v4977 = vpop.f32.mrb[0].mxu0
    %v4978 = vadd.f32 0.0, %v4977
    %v4979 = vpop.f32.mrb[0].mxu0
    %4980 = vmatprep.mubr.f32.mxu0 0.0
    %4981 = vmatmul.mubr.f32.gmra.mrb[0].mxu0 %v4795
    %v4982 = vpop.f32.mrb[0].mxu0
    %v4983 = vadd.f32 0.0, %v4982
    %v4984 = vpop.f32.mrb[0].mxu0
    %4985 = vdwg.mxu0
    %v4986 = vadd.f32 %v4419, %v4968
    %v4987 = vadd.f32 %v4420, %v4973
    %v4988 = vadd.f32 %v4421, %v4978
    %v4989 = vadd.f32 %v4422, %v4983
    %v4990 = vld [vmem:[%s1945] sm:$0x1]
    %v4992 = vlaneseq
    %v4993 = vshrl.u32 %v4992, 7
    %v4994 = vsub.s32 0, %v4993
    %v4995 = vrot.slane %v4990, %v4994
    %v4997 = vadd.f32 %v4986, %v4995
    %v4998 = vadd.f32 %v4987, %v4995
    %v4999 = vadd.f32 %v4988, %v4995
    %v5000 = vadd.f32 %v4989, %v4995
    %v5001 = vld [vmem:[%s1957] sm:$0xff]
    %v5002 = vld [vmem:[%s1957 + $0x8] sm:$0xff]
    %v5003 = vld [vmem:[%s1957 + $0x10] sm:$0xff]
    %v5004 = vld [vmem:[%s1957 + $0x18] sm:$0xff]
    %v5006 = vsel %vm218, %v5001, 0
    %v5009 = vsel %vm218, %v5002, 0
    %v5012 = vsel %vm218, %v5003, 0
    %v5015 = vsel %vm218, %v5004, 0
    %5017 = vmatprep.subr.mxu0 0.0
    %5018 = vmatpush1.msra.mxu0 %v4997
    %5019 = vmatprep.subr.mxu0 0.0
    %5020 = vmatpush1.msra.mxu0 %v4998
    %5021 = vmatprep.subr.mxu0 0.0
    %5022 = vmatpush1.msra.mxu0 %v4999
    %5023 = vmatprep.subr.mxu0 0.0
    %5024 = vmatpush1.msra.mxu0 %v5000
    %5025 = vmatprep.subr.mxu0 0.0
    %5026 = vmatpush1.msra.mxu0 0.0
    %5027 = vmatprep.subr.mxu0 0.0
    %5028 = vmatpush1.msra.mxu0 0.0
    %5029 = vmatprep.subr.mxu0 0.0
    %5030 = vmatpush1.msra.mxu0 0.0
    %5031 = vmatprep.subr.mxu0 0.0
    %5032 = vmatpush1.msra.mxu0 0.0
    %5033 = vmatprep.subr.mxu0 0.0
    %5034 = vmatpush1.msra.mxu0 0.0
    %5035 = vmatprep.subr.mxu0 0.0
    %5036 = vmatpush1.msra.mxu0 0.0
    %5037 = vmatprep.subr.mxu0 0.0
    %5038 = vmatpush1.msra.mxu0 0.0
    %5039 = vmatprep.subr.mxu0 0.0
    %5040 = vmatpush1.msra.mxu0 0.0
    %5041 = vmatprep.subr.mxu0 0.0
    %5042 = vmatpush1.msra.mxu0 0.0
    %5043 = vmatprep.subr.mxu0 0.0
    %5044 = vmatpush1.msra.mxu0 0.0
    %5045 = vmatprep.subr.mxu0 0.0
    %5046 = vmatpush1.msra.mxu0 0.0
    %5047 = vmatprep.subr.mxu0 0.0
    %5048 = vmatpush1.msra.mxu0 0.0
    %5049 = vmatprep.subr.mxu0 0.0
    %5050 = vmatpush1.msra.mxu0 0.0
    %5051 = vmatprep.subr.mxu0 0.0
    %5052 = vmatpush1.msra.mxu0 0.0
    %5053 = vmatprep.subr.mxu0 0.0
    %5054 = vmatpush1.msra.mxu0 0.0
    %5055 = vmatprep.subr.mxu0 0.0
    %5056 = vmatpush1.msra.mxu0 0.0
    %5057 = vmatprep.subr.mxu0 0.0
    %5058 = vmatpush1.msra.mxu0 0.0
    %5059 = vmatprep.subr.mxu0 0.0
    %5060 = vmatpush1.msra.mxu0 0.0
    %5061 = vmatprep.subr.mxu0 0.0
    %5062 = vmatpush1.msra.mxu0 0.0
    %5063 = vmatprep.subr.mxu0 0.0
    %5064 = vmatpush1.msra.mxu0 0.0
    %5065 = vmatprep.subr.mxu0 0.0
    %5066 = vmatpush1.msra.mxu0 0.0
    %5067 = vmatprep.subr.mxu0 0.0
    %5068 = vmatpush1.msra.mxu0 0.0
    %5069 = vmatprep.subr.mxu0 0.0
    %5070 = vmatpush1.msra.mxu0 0.0
    %5071 = vmatprep.subr.mxu0 0.0
    %5072 = vmatpush1.msra.mxu0 0.0
    %5073 = vmatprep.subr.mxu0 0.0
    %5074 = vmatpush1.msra.mxu0 0.0
    %5075 = vmatprep.subr.mxu0 0.0
    %5076 = vmatpush1.msra.mxu0 0.0
    %5077 = vmatprep.subr.mxu0 0.0
    %5078 = vmatpush1.msra.mxu0 0.0
    %5079 = vmatprep.subr.mxu0 0.0
    %5080 = vmatpush1.msra.mxu0 0.0
    %5081 = vmatprep.mubr.f32.mxu0 0.0
    %5082 = vmatmul.mubr.f32.gmra.mrb[0].mxu0 %v5006
    %v5083 = vpop.f32.mrb[0].mxu0
    %v5084 = vadd.f32 0.0, %v5083
    %v5085 = vpop.f32.mrb[0].mxu0
    %5086 = vmatprep.mubr.f32.mxu0 0.0
    %5087 = vmatmul.mubr.f32.gmra.mrb[0].mxu0 %v5009
    %v5088 = vpop.f32.mrb[0].mxu0
    %v5089 = vadd.f32 0.0, %v5088
    %v5090 = vpop.f32.mrb[0].mxu0
    %5091 = vmatprep.mubr.f32.mxu0 0.0
    %5092 = vmatmul.mubr.f32.gmra.mrb[0].mxu0 %v5012
    %v5093 = vpop.f32.mrb[0].mxu0
    %v5094 = vadd.f32 0.0, %v5093
    %v5095 = vpop.f32.mrb[0].mxu0
    %5096 = vmatprep.mubr.f32.mxu0 0.0
    %5097 = vmatmul.mubr.f32.gmra.mrb[0].mxu0 %v5015
    %v5098 = vpop.f32.mrb[0].mxu0
    %v5099 = vadd.f32 0.0, %v5098
    %v5100 = vpop.f32.mrb[0].mxu0
    %5101 = vdwg.mxu0
    %v5102 = vld [vmem:[%s2059] sm:$0xff]
    %v5103 = vld [vmem:[%s2059 + $0x8] sm:$0xff]
    %v5104 = vld [vmem:[%s2059 + $0x10] sm:$0xff]
    %v5105 = vld [vmem:[%s2059 + $0x18] sm:$0xff]
    %v5106 = vld [vmem:[%s2064] sm:$0xff]
    %v5107 = vld [vmem:[%s2064 + $0x8] sm:$0xff]
    %v5108 = vld [vmem:[%s2064 + $0x10] sm:$0xff]
    %v5109 = vld [vmem:[%s2064 + $0x18] sm:$0xff]
    %v5111 = vsel %vm218, %v5084, 0
    %v5114 = vsel %vm218, %v5089, 0
    %v5117 = vsel %vm218, %v5094, 0
    %v5120 = vsel %vm218, %v5099, 0
    %5122 = vmatprep.subr.mxu0 0.0
    %5123 = vmatpush1.msra.mxu0 %v5106
    %5124 = vmatprep.subr.mxu0 0.0
    %5125 = vmatpush1.msra.mxu0 %v5107
    %5126 = vmatprep.subr.mxu0 0.0
    %5127 = vmatpush1.msra.mxu0 %v5108
    %5128 = vmatprep.subr.mxu0 0.0
    %5129 = vmatpush1.msra.mxu0 %v5109
    %5130 = vmatprep.subr.mxu0 0.0
    %5131 = vmatpush1.msra.mxu0 0.0
    %5132 = vmatprep.subr.mxu0 0.0
    %5133 = vmatpush1.msra.mxu0 0.0
    %5134 = vmatprep.subr.mxu0 0.0
    %5135 = vmatpush1.msra.mxu0 0.0
    %5136 = vmatprep.subr.mxu0 0.0
    %5137 = vmatpush1.msra.mxu0 0.0
    %5138 = vmatprep.subr.mxu0 0.0
    %5139 = vmatpush1.msra.mxu0 0.0
    %5140 = vmatprep.subr.mxu0 0.0
    %5141 = vmatpush1.msra.mxu0 0.0
    %5142 = vmatprep.subr.mxu0 0.0
    %5143 = vmatpush1.msra.mxu0 0.0
    %5144 = vmatprep.subr.mxu0 0.0
    %5145 = vmatpush1.msra.mxu0 0.0
    %5146 = vmatprep.subr.mxu0 0.0
    %5147 = vmatpush1.msra.mxu0 0.0
    %5148 = vmatprep.subr.mxu0 0.0
    %5149 = vmatpush1.msra.mxu0 0.0
    %5150 = vmatprep.subr.mxu0 0.0
    %5151 = vmatpush1.msra.mxu0 0.0
    %5152 = vmatprep.subr.mxu0 0.0
    %5153 = vmatpush1.msra.mxu0 0.0
    %5154 = vmatprep.subr.mxu0 0.0
    %5155 = vmatpush1.msra.mxu0 0.0
    %5156 = vmatprep.subr.mxu0 0.0
    %5157 = vmatpush1.msra.mxu0 0.0
    %5158 = vmatprep.subr.mxu0 0.0
    %5159 = vmatpush1.msra.mxu0 0.0
    %5160 = vmatprep.subr.mxu0 0.0
    %5161 = vmatpush1.msra.mxu0 0.0
    %5162 = vmatprep.subr.mxu0 0.0
    %5163 = vmatpush1.msra.mxu0 0.0
    %5164 = vmatprep.subr.mxu0 0.0
    %5165 = vmatpush1.msra.mxu0 0.0
    %5166 = vmatprep.subr.mxu0 0.0
    %5167 = vmatpush1.msra.mxu0 0.0
    %5168 = vmatprep.subr.mxu0 0.0
    %5169 = vmatpush1.msra.mxu0 0.0
    %5170 = vmatprep.subr.mxu0 0.0
    %5171 = vmatpush1.msra.mxu0 0.0
    %5172 = vmatprep.subr.mxu0 0.0
    %5173 = vmatpush1.msra.mxu0 0.0
    %5174 = vmatprep.subr.mxu0 0.0
    %5175 = vmatpush1.msra.mxu0 0.0
    %5176 = vmatprep.subr.mxu0 0.0
    %5177 = vmatpush1.msra.mxu0 0.0
    %5178 = vmatprep.subr.mxu0 0.0
    %5179 = vmatpush1.msra.mxu0 0.0
    %5180 = vmatprep.subr.mxu0 0.0
    %5181 = vmatpush1.msra.mxu0 0.0
    %5182 = vmatprep.subr.mxu0 0.0
    %5183 = vmatpush1.msra.mxu0 0.0
    %5184 = vmatprep.subr.mxu0 0.0
    %5185 = vmatpush1.msra.mxu0 0.0
    %5186 = vmatprep.mubr.f32.mxu0 0.0
    %5187 = vmatmul.mubr.f32.gmra.mrb[0].mxu0 %v5111
    %v5188 = vpop.f32.mrb[0].mxu0
    %v5189 = vadd.f32 0.0, %v5188
    %v5190 = vpop.f32.mrb[0].mxu0
    %5191 = vmatprep.mubr.f32.mxu0 0.0
    %5192 = vmatmul.mubr.f32.gmra.mrb[0].mxu0 %v5114
    %v5193 = vpop.f32.mrb[0].mxu0
    %v5194 = vadd.f32 0.0, %v5193
    %v5195 = vpop.f32.mrb[0].mxu0
    %5196 = vmatprep.mubr.f32.mxu0 0.0
    %5197 = vmatmul.mubr.f32.gmra.mrb[0].mxu0 %v5117
    %v5198 = vpop.f32.mrb[0].mxu0
    %v5199 = vadd.f32 0.0, %v5198
    %v5200 = vpop.f32.mrb[0].mxu0
    %5201 = vmatprep.mubr.f32.mxu0 0.0
    %5202 = vmatmul.mubr.f32.gmra.mrb[0].mxu0 %v5120
    %v5203 = vpop.f32.mrb[0].mxu0
    %v5204 = vadd.f32 0.0, %v5203
    %v5205 = vpop.f32.mrb[0].mxu0
    %5206 = vdwg.mxu0
    %v5208 = vsel %vm218, %v4997, 0
    %v5211 = vsel %vm218, %v4998, 0
    %v5214 = vsel %vm218, %v4999, 0
    %v5217 = vsel %vm218, %v5000, 0
    %5219 = vmatprep.subr.mxu0 0.0
    %5220 = vmatpush1.msra.mxu0 %v5102
    %5221 = vmatprep.subr.mxu0 0.0
    %5222 = vmatpush1.msra.mxu0 %v5103
    %5223 = vmatprep.subr.mxu0 0.0
    %5224 = vmatpush1.msra.mxu0 %v5104
    %5225 = vmatprep.subr.mxu0 0.0
    %5226 = vmatpush1.msra.mxu0 %v5105
    %5227 = vmatprep.subr.mxu0 0.0
    %5228 = vmatpush1.msra.mxu0 0.0
    %5229 = vmatprep.subr.mxu0 0.0
    %5230 = vmatpush1.msra.mxu0 0.0
    %5231 = vmatprep.subr.mxu0 0.0
    %5232 = vmatpush1.msra.mxu0 0.0
    %5233 = vmatprep.subr.mxu0 0.0
    %5234 = vmatpush1.msra.mxu0 0.0
    %5235 = vmatprep.subr.mxu0 0.0
    %5236 = vmatpush1.msra.mxu0 0.0
    %5237 = vmatprep.subr.mxu0 0.0
    %5238 = vmatpush1.msra.mxu0 0.0
    %5239 = vmatprep.subr.mxu0 0.0
    %5240 = vmatpush1.msra.mxu0 0.0
    %5241 = vmatprep.subr.mxu0 0.0
    %5242 = vmatpush1.msra.mxu0 0.0
    %5243 = vmatprep.subr.mxu0 0.0
    %5244 = vmatpush1.msra.mxu0 0.0
    %5245 = vmatprep.subr.mxu0 0.0
    %5246 = vmatpush1.msra.mxu0 0.0
    %5247 = vmatprep.subr.mxu0 0.0
    %5248 = vmatpush1.msra.mxu0 0.0
    %5249 = vmatprep.subr.mxu0 0.0
    %5250 = vmatpush1.msra.mxu0 0.0
    %5251 = vmatprep.subr.mxu0 0.0
    %5252 = vmatpush1.msra.mxu0 0.0
    %5253 = vmatprep.subr.mxu0 0.0
    %5254 = vmatpush1.msra.mxu0 0.0
    %5255 = vmatprep.subr.mxu0 0.0
    %5256 = vmatpush1.msra.mxu0 0.0
    %5257 = vmatprep.subr.mxu0 0.0
    %5258 = vmatpush1.msra.mxu0 0.0
    %5259 = vmatprep.subr.mxu0 0.0
    %5260 = vmatpush1.msra.mxu0 0.0
    %5261 = vmatprep.subr.mxu0 0.0
    %5262 = vmatpush1.msra.mxu0 0.0
    %5263 = vmatprep.subr.mxu0 0.0
    %5264 = vmatpush1.msra.mxu0 0.0
    %5265 = vmatprep.subr.mxu0 0.0
    %5266 = vmatpush1.msra.mxu0 0.0
    %5267 = vmatprep.subr.mxu0 0.0
    %5268 = vmatpush1.msra.mxu0 0.0
    %5269 = vmatprep.subr.mxu0 0.0
    %5270 = vmatpush1.msra.mxu0 0.0
    %5271 = vmatprep.subr.mxu0 0.0
    %5272 = vmatpush1.msra.mxu0 0.0
    %5273 = vmatprep.subr.mxu0 0.0
    %5274 = vmatpush1.msra.mxu0 0.0
    %5275 = vmatprep.subr.mxu0 0.0
    %5276 = vmatpush1.msra.mxu0 0.0
    %5277 = vmatprep.subr.mxu0 0.0
    %5278 = vmatpush1.msra.mxu0 0.0
    %5279 = vmatprep.subr.mxu0 0.0
    %5280 = vmatpush1.msra.mxu0 0.0
    %5281 = vmatprep.subr.mxu0 0.0
    %5282 = vmatpush1.msra.mxu0 0.0
    %5283 = vmatprep.mubr.f32.mxu0 0.0
    %5284 = vmatmul.mubr.f32.gmra.mrb[0].mxu0 %v5208
    %v5285 = vpop.f32.mrb[0].mxu0
    %v5286 = vadd.f32 %v5189, %v5285
    %v5287 = vpop.f32.mrb[0].mxu0
    %5288 = vmatprep.mubr.f32.mxu0 0.0
    %5289 = vmatmul.mubr.f32.gmra.mrb[0].mxu0 %v5211
    %v5290 = vpop.f32.mrb[0].mxu0
    %v5291 = vadd.f32 %v5194, %v5290
    %v5292 = vpop.f32.mrb[0].mxu0
    %5293 = vmatprep.mubr.f32.mxu0 0.0
    %5294 = vmatmul.mubr.f32.gmra.mrb[0].mxu0 %v5214
    %v5295 = vpop.f32.mrb[0].mxu0
    %v5296 = vadd.f32 %v5199, %v5295
    %v5297 = vpop.f32.mrb[0].mxu0
    %5298 = vmatprep.mubr.f32.mxu0 0.0
    %5299 = vmatmul.mubr.f32.gmra.mrb[0].mxu0 %v5217
    %v5300 = vpop.f32.mrb[0].mxu0
    %v5301 = vadd.f32 %v5204, %v5300
    %v5302 = vpop.f32.mrb[0].mxu0
    %5303 = vdwg.mxu0
    %v5304 = vld [vmem:[%s2263] sm:$0x1]
    %v5306 = vlaneseq
    %v5307 = vshrl.u32 %v5306, 7
    %v5308 = vsub.s32 0, %v5307
    %v5309 = vrot.slane %v5304, %v5308
    %v5311 = vadd.f32 %v5286, %v5309
    %v5312 = vadd.f32 %v5291, %v5309
    %v5313 = vadd.f32 %v5296, %v5309
    %v5314 = vadd.f32 %v5301, %v5309
    %v5315 = vtanh.pop %v5311
    %v5316 = vtanh.pop %v5312
    %v5317 = vtanh.pop %v5313
    %v5318 = vtanh.pop %v5314
    %v5319 = vsub.f32 0.0, %v5311
    %v5320 = vsub.f32 0.0, %v5312
    %v5321 = vsub.f32 0.0, %v5313
    %v5322 = vsub.f32 0.0, %v5314
    %v5323 = vmul.f32 %v5319, 1.442695
    %v5324 = vpow.pop %v5323
    %v5325 = vmul.f32 %v5320, 1.442695
    %v5326 = vpow.pop %v5325
    %v5327 = vmul.f32 %v5321, 1.442695
    %v5328 = vpow.pop %v5327
    %v5329 = vmul.f32 %v5322, 1.442695
    %v5330 = vpow.pop %v5329
    %v5331 = vadd.f32 %v5324, 1.0
    %v5332 = vadd.f32 %v5326, 1.0
    %v5333 = vadd.f32 %v5328, 1.0
    %v5334 = vadd.f32 %v5330, 1.0
    %v5335 = vrcp.pop %v5331
    %v5336 = vrcp.pop %v5332
    %v5337 = vrcp.pop %v5333
    %v5338 = vrcp.pop %v5334
    %5343 = vrot.lane.b32.xlu0 %v5335, 96
    %v5344 = vpop.permute.xlu0 %5343
    %5345 = vrot.lane.b32.xlu0 %v5336, 96
    %v5346 = vpop.permute.xlu0 %5345
    %5347 = vrot.lane.b32.xlu0 %v5337, 96
    %v5348 = vpop.permute.xlu0 %5347
    %5349 = vrot.lane.b32.xlu0 %v5338, 96
    %v5350 = vpop.permute.xlu0 %5349
    %v5355 = vmul.f32 %v5315, %v5344
    %v5356 = vmul.f32 %v5316, %v5346
    %v5357 = vmul.f32 %v5317, %v5348
    %v5358 = vmul.f32 %v5318, %v5350
    %v5359 = vld [vmem:[%s2319] sm:$0xff]
    %v5360 = vld [vmem:[%s2319 + $0x8] sm:$0xff]
    %v5361 = vld [vmem:[%s2319 + $0x10] sm:$0xff]
    %v5362 = vld [vmem:[%s2319 + $0x18] sm:$0xff]
    %v5364 = vsel %vm218, %v5355, 0
    %v5367 = vsel %vm218, %v5356, 0
    %v5370 = vsel %vm218, %v5357, 0
    %v5373 = vsel %vm218, %v5358, 0
    %5375 = vmatprep.subr.mxu0 0.0
    %5376 = vmatpush1.msra.mxu0 %v5359
    %5377 = vmatprep.subr.mxu0 0.0
    %5378 = vmatpush1.msra.mxu0 %v5360
    %5379 = vmatprep.subr.mxu0 0.0
    %5380 = vmatpush1.msra.mxu0 %v5361
    %5381 = vmatprep.subr.mxu0 0.0
    %5382 = vmatpush1.msra.mxu0 %v5362
    %5383 = vmatprep.subr.mxu0 0.0
    %5384 = vmatpush1.msra.mxu0 0.0
    %5385 = vmatprep.subr.mxu0 0.0
    %5386 = vmatpush1.msra.mxu0 0.0
    %5387 = vmatprep.subr.mxu0 0.0
    %5388 = vmatpush1.msra.mxu0 0.0
    %5389 = vmatprep.subr.mxu0 0.0
    %5390 = vmatpush1.msra.mxu0 0.0
    %5391 = vmatprep.subr.mxu0 0.0
    %5392 = vmatpush1.msra.mxu0 0.0
    %5393 = vmatprep.subr.mxu0 0.0
    %5394 = vmatpush1.msra.mxu0 0.0
    %5395 = vmatprep.subr.mxu0 0.0
    %5396 = vmatpush1.msra.mxu0 0.0
    %5397 = vmatprep.subr.mxu0 0.0
    %5398 = vmatpush1.msra.mxu0 0.0
    %5399 = vmatprep.subr.mxu0 0.0
    %5400 = vmatpush1.msra.mxu0 0.0
    %5401 = vmatprep.subr.mxu0 0.0
    %5402 = vmatpush1.msra.mxu0 0.0
    %5403 = vmatprep.subr.mxu0 0.0
    %5404 = vmatpush1.msra.mxu0 0.0
    %5405 = vmatprep.subr.mxu0 0.0
    %5406 = vmatpush1.msra.mxu0 0.0
    %5407 = vmatprep.subr.mxu0 0.0
    %5408 = vmatpush1.msra.mxu0 0.0
    %5409 = vmatprep.subr.mxu0 0.0
    %5410 = vmatpush1.msra.mxu0 0.0
    %5411 = vmatprep.subr.mxu0 0.0
    %5412 = vmatpush1.msra.mxu0 0.0
    %5413 = vmatprep.subr.mxu0 0.0
    %5414 = vmatpush1.msra.mxu0 0.0
    %5415 = vmatprep.subr.mxu0 0.0
    %5416 = vmatpush1.msra.mxu0 0.0
    %5417 = vmatprep.subr.mxu0 0.0
    %5418 = vmatpush1.msra.mxu0 0.0
    %5419 = vmatprep.subr.mxu0 0.0
    %5420 = vmatpush1.msra.mxu0 0.0
    %5421 = vmatprep.subr.mxu0 0.0
    %5422 = vmatpush1.msra.mxu0 0.0
    %5423 = vmatprep.subr.mxu0 0.0
    %5424 = vmatpush1.msra.mxu0 0.0
    %5425 = vmatprep.subr.mxu0 0.0
    %5426 = vmatpush1.msra.mxu0 0.0
    %5427 = vmatprep.subr.mxu0 0.0
    %5428 = vmatpush1.msra.mxu0 0.0
    %5429 = vmatprep.subr.mxu0 0.0
    %5430 = vmatpush1.msra.mxu0 0.0
    %5431 = vmatprep.subr.mxu0 0.0
    %5432 = vmatpush1.msra.mxu0 0.0
    %5433 = vmatprep.subr.mxu0 0.0
    %5434 = vmatpush1.msra.mxu0 0.0
    %5435 = vmatprep.subr.mxu0 0.0
    %5436 = vmatpush1.msra.mxu0 0.0
    %5437 = vmatprep.subr.mxu0 0.0
    %5438 = vmatpush1.msra.mxu0 0.0
    %5439 = vmatprep.mubr.f32.mxu0 0.0
    %5440 = vmatmul.mubr.f32.gmra.mrb[0].mxu0 %v5364
    %v5441 = vpop.f32.mrb[0].mxu0
    %v5442 = vadd.f32 0.0, %v5441
    %v5443 = vpop.f32.mrb[0].mxu0
    %5444 = vmatprep.mubr.f32.mxu0 0.0
    %5445 = vmatmul.mubr.f32.gmra.mrb[0].mxu0 %v5367
    %v5446 = vpop.f32.mrb[0].mxu0
    %v5447 = vadd.f32 0.0, %v5446
    %v5448 = vpop.f32.mrb[0].mxu0
    %5449 = vmatprep.mubr.f32.mxu0 0.0
    %5450 = vmatmul.mubr.f32.gmra.mrb[0].mxu0 %v5370
    %v5451 = vpop.f32.mrb[0].mxu0
    %v5452 = vadd.f32 0.0, %v5451
    %v5453 = vpop.f32.mrb[0].mxu0
    %5454 = vmatprep.mubr.f32.mxu0 0.0
    %5455 = vmatmul.mubr.f32.gmra.mrb[0].mxu0 %v5373
    %v5456 = vpop.f32.mrb[0].mxu0
    %v5457 = vadd.f32 0.0, %v5456
    %v5458 = vpop.f32.mrb[0].mxu0
    %5459 = vdwg.mxu0
    %v5460 = vadd.f32 %v4893, %v5442
    %v5461 = vadd.f32 %v4894, %v5447
    %v5462 = vadd.f32 %v4895, %v5452
    %v5463 = vadd.f32 %v4896, %v5457
    %v5464 = vld [vmem:[%s2425] sm:$0x1]
    %v5466 = vlaneseq
    %v5467 = vshrl.u32 %v5466, 7
    %v5468 = vsub.s32 0, %v5467
    %v5469 = vrot.slane %v5464, %v5468
    %v5471 = vadd.f32 %v5460, %v5469
    %v5472 = vadd.f32 %v5461, %v5469
    %v5473 = vadd.f32 %v5462, %v5469
    %v5474 = vadd.f32 %v5463, %v5469
    %v5475 = vmax.f32 %v5471, 0.0
    %v5476 = vmax.f32 %v5472, 0.0
    %v5477 = vmax.f32 %v5473, 0.0
    %v5478 = vmax.f32 %v5474, 0.0
    %v5479 = vld [vmem:[%s11] sm:$0xff]
    %v5480 = vld [vmem:[%s11 + $0x8] sm:$0xff]
    %v5481 = vld [vmem:[%s11 + $0x10] sm:$0xff]
    %v5482 = vld [vmem:[%s11 + $0x18] sm:$0xff]
    %v5483 = vld [vmem:[%s11 + $0x20] sm:$0xff]
    %v5484 = vld [vmem:[%s11 + $0x28] sm:$0xff]
    %v5485 = vld [vmem:[%s11 + $0x30] sm:$0xff]
    %v5486 = vld [vmem:[%s11 + $0x38] sm:$0xff]
    %v5487 = vld [vmem:[%s12] sm:$0x1]
    %v5489 = vlaneseq
    %v5490 = vshrl.u32 %v5489, 7
    %v5491 = vsub.s32 0, %v5490
    %v5492 = vrot.slane %v5487, %v5491
    %v5495 = vsel %vm2456, %v5475, 0
    %v5498 = vsel %vm2456, %v5476, 0
    %v5501 = vsel %vm2456, %v5477, 0
    %v5504 = vsel %vm2456, %v5478, 0
    %5506 = vmatprep.subr.mxu0 0.0
    %5507 = vmatpush1.msra.mxu0 %v5479
    %5508 = vmatprep.subr.mxu0 0.0
    %5509 = vmatpush1.msra.mxu0 %v5480
    %5510 = vmatprep.subr.mxu0 0.0
    %5511 = vmatpush1.msra.mxu0 %v5481
    %5512 = vmatprep.subr.mxu0 0.0
    %5513 = vmatpush1.msra.mxu0 %v5482
    %5514 = vmatprep.subr.mxu0 0.0
    %5515 = vmatpush1.msra.mxu0 %v5483
    %5516 = vmatprep.subr.mxu0 0.0
    %5517 = vmatpush1.msra.mxu0 %v5484
    %5518 = vmatprep.subr.mxu0 0.0
    %5519 = vmatpush1.msra.mxu0 %v5485
    %5520 = vmatprep.subr.mxu0 0.0
    %5521 = vmatpush1.msra.mxu0 %v5486
    %5522 = vmatprep.subr.mxu0 0.0
    %5523 = vmatpush1.msra.mxu0 0.0
    %5524 = vmatprep.subr.mxu0 0.0
    %5525 = vmatpush1.msra.mxu0 0.0
    %5526 = vmatprep.subr.mxu0 0.0
    %5527 = vmatpush1.msra.mxu0 0.0
    %5528 = vmatprep.subr.mxu0 0.0
    %5529 = vmatpush1.msra.mxu0 0.0
    %5530 = vmatprep.subr.mxu0 0.0
    %5531 = vmatpush1.msra.mxu0 0.0
    %5532 = vmatprep.subr.mxu0 0.0
    %5533 = vmatpush1.msra.mxu0 0.0
    %5534 = vmatprep.subr.mxu0 0.0
    %5535 = vmatpush1.msra.mxu0 0.0
    %5536 = vmatprep.subr.mxu0 0.0
    %5537 = vmatpush1.msra.mxu0 0.0
    %5538 = vmatprep.subr.mxu0 0.0
    %5539 = vmatpush1.msra.mxu0 0.0
    %5540 = vmatprep.subr.mxu0 0.0
    %5541 = vmatpush1.msra.mxu0 0.0
    %5542 = vmatprep.subr.mxu0 0.0
    %5543 = vmatpush1.msra.mxu0 0.0
    %5544 = vmatprep.subr.mxu0 0.0
    %5545 = vmatpush1.msra.mxu0 0.0
    %5546 = vmatprep.subr.mxu0 0.0
    %5547 = vmatpush1.msra.mxu0 0.0
    %5548 = vmatprep.subr.mxu0 0.0
    %5549 = vmatpush1.msra.mxu0 0.0
    %5550 = vmatprep.subr.mxu0 0.0
    %5551 = vmatpush1.msra.mxu0 0.0
    %5552 = vmatprep.subr.mxu0 0.0
    %5553 = vmatpush1.msra.mxu0 0.0
    %5554 = vmatprep.subr.mxu0 0.0
    %5555 = vmatpush1.msra.mxu0 0.0
    %5556 = vmatprep.subr.mxu0 0.0
    %5557 = vmatpush1.msra.mxu0 0.0
    %5558 = vmatprep.subr.mxu0 0.0
    %5559 = vmatpush1.msra.mxu0 0.0
    %5560 = vmatprep.subr.mxu0 0.0
    %5561 = vmatpush1.msra.mxu0 0.0
    %5562 = vmatprep.subr.mxu0 0.0
    %5563 = vmatpush1.msra.mxu0 0.0
    %5564 = vmatprep.subr.mxu0 0.0
    %5565 = vmatpush1.msra.mxu0 0.0
    %5566 = vmatprep.subr.mxu0 0.0
    %5567 = vmatpush1.msra.mxu0 0.0
    %5568 = vmatprep.subr.mxu0 0.0
    %5569 = vmatpush1.msra.mxu0 0.0
    %5570 = vmatprep.mubr.f32.mxu0 0.0
    %5571 = vmatmul.mubr.f32.gmra.mrb[0].mxu0 %v5495
    %v5572 = vpop.f32.mrb[0].mxu0
    %v5573 = vadd.f32 %v5492, %v5572
    %v5574 = vpop.f32.mrb[0].mxu0
    %5575 = vmatprep.mubr.f32.mxu0 0.0
    %5576 = vmatmul.mubr.f32.gmra.mrb[0].mxu0 %v5498
    %v5577 = vpop.f32.mrb[0].mxu0
    %v5578 = vadd.f32 %v5492, %v5577
    %v5579 = vpop.f32.mrb[0].mxu0
    %5580 = vmatprep.mubr.f32.mxu0 0.0
    %5581 = vmatmul.mubr.f32.gmra.mrb[0].mxu0 %v5501
    %v5582 = vpop.f32.mrb[0].mxu0
    %v5583 = vadd.f32 %v5492, %v5582
    %v5584 = vpop.f32.mrb[0].mxu0
    %5585 = vmatprep.mubr.f32.mxu0 0.0
    %5586 = vmatmul.mubr.f32.gmra.mrb[0].mxu0 %v5504
    %v5587 = vpop.f32.mrb[0].mxu0
    %v5588 = vadd.f32 %v5492, %v5587
    %v5589 = vpop.f32.mrb[0].mxu0
    %5590 = vdwg.mxu0
    %v5591 = vmax.f32 %v5573, 0.0
    %v5592 = vmax.f32 %v5578, 0.0
    %v5593 = vmax.f32 %v5583, 0.0
    %v5594 = vmax.f32 %v5588, 0.0
    %v5595 = vld [vmem:[%s13] sm:$0xff]
    %v5596 = vld [vmem:[%s13 + $0x8] sm:$0xff]
    %v5597 = vld [vmem:[%s13 + $0x10] sm:$0xff]
    %v5598 = vld [vmem:[%s13 + $0x18] sm:$0xff]
    %v5599 = vld [vmem:[%s13 + $0x20] sm:$0xff]
    %v5600 = vld [vmem:[%s13 + $0x28] sm:$0xff]
    %v5601 = vld [vmem:[%s13 + $0x30] sm:$0xff]
    %v5602 = vld [vmem:[%s13 + $0x38] sm:$0xff]
    %v5603 = vld [vmem:[%s14] sm:$0x1]
    %v5605 = vlaneseq
    %v5606 = vshrl.u32 %v5605, 7
    %v5607 = vsub.s32 0, %v5606
    %v5608 = vrot.slane %v5603, %v5607
    %v5611 = vsel %vm2456, %v5591, 0
    %v5614 = vsel %vm2456, %v5592, 0
    %v5617 = vsel %vm2456, %v5593, 0
    %v5620 = vsel %vm2456, %v5594, 0
    %5622 = vmatprep.subr.mxu0 0.0
    %5623 = vmatpush1.msra.mxu0 %v5595
    %5624 = vmatprep.subr.mxu0 0.0
    %5625 = vmatpush1.msra.mxu0 %v5596
    %5626 = vmatprep.subr.mxu0 0.0
    %5627 = vmatpush1.msra.mxu0 %v5597
    %5628 = vmatprep.subr.mxu0 0.0
    %5629 = vmatpush1.msra.mxu0 %v5598
    %5630 = vmatprep.subr.mxu0 0.0
    %5631 = vmatpush1.msra.mxu0 %v5599
    %5632 = vmatprep.subr.mxu0 0.0
    %5633 = vmatpush1.msra.mxu0 %v5600
    %5634 = vmatprep.subr.mxu0 0.0
    %5635 = vmatpush1.msra.mxu0 %v5601
    %5636 = vmatprep.subr.mxu0 0.0
    %5637 = vmatpush1.msra.mxu0 %v5602
    %5638 = vmatprep.subr.mxu0 0.0
    %5639 = vmatpush1.msra.mxu0 0.0
    %5640 = vmatprep.subr.mxu0 0.0
    %5641 = vmatpush1.msra.mxu0 0.0
    %5642 = vmatprep.subr.mxu0 0.0
    %5643 = vmatpush1.msra.mxu0 0.0
    %5644 = vmatprep.subr.mxu0 0.0
    %5645 = vmatpush1.msra.mxu0 0.0
    %5646 = vmatprep.subr.mxu0 0.0
    %5647 = vmatpush1.msra.mxu0 0.0
    %5648 = vmatprep.subr.mxu0 0.0
    %5649 = vmatpush1.msra.mxu0 0.0
    %5650 = vmatprep.subr.mxu0 0.0
    %5651 = vmatpush1.msra.mxu0 0.0
    %5652 = vmatprep.subr.mxu0 0.0
    %5653 = vmatpush1.msra.mxu0 0.0
    %5654 = vmatprep.subr.mxu0 0.0
    %5655 = vmatpush1.msra.mxu0 0.0
    %5656 = vmatprep.subr.mxu0 0.0
    %5657 = vmatpush1.msra.mxu0 0.0
    %5658 = vmatprep.subr.mxu0 0.0
    %5659 = vmatpush1.msra.mxu0 0.0
    %5660 = vmatprep.subr.mxu0 0.0
    %5661 = vmatpush1.msra.mxu0 0.0
    %5662 = vmatprep.subr.mxu0 0.0
    %5663 = vmatpush1.msra.mxu0 0.0
    %5664 = vmatprep.subr.mxu0 0.0
    %5665 = vmatpush1.msra.mxu0 0.0
    %5666 = vmatprep.subr.mxu0 0.0
    %5667 = vmatpush1.msra.mxu0 0.0
    %5668 = vmatprep.subr.mxu0 0.0
    %5669 = vmatpush1.msra.mxu0 0.0
    %5670 = vmatprep.subr.mxu0 0.0
    %5671 = vmatpush1.msra.mxu0 0.0
    %5672 = vmatprep.subr.mxu0 0.0
    %5673 = vmatpush1.msra.mxu0 0.0
    %5674 = vmatprep.subr.mxu0 0.0
    %5675 = vmatpush1.msra.mxu0 0.0
    %5676 = vmatprep.subr.mxu0 0.0
    %5677 = vmatpush1.msra.mxu0 0.0
    %5678 = vmatprep.subr.mxu0 0.0
    %5679 = vmatpush1.msra.mxu0 0.0
    %5680 = vmatprep.subr.mxu0 0.0
    %5681 = vmatpush1.msra.mxu0 0.0
    %5682 = vmatprep.subr.mxu0 0.0
    %5683 = vmatpush1.msra.mxu0 0.0
    %5684 = vmatprep.subr.mxu0 0.0
    %5685 = vmatpush1.msra.mxu0 0.0
    %5686 = vmatprep.mubr.f32.mxu0 0.0
    %5687 = vmatmul.mubr.f32.gmra.mrb[0].mxu0 %v5611
    %v5688 = vpop.f32.mrb[0].mxu0
    %v5689 = vpop.f32.mrb[0].mxu0
    %5690 = vmatprep.mubr.f32.mxu0 0.0
    %5691 = vmatmul.mubr.f32.gmra.mrb[0].mxu0 %v5614
    %v5692 = vpop.f32.mrb[0].mxu0
    %v5693 = vpop.f32.mrb[0].mxu0
    %5694 = vmatprep.mubr.f32.mxu0 0.0
    %5695 = vmatmul.mubr.f32.gmra.mrb[0].mxu0 %v5617
    %v5696 = vpop.f32.mrb[0].mxu0
    %v5697 = vadd.f32 %v5608, %v5696
    %v5698 = vpop.f32.mrb[0].mxu0
    %5699 = vmatprep.mubr.f32.mxu0 0.0
    %5700 = vmatmul.mubr.f32.gmra.mrb[0].mxu0 %v5620
    %v5701 = vpop.f32.mrb[0].mxu0
    %v5702 = vadd.f32 %v5608, %v5701
    %v5703 = vpop.f32.mrb[0].mxu0
    %5704 = vdwg.mxu0
    %v5705 = vsub.f32 0.0, %v5697
    %v5706 = vsub.f32 0.0, %v5702
    %v5707 = vmul.f32 %v5705, 1.442695
    %v5708 = vpow.pop %v5707
    %v5709 = vmul.f32 %v5706, 1.442695
    %v5710 = vpow.pop %v5709
    %v5711 = vadd.f32 %v5708, 1.0
    %v5712 = vadd.f32 %v5710, 1.0
    %v5713 = vrcp.pop %v5711
    %v5714 = vrcp.pop %v5712
    %v5715 = vmul.f32 %v5713, 0.05
    %v5716 = vmul.f32 %v5714, 0.05
    %v5717 = vsel %vm2680, %v5697, -inf
    %5718 = vmax.xlane.f32.xlu0 %v5717
    %v5719 = vpop.xlane.xlu0 %5718
    %v5720 = vsel %vm2680, %v5702, -inf
    %5721 = vmax.xlane.f32.xlu0 %v5720
    %v5722 = vpop.xlane.xlu0 %5721
    %v5723 = vsub.f32 %v5697, %v5719
    %v5724 = vsub.f32 %v5702, %v5722
    %v5725 = vmul.f32 %v5723, 1.442695
    %v5726 = vpow.pop %v5725
    %v5727 = vmul.f32 %v5724, 1.442695
    %v5728 = vpow.pop %v5727
    %5731 = vrot.lane.b32.xlu0 %v5726, 120
    %v5732 = vpop.permute.xlu0 %5731
    %5733 = vrot.lane.b32.xlu0 %v5728, 120
    %v5734 = vpop.permute.xlu0 %5733
    %v5737 = vsel %vm2701, %v5732, 0.0
    %5738 = vadd.xlane.f32.xlu0 %v5737
    %v5739 = vpop.xlane.xlu0 %5738
    %v5740 = vsel %vm2701, %v5734, 0.0
    %5741 = vadd.xlane.f32.xlu0 %v5740
    %v5742 = vpop.xlane.xlu0 %5741
    %v5743 = vrcp.pop %v5739
    %v5744 = vrcp.pop %v5742
    %v5745 = vmul.f32 %v5726, %v5743
    %v5746 = vmul.f32 %v5728, %v5744
    %v5747 = vrcp.pop %v5715
    %v5748 = vrcp.pop %v5716
    %5750 = vset.pattern.permute.xlu0 0
    %5751 = vperm.xlu0 %5750, %v5713
    %v5752 = vpop.permute.xlu0 %5751
    %5755 = vset.pattern.permute.xlu0 0
    %5756 = vperm.xlu0 %5755, %v5714
    %v5757 = vpop.permute.xlu0 %5756
    %v5759 = vsub.f32 %v56, %v5752
    %v5760 = vsub.f32 %v57, %v5752
    %v5761 = vsub.f32 %v56, %v5757
    %v5762 = vsub.f32 %v57, %v5757
    %5764 = vset.pattern.permute.xlu0 4
    %5765 = vperm.xlu0 %5764, %v5747
    %v5766 = vpop.permute.xlu0 %5765
    %5769 = vset.pattern.permute.xlu0 4
    %5770 = vperm.xlu0 %5769, %v5748
    %v5771 = vpop.permute.xlu0 %5770
    %v5773 = vmul.f32 %v5759, %v5766
    %v5774 = vmul.f32 %v5760, %v5766
    %v5775 = vmul.f32 %v5761, %v5771
    %v5776 = vmul.f32 %v5762, %v5771
    %v5777 = vsub.f32 0.0, %v5773
    %v5778 = vsub.f32 0.0, %v5774
    %v5779 = vsub.f32 0.0, %v5775
    %v5780 = vsub.f32 0.0, %v5776
    %v5781 = vmul.f32 %v5777, 1.442695
    %v5782 = vpow.pop %v5781
    %v5783 = vmul.f32 %v5778, 1.442695
    %v5784 = vpow.pop %v5783
    %v5785 = vmul.f32 %v5779, 1.442695
    %v5786 = vpow.pop %v5785
    %v5787 = vmul.f32 %v5780, 1.442695
    %v5788 = vpow.pop %v5787
    %v5789 = vadd.f32 %v5782, 1.0
    %v5790 = vadd.f32 %v5784, 1.0
    %v5791 = vadd.f32 %v5786, 1.0
    %v5792 = vadd.f32 %v5788, 1.0
    %v5793 = vrcp.pop %v5789
    %v5794 = vrcp.pop %v5790
    %v5795 = vrcp.pop %v5791
    %v5796 = vrcp.pop %v5792
    %v5797 = vsub.f32 %v2762, %v5752
    %v5798 = vsub.f32 %v2763, %v5752
    %v5799 = vsub.f32 %v2762, %v5757
    %v5800 = vsub.f32 %v2763, %v5757
    %v5801 = vmul.f32 %v5797, %v5766
    %v5802 = vmul.f32 %v5798, %v5766
    %v5803 = vmul.f32 %v5799, %v5771
    %v5804 = vmul.f32 %v5800, %v5771
    %v5805 = vsub.f32 0.0, %v5801
    %v5806 = vsub.f32 0.0, %v5802
    %v5807 = vsub.f32 0.0, %v5803
    %v5808 = vsub.f32 0.0, %v5804
    %v5809 = vmul.f32 %v5805, 1.442695
    %v5810 = vpow.pop %v5809
    %v5811 = vmul.f32 %v5806, 1.442695
    %v5812 = vpow.pop %v5811
    %v5813 = vmul.f32 %v5807, 1.442695
    %v5814 = vpow.pop %v5813
    %v5815 = vmul.f32 %v5808, 1.442695
    %v5816 = vpow.pop %v5815
    %v5817 = vadd.f32 %v5810, 1.0
    %v5818 = vadd.f32 %v5812, 1.0
    %v5819 = vadd.f32 %v5814, 1.0
    %v5820 = vadd.f32 %v5816, 1.0
    %v5821 = vrcp.pop %v5817
    %v5822 = vrcp.pop %v5818
    %v5823 = vrcp.pop %v5819
    %v5824 = vrcp.pop %v5820
    %v5825 = vsub.f32 %v5821, %v5793
    %v5826 = vsub.f32 %v5822, %v5794
    %v5827 = vsub.f32 %v5823, %v5795
    %v5828 = vsub.f32 %v5824, %v5796
    %5830 = vset.pattern.permute.xlu0 8
    %5831 = vperm.xlu0 %5830, %v5745
    %v5832 = vpop.permute.xlu0 %5831
    %5835 = vset.pattern.permute.xlu0 8
    %5836 = vperm.xlu0 %5835, %v5746
    %v5837 = vpop.permute.xlu0 %5836
    %v5839 = vmul.f32 %v5832, %v5825
    %v5840 = vmul.f32 %v5832, %v5826
    %v5841 = vmul.f32 %v5837, %v5827
    %v5842 = vmul.f32 %v5837, %v5828
    %v5843 = vadd.f32 %v5839, 0.0
    %v5844 = vadd.f32 %v5840, 0.0
    %v5845 = vadd.f32 %v5841, 0.0
    %v5846 = vadd.f32 %v5842, 0.0
    %5847 = vset.pattern.permute.xlu0 1
    %5848 = vperm.xlu0 %5847, %v5713
    %v5849 = vpop.permute.xlu0 %5848
    %5851 = vset.pattern.permute.xlu0 1
    %5852 = vperm.xlu0 %5851, %v5714
    %v5853 = vpop.permute.xlu0 %5852
    %v5855 = vsub.f32 %v56, %v5849
    %v5856 = vsub.f32 %v57, %v5849
    %v5857 = vsub.f32 %v56, %v5853
    %v5858 = vsub.f32 %v57, %v5853
    %5859 = vset.pattern.permute.xlu0 5
    %5860 = vperm.xlu0 %5859, %v5747
    %v5861 = vpop.permute.xlu0 %5860
    %5863 = vset.pattern.permute.xlu0 5
    %5864 = vperm.xlu0 %5863, %v5748
    %v5865 = vpop.permute.xlu0 %5864
    %v5867 = vmul.f32 %v5855, %v5861
    %v5868 = vmul.f32 %v5856, %v5861
    %v5869 = vmul.f32 %v5857, %v5865
    %v5870 = vmul.f32 %v5858, %v5865
    %v5871 = vsub.f32 0.0, %v5867
    %v5872 = vsub.f32 0.0, %v5868
    %v5873 = vsub.f32 0.0, %v5869
    %v5874 = vsub.f32 0.0, %v5870
    %v5875 = vmul.f32 %v5871, 1.442695
    %v5876 = vpow.pop %v5875
    %v5877 = vmul.f32 %v5872, 1.442695
    %v5878 = vpow.pop %v5877
    %v5879 = vmul.f32 %v5873, 1.442695
    %v5880 = vpow.pop %v5879
    %v5881 = vmul.f32 %v5874, 1.442695
    %v5882 = vpow.pop %v5881
    %v5883 = vadd.f32 %v5876, 1.0
    %v5884 = vadd.f32 %v5878, 1.0
    %v5885 = vadd.f32 %v5880, 1.0
    %v5886 = vadd.f32 %v5882, 1.0
    %v5887 = vrcp.pop %v5883
    %v5888 = vrcp.pop %v5884
    %v5889 = vrcp.pop %v5885
    %v5890 = vrcp.pop %v5886
    %v5891 = vsub.f32 %v2762, %v5849
    %v5892 = vsub.f32 %v2763, %v5849
    %v5893 = vsub.f32 %v2762, %v5853
    %v5894 = vsub.f32 %v2763, %v5853
    %v5895 = vmul.f32 %v5891, %v5861
    %v5896 = vmul.f32 %v5892, %v5861
    %v5897 = vmul.f32 %v5893, %v5865
    %v5898 = vmul.f32 %v5894, %v5865
    %v5899 = vsub.f32 0.0, %v5895
    %v5900 = vsub.f32 0.0, %v5896
    %v5901 = vsub.f32 0.0, %v5897
    %v5902 = vsub.f32 0.0, %v5898
    %v5903 = vmul.f32 %v5899, 1.442695
    %v5904 = vpow.pop %v5903
    %v5905 = vmul.f32 %v5900, 1.442695
    %v5906 = vpow.pop %v5905
    %v5907 = vmul.f32 %v5901, 1.442695
    %v5908 = vpow.pop %v5907
    %v5909 = vmul.f32 %v5902, 1.442695
    %v5910 = vpow.pop %v5909
    %v5911 = vadd.f32 %v5904, 1.0
    %v5912 = vadd.f32 %v5906, 1.0
    %v5913 = vadd.f32 %v5908, 1.0
    %v5914 = vadd.f32 %v5910, 1.0
    %v5915 = vrcp.pop %v5911
    %v5916 = vrcp.pop %v5912
    %v5917 = vrcp.pop %v5913
    %v5918 = vrcp.pop %v5914
    %v5919 = vsub.f32 %v5915, %v5887
    %v5920 = vsub.f32 %v5916, %v5888
    %v5921 = vsub.f32 %v5917, %v5889
    %v5922 = vsub.f32 %v5918, %v5890
    %5923 = vset.pattern.permute.xlu0 9
    %5924 = vperm.xlu0 %5923, %v5745
    %v5925 = vpop.permute.xlu0 %5924
    %5927 = vset.pattern.permute.xlu0 9
    %5928 = vperm.xlu0 %5927, %v5746
    %v5929 = vpop.permute.xlu0 %5928
    %v5931 = vmul.f32 %v5925, %v5919
    %v5932 = vmul.f32 %v5925, %v5920
    %v5933 = vmul.f32 %v5929, %v5921
    %v5934 = vmul.f32 %v5929, %v5922
    %v5935 = vadd.f32 %v5843, %v5931
    %v5936 = vadd.f32 %v5844, %v5932
    %v5937 = vadd.f32 %v5845, %v5933
    %v5938 = vadd.f32 %v5846, %v5934
    %5939 = vset.pattern.permute.xlu0 2
    %5940 = vperm.xlu0 %5939, %v5713
    %v5941 = vpop.permute.xlu0 %5940
    %5943 = vset.pattern.permute.xlu0 2
    %5944 = vperm.xlu0 %5943, %v5714
    %v5945 = vpop.permute.xlu0 %5944
    %v5947 = vsub.f32 %v56, %v5941
    %v5948 = vsub.f32 %v57, %v5941
    %v5949 = vsub.f32 %v56, %v5945
    %v5950 = vsub.f32 %v57, %v5945
    %5951 = vset.pattern.permute.xlu0 6
    %5952 = vperm.xlu0 %5951, %v5747
    %v5953 = vpop.permute.xlu0 %5952
    %5955 = vset.pattern.permute.xlu0 6
    %5956 = vperm.xlu0 %5955, %v5748
    %v5957 = vpop.permute.xlu0 %5956
    %v5959 = vmul.f32 %v5947, %v5953
    %v5960 = vmul.f32 %v5948, %v5953
    %v5961 = vmul.f32 %v5949, %v5957
    %v5962 = vmul.f32 %v5950, %v5957
    %v5963 = vsub.f32 0.0, %v5959
    %v5964 = vsub.f32 0.0, %v5960
    %v5965 = vsub.f32 0.0, %v5961
    %v5966 = vsub.f32 0.0, %v5962
    %v5967 = vmul.f32 %v5963, 1.442695
    %v5968 = vpow.pop %v5967
    %v5969 = vmul.f32 %v5964, 1.442695
    %v5970 = vpow.pop %v5969
    %v5971 = vmul.f32 %v5965, 1.442695
    %v5972 = vpow.pop %v5971
    %v5973 = vmul.f32 %v5966, 1.442695
    %v5974 = vpow.pop %v5973
    %v5975 = vadd.f32 %v5968, 1.0
    %v5976 = vadd.f32 %v5970, 1.0
    %v5977 = vadd.f32 %v5972, 1.0
    %v5978 = vadd.f32 %v5974, 1.0
    %v5979 = vrcp.pop %v5975
    %v5980 = vrcp.pop %v5976
    %v5981 = vrcp.pop %v5977
    %v5982 = vrcp.pop %v5978
    %v5983 = vsub.f32 %v2762, %v5941
    %v5984 = vsub.f32 %v2763, %v5941
    %v5985 = vsub.f32 %v2762, %v5945
    %v5986 = vsub.f32 %v2763, %v5945
    %v5987 = vmul.f32 %v5983, %v5953
    %v5988 = vmul.f32 %v5984, %v5953
    %v5989 = vmul.f32 %v5985, %v5957
    %v5990 = vmul.f32 %v5986, %v5957
    %v5991 = vsub.f32 0.0, %v5987
    %v5992 = vsub.f32 0.0, %v5988
    %v5993 = vsub.f32 0.0, %v5989
    %v5994 = vsub.f32 0.0, %v5990
    %v5995 = vmul.f32 %v5991, 1.442695
    %v5996 = vpow.pop %v5995
    %v5997 = vmul.f32 %v5992, 1.442695
    %v5998 = vpow.pop %v5997
    %v5999 = vmul.f32 %v5993, 1.442695
    %v6000 = vpow.pop %v5999
    %v6001 = vmul.f32 %v5994, 1.442695
    %v6002 = vpow.pop %v6001
    %v6003 = vadd.f32 %v5996, 1.0
    %v6004 = vadd.f32 %v5998, 1.0
    %v6005 = vadd.f32 %v6000, 1.0
    %v6006 = vadd.f32 %v6002, 1.0
    %v6007 = vrcp.pop %v6003
    %v6008 = vrcp.pop %v6004
    %v6009 = vrcp.pop %v6005
    %v6010 = vrcp.pop %v6006
    %v6011 = vsub.f32 %v6007, %v5979
    %v6012 = vsub.f32 %v6008, %v5980
    %v6013 = vsub.f32 %v6009, %v5981
    %v6014 = vsub.f32 %v6010, %v5982
    %6015 = vset.pattern.permute.xlu0 10
    %6016 = vperm.xlu0 %6015, %v5745
    %v6017 = vpop.permute.xlu0 %6016
    %6019 = vset.pattern.permute.xlu0 10
    %6020 = vperm.xlu0 %6019, %v5746
    %v6021 = vpop.permute.xlu0 %6020
    %v6023 = vmul.f32 %v6017, %v6011
    %v6024 = vmul.f32 %v6017, %v6012
    %v6025 = vmul.f32 %v6021, %v6013
    %v6026 = vmul.f32 %v6021, %v6014
    %v6027 = vadd.f32 %v5935, %v6023
    %v6028 = vadd.f32 %v5936, %v6024
    %v6029 = vadd.f32 %v5937, %v6025
    %v6030 = vadd.f32 %v5938, %v6026
    %6031 = vset.pattern.permute.xlu0 3
    %6032 = vperm.xlu0 %6031, %v5713
    %v6033 = vpop.permute.xlu0 %6032
    %6035 = vset.pattern.permute.xlu0 3
    %6036 = vperm.xlu0 %6035, %v5714
    %v6037 = vpop.permute.xlu0 %6036
    %v6039 = vsub.f32 %v56, %v6033
    %v6040 = vsub.f32 %v57, %v6033
    %v6041 = vsub.f32 %v56, %v6037
    %v6042 = vsub.f32 %v57, %v6037
    %6043 = vset.pattern.permute.xlu0 7
    %6044 = vperm.xlu0 %6043, %v5747
    %v6045 = vpop.permute.xlu0 %6044
    %6047 = vset.pattern.permute.xlu0 7
    %6048 = vperm.xlu0 %6047, %v5748
    %v6049 = vpop.permute.xlu0 %6048
    %v6051 = vmul.f32 %v6039, %v6045
    %v6052 = vmul.f32 %v6040, %v6045
    %v6053 = vmul.f32 %v6041, %v6049
    %v6054 = vmul.f32 %v6042, %v6049
    %v6055 = vsub.f32 0.0, %v6051
    %v6056 = vsub.f32 0.0, %v6052
    %v6057 = vsub.f32 0.0, %v6053
    %v6058 = vsub.f32 0.0, %v6054
    %v6059 = vmul.f32 %v6055, 1.442695
    %v6060 = vpow.pop %v6059
    %v6061 = vmul.f32 %v6056, 1.442695
    %v6062 = vpow.pop %v6061
    %v6063 = vmul.f32 %v6057, 1.442695
    %v6064 = vpow.pop %v6063
    %v6065 = vmul.f32 %v6058, 1.442695
    %v6066 = vpow.pop %v6065
    %v6067 = vadd.f32 %v6060, 1.0
    %v6068 = vadd.f32 %v6062, 1.0
    %v6069 = vadd.f32 %v6064, 1.0
    %v6070 = vadd.f32 %v6066, 1.0
    %v6071 = vrcp.pop %v6067
    %v6072 = vrcp.pop %v6068
    %v6073 = vrcp.pop %v6069
    %v6074 = vrcp.pop %v6070
    %v6075 = vsub.f32 %v2762, %v6033
    %v6076 = vsub.f32 %v2763, %v6033
    %v6077 = vsub.f32 %v2762, %v6037
    %v6078 = vsub.f32 %v2763, %v6037
    %v6079 = vmul.f32 %v6075, %v6045
    %v6080 = vmul.f32 %v6076, %v6045
    %v6081 = vmul.f32 %v6077, %v6049
    %v6082 = vmul.f32 %v6078, %v6049
    %v6083 = vsub.f32 0.0, %v6079
    %v6084 = vsub.f32 0.0, %v6080
    %v6085 = vsub.f32 0.0, %v6081
    %v6086 = vsub.f32 0.0, %v6082
    %v6087 = vmul.f32 %v6083, 1.442695
    %v6088 = vpow.pop %v6087
    %v6089 = vmul.f32 %v6084, 1.442695
    %v6090 = vpow.pop %v6089
    %v6091 = vmul.f32 %v6085, 1.442695
    %v6092 = vpow.pop %v6091
    %v6093 = vmul.f32 %v6086, 1.442695
    %v6094 = vpow.pop %v6093
    %v6095 = vadd.f32 %v6088, 1.0
    %v6096 = vadd.f32 %v6090, 1.0
    %v6097 = vadd.f32 %v6092, 1.0
    %v6098 = vadd.f32 %v6094, 1.0
    %v6099 = vrcp.pop %v6095
    %v6100 = vrcp.pop %v6096
    %v6101 = vrcp.pop %v6097
    %v6102 = vrcp.pop %v6098
    %v6103 = vsub.f32 %v6099, %v6071
    %v6104 = vsub.f32 %v6100, %v6072
    %v6105 = vsub.f32 %v6101, %v6073
    %v6106 = vsub.f32 %v6102, %v6074
    %6107 = vset.pattern.permute.xlu0 11
    %6108 = vperm.xlu0 %6107, %v5745
    %v6109 = vpop.permute.xlu0 %6108
    %6111 = vset.pattern.permute.xlu0 11
    %6112 = vperm.xlu0 %6111, %v5746
    %v6113 = vpop.permute.xlu0 %6112
    %v6115 = vmul.f32 %v6109, %v6103
    %v6116 = vmul.f32 %v6109, %v6104
    %v6117 = vmul.f32 %v6113, %v6105
    %v6118 = vmul.f32 %v6113, %v6106
    %v6119 = vadd.f32 %v6027, %v6115
    %v6120 = vadd.f32 %v6028, %v6116
    %v6121 = vadd.f32 %v6029, %v6117
    %v6122 = vadd.f32 %v6030, %v6118
    %v6123 = vadd.f32 %v6119, %v6120
    %6124 = vadd.xlane.f32.xlu0 %v6123
    %v6125 = vpop.xlane.xlu0 %6124
    %v6126 = vadd.f32 %v6121, %v6122
    %6127 = vadd.xlane.f32.xlu0 %v6126
    %v6128 = vpop.xlane.xlu0 %6127
    %v6129 = vrcp.pop %v6125
    %v6130 = vrcp.pop %v6128
    %v6131 = vmul.f32 %v6119, %v6129
    %v6132 = vmul.f32 %v6120, %v6129
    %v6133 = vmul.f32 %v6121, %v6130
    %v6134 = vmul.f32 %v6122, %v6130
    %v6135 = vadd.f32 %v6131, 1e-12
    %v6136 = vadd.f32 %v6132, 1e-12
    %v6137 = vadd.f32 %v6133, 1e-12
    %v6138 = vadd.f32 %v6134, 1e-12
    %v6139 = vlog2.pop %v6135
    %v6140 = vmul.f32 %v6139, 0.6931472
    %v6141 = vlog2.pop %v6136
    %v6142 = vmul.f32 %v6141, 0.6931472
    %v6143 = vlog2.pop %v6137
    %v6144 = vmul.f32 %v6143, 0.6931472
    %v6145 = vlog2.pop %v6138
    %v6146 = vmul.f32 %v6145, 0.6931472
    %s6147 = scalar_lea.vmem [#allocation2], 32
    %6148 = vst [vmem:[%s6147] sm:$0xff] %v6140
    %6149 = vst [vmem:[%s6147 + $0x8] sm:$0xff] %v6142
    %6150 = vst [vmem:[%s6147 + $0x10] sm:$0xff] %v6144
    %6151 = vst [vmem:[%s6147 + $0x18] sm:$0xff] %v6146
    // Predicated region
    $region62: #{encoder_forward.1} parent=1 // pred_check
      _
    $region63: #{encoder_forward.1} parent=1 // pred_check_branch
      %6153 = sbr.rel (0) target = $region65
    $region64: #{encoder_forward.1} parent=1 // pred_region
      %s6155 = ssub.s32 1024, 1024
      %6156 = vsyncadd [#allocation3], %s6155
      %s6157 = sshll.u32 [#allocation2], 4
      %s6158 = int_to_ptr.vmem [resolvable:$true] %s6157
      %6163 = dma.vmem_to_hbm [thread:$0]  %s6158, 1024, %s15, [#allocation3], 256, 256, 16
    $region65: #{encoder_forward.1} parent=1 // pred_fallthru
      _
    // Predicated region
    $region66: #{encoder_forward.1} parent=1 // pred_check
      _
    $region67: #{encoder_forward.1} parent=1 // pred_check_branch
      %6165 = sbr.rel (0) target = $region69
    $region68: #{encoder_forward.1} parent=1 // pred_region
      %6166 = dma.done [#allocation3], 1024
    $region69: #{encoder_forward.1} parent=1 // pred_fallthru
      _
    %6167 = vsyncpa [#allocation3], 1

</llo_original>
